<compile_context>
chip_gen: v7x
topology: tpu7x:2x2x1
jax: 0.10.0
libtpu: 0.0.40
codegen_flags: <defaults>
</compile_context>

<pallas_src>
import functools
import math

import jax
import jax.numpy as jnp
import numpy as np
from jax.experimental import pallas as pl
from jax.experimental.pallas import tpu as pltpu


def _freq_bands(L: int) -> np.ndarray:
    """f32 frequency bands 2**l * pi, matching the torch module exactly."""
    return (2.0 ** np.arange(L, dtype=np.float32)) * np.float32(np.pi)


def _expansion_matrix(D: int, L: int, k: int) -> np.ndarray:
    """(k*D, k*W) 0/1 matrix: x_super @ S broadcasts each input coordinate into
    its 2L output columns, already in the final super-row column order."""
    W = 2 * L * D
    S = np.zeros((k * D, k * W), dtype=np.float32)
    for r in range(k):
        for d in range(D):
            c0 = r * W + d * 2 * L
            S[r * D + d, c0:c0 + 2 * L] = 1.0
    return S


def _freq_sign_row(D: int, L: int, k: int) -> np.ndarray:
    """(1, k*W) f32 row: +f_l on sin columns, -f_l on cos columns.
    The sign doubles as the sin/cos lane selector."""
    f = _freq_bands(L)
    per_coord = np.concatenate([f, -f])                  # (2L,) : [ +f_l | -f_l ]
    return np.tile(per_coord, k * D)[None, :].astype(np.float32)


def _pe_kernel(x_ref, s_ref, f_ref, o_ref):
    """Per-tile hot path.

    x_ref: (T, k*D)    input super-rows
    s_ref: (k*D, k*W)  bf16 0/1 expansion matrix (constant)
    f_ref: (1, k*W)    f32 signed frequency row (constant)
    o_ref: (T, k*W)    lane-dense output tile
    """
    f32, bf16 = jnp.float32, jnp.bfloat16
    x = x_ref[...].astype(f32)

    # Exact 3-way bf16 split: x == hi + mid + lo with every chunk exactly
    # representable in bf16, so three single-pass MXU matmuls with f32
    # accumulation broadcast x into output column order *bit exactly*.
    hi = x.astype(bf16)
    rem = x - hi.astype(f32)
    mid = rem.astype(bf16)
    lo = (rem - mid.astype(f32)).astype(bf16)

    s = s_ref[...]
    xb = (jnp.dot(hi, s, preferred_element_type=f32)
          + jnp.dot(mid, s, preferred_element_type=f32)
          + jnp.dot(lo, s, preferred_element_type=f32))      # (T, k*W) broadcast of x

    fsel = jnp.broadcast_to(f_ref[...], xb.shape)            # f32 sublane broadcast
    args = xb * jnp.abs(fsel)                                 # exact f32 x*f, bitwise == reference

    # Single lane-masked select (per review): no concatenates / sub-vreg
    # relayout; sin+cos over the full tile ride in the slack of this
    # writeback-bound kernel.
    o_ref[...] = jnp.where(fsel < 0.0, jnp.cos(args), jnp.sin(args)).astype(o_ref.dtype)


@functools.partial(jax.jit, static_argnames=("L", "tile_rows"))
def positional_encoding(x: jax.Array, L: int = 10, tile_rows=None) -> jax.Array:
    """Pallas-backed equivalent of PositionalEncoding(L).forward(x) for 2-D x."""
    N, D = x.shape
    W = 2 * L * D

    # Smallest row-group k making the output super-row a multiple of 128 lanes.
    k = 128 // math.gcd(W, 128)
    kD, kW = k * D, k * W

    orig_n = N
    pad = (-N) % k
    if pad:
        # NOTE: triggers a post-call slice (full output copy); production
        # callers should pad N to a multiple of k upstream.
        x = jnp.concatenate([x, jnp.zeros((pad, D), dtype=x.dtype)], axis=0)
        N += pad
    n_super = N // k

    # Free row-major regroupings: (N, D) <-> (N/k, k*D) and (N/k, k*W) <-> (N, W).
    x_r = x.reshape(n_super, kD)

    if tile_rows is None:
        # ~1 MiB of lane-dense f32 output per pipeline buffer: big enough to
        # amortize the ~0.35us/step overhead, small enough that double-buffered
        # blocks + in-kernel temporaries stay well under v5e's 16 MiB default
        # scoped VMEM (and v7x's 64 MiB physical VMEM). Sweep upward on v6e.
        tile_rows = max(8, ((1 << 20) // (kW * 4)) // 8 * 8)
        if n_super >= 16:
            # Keep the grid at >= 2 steps so DMA/compute overlap and the v7x
            # megacore split of the "parallel" row axis actually engage.
            tile_rows = min(tile_rows, max(8, (n_super // 2) // 8 * 8))
    tile_rows = min(tile_rows, n_super)
    if tile_rows < n_super:
        tile_rows = max(8, (tile_rows // 8) * 8)          # sublane-aligned blocks

    S = jnp.asarray(_expansion_matrix(D, L, k), dtype=jnp.bfloat16)
    fsel = jnp.asarray(_freq_sign_row(D, L, k))

    out = pl.pallas_call(
        _pe_kernel,
        out_shape=jax.ShapeDtypeStruct((n_super, kW), x.dtype),
        grid=(pl.cdiv(n_super, tile_rows),),
        in_specs=[
            pl.BlockSpec((tile_rows, kD), lambda i: (i, 0)),   # input rows
            pl.BlockSpec((kD, kW), lambda i: (0, 0)),          # constant, fetched once
            pl.BlockSpec((1, kW), lambda i: (0, 0)),           # constant, fetched once
        ],
        out_specs=pl.BlockSpec((tile_rows, kW), lambda i: (i, 0)),
        compiler_params=pltpu.CompilerParams(
            dimension_semantics=("parallel",),   # row tiles shard across TCs (v7x)
        ),
    )(x_r, S, fsel)

    out = out.reshape(N, W)
    return out[:orig_n] if pad else out


def _reference(x: jax.Array, L: int = 10) -> jax.Array:
    """Pure-JAX transcription of the PyTorch forward, for verification."""
    freqs = jnp.asarray(_freq_bands(L))
    xf = x.astype(jnp.float32)
    sin_t = jnp.sin(xf[..., None] * freqs)
    cos_t = jnp.cos(xf[..., None] * freqs)
    out = jnp.concatenate([sin_t, cos_t], axis=-1).reshape(x.shape[0], -1)
    return out.astype(x.dtype)


if __name__ == "__main__":
    key = jax.random.PRNGKey(0)
    N, D, L = 2048, 3, 10                 # NeRF: 3-D coords, L=10 frequency bands
    x = jax.random.uniform(key, (N, D), dtype=jnp.float32, minval=-1.0, maxval=1.0)

    # k=32 super-rows -> 64 lane-dense rows of width 1920; tile_rows=16 gives a
    # 4-step pipelined grid (exercises the multi-tile path + megacore split).
    out = jax.block_until_ready(positional_encoding(x, L=L, tile_rows=16))
    ref = _reference(x, L=L)

    assert out.shape == (N, 2 * L * D), out.shape
    err = float(jnp.max(jnp.abs(out - ref)))
    # The sin/cos arguments are reproduced bit-exactly in-kernel; the headroom
    # only covers sin/cos implementation differences (Mosaic vs XLA) at
    # |arg| up to 2^9 * pi.
    assert err < 2e-4, f"max abs err {err}"

    print("KERNEL_OK")
</pallas_src>

<mosaic_0001>
module attributes {stable_mosaic.version = 11 : i64} {
  func.func @_pe_kernel(%arg0: i32, %arg1: memref<16x96xf32, #tpu.memory_space<vmem>>, %arg2: memref<96x1920xbf16, #tpu.memory_space<vmem>>, %arg3: memref<1x1920xf32, #tpu.memory_space<vmem>>, %arg4: memref<16x1920xf32, #tpu.memory_space<vmem>>) attributes {dimension_semantics = [#tpu.dimension_semantics<parallel>], iteration_bounds = array<i64: 4>, scalar_prefetch = 0 : i64, scratch_operands = 0 : i64, tpu.core_type = #tpu.core_type<tc>, window_params = [{transform_indices = @transform_0, window_bounds = array<i64: 16, 96>}, {pipeline_mode = #tpu.pipeline_mode<synchronous>, transform_indices = @transform_1, window_bounds = array<i64: 96, 1920>}, {pipeline_mode = #tpu.pipeline_mode<synchronous>, transform_indices = @transform_2, window_bounds = array<i64: 1, 1920>}, {transform_indices = @transform_3, window_bounds = array<i64: 16, 1920>}]} {
    %c0 = arith.constant 0 : index
    %c0_0 = arith.constant 0 : index
    %0 = vector.load %arg1[%c0, %c0_0] : memref<16x96xf32, #tpu.memory_space<vmem>>, vector<16x96xf32>
    %1 = arith.truncf %0 : vector<16x96xf32> to vector<16x96xbf16>
    %2 = arith.extf %1 : vector<16x96xbf16> to vector<16x96xf32>
    %3 = arith.subf %0, %2 : vector<16x96xf32>
    %4 = arith.truncf %3 : vector<16x96xf32> to vector<16x96xbf16>
    %5 = arith.extf %4 : vector<16x96xbf16> to vector<16x96xf32>
    %6 = arith.subf %3, %5 : vector<16x96xf32>
    %7 = arith.truncf %6 : vector<16x96xf32> to vector<16x96xbf16>
    %c0_1 = arith.constant 0 : index
    %c0_2 = arith.constant 0 : index
    %8 = vector.load %arg2[%c0_1, %c0_2] : memref<96x1920xbf16, #tpu.memory_space<vmem>>, vector<96x1920xbf16>
    %cst = arith.constant dense<0.000000e+00> : vector<16x1920xf32>
    %9 = tpu.matmul %1, %8, %cst {dimension_numbers = #tpu.dot_dimension_numbers<[1], [0], [0], [1], [0, 0, 1, 1], [], []>} : vector<16x96xbf16>, vector<96x1920xbf16>, vector<16x1920xf32> -> vector<16x1920xf32>
    %cst_3 = arith.constant dense<0.000000e+00> : vector<16x1920xf32>
    %10 = tpu.matmul %4, %8, %cst_3 {dimension_numbers = #tpu.dot_dimension_numbers<[1], [0], [0], [1], [0, 0, 1, 1], [], []>} : vector<16x96xbf16>, vector<96x1920xbf16>, vector<16x1920xf32> -> vector<16x1920xf32>
    %11 = arith.addf %9, %10 : vector<16x1920xf32>
    %cst_4 = arith.constant dense<0.000000e+00> : vector<16x1920xf32>
    %12 = tpu.matmul %7, %8, %cst_4 {dimension_numbers = #tpu.dot_dimension_numbers<[1], [0], [0], [1], [0, 0, 1, 1], [], []>} : vector<16x96xbf16>, vector<96x1920xbf16>, vector<16x1920xf32> -> vector<16x1920xf32>
    %13 = arith.addf %11, %12 : vector<16x1920xf32>
    %c0_5 = arith.constant 0 : index
    %c0_6 = arith.constant 0 : index
    %14 = vector.load %arg3[%c0_5, %c0_6] : memref<1x1920xf32, #tpu.memory_space<vmem>>, vector<1x1920xf32>
    %15 = vector.shape_cast %14 : vector<1x1920xf32> to vector<1x1920xf32>
    %16 = vector.broadcast %15 : vector<1x1920xf32> to vector<16x1920xf32>
    %17 = math.absf %16 : vector<16x1920xf32>
    %18 = arith.mulf %13, %17 : vector<16x1920xf32>
    %cst_7 = arith.constant 0.000000e+00 : f32
    %19 = vector.broadcast %cst_7 : f32 to vector<16x1920xf32>
    %20 = arith.cmpf olt, %16, %19 : vector<16x1920xf32>
    %21 = math.cos %18 : vector<16x1920xf32>
    %22 = math.sin %18 : vector<16x1920xf32>
    %23 = arith.select %20, %21, %22 : vector<16x1920xi1>, vector<16x1920xf32>
    %c0_8 = arith.constant 0 : index
    %c0_9 = arith.constant 0 : index
    %24 = vector.load %arg4[%c0_8, %c0_9] : memref<16x1920xf32, #tpu.memory_space<vmem>>, vector<16x1920xf32>
    tpu.vector_store %arg4[%c0_8, %c0_9], %23 {strides = array<i32>} : memref<16x1920xf32, #tpu.memory_space<vmem>>, vector<16x1920xf32>,
    return
  }
  func.func @transform_0(%arg0: i32) -> (i32, i32) {
    %c0_i32 = arith.constant 0 : i32
    %c0_i32_0 = arith.constant 0 : i32
    return %arg0, %c0_i32 : i32, i32
  }
  func.func @transform_1(%arg0: i32) -> (i32, i32) {
    %c0_i32 = arith.constant 0 : i32
    %c0_i32_0 = arith.constant 0 : i32
    %c0_i32_1 = arith.constant 0 : i32
    return %c0_i32, %c0_i32_0 : i32, i32
  }
  func.func @transform_2(%arg0: i32) -> (i32, i32) {
    %c0_i32 = arith.constant 0 : i32
    %c0_i32_0 = arith.constant 0 : i32
    %c0_i32_1 = arith.constant 0 : i32
    return %c0_i32, %c0_i32_0 : i32, i32
  }
  func.func @transform_3(%arg0: i32) -> (i32, i32) {
    %c0_i32 = arith.constant 0 : i32
    %c0_i32_0 = arith.constant 0 : i32
    return %arg0, %c0_i32 : i32, i32
  }
}

</mosaic_0001>

<llo_original>
// kernel: positional_encoding.1
$region0: #{positional_encoding.1}
  #allocation0 [shape = 'u32[]', space=smem, size = 0x4, offset = 0x4, fixed_abs, tag = 'smem constant byte address 0x4 - core index']
  #allocation1 [shape = 'u32[144,128]{1,0:T(1,128)}', space=vmem, size = 0x12000, scoped, tag = 'internal scratch']
  %s0 = inlined_call_operand.vmem [shape: f32[64,96], index: 0, kind: input, shape index: {}]
  %s1 = inlined_call_operand.vmem [shape: bf16[96,1920], index: 1, kind: input, shape index: {}]
  %s2 = inlined_call_operand.vmem [shape: f32[1,1920], index: 2, kind: input, shape index: {}]
  %s3 = inlined_call_operand.vmem [shape: f32[64,1920], index: 3, kind: output, shape index: {}]
  %s4 = sld [smem:[#allocation0]]
  $region45: #{positional_encoding.1} parent=0
    _
  %s6 = ssub.s32 1, %s4
  %s7 = scalar_select 0, %s6, %s4
  loop: start=0, step=1, limit=6
  $region2: #{positional_encoding.1} parent=0 // loop_pre_header
    _
  $region3: #{positional_encoding.1} parent=0 // loop_header
    %s9 = sphi 0, %s13
    %p10 = scmp.ge.s32.totalorder %s9, 6
    %s19 = sphi 0, %s21
    %s22 = sphi 0, %s19
    %s23 = sphi 0, %s22
    %s39 = sphi 0, %s23
    %s43 = sphi 0, %s43
    %s45 = sphi 0, %s43
    %s46 = sphi 0, %s45
    %s60 = sphi 0, %s46
    %s64 = sphi 0, %s64
    %s66 = sphi 0, %s64
    %s67 = sphi 0, %s66
    %s81 = sphi 0, %s67
    %s87 = sphi 0, %s89
    %s90 = sphi 0, %s87
    %s91 = sphi 0, %s90
    %s107 = sphi 0, %s91
  $region4: #{positional_encoding.1} parent=0 // loop_header_branch
    %12 = sbr.rel (%p10) target = $region8
  $region5: #{positional_encoding.1} parent=0 // loop_body
    %s14 = ssub.s32 %s9, 1
    %s15 = ssub.s32 %s9, 2
    %s16 = sadd.s32 %s9, 1
    %s17 = ssub.s32 %s9, %s16
    %p18 = scmp.eq.s32.totalorder %s17, 0
    %s20 = sadd.s32 %s19, 1
    %s21 = scalar_select %p18, %s19, %s20
    %p24 = pneg %p18
    %p25 = scmp.eq.s32.totalorder %s9, 3
    %p26 = por %p24, %p25
    %p27 = scmp.ne.s32.totalorder %s19, %s22
    %p28 = scmp.eq.s32.totalorder %s9, 0
    %p29 = por %p27, %p28
    %p30 = scmp.ne.s32.totalorder %s19, %s22
    %p31 = scmp.eq.s32.totalorder %s14, 3
    %p32 = por %p30, %p31
    %p33 = scmp.ne.s32.totalorder %s22, %s23
    %p34 = scmp.eq.s32.totalorder %s14, 0
    %p35 = por %p33, %p34
    %p36 = scmp.ne.s32.totalorder %s22, %s23
    %p37 = scmp.eq.s32.totalorder %s15, 3
    %p38 = por %p36, %p37
    %p40 = scmp.ne.s32.totalorder %s23, %s39
    %p41 = scmp.eq.s32.totalorder %s15, 0
    %p42 = por %p40, %p41
    %s44 = sadd.s32 %s43, 1
    %p47 = scmp.eq.s32.totalorder %s9, 3
    %p48 = scmp.ne.s32.totalorder %s43, %s45
    %p49 = scmp.eq.s32.totalorder %s9, 0
    %p50 = por %p48, %p49
    %p51 = scmp.ne.s32.totalorder %s43, %s45
    %p52 = scmp.eq.s32.totalorder %s14, 3
    %p53 = por %p51, %p52
    %p54 = scmp.ne.s32.totalorder %s45, %s46
    %p55 = scmp.eq.s32.totalorder %s14, 0
    %p56 = por %p54, %p55
    %p57 = scmp.ne.s32.totalorder %s45, %s46
    %p58 = scmp.eq.s32.totalorder %s15, 3
    %p59 = por %p57, %p58
    %p61 = scmp.ne.s32.totalorder %s46, %s60
    %p62 = scmp.eq.s32.totalorder %s15, 0
    %p63 = por %p61, %p62
    %s65 = sadd.s32 %s64, 1
    %p68 = scmp.eq.s32.totalorder %s9, 3
    %p69 = scmp.ne.s32.totalorder %s64, %s66
    %p70 = scmp.eq.s32.totalorder %s9, 0
    %p71 = por %p69, %p70
    %p72 = scmp.ne.s32.totalorder %s64, %s66
    %p73 = scmp.eq.s32.totalorder %s14, 3
    %p74 = por %p72, %p73
    %p75 = scmp.ne.s32.totalorder %s66, %s67
    %p76 = scmp.eq.s32.totalorder %s14, 0
    %p77 = por %p75, %p76
    %p78 = scmp.ne.s32.totalorder %s66, %s67
    %p79 = scmp.eq.s32.totalorder %s15, 3
    %p80 = por %p78, %p79
    %p82 = scmp.ne.s32.totalorder %s67, %s81
    %p83 = scmp.eq.s32.totalorder %s15, 0
    %p84 = por %p82, %p83
    %s85 = ssub.s32 %s9, %s16
    %p86 = scmp.eq.s32.totalorder %s85, 0
    %s88 = sadd.s32 %s87, 1
    %s89 = scalar_select %p86, %s87, %s88
    %p92 = pneg %p86
    %p93 = scmp.eq.s32.totalorder %s9, 3
    %p94 = por %p92, %p93
    %p95 = scmp.ne.s32.totalorder %s87, %s90
    %p96 = scmp.eq.s32.totalorder %s9, 0
    %p97 = por %p95, %p96
    %p98 = scmp.ne.s32.totalorder %s87, %s90
    %p99 = scmp.eq.s32.totalorder %s14, 3
    %p100 = por %p98, %p99
    %p101 = scmp.ne.s32.totalorder %s90, %s91
    %p102 = scmp.eq.s32.totalorder %s14, 0
    %p103 = por %p101, %p102
    %p104 = scmp.ne.s32.totalorder %s90, %s91
    %p105 = scmp.eq.s32.totalorder %s15, 3
    %p106 = por %p104, %p105
    %p108 = scmp.ne.s32.totalorder %s91, %s107
    %p109 = scmp.eq.s32.totalorder %s15, 0
    %p110 = por %p108, %p109
    %p111 = scmp.le.s32.totalorder 1, %s9
    %p112 = scmp.lt.s32.totalorder %s9, 5
    %p113 = pnand %p111, %p112
    %p114 = pneg %p113
    // Predicated region
    $region9: #{positional_encoding.1} parent=5 // pred_check
      _
    $region10: #{positional_encoding.1} parent=5 // pred_check_branch
      %116 = sbr.rel (%p113) target = $region12
    $region11: #{positional_encoding.1} parent=5 // pred_region
      %s117 = ssub.s32 %s9, 1
      // Predicated region
      $region13: #{positional_encoding.1} parent=11 // pred_check
        %p118 = pneg %p56
      $region14: #{positional_encoding.1} parent=11 // pred_check_branch
        %120 = sbr.rel (%p118) target = $region16
      $region15: #{positional_encoding.1} parent=11 // pred_region
        _
      $region16: #{positional_encoding.1} parent=11 // pred_fallthru
        _
      // Predicated region
      $region17: #{positional_encoding.1} parent=11 // pred_check
        %p121 = pneg %p77
      $region18: #{positional_encoding.1} parent=11 // pred_check_branch
        %123 = sbr.rel (%p121) target = $region20
      $region19: #{positional_encoding.1} parent=11 // pred_region
        _
      $region20: #{positional_encoding.1} parent=11 // pred_fallthru
        _
    $region12: #{positional_encoding.1} parent=5 // pred_fallthru
      _
    %p124 = scmp.lt.s32.totalorder %s9, 4
    // Predicated region
    $region21: #{positional_encoding.1} parent=5 // pred_check
      %p125 = pneg %p124
    $region22: #{positional_encoding.1} parent=5 // pred_check_branch
      %127 = sbr.rel (%p125) target = $region24
    $region23: #{positional_encoding.1} parent=5 // pred_region
      // Predicated region
      $region25: #{positional_encoding.1} parent=23 // pred_check
        %p128 = pneg %p29
      $region26: #{positional_encoding.1} parent=23 // pred_check_branch
        %130 = sbr.rel (%p128) target = $region28
      $region27: #{positional_encoding.1} parent=23 // pred_region
        %s131 = smul.u32 2, %s9
        %p132 = scmp.lt.s32.totalorder %s131, 7
        %s133 = scalar_select %p132, %s131, 7
        %s134 = smul.addr %s133, 8
        %s135 = scalar_lea.vmem %s0, %s134
        %s136 = smul.u32 2, %s9
      $region28: #{positional_encoding.1} parent=23 // pred_fallthru
        _
    $region24: #{positional_encoding.1} parent=5 // pred_fallthru
      _
    %p137 = scmp.le.s32.totalorder 1, %s9
    %p138 = scmp.lt.s32.totalorder %s9, 5
    %p139 = pnand %p137, %p138
    %p140 = pneg %p139
    // Predicated region
    $region29: #{positional_encoding.1} parent=5 // pred_check
      _
    $region30: #{positional_encoding.1} parent=5 // pred_check_branch
      %142 = sbr.rel (%p139) target = $region32
    $region31: #{positional_encoding.1} parent=5 // pred_region
      %s143 = ssub.s32 %s9, 1
      %s144 = smul.u32 2, %s14
      %p145 = scmp.lt.s32.totalorder %s144, 7
      %s146 = scalar_select %p145, %s144, 7
      %s147 = smul.addr %s146, 8
      %s148 = scalar_lea.vmem %s0, %s147
      %p149 = pneg %p35
      %p150 = pneg %p32
      %p151 = pneg %p56
      %p152 = pneg %p53
      %p153 = pneg %p77
      %p154 = pneg %p74
      %p155 = pneg %p103
      %p156 = pneg %p100
      %s157 = smul.u32 2, %s14
      %p158 = scmp.lt.s32.totalorder %s157, 7
      %s159 = scalar_select %p158, %s157, 7
      %s160 = smul.addr %s159, 15
      %s161 = smul.addr %s160, 8
      %s162 = scalar_lea.vmem %s3, %s161
      %s163 = smul.u32 2, %s14
      %p164 = scmp.lt.s32.totalorder %s163, 7
      %s165 = scalar_select %p164, %s163, 7
      %s166 = smul.addr %s165, 8
      %s167 = scalar_lea.vmem %s0, %s166
      %s168 = smul.u32 2, %s14
      %s169 = smul.u32 2, %s14
      %p170 = scmp.lt.s32.totalorder %s169, 7
      %s171 = scalar_select %p170, %s169, 7
      %s172 = smul.addr %s171, 15
      %s173 = smul.addr %s172, 8
      %s174 = scalar_lea.vmem %s3, %s173
      %s175 = smul.u32 2, %s14
      %v177 = vld [vmem:[%s167] sm:$0xff]
      %v178 = vld [vmem:[%s167 + $0x8] sm:$0xff]
      %v179 = vpack.c.bf16 %v178, %v177
      %v180 = vunpack.c.l.bf16 %v179
      %v181 = vunpack.c.h.bf16 %v179
      %v182 = vsub.f32 %v177, %v180
      %v183 = vsub.f32 %v178, %v181
      %v184 = vpack.c.bf16 %v183, %v182
      %v185 = vunpack.c.l.bf16 %v184
      %v186 = vunpack.c.h.bf16 %v184
      %v187 = vsub.f32 %v182, %v185
      %v188 = vsub.f32 %v183, %v186
      %v189 = vpack.c.bf16 %v188, %v187
      %v190 = vld [vmem:[%s1] sm:$0xff]
      %v191 = vld [vmem:[%s1 + $0x8] sm:$0xff]
      %v192 = vld [vmem:[%s1 + $0x10] sm:$0xff]
      %v193 = vld [vmem:[%s1 + $0x18] sm:$0xff]
      %v194 = vld [vmem:[%s1 + $0x20] sm:$0xff]
      %v195 = vld [vmem:[%s1 + $0x28] sm:$0xff]
      %v196 = vld [vmem:[%s1 + $0x30] sm:$0xff]
      %v197 = vld [vmem:[%s1 + $0x38] sm:$0xf]
      %v198 = vld [vmem:[%s1 + $0x3c] sm:$0xff]
      %v199 = vld [vmem:[%s1 + $0x44] sm:$0xff]
      %v200 = vld [vmem:[%s1 + $0x4c] sm:$0xff]
      %v201 = vld [vmem:[%s1 + $0x54] sm:$0xff]
      %v202 = vld [vmem:[%s1 + $0x5c] sm:$0xff]
      %v203 = vld [vmem:[%s1 + $0x64] sm:$0xff]
      %v204 = vld [vmem:[%s1 + $0x6c] sm:$0xff]
      %v205 = vld [vmem:[%s1 + $0x74] sm:$0xf]
      %v206 = vld [vmem:[%s1 + $0x78] sm:$0xff]
      %v207 = vld [vmem:[%s1 + $0x80] sm:$0xff]
      %v208 = vld [vmem:[%s1 + $0x88] sm:$0xff]
      %v209 = vld [vmem:[%s1 + $0x90] sm:$0xff]
      %v210 = vld [vmem:[%s1 + $0x98] sm:$0xff]
      %v211 = vld [vmem:[%s1 + $0xa0] sm:$0xff]
      %v212 = vld [vmem:[%s1 + $0xa8] sm:$0xff]
      %v213 = vld [vmem:[%s1 + $0xb0] sm:$0xf]
      %v214 = vld [vmem:[%s1 + $0xb4] sm:$0xff]
      %v215 = vld [vmem:[%s1 + $0xbc] sm:$0xff]
      %v216 = vld [vmem:[%s1 + $0xc4] sm:$0xff]
      %v217 = vld [vmem:[%s1 + $0xcc] sm:$0xff]
      %v218 = vld [vmem:[%s1 + $0xd4] sm:$0xff]
      %v219 = vld [vmem:[%s1 + $0xdc] sm:$0xff]
      %v220 = vld [vmem:[%s1 + $0xe4] sm:$0xff]
      %v221 = vld [vmem:[%s1 + $0xec] sm:$0xf]
      %v222 = vld [vmem:[%s1 + $0xf0] sm:$0xff]
      %v223 = vld [vmem:[%s1 + $0xf8] sm:$0xff]
      %v224 = vld [vmem:[%s1 + $0x100] sm:$0xff]
      %v225 = vld [vmem:[%s1 + $0x108] sm:$0xff]
      %v226 = vld [vmem:[%s1 + $0x110] sm:$0xff]
      %v227 = vld [vmem:[%s1 + $0x118] sm:$0xff]
      %v228 = vld [vmem:[%s1 + $0x120] sm:$0xff]
      %v229 = vld [vmem:[%s1 + $0x128] sm:$0xf]
      %v230 = vld [vmem:[%s1 + $0x12c] sm:$0xff]
      %v231 = vld [vmem:[%s1 + $0x134] sm:$0xff]
      %v232 = vld [vmem:[%s1 + $0x13c] sm:$0xff]
      %v233 = vld [vmem:[%s1 + $0x144] sm:$0xff]
      %v234 = vld [vmem:[%s1 + $0x14c] sm:$0xff]
      %v235 = vld [vmem:[%s1 + $0x154] sm:$0xff]
      %v236 = vld [vmem:[%s1 + $0x15c] sm:$0xff]
      %v237 = vld [vmem:[%s1 + $0x164] sm:$0xf]
      %v238 = vld [vmem:[%s1 + $0x168] sm:$0xff]
      %v239 = vld [vmem:[%s1 + $0x170] sm:$0xff]
      %v240 = vld [vmem:[%s1 + $0x178] sm:$0xff]
      %v241 = vld [vmem:[%s1 + $0x180] sm:$0xff]
      %v242 = vld [vmem:[%s1 + $0x188] sm:$0xff]
      %v243 = vld [vmem:[%s1 + $0x190] sm:$0xff]
      %v244 = vld [vmem:[%s1 + $0x198] sm:$0xff]
      %v245 = vld [vmem:[%s1 + $0x1a0] sm:$0xf]
      %v246 = vld [vmem:[%s1 + $0x1a4] sm:$0xff]
      %v247 = vld [vmem:[%s1 + $0x1ac] sm:$0xff]
      %v248 = vld [vmem:[%s1 + $0x1b4] sm:$0xff]
      %v249 = vld [vmem:[%s1 + $0x1bc] sm:$0xff]
      %v250 = vld [vmem:[%s1 + $0x1c4] sm:$0xff]
      %v251 = vld [vmem:[%s1 + $0x1cc] sm:$0xff]
      %v252 = vld [vmem:[%s1 + $0x1d4] sm:$0xff]
      %v253 = vld [vmem:[%s1 + $0x1dc] sm:$0xf]
      %v254 = vld [vmem:[%s1 + $0x1e0] sm:$0xff]
      %v255 = vld [vmem:[%s1 + $0x1e8] sm:$0xff]
      %v256 = vld [vmem:[%s1 + $0x1f0] sm:$0xff]
      %v257 = vld [vmem:[%s1 + $0x1f8] sm:$0xff]
      %v258 = vld [vmem:[%s1 + $0x200] sm:$0xff]
      %v259 = vld [vmem:[%s1 + $0x208] sm:$0xff]
      %v260 = vld [vmem:[%s1 + $0x210] sm:$0xff]
      %v261 = vld [vmem:[%s1 + $0x218] sm:$0xf]
      %v262 = vld [vmem:[%s1 + $0x21c] sm:$0xff]
      %v263 = vld [vmem:[%s1 + $0x224] sm:$0xff]
      %v264 = vld [vmem:[%s1 + $0x22c] sm:$0xff]
      %v265 = vld [vmem:[%s1 + $0x234] sm:$0xff]
      %v266 = vld [vmem:[%s1 + $0x23c] sm:$0xff]
      %v267 = vld [vmem:[%s1 + $0x244] sm:$0xff]
      %v268 = vld [vmem:[%s1 + $0x24c] sm:$0xff]
      %v269 = vld [vmem:[%s1 + $0x254] sm:$0xf]
      %v270 = vld [vmem:[%s1 + $0x258] sm:$0xff]
      %v271 = vld [vmem:[%s1 + $0x260] sm:$0xff]
      %v272 = vld [vmem:[%s1 + $0x268] sm:$0xff]
      %v273 = vld [vmem:[%s1 + $0x270] sm:$0xff]
      %v274 = vld [vmem:[%s1 + $0x278] sm:$0xff]
      %v275 = vld [vmem:[%s1 + $0x280] sm:$0xff]
      %v276 = vld [vmem:[%s1 + $0x288] sm:$0xff]
      %v277 = vld [vmem:[%s1 + $0x290] sm:$0xf]
      %v278 = vld [vmem:[%s1 + $0x294] sm:$0xff]
      %v279 = vld [vmem:[%s1 + $0x29c] sm:$0xff]
      %v280 = vld [vmem:[%s1 + $0x2a4] sm:$0xff]
      %v281 = vld [vmem:[%s1 + $0x2ac] sm:$0xff]
      %v282 = vld [vmem:[%s1 + $0x2b4] sm:$0xff]
      %v283 = vld [vmem:[%s1 + $0x2bc] sm:$0xff]
      %v284 = vld [vmem:[%s1 + $0x2c4] sm:$0xff]
      %v285 = vld [vmem:[%s1 + $0x2cc] sm:$0xf]
      %v382 = vunpack.c.l.b16 %v190
      %v383 = vunpack.c.h.b16 %v190
      %v384 = vunpack.c.l.b16 %v191
      %v385 = vunpack.c.h.b16 %v191
      %v386 = vunpack.c.l.b16 %v192
      %v387 = vunpack.c.h.b16 %v192
      %v388 = vunpack.c.l.b16 %v193
      %v389 = vunpack.c.h.b16 %v193
      %v390 = vunpack.c.l.b16 %v194
      %v391 = vunpack.c.h.b16 %v194
      %v392 = vunpack.c.l.b16 %v195
      %v393 = vunpack.c.h.b16 %v195
      %v394 = vunpack.c.l.b16 %v196
      %v395 = vunpack.c.h.b16 %v196
      %v396 = vunpack.c.l.b16 %v197
      %v397 = vunpack.c.l.b16 %v198
      %v398 = vunpack.c.h.b16 %v198
      %v399 = vunpack.c.l.b16 %v199
      %v400 = vunpack.c.h.b16 %v199
      %v401 = vunpack.c.l.b16 %v200
      %v402 = vunpack.c.h.b16 %v200
      %v403 = vunpack.c.l.b16 %v201
      %v404 = vunpack.c.h.b16 %v201
      %v405 = vunpack.c.l.b16 %v202
      %v406 = vunpack.c.h.b16 %v202
      %v407 = vunpack.c.l.b16 %v203
      %v408 = vunpack.c.h.b16 %v203
      %v409 = vunpack.c.l.b16 %v204
      %v410 = vunpack.c.h.b16 %v204
      %v411 = vunpack.c.l.b16 %v205
      %v412 = vunpack.c.l.b16 %v206
      %v413 = vunpack.c.h.b16 %v206
      %v414 = vunpack.c.l.b16 %v207
      %v415 = vunpack.c.h.b16 %v207
      %v416 = vunpack.c.l.b16 %v208
      %v417 = vunpack.c.h.b16 %v208
      %v418 = vunpack.c.l.b16 %v209
      %v419 = vunpack.c.h.b16 %v209
      %v420 = vunpack.c.l.b16 %v210
      %v421 = vunpack.c.h.b16 %v210
      %v422 = vunpack.c.l.b16 %v211
      %v423 = vunpack.c.h.b16 %v211
      %v424 = vunpack.c.l.b16 %v212
      %v425 = vunpack.c.h.b16 %v212
      %v426 = vunpack.c.l.b16 %v213
      %v427 = vunpack.c.l.b16 %v214
      %v428 = vunpack.c.h.b16 %v214
      %v429 = vunpack.c.l.b16 %v215
      %v430 = vunpack.c.h.b16 %v215
      %v431 = vunpack.c.l.b16 %v216
      %v432 = vunpack.c.h.b16 %v216
      %v433 = vunpack.c.l.b16 %v217
      %v434 = vunpack.c.h.b16 %v217
      %v435 = vunpack.c.l.b16 %v218
      %v436 = vunpack.c.h.b16 %v218
      %v437 = vunpack.c.l.b16 %v219
      %v438 = vunpack.c.h.b16 %v219
      %v439 = vunpack.c.l.b16 %v220
      %v440 = vunpack.c.h.b16 %v220
      %v441 = vunpack.c.l.b16 %v221
      %v442 = vunpack.c.l.b16 %v222
      %v443 = vunpack.c.h.b16 %v222
      %v444 = vunpack.c.l.b16 %v223
      %v445 = vunpack.c.h.b16 %v223
      %v446 = vunpack.c.l.b16 %v224
      %v447 = vunpack.c.h.b16 %v224
      %v448 = vunpack.c.l.b16 %v225
      %v449 = vunpack.c.h.b16 %v225
      %v450 = vunpack.c.l.b16 %v226
      %v451 = vunpack.c.h.b16 %v226
      %v452 = vunpack.c.l.b16 %v227
      %v453 = vunpack.c.h.b16 %v227
      %v454 = vunpack.c.l.b16 %v228
      %v455 = vunpack.c.h.b16 %v228
      %v456 = vunpack.c.l.b16 %v229
      %v457 = vunpack.c.l.b16 %v230
      %v458 = vunpack.c.h.b16 %v230
      %v459 = vunpack.c.l.b16 %v231
      %v460 = vunpack.c.h.b16 %v231
      %v461 = vunpack.c.l.b16 %v232
      %v462 = vunpack.c.h.b16 %v232
      %v463 = vunpack.c.l.b16 %v233
      %v464 = vunpack.c.h.b16 %v233
      %v465 = vunpack.c.l.b16 %v234
      %v466 = vunpack.c.h.b16 %v234
      %v467 = vunpack.c.l.b16 %v235
      %v468 = vunpack.c.h.b16 %v235
      %v469 = vunpack.c.l.b16 %v236
      %v470 = vunpack.c.h.b16 %v236
      %v471 = vunpack.c.l.b16 %v237
      %v472 = vunpack.c.l.b16 %v238
      %v473 = vunpack.c.h.b16 %v238
      %v474 = vunpack.c.l.b16 %v239
      %v475 = vunpack.c.h.b16 %v239
      %v476 = vunpack.c.l.b16 %v240
      %v477 = vunpack.c.h.b16 %v240
      %v478 = vunpack.c.l.b16 %v241
      %v479 = vunpack.c.h.b16 %v241
      %v480 = vunpack.c.l.b16 %v242
      %v481 = vunpack.c.h.b16 %v242
      %v482 = vunpack.c.l.b16 %v243
      %v483 = vunpack.c.h.b16 %v243
      %v484 = vunpack.c.l.b16 %v244
      %v485 = vunpack.c.h.b16 %v244
      %v486 = vunpack.c.l.b16 %v245
      %v487 = vunpack.c.l.b16 %v246
      %v488 = vunpack.c.h.b16 %v246
      %v489 = vunpack.c.l.b16 %v247
      %v490 = vunpack.c.h.b16 %v247
      %v491 = vunpack.c.l.b16 %v248
      %v492 = vunpack.c.h.b16 %v248
      %v493 = vunpack.c.l.b16 %v249
      %v494 = vunpack.c.h.b16 %v249
      %v495 = vunpack.c.l.b16 %v250
      %v496 = vunpack.c.h.b16 %v250
      %v497 = vunpack.c.l.b16 %v251
      %v498 = vunpack.c.h.b16 %v251
      %v499 = vunpack.c.l.b16 %v252
      %v500 = vunpack.c.h.b16 %v252
      %v501 = vunpack.c.l.b16 %v253
      %v502 = vunpack.c.l.b16 %v254
      %v503 = vunpack.c.h.b16 %v254
      %v504 = vunpack.c.l.b16 %v255
      %v505 = vunpack.c.h.b16 %v255
      %v506 = vunpack.c.l.b16 %v256
      %v507 = vunpack.c.h.b16 %v256
      %v508 = vunpack.c.l.b16 %v257
      %v509 = vunpack.c.h.b16 %v257
      %v510 = vunpack.c.l.b16 %v258
      %v511 = vunpack.c.h.b16 %v258
      %v512 = vunpack.c.l.b16 %v259
      %v513 = vunpack.c.h.b16 %v259
      %v514 = vunpack.c.l.b16 %v260
      %v515 = vunpack.c.h.b16 %v260
      %v516 = vunpack.c.l.b16 %v261
      %v517 = vunpack.c.l.b16 %v262
      %v518 = vunpack.c.h.b16 %v262
      %v519 = vunpack.c.l.b16 %v263
      %v520 = vunpack.c.h.b16 %v263
      %v521 = vunpack.c.l.b16 %v264
      %v522 = vunpack.c.h.b16 %v264
      %v523 = vunpack.c.l.b16 %v265
      %v524 = vunpack.c.h.b16 %v265
      %v525 = vunpack.c.l.b16 %v266
      %v526 = vunpack.c.h.b16 %v266
      %v527 = vunpack.c.l.b16 %v267
      %v528 = vunpack.c.h.b16 %v267
      %v529 = vunpack.c.l.b16 %v268
      %v530 = vunpack.c.h.b16 %v268
      %v531 = vunpack.c.l.b16 %v269
      %v532 = vunpack.c.l.b16 %v270
      %v533 = vunpack.c.h.b16 %v270
      %v534 = vunpack.c.l.b16 %v271
      %v535 = vunpack.c.h.b16 %v271
      %v536 = vunpack.c.l.b16 %v272
      %v537 = vunpack.c.h.b16 %v272
      %v538 = vunpack.c.l.b16 %v273
      %v539 = vunpack.c.h.b16 %v273
      %v540 = vunpack.c.l.b16 %v274
      %v541 = vunpack.c.h.b16 %v274
      %v542 = vunpack.c.l.b16 %v275
      %v543 = vunpack.c.h.b16 %v275
      %v544 = vunpack.c.l.b16 %v276
      %v545 = vunpack.c.h.b16 %v276
      %v546 = vunpack.c.l.b16 %v277
      %v547 = vunpack.c.l.b16 %v278
      %v548 = vunpack.c.h.b16 %v278
      %v549 = vunpack.c.l.b16 %v279
      %v550 = vunpack.c.h.b16 %v279
      %v551 = vunpack.c.l.b16 %v280
      %v552 = vunpack.c.h.b16 %v280
      %v553 = vunpack.c.l.b16 %v281
      %v554 = vunpack.c.h.b16 %v281
      %v555 = vunpack.c.l.b16 %v282
      %v556 = vunpack.c.h.b16 %v282
      %v557 = vunpack.c.l.b16 %v283
      %v558 = vunpack.c.h.b16 %v283
      %v559 = vunpack.c.l.b16 %v284
      %v560 = vunpack.c.h.b16 %v284
      %v561 = vunpack.c.l.b16 %v285
      %v562 = vpack.c.b16 %v397, %v382
      %v563 = vpack.c.b16 %v398, %v383
      %v564 = vpack.c.b16 %v399, %v384
      %v565 = vpack.c.b16 %v400, %v385
      %v566 = vpack.c.b16 %v401, %v386
      %v567 = vpack.c.b16 %v402, %v387
      %v568 = vpack.c.b16 %v403, %v388
      %v569 = vpack.c.b16 %v404, %v389
      %v570 = vpack.c.b16 %v405, %v390
      %v571 = vpack.c.b16 %v406, %v391
      %v572 = vpack.c.b16 %v407, %v392
      %v573 = vpack.c.b16 %v408, %v393
      %v574 = vpack.c.b16 %v409, %v394
      %v575 = vpack.c.b16 %v410, %v395
      %v576 = vpack.c.b16 %v411, %v396
      %v577 = vpack.c.b16 %v427, %v412
      %v578 = vpack.c.b16 %v428, %v413
      %v579 = vpack.c.b16 %v429, %v414
      %v580 = vpack.c.b16 %v430, %v415
      %v581 = vpack.c.b16 %v431, %v416
      %v582 = vpack.c.b16 %v432, %v417
      %v583 = vpack.c.b16 %v433, %v418
      %v584 = vpack.c.b16 %v434, %v419
      %v585 = vpack.c.b16 %v435, %v420
      %v586 = vpack.c.b16 %v436, %v421
      %v587 = vpack.c.b16 %v437, %v422
      %v588 = vpack.c.b16 %v438, %v423
      %v589 = vpack.c.b16 %v439, %v424
      %v590 = vpack.c.b16 %v440, %v425
      %v591 = vpack.c.b16 %v441, %v426
      %v592 = vpack.c.b16 %v457, %v442
      %v593 = vpack.c.b16 %v458, %v443
      %v594 = vpack.c.b16 %v459, %v444
      %v595 = vpack.c.b16 %v460, %v445
      %v596 = vpack.c.b16 %v461, %v446
      %v597 = vpack.c.b16 %v462, %v447
      %v598 = vpack.c.b16 %v463, %v448
      %v599 = vpack.c.b16 %v464, %v449
      %v600 = vpack.c.b16 %v465, %v450
      %v601 = vpack.c.b16 %v466, %v451
      %v602 = vpack.c.b16 %v467, %v452
      %v603 = vpack.c.b16 %v468, %v453
      %v604 = vpack.c.b16 %v469, %v454
      %v605 = vpack.c.b16 %v470, %v455
      %v606 = vpack.c.b16 %v471, %v456
      %v607 = vpack.c.b16 %v487, %v472
      %v608 = vpack.c.b16 %v488, %v473
      %v609 = vpack.c.b16 %v489, %v474
      %v610 = vpack.c.b16 %v490, %v475
      %v611 = vpack.c.b16 %v491, %v476
      %v612 = vpack.c.b16 %v492, %v477
      %v613 = vpack.c.b16 %v493, %v478
      %v614 = vpack.c.b16 %v494, %v479
      %v615 = vpack.c.b16 %v495, %v480
      %v616 = vpack.c.b16 %v496, %v481
      %v617 = vpack.c.b16 %v497, %v482
      %v618 = vpack.c.b16 %v498, %v483
      %v619 = vpack.c.b16 %v499, %v484
      %v620 = vpack.c.b16 %v500, %v485
      %v621 = vpack.c.b16 %v501, %v486
      %v622 = vpack.c.b16 %v517, %v502
      %v623 = vpack.c.b16 %v518, %v503
      %v624 = vpack.c.b16 %v519, %v504
      %v625 = vpack.c.b16 %v520, %v505
      %v626 = vpack.c.b16 %v521, %v506
      %v627 = vpack.c.b16 %v522, %v507
      %v628 = vpack.c.b16 %v523, %v508
      %v629 = vpack.c.b16 %v524, %v509
      %v630 = vpack.c.b16 %v525, %v510
      %v631 = vpack.c.b16 %v526, %v511
      %v632 = vpack.c.b16 %v527, %v512
      %v633 = vpack.c.b16 %v528, %v513
      %v634 = vpack.c.b16 %v529, %v514
      %v635 = vpack.c.b16 %v530, %v515
      %v636 = vpack.c.b16 %v531, %v516
      %v637 = vpack.c.b16 %v547, %v532
      %v638 = vpack.c.b16 %v548, %v533
      %v639 = vpack.c.b16 %v549, %v534
      %v640 = vpack.c.b16 %v550, %v535
      %v641 = vpack.c.b16 %v551, %v536
      %v642 = vpack.c.b16 %v552, %v537
      %v643 = vpack.c.b16 %v553, %v538
      %v644 = vpack.c.b16 %v554, %v539
      %v645 = vpack.c.b16 %v555, %v540
      %v646 = vpack.c.b16 %v556, %v541
      %v647 = vpack.c.b16 %v557, %v542
      %v648 = vpack.c.b16 %v558, %v543
      %v649 = vpack.c.b16 %v559, %v544
      %v650 = vpack.c.b16 %v560, %v545
      %v651 = vpack.c.b16 %v561, %v546
      %vm742 = vcmask 785408
      %v744 = vsel %vm742, %v184, 0
      %746 = vmatprep.subr.bf16.mxu0 %v563
      %747 = vmatpush1.bf16.msra.mxu0 %v562
      %748 = vmatprep.subr.bf16.mxu0 %v578
      %749 = vmatpush1.bf16.msra.mxu0 %v577
      %750 = vmatprep.subr.bf16.mxu0 %v593
      %751 = vmatpush1.bf16.msra.mxu0 %v592
      %752 = vmatprep.subr.bf16.mxu0 %v608
      %753 = vmatpush1.bf16.msra.mxu0 %v607
      %754 = vmatprep.subr.bf16.mxu0 %v623
      %755 = vmatpush1.bf16.msra.mxu0 %v622
      %756 = vmatprep.subr.bf16.mxu0 %v638
      %757 = vmatpush1.bf16.msra.mxu0 %v637
      %758 = vmatprep.subr.bf16.mxu0 0
      %759 = vmatpush1.bf16.msra.mxu0 0
      %760 = vmatprep.subr.bf16.mxu0 0
      %761 = vmatpush1.bf16.msra.mxu0 0
      %762 = vmatprep.subr.bf16.mxu0 0
      %763 = vmatpush1.bf16.msra.mxu0 0
      %764 = vmatprep.subr.bf16.mxu0 0
      %765 = vmatpush1.bf16.msra.mxu0 0
      %766 = vmatprep.subr.bf16.mxu0 0
      %767 = vmatpush1.bf16.msra.mxu0 0
      %768 = vmatprep.subr.bf16.mxu0 0
      %769 = vmatpush1.bf16.msra.mxu0 0
      %770 = vmatprep.subr.bf16.mxu0 0
      %771 = vmatpush1.bf16.msra.mxu0 0
      %772 = vmatprep.subr.bf16.mxu0 0
      %773 = vmatpush1.bf16.msra.mxu0 0
      %774 = vmatprep.subr.bf16.mxu0 0
      %775 = vmatpush1.bf16.msra.mxu0 0
      %776 = vmatprep.subr.bf16.mxu0 0
      %777 = vmatpush1.bf16.msra.mxu0 0
      %778 = vmatprep.mubr.bf16.mxu0 0
      %779 = vmatmul.mubr.bf16.gmra.mrb[0].mxu0 %v744
      %v780 = vpop.f32.mrb[0].mxu0
      %v781 = vadd.f32 0.0, %v780
      %v782 = vpop.f32.mrb[0].mxu0
      %v783 = vadd.f32 0.0, %v782
      %v784 = vpop.f32.mrb[0].mxu0
      %v785 = vadd.f32 0.0, %v784
      %v786 = vpop.f32.mrb[0].mxu0
      %v787 = vadd.f32 0.0, %v786
      %788 = vdwg.mxu0
      %789 = vmatprep.subr.bf16.mxu0 %v565
      %790 = vmatpush1.bf16.msra.mxu0 %v564
      %791 = vmatprep.subr.bf16.mxu0 %v580
      %792 = vmatpush1.bf16.msra.mxu0 %v579
      %793 = vmatprep.subr.bf16.mxu0 %v595
      %794 = vmatpush1.bf16.msra.mxu0 %v594
      %795 = vmatprep.subr.bf16.mxu0 %v610
      %796 = vmatpush1.bf16.msra.mxu0 %v609
      %797 = vmatprep.subr.bf16.mxu0 %v625
      %798 = vmatpush1.bf16.msra.mxu0 %v624
      %799 = vmatprep.subr.bf16.mxu0 %v640
      %800 = vmatpush1.bf16.msra.mxu0 %v639
      %801 = vmatprep.subr.bf16.mxu0 0
      %802 = vmatpush1.bf16.msra.mxu0 0
      %803 = vmatprep.subr.bf16.mxu0 0
      %804 = vmatpush1.bf16.msra.mxu0 0
      %805 = vmatprep.subr.bf16.mxu0 0
      %806 = vmatpush1.bf16.msra.mxu0 0
      %807 = vmatprep.subr.bf16.mxu0 0
      %808 = vmatpush1.bf16.msra.mxu0 0
      %809 = vmatprep.subr.bf16.mxu0 0
      %810 = vmatpush1.bf16.msra.mxu0 0
      %811 = vmatprep.subr.bf16.mxu0 0
      %812 = vmatpush1.bf16.msra.mxu0 0
      %813 = vmatprep.subr.bf16.mxu0 0
      %814 = vmatpush1.bf16.msra.mxu0 0
      %815 = vmatprep.subr.bf16.mxu0 0
      %816 = vmatpush1.bf16.msra.mxu0 0
      %817 = vmatprep.subr.bf16.mxu0 0
      %818 = vmatpush1.bf16.msra.mxu0 0
      %819 = vmatprep.subr.bf16.mxu0 0
      %820 = vmatpush1.bf16.msra.mxu0 0
      %821 = vmatprep.mubr.bf16.mxu0 0
      %822 = vmatmul.mubr.bf16.gmra.mrb[0].mxu0 %v744
      %v823 = vpop.f32.mrb[0].mxu0
      %v824 = vadd.f32 0.0, %v823
      %v825 = vpop.f32.mrb[0].mxu0
      %v826 = vadd.f32 0.0, %v825
      %v827 = vpop.f32.mrb[0].mxu0
      %v828 = vadd.f32 0.0, %v827
      %v829 = vpop.f32.mrb[0].mxu0
      %v830 = vadd.f32 0.0, %v829
      %831 = vdwg.mxu0
      %832 = vmatprep.subr.bf16.mxu0 %v567
      %833 = vmatpush1.bf16.msra.mxu0 %v566
      %834 = vmatprep.subr.bf16.mxu0 %v582
      %835 = vmatpush1.bf16.msra.mxu0 %v581
      %836 = vmatprep.subr.bf16.mxu0 %v597
      %837 = vmatpush1.bf16.msra.mxu0 %v596
      %838 = vmatprep.subr.bf16.mxu0 %v612
      %839 = vmatpush1.bf16.msra.mxu0 %v611
      %840 = vmatprep.subr.bf16.mxu0 %v627
      %841 = vmatpush1.bf16.msra.mxu0 %v626
      %842 = vmatprep.subr.bf16.mxu0 %v642
      %843 = vmatpush1.bf16.msra.mxu0 %v641
      %844 = vmatprep.subr.bf16.mxu0 0
      %845 = vmatpush1.bf16.msra.mxu0 0
      %846 = vmatprep.subr.bf16.mxu0 0
      %847 = vmatpush1.bf16.msra.mxu0 0
      %848 = vmatprep.subr.bf16.mxu0 0
      %849 = vmatpush1.bf16.msra.mxu0 0
      %850 = vmatprep.subr.bf16.mxu0 0
      %851 = vmatpush1.bf16.msra.mxu0 0
      %852 = vmatprep.subr.bf16.mxu0 0
      %853 = vmatpush1.bf16.msra.mxu0 0
      %854 = vmatprep.subr.bf16.mxu0 0
      %855 = vmatpush1.bf16.msra.mxu0 0
      %856 = vmatprep.subr.bf16.mxu0 0
      %857 = vmatpush1.bf16.msra.mxu0 0
      %858 = vmatprep.subr.bf16.mxu0 0
      %859 = vmatpush1.bf16.msra.mxu0 0
      %860 = vmatprep.subr.bf16.mxu0 0
      %861 = vmatpush1.bf16.msra.mxu0 0
      %862 = vmatprep.subr.bf16.mxu0 0
      %863 = vmatpush1.bf16.msra.mxu0 0
      %864 = vmatprep.mubr.bf16.mxu0 0
      %865 = vmatmul.mubr.bf16.gmra.mrb[0].mxu0 %v744
      %v866 = vpop.f32.mrb[0].mxu0
      %v867 = vadd.f32 0.0, %v866
      %v868 = vpop.f32.mrb[0].mxu0
      %v869 = vadd.f32 0.0, %v868
      %v870 = vpop.f32.mrb[0].mxu0
      %v871 = vadd.f32 0.0, %v870
      %v872 = vpop.f32.mrb[0].mxu0
      %v873 = vadd.f32 0.0, %v872
      %874 = vdwg.mxu0
      %875 = vmatprep.subr.bf16.mxu0 %v569
      %876 = vmatpush1.bf16.msra.mxu0 %v568
      %877 = vmatprep.subr.bf16.mxu0 %v584
      %878 = vmatpush1.bf16.msra.mxu0 %v583
      %879 = vmatprep.subr.bf16.mxu0 %v599
      %880 = vmatpush1.bf16.msra.mxu0 %v598
      %881 = vmatprep.subr.bf16.mxu0 %v614
      %882 = vmatpush1.bf16.msra.mxu0 %v613
      %883 = vmatprep.subr.bf16.mxu0 %v629
      %884 = vmatpush1.bf16.msra.mxu0 %v628
      %885 = vmatprep.subr.bf16.mxu0 %v644
      %886 = vmatpush1.bf16.msra.mxu0 %v643
      %887 = vmatprep.subr.bf16.mxu0 0
      %888 = vmatpush1.bf16.msra.mxu0 0
      %889 = vmatprep.subr.bf16.mxu0 0
      %890 = vmatpush1.bf16.msra.mxu0 0
      %891 = vmatprep.subr.bf16.mxu0 0
      %892 = vmatpush1.bf16.msra.mxu0 0
      %893 = vmatprep.subr.bf16.mxu0 0
      %894 = vmatpush1.bf16.msra.mxu0 0
      %895 = vmatprep.subr.bf16.mxu0 0
      %896 = vmatpush1.bf16.msra.mxu0 0
      %897 = vmatprep.subr.bf16.mxu0 0
      %898 = vmatpush1.bf16.msra.mxu0 0
      %899 = vmatprep.subr.bf16.mxu0 0
      %900 = vmatpush1.bf16.msra.mxu0 0
      %901 = vmatprep.subr.bf16.mxu0 0
      %902 = vmatpush1.bf16.msra.mxu0 0
      %903 = vmatprep.subr.bf16.mxu0 0
      %904 = vmatpush1.bf16.msra.mxu0 0
      %905 = vmatprep.subr.bf16.mxu0 0
      %906 = vmatpush1.bf16.msra.mxu0 0
      %907 = vmatprep.mubr.bf16.mxu0 0
      %908 = vmatmul.mubr.bf16.gmra.mrb[0].mxu0 %v744
      %v909 = vpop.f32.mrb[0].mxu0
      %v910 = vadd.f32 0.0, %v909
      %v911 = vpop.f32.mrb[0].mxu0
      %v912 = vadd.f32 0.0, %v911
      %v913 = vpop.f32.mrb[0].mxu0
      %v914 = vadd.f32 0.0, %v913
      %v915 = vpop.f32.mrb[0].mxu0
      %v916 = vadd.f32 0.0, %v915
      %917 = vdwg.mxu0
      %918 = vmatprep.subr.bf16.mxu0 %v571
      %919 = vmatpush1.bf16.msra.mxu0 %v570
      %920 = vmatprep.subr.bf16.mxu0 %v586
      %921 = vmatpush1.bf16.msra.mxu0 %v585
      %922 = vmatprep.subr.bf16.mxu0 %v601
      %923 = vmatpush1.bf16.msra.mxu0 %v600
      %924 = vmatprep.subr.bf16.mxu0 %v616
      %925 = vmatpush1.bf16.msra.mxu0 %v615
      %926 = vmatprep.subr.bf16.mxu0 %v631
      %927 = vmatpush1.bf16.msra.mxu0 %v630
      %928 = vmatprep.subr.bf16.mxu0 %v646
      %929 = vmatpush1.bf16.msra.mxu0 %v645
      %930 = vmatprep.subr.bf16.mxu0 0
      %931 = vmatpush1.bf16.msra.mxu0 0
      %932 = vmatprep.subr.bf16.mxu0 0
      %933 = vmatpush1.bf16.msra.mxu0 0
      %934 = vmatprep.subr.bf16.mxu0 0
      %935 = vmatpush1.bf16.msra.mxu0 0
      %936 = vmatprep.subr.bf16.mxu0 0
      %937 = vmatpush1.bf16.msra.mxu0 0
      %938 = vmatprep.subr.bf16.mxu0 0
      %939 = vmatpush1.bf16.msra.mxu0 0
      %940 = vmatprep.subr.bf16.mxu0 0
      %941 = vmatpush1.bf16.msra.mxu0 0
      %942 = vmatprep.subr.bf16.mxu0 0
      %943 = vmatpush1.bf16.msra.mxu0 0
      %944 = vmatprep.subr.bf16.mxu0 0
      %945 = vmatpush1.bf16.msra.mxu0 0
      %946 = vmatprep.subr.bf16.mxu0 0
      %947 = vmatpush1.bf16.msra.mxu0 0
      %948 = vmatprep.subr.bf16.mxu0 0
      %949 = vmatpush1.bf16.msra.mxu0 0
      %950 = vmatprep.mubr.bf16.mxu0 0
      %951 = vmatmul.mubr.bf16.gmra.mrb[0].mxu0 %v744
      %v952 = vpop.f32.mrb[0].mxu0
      %v953 = vadd.f32 0.0, %v952
      %v954 = vpop.f32.mrb[0].mxu0
      %v955 = vadd.f32 0.0, %v954
      %v956 = vpop.f32.mrb[0].mxu0
      %v957 = vadd.f32 0.0, %v956
      %v958 = vpop.f32.mrb[0].mxu0
      %v959 = vadd.f32 0.0, %v958
      %960 = vdwg.mxu0
      %961 = vmatprep.subr.bf16.mxu0 %v573
      %962 = vmatpush1.bf16.msra.mxu0 %v572
      %963 = vmatprep.subr.bf16.mxu0 %v588
      %964 = vmatpush1.bf16.msra.mxu0 %v587
      %965 = vmatprep.subr.bf16.mxu0 %v603
      %966 = vmatpush1.bf16.msra.mxu0 %v602
      %967 = vmatprep.subr.bf16.mxu0 %v618
      %968 = vmatpush1.bf16.msra.mxu0 %v617
      %969 = vmatprep.subr.bf16.mxu0 %v633
      %970 = vmatpush1.bf16.msra.mxu0 %v632
      %971 = vmatprep.subr.bf16.mxu0 %v648
      %972 = vmatpush1.bf16.msra.mxu0 %v647
      %973 = vmatprep.subr.bf16.mxu0 0
      %974 = vmatpush1.bf16.msra.mxu0 0
      %975 = vmatprep.subr.bf16.mxu0 0
      %976 = vmatpush1.bf16.msra.mxu0 0
      %977 = vmatprep.subr.bf16.mxu0 0
      %978 = vmatpush1.bf16.msra.mxu0 0
      %979 = vmatprep.subr.bf16.mxu0 0
      %980 = vmatpush1.bf16.msra.mxu0 0
      %981 = vmatprep.subr.bf16.mxu0 0
      %982 = vmatpush1.bf16.msra.mxu0 0
      %983 = vmatprep.subr.bf16.mxu0 0
      %984 = vmatpush1.bf16.msra.mxu0 0
      %985 = vmatprep.subr.bf16.mxu0 0
      %986 = vmatpush1.bf16.msra.mxu0 0
      %987 = vmatprep.subr.bf16.mxu0 0
      %988 = vmatpush1.bf16.msra.mxu0 0
      %989 = vmatprep.subr.bf16.mxu0 0
      %990 = vmatpush1.bf16.msra.mxu0 0
      %991 = vmatprep.subr.bf16.mxu0 0
      %992 = vmatpush1.bf16.msra.mxu0 0
      %993 = vmatprep.mubr.bf16.mxu0 0
      %994 = vmatmul.mubr.bf16.gmra.mrb[0].mxu0 %v744
      %v995 = vpop.f32.mrb[0].mxu0
      %v996 = vadd.f32 0.0, %v995
      %v997 = vpop.f32.mrb[0].mxu0
      %v998 = vadd.f32 0.0, %v997
      %v999 = vpop.f32.mrb[0].mxu0
      %v1000 = vadd.f32 0.0, %v999
      %v1001 = vpop.f32.mrb[0].mxu0
      %v1002 = vadd.f32 0.0, %v1001
      %1003 = vdwg.mxu0
      %1004 = vmatprep.subr.bf16.mxu0 %v575
      %1005 = vmatpush1.bf16.msra.mxu0 %v574
      %1006 = vmatprep.subr.bf16.mxu0 %v590
      %1007 = vmatpush1.bf16.msra.mxu0 %v589
      %1008 = vmatprep.subr.bf16.mxu0 %v605
      %1009 = vmatpush1.bf16.msra.mxu0 %v604
      %1010 = vmatprep.subr.bf16.mxu0 %v620
      %1011 = vmatpush1.bf16.msra.mxu0 %v619
      %1012 = vmatprep.subr.bf16.mxu0 %v635
      %1013 = vmatpush1.bf16.msra.mxu0 %v634
      %1014 = vmatprep.subr.bf16.mxu0 %v650
      %1015 = vmatpush1.bf16.msra.mxu0 %v649
      %1016 = vmatprep.subr.bf16.mxu0 0
      %1017 = vmatpush1.bf16.msra.mxu0 0
      %1018 = vmatprep.subr.bf16.mxu0 0
      %1019 = vmatpush1.bf16.msra.mxu0 0
      %1020 = vmatprep.subr.bf16.mxu0 0
      %1021 = vmatpush1.bf16.msra.mxu0 0
      %1022 = vmatprep.subr.bf16.mxu0 0
      %1023 = vmatpush1.bf16.msra.mxu0 0
      %1024 = vmatprep.subr.bf16.mxu0 0
      %1025 = vmatpush1.bf16.msra.mxu0 0
      %1026 = vmatprep.subr.bf16.mxu0 0
      %1027 = vmatpush1.bf16.msra.mxu0 0
      %1028 = vmatprep.subr.bf16.mxu0 0
      %1029 = vmatpush1.bf16.msra.mxu0 0
      %1030 = vmatprep.subr.bf16.mxu0 0
      %1031 = vmatpush1.bf16.msra.mxu0 0
      %1032 = vmatprep.subr.bf16.mxu0 0
      %1033 = vmatpush1.bf16.msra.mxu0 0
      %1034 = vmatprep.subr.bf16.mxu0 0
      %1035 = vmatpush1.bf16.msra.mxu0 0
      %1036 = vmatprep.mubr.bf16.mxu0 0
      %1037 = vmatmul.mubr.bf16.gmra.mrb[0].mxu0 %v744
      %v1038 = vpop.f32.mrb[0].mxu0
      %v1039 = vadd.f32 0.0, %v1038
      %v1040 = vpop.f32.mrb[0].mxu0
      %v1041 = vadd.f32 0.0, %v1040
      %v1042 = vpop.f32.mrb[0].mxu0
      %v1043 = vadd.f32 0.0, %v1042
      %v1044 = vpop.f32.mrb[0].mxu0
      %v1045 = vadd.f32 0.0, %v1044
      %1046 = vdwg.mxu0
      %1047 = vmatprep.subr.bf16.mxu0 0
      %1048 = vmatpush1.bf16.msra.mxu0 %v576
      %1049 = vmatprep.subr.bf16.mxu0 0
      %1050 = vmatpush1.bf16.msra.mxu0 %v591
      %1051 = vmatprep.subr.bf16.mxu0 0
      %1052 = vmatpush1.bf16.msra.mxu0 %v606
      %1053 = vmatprep.subr.bf16.mxu0 0
      %1054 = vmatpush1.bf16.msra.mxu0 %v621
      %1055 = vmatprep.subr.bf16.mxu0 0
      %1056 = vmatpush1.bf16.msra.mxu0 %v636
      %1057 = vmatprep.subr.bf16.mxu0 0
      %1058 = vmatpush1.bf16.msra.mxu0 %v651
      %1059 = vmatprep.subr.bf16.mxu0 0
      %1060 = vmatpush1.bf16.msra.mxu0 0
      %1061 = vmatprep.subr.bf16.mxu0 0
      %1062 = vmatpush1.bf16.msra.mxu0 0
      %1063 = vmatprep.subr.bf16.mxu0 0
      %1064 = vmatpush1.bf16.msra.mxu0 0
      %1065 = vmatprep.subr.bf16.mxu0 0
      %1066 = vmatpush1.bf16.msra.mxu0 0
      %1067 = vmatprep.subr.bf16.mxu0 0
      %1068 = vmatpush1.bf16.msra.mxu0 0
      %1069 = vmatprep.subr.bf16.mxu0 0
      %1070 = vmatpush1.bf16.msra.mxu0 0
      %1071 = vmatprep.subr.bf16.mxu0 0
      %1072 = vmatpush1.bf16.msra.mxu0 0
      %1073 = vmatprep.subr.bf16.mxu0 0
      %1074 = vmatpush1.bf16.msra.mxu0 0
      %1075 = vmatprep.subr.bf16.mxu0 0
      %1076 = vmatpush1.bf16.msra.mxu0 0
      %1077 = vmatprep.subr.bf16.mxu0 0
      %1078 = vmatpush1.bf16.msra.mxu0 0
      %1079 = vmatprep.mubr.bf16.mxu0 0
      %1080 = vmatmul.mubr.bf16.gmra.mrb[0].mxu0 %v744
      %v1081 = vpop.f32.mrb[0].mxu0
      %v1082 = vadd.f32 0.0, %v1081
      %v1083 = vpop.f32.mrb[0].mxu0
      %v1084 = vpop.f32.mrb[0].mxu0
      %v1085 = vadd.f32 0.0, %v1084
      %v1086 = vpop.f32.mrb[0].mxu0
      %1087 = vdwg.mxu0
      %v1089 = vsel %vm742, %v179, 0
      %1091 = vmatprep.subr.bf16.mxu0 %v563
      %1092 = vmatpush1.bf16.msra.mxu0 %v562
      %1093 = vmatprep.subr.bf16.mxu0 %v578
      %1094 = vmatpush1.bf16.msra.mxu0 %v577
      %1095 = vmatprep.subr.bf16.mxu0 %v593
      %1096 = vmatpush1.bf16.msra.mxu0 %v592
      %1097 = vmatprep.subr.bf16.mxu0 %v608
      %1098 = vmatpush1.bf16.msra.mxu0 %v607
      %1099 = vmatprep.subr.bf16.mxu0 %v623
      %1100 = vmatpush1.bf16.msra.mxu0 %v622
      %1101 = vmatprep.subr.bf16.mxu0 %v638
      %1102 = vmatpush1.bf16.msra.mxu0 %v637
      %1103 = vmatprep.subr.bf16.mxu0 0
      %1104 = vmatpush1.bf16.msra.mxu0 0
      %1105 = vmatprep.subr.bf16.mxu0 0
      %1106 = vmatpush1.bf16.msra.mxu0 0
      %1107 = vmatprep.subr.bf16.mxu0 0
      %1108 = vmatpush1.bf16.msra.mxu0 0
      %1109 = vmatprep.subr.bf16.mxu0 0
      %1110 = vmatpush1.bf16.msra.mxu0 0
      %1111 = vmatprep.subr.bf16.mxu0 0
      %1112 = vmatpush1.bf16.msra.mxu0 0
      %1113 = vmatprep.subr.bf16.mxu0 0
      %1114 = vmatpush1.bf16.msra.mxu0 0
      %1115 = vmatprep.subr.bf16.mxu0 0
      %1116 = vmatpush1.bf16.msra.mxu0 0
      %1117 = vmatprep.subr.bf16.mxu0 0
      %1118 = vmatpush1.bf16.msra.mxu0 0
      %1119 = vmatprep.subr.bf16.mxu0 0
      %1120 = vmatpush1.bf16.msra.mxu0 0
      %1121 = vmatprep.subr.bf16.mxu0 0
      %1122 = vmatpush1.bf16.msra.mxu0 0
      %1123 = vmatprep.mubr.bf16.mxu0 0
      %1124 = vmatmul.mubr.bf16.gmra.mrb[0].mxu0 %v1089
      %v1125 = vpop.f32.mrb[0].mxu0
      %v1126 = vadd.f32 %v781, %v1125
      %v1127 = vpop.f32.mrb[0].mxu0
      %v1128 = vadd.f32 %v783, %v1127
      %v1129 = vpop.f32.mrb[0].mxu0
      %v1130 = vadd.f32 %v785, %v1129
      %v1131 = vpop.f32.mrb[0].mxu0
      %v1132 = vadd.f32 %v787, %v1131
      %1133 = vdwg.mxu0
      %1134 = vmatprep.subr.bf16.mxu0 %v565
      %1135 = vmatpush1.bf16.msra.mxu0 %v564
      %1136 = vmatprep.subr.bf16.mxu0 %v580
      %1137 = vmatpush1.bf16.msra.mxu0 %v579
      %1138 = vmatprep.subr.bf16.mxu0 %v595
      %1139 = vmatpush1.bf16.msra.mxu0 %v594
      %1140 = vmatprep.subr.bf16.mxu0 %v610
      %1141 = vmatpush1.bf16.msra.mxu0 %v609
      %1142 = vmatprep.subr.bf16.mxu0 %v625
      %1143 = vmatpush1.bf16.msra.mxu0 %v624
      %1144 = vmatprep.subr.bf16.mxu0 %v640
      %1145 = vmatpush1.bf16.msra.mxu0 %v639
      %1146 = vmatprep.subr.bf16.mxu0 0
      %1147 = vmatpush1.bf16.msra.mxu0 0
      %1148 = vmatprep.subr.bf16.mxu0 0
      %1149 = vmatpush1.bf16.msra.mxu0 0
      %1150 = vmatprep.subr.bf16.mxu0 0
      %1151 = vmatpush1.bf16.msra.mxu0 0
      %1152 = vmatprep.subr.bf16.mxu0 0
      %1153 = vmatpush1.bf16.msra.mxu0 0
      %1154 = vmatprep.subr.bf16.mxu0 0
      %1155 = vmatpush1.bf16.msra.mxu0 0
      %1156 = vmatprep.subr.bf16.mxu0 0
      %1157 = vmatpush1.bf16.msra.mxu0 0
      %1158 = vmatprep.subr.bf16.mxu0 0
      %1159 = vmatpush1.bf16.msra.mxu0 0
      %1160 = vmatprep.subr.bf16.mxu0 0
      %1161 = vmatpush1.bf16.msra.mxu0 0
      %1162 = vmatprep.subr.bf16.mxu0 0
      %1163 = vmatpush1.bf16.msra.mxu0 0
      %1164 = vmatprep.subr.bf16.mxu0 0
      %1165 = vmatpush1.bf16.msra.mxu0 0
      %1166 = vmatprep.mubr.bf16.mxu0 0
      %1167 = vmatmul.mubr.bf16.gmra.mrb[0].mxu0 %v1089
      %v1168 = vpop.f32.mrb[0].mxu0
      %v1169 = vadd.f32 %v824, %v1168
      %v1170 = vpop.f32.mrb[0].mxu0
      %v1171 = vadd.f32 %v826, %v1170
      %v1172 = vpop.f32.mrb[0].mxu0
      %v1173 = vadd.f32 %v828, %v1172
      %v1174 = vpop.f32.mrb[0].mxu0
      %v1175 = vadd.f32 %v830, %v1174
      %1176 = vdwg.mxu0
      %1177 = vmatprep.subr.bf16.mxu0 %v567
      %1178 = vmatpush1.bf16.msra.mxu0 %v566
      %1179 = vmatprep.subr.bf16.mxu0 %v582
      %1180 = vmatpush1.bf16.msra.mxu0 %v581
      %1181 = vmatprep.subr.bf16.mxu0 %v597
      %1182 = vmatpush1.bf16.msra.mxu0 %v596
      %1183 = vmatprep.subr.bf16.mxu0 %v612
      %1184 = vmatpush1.bf16.msra.mxu0 %v611
      %1185 = vmatprep.subr.bf16.mxu0 %v627
      %1186 = vmatpush1.bf16.msra.mxu0 %v626
      %1187 = vmatprep.subr.bf16.mxu0 %v642
      %1188 = vmatpush1.bf16.msra.mxu0 %v641
      %1189 = vmatprep.subr.bf16.mxu0 0
      %1190 = vmatpush1.bf16.msra.mxu0 0
      %1191 = vmatprep.subr.bf16.mxu0 0
      %1192 = vmatpush1.bf16.msra.mxu0 0
      %1193 = vmatprep.subr.bf16.mxu0 0
      %1194 = vmatpush1.bf16.msra.mxu0 0
      %1195 = vmatprep.subr.bf16.mxu0 0
      %1196 = vmatpush1.bf16.msra.mxu0 0
      %1197 = vmatprep.subr.bf16.mxu0 0
      %1198 = vmatpush1.bf16.msra.mxu0 0
      %1199 = vmatprep.subr.bf16.mxu0 0
      %1200 = vmatpush1.bf16.msra.mxu0 0
      %1201 = vmatprep.subr.bf16.mxu0 0
      %1202 = vmatpush1.bf16.msra.mxu0 0
      %1203 = vmatprep.subr.bf16.mxu0 0
      %1204 = vmatpush1.bf16.msra.mxu0 0
      %1205 = vmatprep.subr.bf16.mxu0 0
      %1206 = vmatpush1.bf16.msra.mxu0 0
      %1207 = vmatprep.subr.bf16.mxu0 0
      %1208 = vmatpush1.bf16.msra.mxu0 0
      %1209 = vmatprep.mubr.bf16.mxu0 0
      %1210 = vmatmul.mubr.bf16.gmra.mrb[0].mxu0 %v1089
      %v1211 = vpop.f32.mrb[0].mxu0
      %v1212 = vadd.f32 %v867, %v1211
      %v1213 = vpop.f32.mrb[0].mxu0
      %v1214 = vadd.f32 %v869, %v1213
      %v1215 = vpop.f32.mrb[0].mxu0
      %v1216 = vadd.f32 %v871, %v1215
      %v1217 = vpop.f32.mrb[0].mxu0
      %v1218 = vadd.f32 %v873, %v1217
      %1219 = vdwg.mxu0
      %1220 = vmatprep.subr.bf16.mxu0 %v569
      %1221 = vmatpush1.bf16.msra.mxu0 %v568
      %1222 = vmatprep.subr.bf16.mxu0 %v584
      %1223 = vmatpush1.bf16.msra.mxu0 %v583
      %1224 = vmatprep.subr.bf16.mxu0 %v599
      %1225 = vmatpush1.bf16.msra.mxu0 %v598
      %1226 = vmatprep.subr.bf16.mxu0 %v614
      %1227 = vmatpush1.bf16.msra.mxu0 %v613
      %1228 = vmatprep.subr.bf16.mxu0 %v629
      %1229 = vmatpush1.bf16.msra.mxu0 %v628
      %1230 = vmatprep.subr.bf16.mxu0 %v644
      %1231 = vmatpush1.bf16.msra.mxu0 %v643
      %1232 = vmatprep.subr.bf16.mxu0 0
      %1233 = vmatpush1.bf16.msra.mxu0 0
      %1234 = vmatprep.subr.bf16.mxu0 0
      %1235 = vmatpush1.bf16.msra.mxu0 0
      %1236 = vmatprep.subr.bf16.mxu0 0
      %1237 = vmatpush1.bf16.msra.mxu0 0
      %1238 = vmatprep.subr.bf16.mxu0 0
      %1239 = vmatpush1.bf16.msra.mxu0 0
      %1240 = vmatprep.subr.bf16.mxu0 0
      %1241 = vmatpush1.bf16.msra.mxu0 0
      %1242 = vmatprep.subr.bf16.mxu0 0
      %1243 = vmatpush1.bf16.msra.mxu0 0
      %1244 = vmatprep.subr.bf16.mxu0 0
      %1245 = vmatpush1.bf16.msra.mxu0 0
      %1246 = vmatprep.subr.bf16.mxu0 0
      %1247 = vmatpush1.bf16.msra.mxu0 0
      %1248 = vmatprep.subr.bf16.mxu0 0
      %1249 = vmatpush1.bf16.msra.mxu0 0
      %1250 = vmatprep.subr.bf16.mxu0 0
      %1251 = vmatpush1.bf16.msra.mxu0 0
      %1252 = vmatprep.mubr.bf16.mxu0 0
      %1253 = vmatmul.mubr.bf16.gmra.mrb[0].mxu0 %v1089
      %v1254 = vpop.f32.mrb[0].mxu0
      %v1255 = vadd.f32 %v910, %v1254
      %v1256 = vpop.f32.mrb[0].mxu0
      %v1257 = vadd.f32 %v912, %v1256
      %v1258 = vpop.f32.mrb[0].mxu0
      %v1259 = vadd.f32 %v914, %v1258
      %v1260 = vpop.f32.mrb[0].mxu0
      %v1261 = vadd.f32 %v916, %v1260
      %1262 = vdwg.mxu0
      %1263 = vmatprep.subr.bf16.mxu0 %v571
      %1264 = vmatpush1.bf16.msra.mxu0 %v570
      %1265 = vmatprep.subr.bf16.mxu0 %v586
      %1266 = vmatpush1.bf16.msra.mxu0 %v585
      %1267 = vmatprep.subr.bf16.mxu0 %v601
      %1268 = vmatpush1.bf16.msra.mxu0 %v600
      %1269 = vmatprep.subr.bf16.mxu0 %v616
      %1270 = vmatpush1.bf16.msra.mxu0 %v615
      %1271 = vmatprep.subr.bf16.mxu0 %v631
      %1272 = vmatpush1.bf16.msra.mxu0 %v630
      %1273 = vmatprep.subr.bf16.mxu0 %v646
      %1274 = vmatpush1.bf16.msra.mxu0 %v645
      %1275 = vmatprep.subr.bf16.mxu0 0
      %1276 = vmatpush1.bf16.msra.mxu0 0
      %1277 = vmatprep.subr.bf16.mxu0 0
      %1278 = vmatpush1.bf16.msra.mxu0 0
      %1279 = vmatprep.subr.bf16.mxu0 0
      %1280 = vmatpush1.bf16.msra.mxu0 0
      %1281 = vmatprep.subr.bf16.mxu0 0
      %1282 = vmatpush1.bf16.msra.mxu0 0
      %1283 = vmatprep.subr.bf16.mxu0 0
      %1284 = vmatpush1.bf16.msra.mxu0 0
      %1285 = vmatprep.subr.bf16.mxu0 0
      %1286 = vmatpush1.bf16.msra.mxu0 0
      %1287 = vmatprep.subr.bf16.mxu0 0
      %1288 = vmatpush1.bf16.msra.mxu0 0
      %1289 = vmatprep.subr.bf16.mxu0 0
      %1290 = vmatpush1.bf16.msra.mxu0 0
      %1291 = vmatprep.subr.bf16.mxu0 0
      %1292 = vmatpush1.bf16.msra.mxu0 0
      %1293 = vmatprep.subr.bf16.mxu0 0
      %1294 = vmatpush1.bf16.msra.mxu0 0
      %1295 = vmatprep.mubr.bf16.mxu0 0
      %1296 = vmatmul.mubr.bf16.gmra.mrb[0].mxu0 %v1089
      %v1297 = vpop.f32.mrb[0].mxu0
      %v1298 = vadd.f32 %v953, %v1297
      %v1299 = vpop.f32.mrb[0].mxu0
      %v1300 = vadd.f32 %v955, %v1299
      %v1301 = vpop.f32.mrb[0].mxu0
      %v1302 = vadd.f32 %v957, %v1301
      %v1303 = vpop.f32.mrb[0].mxu0
      %v1304 = vadd.f32 %v959, %v1303
      %1305 = vdwg.mxu0
      %1306 = vmatprep.subr.bf16.mxu0 %v573
      %1307 = vmatpush1.bf16.msra.mxu0 %v572
      %1308 = vmatprep.subr.bf16.mxu0 %v588
      %1309 = vmatpush1.bf16.msra.mxu0 %v587
      %1310 = vmatprep.subr.bf16.mxu0 %v603
      %1311 = vmatpush1.bf16.msra.mxu0 %v602
      %1312 = vmatprep.subr.bf16.mxu0 %v618
      %1313 = vmatpush1.bf16.msra.mxu0 %v617
      %1314 = vmatprep.subr.bf16.mxu0 %v633
      %1315 = vmatpush1.bf16.msra.mxu0 %v632
      %1316 = vmatprep.subr.bf16.mxu0 %v648
      %1317 = vmatpush1.bf16.msra.mxu0 %v647
      %1318 = vmatprep.subr.bf16.mxu0 0
      %1319 = vmatpush1.bf16.msra.mxu0 0
      %1320 = vmatprep.subr.bf16.mxu0 0
      %1321 = vmatpush1.bf16.msra.mxu0 0
      %1322 = vmatprep.subr.bf16.mxu0 0
      %1323 = vmatpush1.bf16.msra.mxu0 0
      %1324 = vmatprep.subr.bf16.mxu0 0
      %1325 = vmatpush1.bf16.msra.mxu0 0
      %1326 = vmatprep.subr.bf16.mxu0 0
      %1327 = vmatpush1.bf16.msra.mxu0 0
      %1328 = vmatprep.subr.bf16.mxu0 0
      %1329 = vmatpush1.bf16.msra.mxu0 0
      %1330 = vmatprep.subr.bf16.mxu0 0
      %1331 = vmatpush1.bf16.msra.mxu0 0
      %1332 = vmatprep.subr.bf16.mxu0 0
      %1333 = vmatpush1.bf16.msra.mxu0 0
      %1334 = vmatprep.subr.bf16.mxu0 0
      %1335 = vmatpush1.bf16.msra.mxu0 0
      %1336 = vmatprep.subr.bf16.mxu0 0
      %1337 = vmatpush1.bf16.msra.mxu0 0
      %1338 = vmatprep.mubr.bf16.mxu0 0
      %1339 = vmatmul.mubr.bf16.gmra.mrb[0].mxu0 %v1089
      %v1340 = vpop.f32.mrb[0].mxu0
      %v1341 = vadd.f32 %v996, %v1340
      %v1342 = vpop.f32.mrb[0].mxu0
      %v1343 = vadd.f32 %v998, %v1342
      %v1344 = vpop.f32.mrb[0].mxu0
      %v1345 = vadd.f32 %v1000, %v1344
      %v1346 = vpop.f32.mrb[0].mxu0
      %v1347 = vadd.f32 %v1002, %v1346
      %1348 = vdwg.mxu0
      %1349 = vmatprep.subr.bf16.mxu0 %v575
      %1350 = vmatpush1.bf16.msra.mxu0 %v574
      %1351 = vmatprep.subr.bf16.mxu0 %v590
      %1352 = vmatpush1.bf16.msra.mxu0 %v589
      %1353 = vmatprep.subr.bf16.mxu0 %v605
      %1354 = vmatpush1.bf16.msra.mxu0 %v604
      %1355 = vmatprep.subr.bf16.mxu0 %v620
      %1356 = vmatpush1.bf16.msra.mxu0 %v619
      %1357 = vmatprep.subr.bf16.mxu0 %v635
      %1358 = vmatpush1.bf16.msra.mxu0 %v634
      %1359 = vmatprep.subr.bf16.mxu0 %v650
      %1360 = vmatpush1.bf16.msra.mxu0 %v649
      %1361 = vmatprep.subr.bf16.mxu0 0
      %1362 = vmatpush1.bf16.msra.mxu0 0
      %1363 = vmatprep.subr.bf16.mxu0 0
      %1364 = vmatpush1.bf16.msra.mxu0 0
      %1365 = vmatprep.subr.bf16.mxu0 0
      %1366 = vmatpush1.bf16.msra.mxu0 0
      %1367 = vmatprep.subr.bf16.mxu0 0
      %1368 = vmatpush1.bf16.msra.mxu0 0
      %1369 = vmatprep.subr.bf16.mxu0 0
      %1370 = vmatpush1.bf16.msra.mxu0 0
      %1371 = vmatprep.subr.bf16.mxu0 0
      %1372 = vmatpush1.bf16.msra.mxu0 0
      %1373 = vmatprep.subr.bf16.mxu0 0
      %1374 = vmatpush1.bf16.msra.mxu0 0
      %1375 = vmatprep.subr.bf16.mxu0 0
      %1376 = vmatpush1.bf16.msra.mxu0 0
      %1377 = vmatprep.subr.bf16.mxu0 0
      %1378 = vmatpush1.bf16.msra.mxu0 0
      %1379 = vmatprep.subr.bf16.mxu0 0
      %1380 = vmatpush1.bf16.msra.mxu0 0
      %1381 = vmatprep.mubr.bf16.mxu0 0
      %1382 = vmatmul.mubr.bf16.gmra.mrb[0].mxu0 %v1089
      %v1383 = vpop.f32.mrb[0].mxu0
      %v1384 = vadd.f32 %v1039, %v1383
      %v1385 = vpop.f32.mrb[0].mxu0
      %v1386 = vadd.f32 %v1041, %v1385
      %v1387 = vpop.f32.mrb[0].mxu0
      %v1388 = vadd.f32 %v1043, %v1387
      %v1389 = vpop.f32.mrb[0].mxu0
      %v1390 = vadd.f32 %v1045, %v1389
      %1391 = vdwg.mxu0
      %1392 = vmatprep.subr.bf16.mxu0 0
      %1393 = vmatpush1.bf16.msra.mxu0 %v576
      %1394 = vmatprep.subr.bf16.mxu0 0
      %1395 = vmatpush1.bf16.msra.mxu0 %v591
      %1396 = vmatprep.subr.bf16.mxu0 0
      %1397 = vmatpush1.bf16.msra.mxu0 %v606
      %1398 = vmatprep.subr.bf16.mxu0 0
      %1399 = vmatpush1.bf16.msra.mxu0 %v621
      %1400 = vmatprep.subr.bf16.mxu0 0
      %1401 = vmatpush1.bf16.msra.mxu0 %v636
      %1402 = vmatprep.subr.bf16.mxu0 0
      %1403 = vmatpush1.bf16.msra.mxu0 %v651
      %1404 = vmatprep.subr.bf16.mxu0 0
      %1405 = vmatpush1.bf16.msra.mxu0 0
      %1406 = vmatprep.subr.bf16.mxu0 0
      %1407 = vmatpush1.bf16.msra.mxu0 0
      %1408 = vmatprep.subr.bf16.mxu0 0
      %1409 = vmatpush1.bf16.msra.mxu0 0
      %1410 = vmatprep.subr.bf16.mxu0 0
      %1411 = vmatpush1.bf16.msra.mxu0 0
      %1412 = vmatprep.subr.bf16.mxu0 0
      %1413 = vmatpush1.bf16.msra.mxu0 0
      %1414 = vmatprep.subr.bf16.mxu0 0
      %1415 = vmatpush1.bf16.msra.mxu0 0
      %1416 = vmatprep.subr.bf16.mxu0 0
      %1417 = vmatpush1.bf16.msra.mxu0 0
      %1418 = vmatprep.subr.bf16.mxu0 0
      %1419 = vmatpush1.bf16.msra.mxu0 0
      %1420 = vmatprep.subr.bf16.mxu0 0
      %1421 = vmatpush1.bf16.msra.mxu0 0
      %1422 = vmatprep.subr.bf16.mxu0 0
      %1423 = vmatpush1.bf16.msra.mxu0 0
      %1424 = vmatprep.mubr.bf16.mxu0 0
      %1425 = vmatmul.mubr.bf16.gmra.mrb[0].mxu0 %v1089
      %v1426 = vpop.f32.mrb[0].mxu0
      %v1427 = vadd.f32 %v1082, %v1426
      %v1428 = vpop.f32.mrb[0].mxu0
      %v1429 = vpop.f32.mrb[0].mxu0
      %v1430 = vadd.f32 %v1085, %v1429
      %v1431 = vpop.f32.mrb[0].mxu0
      %1432 = vdwg.mxu0
      %v1434 = vsel %vm742, %v189, 0
      %1436 = vmatprep.subr.bf16.mxu0 %v563
      %1437 = vmatpush1.bf16.msra.mxu0 %v562
      %1438 = vmatprep.subr.bf16.mxu0 %v578
      %1439 = vmatpush1.bf16.msra.mxu0 %v577
      %1440 = vmatprep.subr.bf16.mxu0 %v593
      %1441 = vmatpush1.bf16.msra.mxu0 %v592
      %1442 = vmatprep.subr.bf16.mxu0 %v608
      %1443 = vmatpush1.bf16.msra.mxu0 %v607
      %1444 = vmatprep.subr.bf16.mxu0 %v623
      %1445 = vmatpush1.bf16.msra.mxu0 %v622
      %1446 = vmatprep.subr.bf16.mxu0 %v638
      %1447 = vmatpush1.bf16.msra.mxu0 %v637
      %1448 = vmatprep.subr.bf16.mxu0 0
      %1449 = vmatpush1.bf16.msra.mxu0 0
      %1450 = vmatprep.subr.bf16.mxu0 0
      %1451 = vmatpush1.bf16.msra.mxu0 0
      %1452 = vmatprep.subr.bf16.mxu0 0
      %1453 = vmatpush1.bf16.msra.mxu0 0
      %1454 = vmatprep.subr.bf16.mxu0 0
      %1455 = vmatpush1.bf16.msra.mxu0 0
      %1456 = vmatprep.subr.bf16.mxu0 0
      %1457 = vmatpush1.bf16.msra.mxu0 0
      %1458 = vmatprep.subr.bf16.mxu0 0
      %1459 = vmatpush1.bf16.msra.mxu0 0
      %1460 = vmatprep.subr.bf16.mxu0 0
      %1461 = vmatpush1.bf16.msra.mxu0 0
      %1462 = vmatprep.subr.bf16.mxu0 0
      %1463 = vmatpush1.bf16.msra.mxu0 0
      %1464 = vmatprep.subr.bf16.mxu0 0
      %1465 = vmatpush1.bf16.msra.mxu0 0
      %1466 = vmatprep.subr.bf16.mxu0 0
      %1467 = vmatpush1.bf16.msra.mxu0 0
      %1468 = vmatprep.mubr.bf16.mxu0 0
      %1469 = vmatmul.mubr.bf16.gmra.mrb[0].mxu0 %v1434
      %v1470 = vpop.f32.mrb[0].mxu0
      %v1471 = vadd.f32 0.0, %v1470
      %v1472 = vpop.f32.mrb[0].mxu0
      %v1473 = vadd.f32 0.0, %v1472
      %v1474 = vpop.f32.mrb[0].mxu0
      %v1475 = vadd.f32 0.0, %v1474
      %v1476 = vpop.f32.mrb[0].mxu0
      %v1477 = vadd.f32 0.0, %v1476
      %1478 = vdwg.mxu0
      %1479 = vmatprep.subr.bf16.mxu0 %v565
      %1480 = vmatpush1.bf16.msra.mxu0 %v564
      %1481 = vmatprep.subr.bf16.mxu0 %v580
      %1482 = vmatpush1.bf16.msra.mxu0 %v579
      %1483 = vmatprep.subr.bf16.mxu0 %v595
      %1484 = vmatpush1.bf16.msra.mxu0 %v594
      %1485 = vmatprep.subr.bf16.mxu0 %v610
      %1486 = vmatpush1.bf16.msra.mxu0 %v609
      %1487 = vmatprep.subr.bf16.mxu0 %v625
      %1488 = vmatpush1.bf16.msra.mxu0 %v624
      %1489 = vmatprep.subr.bf16.mxu0 %v640
      %1490 = vmatpush1.bf16.msra.mxu0 %v639
      %1491 = vmatprep.subr.bf16.mxu0 0
      %1492 = vmatpush1.bf16.msra.mxu0 0
      %1493 = vmatprep.subr.bf16.mxu0 0
      %1494 = vmatpush1.bf16.msra.mxu0 0
      %1495 = vmatprep.subr.bf16.mxu0 0
      %1496 = vmatpush1.bf16.msra.mxu0 0
      %1497 = vmatprep.subr.bf16.mxu0 0
      %1498 = vmatpush1.bf16.msra.mxu0 0
      %1499 = vmatprep.subr.bf16.mxu0 0
      %1500 = vmatpush1.bf16.msra.mxu0 0
      %1501 = vmatprep.subr.bf16.mxu0 0
      %1502 = vmatpush1.bf16.msra.mxu0 0
      %1503 = vmatprep.subr.bf16.mxu0 0
      %1504 = vmatpush1.bf16.msra.mxu0 0
      %1505 = vmatprep.subr.bf16.mxu0 0
      %1506 = vmatpush1.bf16.msra.mxu0 0
      %1507 = vmatprep.subr.bf16.mxu0 0
      %1508 = vmatpush1.bf16.msra.mxu0 0
      %1509 = vmatprep.subr.bf16.mxu0 0
      %1510 = vmatpush1.bf16.msra.mxu0 0
      %1511 = vmatprep.mubr.bf16.mxu0 0
      %1512 = vmatmul.mubr.bf16.gmra.mrb[0].mxu0 %v1434
      %v1513 = vpop.f32.mrb[0].mxu0
      %v1514 = vadd.f32 0.0, %v1513
      %v1515 = vpop.f32.mrb[0].mxu0
      %v1516 = vadd.f32 0.0, %v1515
      %v1517 = vpop.f32.mrb[0].mxu0
      %v1518 = vadd.f32 0.0, %v1517
      %v1519 = vpop.f32.mrb[0].mxu0
      %v1520 = vadd.f32 0.0, %v1519
      %1521 = vdwg.mxu0
      %1522 = vmatprep.subr.bf16.mxu0 %v567
      %1523 = vmatpush1.bf16.msra.mxu0 %v566
      %1524 = vmatprep.subr.bf16.mxu0 %v582
      %1525 = vmatpush1.bf16.msra.mxu0 %v581
      %1526 = vmatprep.subr.bf16.mxu0 %v597
      %1527 = vmatpush1.bf16.msra.mxu0 %v596
      %1528 = vmatprep.subr.bf16.mxu0 %v612
      %1529 = vmatpush1.bf16.msra.mxu0 %v611
      %1530 = vmatprep.subr.bf16.mxu0 %v627
      %1531 = vmatpush1.bf16.msra.mxu0 %v626
      %1532 = vmatprep.subr.bf16.mxu0 %v642
      %1533 = vmatpush1.bf16.msra.mxu0 %v641
      %1534 = vmatprep.subr.bf16.mxu0 0
      %1535 = vmatpush1.bf16.msra.mxu0 0
      %1536 = vmatprep.subr.bf16.mxu0 0
      %1537 = vmatpush1.bf16.msra.mxu0 0
      %1538 = vmatprep.subr.bf16.mxu0 0
      %1539 = vmatpush1.bf16.msra.mxu0 0
      %1540 = vmatprep.subr.bf16.mxu0 0
      %1541 = vmatpush1.bf16.msra.mxu0 0
      %1542 = vmatprep.subr.bf16.mxu0 0
      %1543 = vmatpush1.bf16.msra.mxu0 0
      %1544 = vmatprep.subr.bf16.mxu0 0
      %1545 = vmatpush1.bf16.msra.mxu0 0
      %1546 = vmatprep.subr.bf16.mxu0 0
      %1547 = vmatpush1.bf16.msra.mxu0 0
      %1548 = vmatprep.subr.bf16.mxu0 0
      %1549 = vmatpush1.bf16.msra.mxu0 0
      %1550 = vmatprep.subr.bf16.mxu0 0
      %1551 = vmatpush1.bf16.msra.mxu0 0
      %1552 = vmatprep.subr.bf16.mxu0 0
      %1553 = vmatpush1.bf16.msra.mxu0 0
      %1554 = vmatprep.mubr.bf16.mxu0 0
      %1555 = vmatmul.mubr.bf16.gmra.mrb[0].mxu0 %v1434
      %v1556 = vpop.f32.mrb[0].mxu0
      %v1557 = vadd.f32 0.0, %v1556
      %v1558 = vpop.f32.mrb[0].mxu0
      %v1559 = vadd.f32 0.0, %v1558
      %v1560 = vpop.f32.mrb[0].mxu0
      %v1561 = vadd.f32 0.0, %v1560
      %v1562 = vpop.f32.mrb[0].mxu0
      %v1563 = vadd.f32 0.0, %v1562
      %1564 = vdwg.mxu0
      %1565 = vmatprep.subr.bf16.mxu0 %v569
      %1566 = vmatpush1.bf16.msra.mxu0 %v568
      %1567 = vmatprep.subr.bf16.mxu0 %v584
      %1568 = vmatpush1.bf16.msra.mxu0 %v583
      %1569 = vmatprep.subr.bf16.mxu0 %v599
      %1570 = vmatpush1.bf16.msra.mxu0 %v598
      %1571 = vmatprep.subr.bf16.mxu0 %v614
      %1572 = vmatpush1.bf16.msra.mxu0 %v613
      %1573 = vmatprep.subr.bf16.mxu0 %v629
      %1574 = vmatpush1.bf16.msra.mxu0 %v628
      %1575 = vmatprep.subr.bf16.mxu0 %v644
      %1576 = vmatpush1.bf16.msra.mxu0 %v643
      %1577 = vmatprep.subr.bf16.mxu0 0
      %1578 = vmatpush1.bf16.msra.mxu0 0
      %1579 = vmatprep.subr.bf16.mxu0 0
      %1580 = vmatpush1.bf16.msra.mxu0 0
      %1581 = vmatprep.subr.bf16.mxu0 0
      %1582 = vmatpush1.bf16.msra.mxu0 0
      %1583 = vmatprep.subr.bf16.mxu0 0
      %1584 = vmatpush1.bf16.msra.mxu0 0
      %1585 = vmatprep.subr.bf16.mxu0 0
      %1586 = vmatpush1.bf16.msra.mxu0 0
      %1587 = vmatprep.subr.bf16.mxu0 0
      %1588 = vmatpush1.bf16.msra.mxu0 0
      %1589 = vmatprep.subr.bf16.mxu0 0
      %1590 = vmatpush1.bf16.msra.mxu0 0
      %1591 = vmatprep.subr.bf16.mxu0 0
      %1592 = vmatpush1.bf16.msra.mxu0 0
      %1593 = vmatprep.subr.bf16.mxu0 0
      %1594 = vmatpush1.bf16.msra.mxu0 0
      %1595 = vmatprep.subr.bf16.mxu0 0
      %1596 = vmatpush1.bf16.msra.mxu0 0
      %1597 = vmatprep.mubr.bf16.mxu0 0
      %1598 = vmatmul.mubr.bf16.gmra.mrb[0].mxu0 %v1434
      %v1599 = vpop.f32.mrb[0].mxu0
      %v1600 = vadd.f32 0.0, %v1599
      %v1601 = vpop.f32.mrb[0].mxu0
      %v1602 = vadd.f32 0.0, %v1601
      %v1603 = vpop.f32.mrb[0].mxu0
      %v1604 = vadd.f32 0.0, %v1603
      %v1605 = vpop.f32.mrb[0].mxu0
      %v1606 = vadd.f32 0.0, %v1605
      %1607 = vdwg.mxu0
      %1608 = vmatprep.subr.bf16.mxu0 %v571
      %1609 = vmatpush1.bf16.msra.mxu0 %v570
      %1610 = vmatprep.subr.bf16.mxu0 %v586
      %1611 = vmatpush1.bf16.msra.mxu0 %v585
      %1612 = vmatprep.subr.bf16.mxu0 %v601
      %1613 = vmatpush1.bf16.msra.mxu0 %v600
      %1614 = vmatprep.subr.bf16.mxu0 %v616
      %1615 = vmatpush1.bf16.msra.mxu0 %v615
      %1616 = vmatprep.subr.bf16.mxu0 %v631
      %1617 = vmatpush1.bf16.msra.mxu0 %v630
      %1618 = vmatprep.subr.bf16.mxu0 %v646
      %1619 = vmatpush1.bf16.msra.mxu0 %v645
      %1620 = vmatprep.subr.bf16.mxu0 0
      %1621 = vmatpush1.bf16.msra.mxu0 0
      %1622 = vmatprep.subr.bf16.mxu0 0
      %1623 = vmatpush1.bf16.msra.mxu0 0
      %1624 = vmatprep.subr.bf16.mxu0 0
      %1625 = vmatpush1.bf16.msra.mxu0 0
      %1626 = vmatprep.subr.bf16.mxu0 0
      %1627 = vmatpush1.bf16.msra.mxu0 0
      %1628 = vmatprep.subr.bf16.mxu0 0
      %1629 = vmatpush1.bf16.msra.mxu0 0
      %1630 = vmatprep.subr.bf16.mxu0 0
      %1631 = vmatpush1.bf16.msra.mxu0 0
      %1632 = vmatprep.subr.bf16.mxu0 0
      %1633 = vmatpush1.bf16.msra.mxu0 0
      %1634 = vmatprep.subr.bf16.mxu0 0
      %1635 = vmatpush1.bf16.msra.mxu0 0
      %1636 = vmatprep.subr.bf16.mxu0 0
      %1637 = vmatpush1.bf16.msra.mxu0 0
      %1638 = vmatprep.subr.bf16.mxu0 0
      %1639 = vmatpush1.bf16.msra.mxu0 0
      %1640 = vmatprep.mubr.bf16.mxu0 0
      %1641 = vmatmul.mubr.bf16.gmra.mrb[0].mxu0 %v1434
      %v1642 = vpop.f32.mrb[0].mxu0
      %v1643 = vadd.f32 0.0, %v1642
      %v1644 = vpop.f32.mrb[0].mxu0
      %v1645 = vadd.f32 0.0, %v1644
      %v1646 = vpop.f32.mrb[0].mxu0
      %v1647 = vadd.f32 0.0, %v1646
      %v1648 = vpop.f32.mrb[0].mxu0
      %v1649 = vadd.f32 0.0, %v1648
      %1650 = vdwg.mxu0
      %1651 = vmatprep.subr.bf16.mxu0 %v573
      %1652 = vmatpush1.bf16.msra.mxu0 %v572
      %1653 = vmatprep.subr.bf16.mxu0 %v588
      %1654 = vmatpush1.bf16.msra.mxu0 %v587
      %1655 = vmatprep.subr.bf16.mxu0 %v603
      %1656 = vmatpush1.bf16.msra.mxu0 %v602
      %1657 = vmatprep.subr.bf16.mxu0 %v618
      %1658 = vmatpush1.bf16.msra.mxu0 %v617
      %1659 = vmatprep.subr.bf16.mxu0 %v633
      %1660 = vmatpush1.bf16.msra.mxu0 %v632
      %1661 = vmatprep.subr.bf16.mxu0 %v648
      %1662 = vmatpush1.bf16.msra.mxu0 %v647
      %1663 = vmatprep.subr.bf16.mxu0 0
      %1664 = vmatpush1.bf16.msra.mxu0 0
      %1665 = vmatprep.subr.bf16.mxu0 0
      %1666 = vmatpush1.bf16.msra.mxu0 0
      %1667 = vmatprep.subr.bf16.mxu0 0
      %1668 = vmatpush1.bf16.msra.mxu0 0
      %1669 = vmatprep.subr.bf16.mxu0 0
      %1670 = vmatpush1.bf16.msra.mxu0 0
      %1671 = vmatprep.subr.bf16.mxu0 0
      %1672 = vmatpush1.bf16.msra.mxu0 0
      %1673 = vmatprep.subr.bf16.mxu0 0
      %1674 = vmatpush1.bf16.msra.mxu0 0
      %1675 = vmatprep.subr.bf16.mxu0 0
      %1676 = vmatpush1.bf16.msra.mxu0 0
      %1677 = vmatprep.subr.bf16.mxu0 0
      %1678 = vmatpush1.bf16.msra.mxu0 0
      %1679 = vmatprep.subr.bf16.mxu0 0
      %1680 = vmatpush1.bf16.msra.mxu0 0
      %1681 = vmatprep.subr.bf16.mxu0 0
      %1682 = vmatpush1.bf16.msra.mxu0 0
      %1683 = vmatprep.mubr.bf16.mxu0 0
      %1684 = vmatmul.mubr.bf16.gmra.mrb[0].mxu0 %v1434
      %v1685 = vpop.f32.mrb[0].mxu0
      %v1686 = vadd.f32 0.0, %v1685
      %v1687 = vpop.f32.mrb[0].mxu0
      %v1688 = vadd.f32 0.0, %v1687
      %v1689 = vpop.f32.mrb[0].mxu0
      %v1690 = vadd.f32 0.0, %v1689
      %v1691 = vpop.f32.mrb[0].mxu0
      %v1692 = vadd.f32 0.0, %v1691
      %1693 = vdwg.mxu0
      %1694 = vmatprep.subr.bf16.mxu0 %v575
      %1695 = vmatpush1.bf16.msra.mxu0 %v574
      %1696 = vmatprep.subr.bf16.mxu0 %v590
      %1697 = vmatpush1.bf16.msra.mxu0 %v589
      %1698 = vmatprep.subr.bf16.mxu0 %v605
      %1699 = vmatpush1.bf16.msra.mxu0 %v604
      %1700 = vmatprep.subr.bf16.mxu0 %v620
      %1701 = vmatpush1.bf16.msra.mxu0 %v619
      %1702 = vmatprep.subr.bf16.mxu0 %v635
      %1703 = vmatpush1.bf16.msra.mxu0 %v634
      %1704 = vmatprep.subr.bf16.mxu0 %v650
      %1705 = vmatpush1.bf16.msra.mxu0 %v649
      %1706 = vmatprep.subr.bf16.mxu0 0
      %1707 = vmatpush1.bf16.msra.mxu0 0
      %1708 = vmatprep.subr.bf16.mxu0 0
      %1709 = vmatpush1.bf16.msra.mxu0 0
      %1710 = vmatprep.subr.bf16.mxu0 0
      %1711 = vmatpush1.bf16.msra.mxu0 0
      %1712 = vmatprep.subr.bf16.mxu0 0
      %1713 = vmatpush1.bf16.msra.mxu0 0
      %1714 = vmatprep.subr.bf16.mxu0 0
      %1715 = vmatpush1.bf16.msra.mxu0 0
      %1716 = vmatprep.subr.bf16.mxu0 0
      %1717 = vmatpush1.bf16.msra.mxu0 0
      %1718 = vmatprep.subr.bf16.mxu0 0
      %1719 = vmatpush1.bf16.msra.mxu0 0
      %1720 = vmatprep.subr.bf16.mxu0 0
      %1721 = vmatpush1.bf16.msra.mxu0 0
      %1722 = vmatprep.subr.bf16.mxu0 0
      %1723 = vmatpush1.bf16.msra.mxu0 0
      %1724 = vmatprep.subr.bf16.mxu0 0
      %1725 = vmatpush1.bf16.msra.mxu0 0
      %1726 = vmatprep.mubr.bf16.mxu0 0
      %1727 = vmatmul.mubr.bf16.gmra.mrb[0].mxu0 %v1434
      %v1728 = vpop.f32.mrb[0].mxu0
      %v1729 = vadd.f32 0.0, %v1728
      %v1730 = vpop.f32.mrb[0].mxu0
      %v1731 = vadd.f32 0.0, %v1730
      %v1732 = vpop.f32.mrb[0].mxu0
      %v1733 = vadd.f32 0.0, %v1732
      %v1734 = vpop.f32.mrb[0].mxu0
      %v1735 = vadd.f32 0.0, %v1734
      %1736 = vdwg.mxu0
      %1737 = vmatprep.subr.bf16.mxu0 0
      %1738 = vmatpush1.bf16.msra.mxu0 %v576
      %1739 = vmatprep.subr.bf16.mxu0 0
      %1740 = vmatpush1.bf16.msra.mxu0 %v591
      %1741 = vmatprep.subr.bf16.mxu0 0
      %1742 = vmatpush1.bf16.msra.mxu0 %v606
      %1743 = vmatprep.subr.bf16.mxu0 0
      %1744 = vmatpush1.bf16.msra.mxu0 %v621
      %1745 = vmatprep.subr.bf16.mxu0 0
      %1746 = vmatpush1.bf16.msra.mxu0 %v636
      %1747 = vmatprep.subr.bf16.mxu0 0
      %1748 = vmatpush1.bf16.msra.mxu0 %v651
      %1749 = vmatprep.subr.bf16.mxu0 0
      %1750 = vmatpush1.bf16.msra.mxu0 0
      %1751 = vmatprep.subr.bf16.mxu0 0
      %1752 = vmatpush1.bf16.msra.mxu0 0
      %1753 = vmatprep.subr.bf16.mxu0 0
      %1754 = vmatpush1.bf16.msra.mxu0 0
      %1755 = vmatprep.subr.bf16.mxu0 0
      %1756 = vmatpush1.bf16.msra.mxu0 0
      %1757 = vmatprep.subr.bf16.mxu0 0
      %1758 = vmatpush1.bf16.msra.mxu0 0
      %1759 = vmatprep.subr.bf16.mxu0 0
      %1760 = vmatpush1.bf16.msra.mxu0 0
      %1761 = vmatprep.subr.bf16.mxu0 0
      %1762 = vmatpush1.bf16.msra.mxu0 0
      %1763 = vmatprep.subr.bf16.mxu0 0
      %1764 = vmatpush1.bf16.msra.mxu0 0
      %1765 = vmatprep.subr.bf16.mxu0 0
      %1766 = vmatpush1.bf16.msra.mxu0 0
      %1767 = vmatprep.subr.bf16.mxu0 0
      %1768 = vmatpush1.bf16.msra.mxu0 0
      %1769 = vmatprep.mubr.bf16.mxu0 0
      %1770 = vmatmul.mubr.bf16.gmra.mrb[0].mxu0 %v1434
      %v1771 = vpop.f32.mrb[0].mxu0
      %v1772 = vadd.f32 0.0, %v1771
      %v1773 = vpop.f32.mrb[0].mxu0
      %v1774 = vpop.f32.mrb[0].mxu0
      %v1775 = vadd.f32 0.0, %v1774
      %v1776 = vpop.f32.mrb[0].mxu0
      %1777 = vdwg.mxu0
      %v1778 = vadd.f32 %v1126, %v1471
      %v1779 = vadd.f32 %v1128, %v1473
      %v1780 = vadd.f32 %v1169, %v1514
      %v1781 = vadd.f32 %v1171, %v1516
      %v1782 = vadd.f32 %v1212, %v1557
      %v1783 = vadd.f32 %v1214, %v1559
      %v1784 = vadd.f32 %v1255, %v1600
      %v1785 = vadd.f32 %v1257, %v1602
      %v1786 = vadd.f32 %v1298, %v1643
      %v1787 = vadd.f32 %v1300, %v1645
      %v1788 = vadd.f32 %v1341, %v1686
      %v1789 = vadd.f32 %v1343, %v1688
      %v1790 = vadd.f32 %v1384, %v1729
      %v1791 = vadd.f32 %v1386, %v1731
      %v1792 = vadd.f32 %v1427, %v1772
      %v1793 = vadd.f32 %v1130, %v1475
      %v1794 = vadd.f32 %v1132, %v1477
      %v1795 = vadd.f32 %v1173, %v1518
      %v1796 = vadd.f32 %v1175, %v1520
      %v1797 = vadd.f32 %v1216, %v1561
      %v1798 = vadd.f32 %v1218, %v1563
      %v1799 = vadd.f32 %v1259, %v1604
      %v1800 = vadd.f32 %v1261, %v1606
      %v1801 = vadd.f32 %v1302, %v1647
      %v1802 = vadd.f32 %v1304, %v1649
      %v1803 = vadd.f32 %v1345, %v1690
      %v1804 = vadd.f32 %v1347, %v1692
      %v1805 = vadd.f32 %v1388, %v1733
      %v1806 = vadd.f32 %v1390, %v1735
      %v1807 = vadd.f32 %v1430, %v1775
      %v1808 = vld [vmem:[%s2] sm:$0xff]
      %v1809 = vld [vmem:[%s2 + $0x8] sm:$0xff]
      %v1812 = vlaneseq
      %v1813 = vshrl.u32 %v1812, 7
      %v1814 = vsub.s32 0, %v1813
      %v1815 = vrot.slane %v1808, %v1814
      %v1816 = vlaneseq
      %v1817 = vshrl.u32 %v1816, 7
      %v1818 = vsub.s32 1, %v1817
      %v1819 = vrot.slane %v1808, %v1818
      %v1820 = vlaneseq
      %v1821 = vshrl.u32 %v1820, 7
      %v1822 = vsub.s32 2, %v1821
      %v1823 = vrot.slane %v1808, %v1822
      %v1824 = vlaneseq
      %v1825 = vshrl.u32 %v1824, 7
      %v1826 = vsub.s32 3, %v1825
      %v1827 = vrot.slane %v1808, %v1826
      %v1828 = vlaneseq
      %v1829 = vshrl.u32 %v1828, 7
      %v1830 = vsub.s32 4, %v1829
      %v1831 = vrot.slane %v1808, %v1830
      %v1832 = vlaneseq
      %v1833 = vshrl.u32 %v1832, 7
      %v1834 = vsub.s32 5, %v1833
      %v1835 = vrot.slane %v1808, %v1834
      %v1836 = vlaneseq
      %v1837 = vshrl.u32 %v1836, 7
      %v1838 = vsub.s32 6, %v1837
      %v1839 = vrot.slane %v1808, %v1838
      %v1840 = vlaneseq
      %v1841 = vshrl.u32 %v1840, 7
      %v1842 = vsub.s32 7, %v1841
      %v1843 = vrot.slane %v1808, %v1842
      %v1844 = vlaneseq
      %v1845 = vshrl.u32 %v1844, 7
      %v1846 = vsub.s32 0, %v1845
      %v1847 = vrot.slane %v1809, %v1846
      %v1848 = vlaneseq
      %v1849 = vshrl.u32 %v1848, 7
      %v1850 = vsub.s32 1, %v1849
      %v1851 = vrot.slane %v1809, %v1850
      %v1852 = vlaneseq
      %v1853 = vshrl.u32 %v1852, 7
      %v1854 = vsub.s32 2, %v1853
      %v1855 = vrot.slane %v1809, %v1854
      %v1856 = vlaneseq
      %v1857 = vshrl.u32 %v1856, 7
      %v1858 = vsub.s32 3, %v1857
      %v1859 = vrot.slane %v1809, %v1858
      %v1860 = vlaneseq
      %v1861 = vshrl.u32 %v1860, 7
      %v1862 = vsub.s32 4, %v1861
      %v1863 = vrot.slane %v1809, %v1862
      %v1864 = vlaneseq
      %v1865 = vshrl.u32 %v1864, 7
      %v1866 = vsub.s32 5, %v1865
      %v1867 = vrot.slane %v1809, %v1866
      %v1868 = vlaneseq
      %v1869 = vshrl.u32 %v1868, 7
      %v1870 = vsub.s32 6, %v1869
      %v1871 = vrot.slane %v1809, %v1870
      %v1887 = vand.u32 2147483647, %v1815
      %v1888 = vand.u32 2147483647, %v1819
      %v1889 = vand.u32 2147483647, %v1823
      %v1890 = vand.u32 2147483647, %v1827
      %v1891 = vand.u32 2147483647, %v1831
      %v1892 = vand.u32 2147483647, %v1835
      %v1893 = vand.u32 2147483647, %v1839
      %v1894 = vand.u32 2147483647, %v1843
      %v1895 = vand.u32 2147483647, %v1847
      %v1896 = vand.u32 2147483647, %v1851
      %v1897 = vand.u32 2147483647, %v1855
      %v1898 = vand.u32 2147483647, %v1859
      %v1899 = vand.u32 2147483647, %v1863
      %v1900 = vand.u32 2147483647, %v1867
      %v1901 = vand.u32 2147483647, %v1871
      %v1902 = vmul.f32 %v1778, %v1887
      %v1903 = vmul.f32 %v1779, %v1888
      %v1904 = vmul.f32 %v1780, %v1889
      %v1905 = vmul.f32 %v1781, %v1890
      %v1906 = vmul.f32 %v1782, %v1891
      %v1907 = vmul.f32 %v1783, %v1892
      %v1908 = vmul.f32 %v1784, %v1893
      %v1909 = vmul.f32 %v1785, %v1894
      %v1910 = vmul.f32 %v1786, %v1895
      %v1911 = vmul.f32 %v1787, %v1896
      %v1912 = vmul.f32 %v1788, %v1897
      %v1913 = vmul.f32 %v1789, %v1898
      %v1914 = vmul.f32 %v1790, %v1899
      %v1915 = vmul.f32 %v1791, %v1900
      %v1916 = vmul.f32 %v1792, %v1901
      %v1917 = vmul.f32 %v1793, %v1887
      %v1918 = vmul.f32 %v1794, %v1888
      %v1919 = vmul.f32 %v1795, %v1889
      %v1920 = vmul.f32 %v1796, %v1890
      %v1921 = vmul.f32 %v1797, %v1891
      %v1922 = vmul.f32 %v1798, %v1892
      %v1923 = vmul.f32 %v1799, %v1893
      %v1924 = vmul.f32 %v1800, %v1894
      %v1925 = vmul.f32 %v1801, %v1895
      %v1926 = vmul.f32 %v1802, %v1896
      %v1927 = vmul.f32 %v1803, %v1897
      %v1928 = vmul.f32 %v1804, %v1898
      %v1929 = vmul.f32 %v1805, %v1899
      %v1930 = vmul.f32 %v1806, %v1900
      %v1931 = vmul.f32 %v1807, %v1901
      %vm1932 = vcmp.lt.f32.partialorder %v1815, 0.0
      %vm1933 = vcmp.lt.f32.partialorder %v1819, 0.0
      %vm1934 = vcmp.lt.f32.partialorder %v1823, 0.0
      %vm1935 = vcmp.lt.f32.partialorder %v1827, 0.0
      %vm1936 = vcmp.lt.f32.partialorder %v1831, 0.0
      %vm1937 = vcmp.lt.f32.partialorder %v1835, 0.0
      %vm1938 = vcmp.lt.f32.partialorder %v1839, 0.0
      %vm1939 = vcmp.lt.f32.partialorder %v1843, 0.0
      %vm1940 = vcmp.lt.f32.partialorder %v1847, 0.0
      %vm1941 = vcmp.lt.f32.partialorder %v1851, 0.0
      %vm1942 = vcmp.lt.f32.partialorder %v1855, 0.0
      %vm1943 = vcmp.lt.f32.partialorder %v1859, 0.0
      %vm1944 = vcmp.lt.f32.partialorder %v1863, 0.0
      %vm1945 = vcmp.lt.f32.partialorder %v1867, 0.0
      %vm1946 = vcmp.lt.f32.partialorder %v1871, 0.0
      %v1947 = vand.u32 2147483647, %v1902
      %vm1948 = vcmp.le.f32.partialorder %v1947, 0.7853982
      %vm1949 = vcmp.lt.s32.totalorder %v1902, 0
      %v1950 = vand.u32 %v1902, 2139095040
      %v1951 = vshrl.u32 %v1950, 23
      %v1952 = vsub.s32 %v1951, 127
      %v1953 = vand.u32 2147483647, %v1902
      %v1954 = vand.u32 %v1953, 8388607
      %v1955 = vor.u32 %v1954, 8388608
      %v1956 = vsub.s32 0, %v1955
      %v1957 = vadd.s32 %v1952, 1
      %vm1958 = vcmp.gt.s32.totalorder %v1957, 0
      %v1959 = vsel %vm1958, %v1957, 0
      %v1960 = vshrl.u32 %v1959, 5
      %v1961 = vand.u32 %v1959, 31
      %v1962 = vsub.s32 32, %v1961
      %v1963 = vshrl.u32 683565275, %v1962
      %v1964 = vshll.u32 683565275, %v1961
      %v1965 = vshrl.u32 2475754826, %v1962
      %v1966 = vor.u32 %v1964, %v1965
      %v1967 = vshll.u32 2475754826, %v1961
      %v1968 = vshrl.u32 2131351028, %v1962
      %v1969 = vor.u32 %v1967, %v1968
      %v1970 = vshll.u32 2131351028, %v1961
      %v1971 = vshrl.u32 2102212464, %v1962
      %v1972 = vor.u32 %v1970, %v1971
      %v1973 = vshll.u32 2102212464, %v1961
      %v1974 = vshrl.u32 920167782, %v1962
      %v1975 = vor.u32 %v1973, %v1974
      %v1976 = vshll.u32 920167782, %v1961
      %v1977 = vshrl.u32 1326507024, %v1962
      %v1978 = vor.u32 %v1976, %v1977
      %vm1979 = vcmp.lt.s32.totalorder %v1960, 1
      %vm1980 = vcmp.lt.s32.totalorder %v1960, 2
      %vm1981 = vcmp.lt.s32.totalorder %v1960, 3
      %vm1982 = vcmp.lt.s32.totalorder %v1960, 4
      %v1983 = vsel %vm1979, %v1963, %v1966
      %v1984 = vsel %vm1982, %v1972, 2102212464
      %v1985 = vsel %vm1981, %v1969, %v1984
      %v1986 = vsel %vm1980, %v1983, %v1985
      %v1987 = vsel %vm1979, %v1966, %v1969
      %v1988 = vsel %vm1982, %v1975, 920167782
      %v1989 = vsel %vm1981, %v1972, %v1988
      %v1990 = vsel %vm1980, %v1987, %v1989
      %v1991 = vsel %vm1979, %v1969, %v1972
      %v1992 = vsel %vm1982, %v1978, 1326507024
      %v1993 = vsel %vm1981, %v1975, %v1992
      %v1994 = vsel %vm1980, %v1991, %v1993
      %v1995 = vshll.u32 %v1955, 8
      %v1996 = vmul.u32.u64.compose %v1995, %v1994
      %v1997 = vextract.low.u32 %v1996
      %v1998 = vextract.high.u32 %v1996
      %v1999 = vmul.u32.u64.compose %v1995, %v1990
      %v2000 = vextract.low.u32 %v1999
      %v2001 = vextract.high.u32 %v1999
      %v2002 = vmul.u32 %v1995, %v1986
      %v2003 = vadd.s32 %v1998, %v2000
      %vm2004 = vc.u32 %v1998, %v2000
      %v2005 = vadd.s32 %v2001, 1
      %v2006 = vsel %vm2004, %v2005, %v2001
      %v2007 = vadd.s32 %v2002, %v2006
      %v2008 = vadd.s32 %v2007, 536870912
      %v2009 = vshrl.u32 %v2008, 30
      %v2010 = vshll.u32 %v2009, 30
      %v2011 = vsub.s32 %v2007, %v2010
      %vm2012 = vcmp.lt.s32.totalorder %v2011, 0
      %v2013 = vsub.s32 0, %v2011
      %v2014 = vsel %vm2012, %v2013, %v2011
      %v2015 = vclz %v2014
      %v2016 = vsub.s32 %v2015, 2
      %vm2017 = vcmp.gt.s32.totalorder 0, %v2016
      %v2018 = vsel %vm2017, 0, %v2016
      %v2019 = vsub.s32 32, %v2018
      %v2020 = vshll.u32 %v2011, %v2018
      %v2021 = vshrl.u32 %v2003, %v2019
      %v2022 = vor.u32 %v2020, %v2021
      %v2023 = vsub.s32 4294967266, %v2018
      %v2024 = vadd.s32 %v2023, 127
      %v2025 = vshll.u32 %v2024, 23
      %v2026 = vor.u32 4788187, %v2025
      %v2027 = vand.u32 2147483647, %v2026
      %v2029 = vcvt.s32.f32 %v2022
      %v2030 = vmul.f32 %v2029, %v2027
      %v2031 = vxor.u32 %v2030, 2147483648
      %v2032 = vsel %vm1949, %v2031, %v2030
      %v2033 = vsub.s32 4, %v2009
      %v2034 = vsel %vm1949, %v2033, %v2009
      %v2035 = vsel %vm1948, %v1902, %v2032
      %v2036 = vsel %vm1948, 0, %v2034
      %v2037 = vcosq.f32.pop %v2035
      %v2038 = vsinq.f32.pop %v2035
      %vm2039 = vweird.f32 %v1902
      %v2040 = vand.u32 %v2036, 3
      %vm2041 = vcmp.lt.s32.totalorder %v2040, 2
      %vm2042 = vcmp.eq.s32.totalorder %v2040, 0
      %v2043 = vxor.u32 %v2038, 2147483648
      %v2044 = vsel %vm2042, %v2037, %v2043
      %vm2045 = vcmp.eq.s32.totalorder %v2040, 2
      %v2046 = vxor.u32 %v2037, 2147483648
      %v2047 = vsel %vm2045, %v2046, %v2038
      %v2048 = vsel %vm2041, %v2044, %v2047
      %v2049 = vsel %vm2039, nan, %v2048
      %v2050 = vand.u32 2147483647, %v1903
      %vm2051 = vcmp.le.f32.partialorder %v2050, 0.7853982
      %vm2052 = vcmp.lt.s32.totalorder %v1903, 0
      %v2053 = vand.u32 %v1903, 2139095040
      %v2054 = vshrl.u32 %v2053, 23
      %v2055 = vsub.s32 %v2054, 127
      %v2056 = vand.u32 2147483647, %v1903
      %v2057 = vand.u32 %v2056, 8388607
      %v2058 = vor.u32 %v2057, 8388608
      %v2059 = vsub.s32 0, %v2058
      %v2060 = vadd.s32 %v2055, 1
      %vm2061 = vcmp.gt.s32.totalorder %v2060, 0
      %v2062 = vsel %vm2061, %v2060, 0
      %v2063 = vshrl.u32 %v2062, 5
      %v2064 = vand.u32 %v2062, 31
      %v2065 = vsub.s32 32, %v2064
      %v2066 = vshrl.u32 683565275, %v2065
      %v2067 = vshll.u32 683565275, %v2064
      %v2068 = vshrl.u32 2475754826, %v2065
      %v2069 = vor.u32 %v2067, %v2068
      %v2070 = vshll.u32 2475754826, %v2064
      %v2071 = vshrl.u32 2131351028, %v2065
      %v2072 = vor.u32 %v2070, %v2071
      %v2073 = vshll.u32 2131351028, %v2064
      %v2074 = vshrl.u32 2102212464, %v2065
      %v2075 = vor.u32 %v2073, %v2074
      %v2076 = vshll.u32 2102212464, %v2064
      %v2077 = vshrl.u32 920167782, %v2065
      %v2078 = vor.u32 %v2076, %v2077
      %v2079 = vshll.u32 920167782, %v2064
      %v2080 = vshrl.u32 1326507024, %v2065
      %v2081 = vor.u32 %v2079, %v2080
      %vm2082 = vcmp.lt.s32.totalorder %v2063, 1
      %vm2083 = vcmp.lt.s32.totalorder %v2063, 2
      %vm2084 = vcmp.lt.s32.totalorder %v2063, 3
      %vm2085 = vcmp.lt.s32.totalorder %v2063, 4
      %v2086 = vsel %vm2082, %v2066, %v2069
      %v2087 = vsel %vm2085, %v2075, 2102212464
      %v2088 = vsel %vm2084, %v2072, %v2087
      %v2089 = vsel %vm2083, %v2086, %v2088
      %v2090 = vsel %vm2082, %v2069, %v2072
      %v2091 = vsel %vm2085, %v2078, 920167782
      %v2092 = vsel %vm2084, %v2075, %v2091
      %v2093 = vsel %vm2083, %v2090, %v2092
      %v2094 = vsel %vm2082, %v2072, %v2075
      %v2095 = vsel %vm2085, %v2081, 1326507024
      %v2096 = vsel %vm2084, %v2078, %v2095
      %v2097 = vsel %vm2083, %v2094, %v2096
      %v2098 = vshll.u32 %v2058, 8
      %v2099 = vmul.u32.u64.compose %v2098, %v2097
      %v2100 = vextract.low.u32 %v2099
      %v2101 = vextract.high.u32 %v2099
      %v2102 = vmul.u32.u64.compose %v2098, %v2093
      %v2103 = vextract.low.u32 %v2102
      %v2104 = vextract.high.u32 %v2102
      %v2105 = vmul.u32 %v2098, %v2089
      %v2106 = vadd.s32 %v2101, %v2103
      %vm2107 = vc.u32 %v2101, %v2103
      %v2108 = vadd.s32 %v2104, 1
      %v2109 = vsel %vm2107, %v2108, %v2104
      %v2110 = vadd.s32 %v2105, %v2109
      %v2111 = vadd.s32 %v2110, 536870912
      %v2112 = vshrl.u32 %v2111, 30
      %v2113 = vshll.u32 %v2112, 30
      %v2114 = vsub.s32 %v2110, %v2113
      %vm2115 = vcmp.lt.s32.totalorder %v2114, 0
      %v2116 = vsub.s32 0, %v2114
      %v2117 = vsel %vm2115, %v2116, %v2114
      %v2118 = vclz %v2117
      %v2119 = vsub.s32 %v2118, 2
      %vm2120 = vcmp.gt.s32.totalorder 0, %v2119
      %v2121 = vsel %vm2120, 0, %v2119
      %v2122 = vsub.s32 32, %v2121
      %v2123 = vshll.u32 %v2114, %v2121
      %v2124 = vshrl.u32 %v2106, %v2122
      %v2125 = vor.u32 %v2123, %v2124
      %v2126 = vsub.s32 4294967266, %v2121
      %v2127 = vadd.s32 %v2126, 127
      %v2128 = vshll.u32 %v2127, 23
      %v2129 = vor.u32 4788187, %v2128
      %v2130 = vand.u32 2147483647, %v2129
      %v2132 = vcvt.s32.f32 %v2125
      %v2133 = vmul.f32 %v2132, %v2130
      %v2134 = vxor.u32 %v2133, 2147483648
      %v2135 = vsel %vm2052, %v2134, %v2133
      %v2136 = vsub.s32 4, %v2112
      %v2137 = vsel %vm2052, %v2136, %v2112
      %v2138 = vsel %vm2051, %v1903, %v2135
      %v2139 = vsel %vm2051, 0, %v2137
      %v2140 = vcosq.f32.pop %v2138
      %v2141 = vsinq.f32.pop %v2138
      %vm2142 = vweird.f32 %v1903
      %v2143 = vand.u32 %v2139, 3
      %vm2144 = vcmp.lt.s32.totalorder %v2143, 2
      %vm2145 = vcmp.eq.s32.totalorder %v2143, 0
      %v2146 = vxor.u32 %v2141, 2147483648
      %v2147 = vsel %vm2145, %v2140, %v2146
      %vm2148 = vcmp.eq.s32.totalorder %v2143, 2
      %v2149 = vxor.u32 %v2140, 2147483648
      %v2150 = vsel %vm2148, %v2149, %v2141
      %v2151 = vsel %vm2144, %v2147, %v2150
      %v2152 = vsel %vm2142, nan, %v2151
      %v2153 = vand.u32 2147483647, %v1904
      %vm2154 = vcmp.le.f32.partialorder %v2153, 0.7853982
      %vm2155 = vcmp.lt.s32.totalorder %v1904, 0
      %v2156 = vand.u32 %v1904, 2139095040
      %v2157 = vshrl.u32 %v2156, 23
      %v2158 = vsub.s32 %v2157, 127
      %v2159 = vand.u32 2147483647, %v1904
      %v2160 = vand.u32 %v2159, 8388607
      %v2161 = vor.u32 %v2160, 8388608
      %v2162 = vsub.s32 0, %v2161
      %v2163 = vadd.s32 %v2158, 1
      %vm2164 = vcmp.gt.s32.totalorder %v2163, 0
      %v2165 = vsel %vm2164, %v2163, 0
      %v2166 = vshrl.u32 %v2165, 5
      %v2167 = vand.u32 %v2165, 31
      %v2168 = vsub.s32 32, %v2167
      %v2169 = vshrl.u32 683565275, %v2168
      %v2170 = vshll.u32 683565275, %v2167
      %v2171 = vshrl.u32 2475754826, %v2168
      %v2172 = vor.u32 %v2170, %v2171
      %v2173 = vshll.u32 2475754826, %v2167
      %v2174 = vshrl.u32 2131351028, %v2168
      %v2175 = vor.u32 %v2173, %v2174
      %v2176 = vshll.u32 2131351028, %v2167
      %v2177 = vshrl.u32 2102212464, %v2168
      %v2178 = vor.u32 %v2176, %v2177
      %v2179 = vshll.u32 2102212464, %v2167
      %v2180 = vshrl.u32 920167782, %v2168
      %v2181 = vor.u32 %v2179, %v2180
      %v2182 = vshll.u32 920167782, %v2167
      %v2183 = vshrl.u32 1326507024, %v2168
      %v2184 = vor.u32 %v2182, %v2183
      %vm2185 = vcmp.lt.s32.totalorder %v2166, 1
      %vm2186 = vcmp.lt.s32.totalorder %v2166, 2
      %vm2187 = vcmp.lt.s32.totalorder %v2166, 3
      %vm2188 = vcmp.lt.s32.totalorder %v2166, 4
      %v2189 = vsel %vm2185, %v2169, %v2172
      %v2190 = vsel %vm2188, %v2178, 2102212464
      %v2191 = vsel %vm2187, %v2175, %v2190
      %v2192 = vsel %vm2186, %v2189, %v2191
      %v2193 = vsel %vm2185, %v2172, %v2175
      %v2194 = vsel %vm2188, %v2181, 920167782
      %v2195 = vsel %vm2187, %v2178, %v2194
      %v2196 = vsel %vm2186, %v2193, %v2195
      %v2197 = vsel %vm2185, %v2175, %v2178
      %v2198 = vsel %vm2188, %v2184, 1326507024
      %v2199 = vsel %vm2187, %v2181, %v2198
      %v2200 = vsel %vm2186, %v2197, %v2199
      %v2201 = vshll.u32 %v2161, 8
      %v2202 = vmul.u32.u64.compose %v2201, %v2200
      %v2203 = vextract.low.u32 %v2202
      %v2204 = vextract.high.u32 %v2202
      %v2205 = vmul.u32.u64.compose %v2201, %v2196
      %v2206 = vextract.low.u32 %v2205
      %v2207 = vextract.high.u32 %v2205
      %v2208 = vmul.u32 %v2201, %v2192
      %v2209 = vadd.s32 %v2204, %v2206
      %vm2210 = vc.u32 %v2204, %v2206
      %v2211 = vadd.s32 %v2207, 1
      %v2212 = vsel %vm2210, %v2211, %v2207
      %v2213 = vadd.s32 %v2208, %v2212
      %v2214 = vadd.s32 %v2213, 536870912
      %v2215 = vshrl.u32 %v2214, 30
      %v2216 = vshll.u32 %v2215, 30
      %v2217 = vsub.s32 %v2213, %v2216
      %vm2218 = vcmp.lt.s32.totalorder %v2217, 0
      %v2219 = vsub.s32 0, %v2217
      %v2220 = vsel %vm2218, %v2219, %v2217
      %v2221 = vclz %v2220
      %v2222 = vsub.s32 %v2221, 2
      %vm2223 = vcmp.gt.s32.totalorder 0, %v2222
      %v2224 = vsel %vm2223, 0, %v2222
      %v2225 = vsub.s32 32, %v2224
      %v2226 = vshll.u32 %v2217, %v2224
      %v2227 = vshrl.u32 %v2209, %v2225
      %v2228 = vor.u32 %v2226, %v2227
      %v2229 = vsub.s32 4294967266, %v2224
      %v2230 = vadd.s32 %v2229, 127
      %v2231 = vshll.u32 %v2230, 23
      %v2232 = vor.u32 4788187, %v2231
      %v2233 = vand.u32 2147483647, %v2232
      %v2235 = vcvt.s32.f32 %v2228
      %v2236 = vmul.f32 %v2235, %v2233
      %v2237 = vxor.u32 %v2236, 2147483648
      %v2238 = vsel %vm2155, %v2237, %v2236
      %v2239 = vsub.s32 4, %v2215
      %v2240 = vsel %vm2155, %v2239, %v2215
      %v2241 = vsel %vm2154, %v1904, %v2238
      %v2242 = vsel %vm2154, 0, %v2240
      %v2243 = vcosq.f32.pop %v2241
      %v2244 = vsinq.f32.pop %v2241
      %vm2245 = vweird.f32 %v1904
      %v2246 = vand.u32 %v2242, 3
      %vm2247 = vcmp.lt.s32.totalorder %v2246, 2
      %vm2248 = vcmp.eq.s32.totalorder %v2246, 0
      %v2249 = vxor.u32 %v2244, 2147483648
      %v2250 = vsel %vm2248, %v2243, %v2249
      %vm2251 = vcmp.eq.s32.totalorder %v2246, 2
      %v2252 = vxor.u32 %v2243, 2147483648
      %v2253 = vsel %vm2251, %v2252, %v2244
      %v2254 = vsel %vm2247, %v2250, %v2253
      %v2255 = vsel %vm2245, nan, %v2254
      %v2256 = vand.u32 2147483647, %v1905
      %vm2257 = vcmp.le.f32.partialorder %v2256, 0.7853982
      %vm2258 = vcmp.lt.s32.totalorder %v1905, 0
      %v2259 = vand.u32 %v1905, 2139095040
      %v2260 = vshrl.u32 %v2259, 23
      %v2261 = vsub.s32 %v2260, 127
      %v2262 = vand.u32 2147483647, %v1905
      %v2263 = vand.u32 %v2262, 8388607
      %v2264 = vor.u32 %v2263, 8388608
      %v2265 = vsub.s32 0, %v2264
      %v2266 = vadd.s32 %v2261, 1
      %vm2267 = vcmp.gt.s32.totalorder %v2266, 0
      %v2268 = vsel %vm2267, %v2266, 0
      %v2269 = vshrl.u32 %v2268, 5
      %v2270 = vand.u32 %v2268, 31
      %v2271 = vsub.s32 32, %v2270
      %v2272 = vshrl.u32 683565275, %v2271
      %v2273 = vshll.u32 683565275, %v2270
      %v2274 = vshrl.u32 2475754826, %v2271
      %v2275 = vor.u32 %v2273, %v2274
      %v2276 = vshll.u32 2475754826, %v2270
      %v2277 = vshrl.u32 2131351028, %v2271
      %v2278 = vor.u32 %v2276, %v2277
      %v2279 = vshll.u32 2131351028, %v2270
      %v2280 = vshrl.u32 2102212464, %v2271
      %v2281 = vor.u32 %v2279, %v2280
      %v2282 = vshll.u32 2102212464, %v2270
      %v2283 = vshrl.u32 920167782, %v2271
      %v2284 = vor.u32 %v2282, %v2283
      %v2285 = vshll.u32 920167782, %v2270
      %v2286 = vshrl.u32 1326507024, %v2271
      %v2287 = vor.u32 %v2285, %v2286
      %vm2288 = vcmp.lt.s32.totalorder %v2269, 1
      %vm2289 = vcmp.lt.s32.totalorder %v2269, 2
      %vm2290 = vcmp.lt.s32.totalorder %v2269, 3
      %vm2291 = vcmp.lt.s32.totalorder %v2269, 4
      %v2292 = vsel %vm2288, %v2272, %v2275
      %v2293 = vsel %vm2291, %v2281, 2102212464
      %v2294 = vsel %vm2290, %v2278, %v2293
      %v2295 = vsel %vm2289, %v2292, %v2294
      %v2296 = vsel %vm2288, %v2275, %v2278
      %v2297 = vsel %vm2291, %v2284, 920167782
      %v2298 = vsel %vm2290, %v2281, %v2297
      %v2299 = vsel %vm2289, %v2296, %v2298
      %v2300 = vsel %vm2288, %v2278, %v2281
      %v2301 = vsel %vm2291, %v2287, 1326507024
      %v2302 = vsel %vm2290, %v2284, %v2301
      %v2303 = vsel %vm2289, %v2300, %v2302
      %v2304 = vshll.u32 %v2264, 8
      %v2305 = vmul.u32.u64.compose %v2304, %v2303
      %v2306 = vextract.low.u32 %v2305
      %v2307 = vextract.high.u32 %v2305
      %v2308 = vmul.u32.u64.compose %v2304, %v2299
      %v2309 = vextract.low.u32 %v2308
      %v2310 = vextract.high.u32 %v2308
      %v2311 = vmul.u32 %v2304, %v2295
      %v2312 = vadd.s32 %v2307, %v2309
      %vm2313 = vc.u32 %v2307, %v2309
      %v2314 = vadd.s32 %v2310, 1
      %v2315 = vsel %vm2313, %v2314, %v2310
      %v2316 = vadd.s32 %v2311, %v2315
      %v2317 = vadd.s32 %v2316, 536870912
      %v2318 = vshrl.u32 %v2317, 30
      %v2319 = vshll.u32 %v2318, 30
      %v2320 = vsub.s32 %v2316, %v2319
      %vm2321 = vcmp.lt.s32.totalorder %v2320, 0
      %v2322 = vsub.s32 0, %v2320
      %v2323 = vsel %vm2321, %v2322, %v2320
      %v2324 = vclz %v2323
      %v2325 = vsub.s32 %v2324, 2
      %vm2326 = vcmp.gt.s32.totalorder 0, %v2325
      %v2327 = vsel %vm2326, 0, %v2325
      %v2328 = vsub.s32 32, %v2327
      %v2329 = vshll.u32 %v2320, %v2327
      %v2330 = vshrl.u32 %v2312, %v2328
      %v2331 = vor.u32 %v2329, %v2330
      %v2332 = vsub.s32 4294967266, %v2327
      %v2333 = vadd.s32 %v2332, 127
      %v2334 = vshll.u32 %v2333, 23
      %v2335 = vor.u32 4788187, %v2334
      %v2336 = vand.u32 2147483647, %v2335
      %v2338 = vcvt.s32.f32 %v2331
      %v2339 = vmul.f32 %v2338, %v2336
      %v2340 = vxor.u32 %v2339, 2147483648
      %v2341 = vsel %vm2258, %v2340, %v2339
      %v2342 = vsub.s32 4, %v2318
      %v2343 = vsel %vm2258, %v2342, %v2318
      %v2344 = vsel %vm2257, %v1905, %v2341
      %v2345 = vsel %vm2257, 0, %v2343
      %v2346 = vcosq.f32.pop %v2344
      %v2347 = vsinq.f32.pop %v2344
      %vm2348 = vweird.f32 %v1905
      %v2349 = vand.u32 %v2345, 3
      %vm2350 = vcmp.lt.s32.totalorder %v2349, 2
      %vm2351 = vcmp.eq.s32.totalorder %v2349, 0
      %v2352 = vxor.u32 %v2347, 2147483648
      %v2353 = vsel %vm2351, %v2346, %v2352
      %vm2354 = vcmp.eq.s32.totalorder %v2349, 2
      %v2355 = vxor.u32 %v2346, 2147483648
      %v2356 = vsel %vm2354, %v2355, %v2347
      %v2357 = vsel %vm2350, %v2353, %v2356
      %v2358 = vsel %vm2348, nan, %v2357
      %v2359 = vand.u32 2147483647, %v1906
      %vm2360 = vcmp.le.f32.partialorder %v2359, 0.7853982
      %vm2361 = vcmp.lt.s32.totalorder %v1906, 0
      %v2362 = vand.u32 %v1906, 2139095040
      %v2363 = vshrl.u32 %v2362, 23
      %v2364 = vsub.s32 %v2363, 127
      %v2365 = vand.u32 2147483647, %v1906
      %v2366 = vand.u32 %v2365, 8388607
      %v2367 = vor.u32 %v2366, 8388608
      %v2368 = vsub.s32 0, %v2367
      %v2369 = vadd.s32 %v2364, 1
      %vm2370 = vcmp.gt.s32.totalorder %v2369, 0
      %v2371 = vsel %vm2370, %v2369, 0
      %v2372 = vshrl.u32 %v2371, 5
      %v2373 = vand.u32 %v2371, 31
      %v2374 = vsub.s32 32, %v2373
      %v2375 = vshrl.u32 683565275, %v2374
      %v2376 = vshll.u32 683565275, %v2373
      %v2377 = vshrl.u32 2475754826, %v2374
      %v2378 = vor.u32 %v2376, %v2377
      %v2379 = vshll.u32 2475754826, %v2373
      %v2380 = vshrl.u32 2131351028, %v2374
      %v2381 = vor.u32 %v2379, %v2380
      %v2382 = vshll.u32 2131351028, %v2373
      %v2383 = vshrl.u32 2102212464, %v2374
      %v2384 = vor.u32 %v2382, %v2383
      %v2385 = vshll.u32 2102212464, %v2373
      %v2386 = vshrl.u32 920167782, %v2374
      %v2387 = vor.u32 %v2385, %v2386
      %v2388 = vshll.u32 920167782, %v2373
      %v2389 = vshrl.u32 1326507024, %v2374
      %v2390 = vor.u32 %v2388, %v2389
      %vm2391 = vcmp.lt.s32.totalorder %v2372, 1
      %vm2392 = vcmp.lt.s32.totalorder %v2372, 2
      %vm2393 = vcmp.lt.s32.totalorder %v2372, 3
      %vm2394 = vcmp.lt.s32.totalorder %v2372, 4
      %v2395 = vsel %vm2391, %v2375, %v2378
      %v2396 = vsel %vm2394, %v2384, 2102212464
      %v2397 = vsel %vm2393, %v2381, %v2396
      %v2398 = vsel %vm2392, %v2395, %v2397
      %v2399 = vsel %vm2391, %v2378, %v2381
      %v2400 = vsel %vm2394, %v2387, 920167782
      %v2401 = vsel %vm2393, %v2384, %v2400
      %v2402 = vsel %vm2392, %v2399, %v2401
      %v2403 = vsel %vm2391, %v2381, %v2384
      %v2404 = vsel %vm2394, %v2390, 1326507024
      %v2405 = vsel %vm2393, %v2387, %v2404
      %v2406 = vsel %vm2392, %v2403, %v2405
      %v2407 = vshll.u32 %v2367, 8
      %v2408 = vmul.u32.u64.compose %v2407, %v2406
      %v2409 = vextract.low.u32 %v2408
      %v2410 = vextract.high.u32 %v2408
      %v2411 = vmul.u32.u64.compose %v2407, %v2402
      %v2412 = vextract.low.u32 %v2411
      %v2413 = vextract.high.u32 %v2411
      %v2414 = vmul.u32 %v2407, %v2398
      %v2415 = vadd.s32 %v2410, %v2412
      %vm2416 = vc.u32 %v2410, %v2412
      %v2417 = vadd.s32 %v2413, 1
      %v2418 = vsel %vm2416, %v2417, %v2413
      %v2419 = vadd.s32 %v2414, %v2418
      %v2420 = vadd.s32 %v2419, 536870912
      %v2421 = vshrl.u32 %v2420, 30
      %v2422 = vshll.u32 %v2421, 30
      %v2423 = vsub.s32 %v2419, %v2422
      %vm2424 = vcmp.lt.s32.totalorder %v2423, 0
      %v2425 = vsub.s32 0, %v2423
      %v2426 = vsel %vm2424, %v2425, %v2423
      %v2427 = vclz %v2426
      %v2428 = vsub.s32 %v2427, 2
      %vm2429 = vcmp.gt.s32.totalorder 0, %v2428
      %v2430 = vsel %vm2429, 0, %v2428
      %v2431 = vsub.s32 32, %v2430
      %v2432 = vshll.u32 %v2423, %v2430
      %v2433 = vshrl.u32 %v2415, %v2431
      %v2434 = vor.u32 %v2432, %v2433
      %v2435 = vsub.s32 4294967266, %v2430
      %v2436 = vadd.s32 %v2435, 127
      %v2437 = vshll.u32 %v2436, 23
      %v2438 = vor.u32 4788187, %v2437
      %v2439 = vand.u32 2147483647, %v2438
      %v2441 = vcvt.s32.f32 %v2434
      %v2442 = vmul.f32 %v2441, %v2439
      %v2443 = vxor.u32 %v2442, 2147483648
      %v2444 = vsel %vm2361, %v2443, %v2442
      %v2445 = vsub.s32 4, %v2421
      %v2446 = vsel %vm2361, %v2445, %v2421
      %v2447 = vsel %vm2360, %v1906, %v2444
      %v2448 = vsel %vm2360, 0, %v2446
      %v2449 = vcosq.f32.pop %v2447
      %v2450 = vsinq.f32.pop %v2447
      %vm2451 = vweird.f32 %v1906
      %v2452 = vand.u32 %v2448, 3
      %vm2453 = vcmp.lt.s32.totalorder %v2452, 2
      %vm2454 = vcmp.eq.s32.totalorder %v2452, 0
      %v2455 = vxor.u32 %v2450, 2147483648
      %v2456 = vsel %vm2454, %v2449, %v2455
      %vm2457 = vcmp.eq.s32.totalorder %v2452, 2
      %v2458 = vxor.u32 %v2449, 2147483648
      %v2459 = vsel %vm2457, %v2458, %v2450
      %v2460 = vsel %vm2453, %v2456, %v2459
      %v2461 = vsel %vm2451, nan, %v2460
      %v2462 = vand.u32 2147483647, %v1907
      %vm2463 = vcmp.le.f32.partialorder %v2462, 0.7853982
      %vm2464 = vcmp.lt.s32.totalorder %v1907, 0
      %v2465 = vand.u32 %v1907, 2139095040
      %v2466 = vshrl.u32 %v2465, 23
      %v2467 = vsub.s32 %v2466, 127
      %v2468 = vand.u32 2147483647, %v1907
      %v2469 = vand.u32 %v2468, 8388607
      %v2470 = vor.u32 %v2469, 8388608
      %v2471 = vsub.s32 0, %v2470
      %v2472 = vadd.s32 %v2467, 1
      %vm2473 = vcmp.gt.s32.totalorder %v2472, 0
      %v2474 = vsel %vm2473, %v2472, 0
      %v2475 = vshrl.u32 %v2474, 5
      %v2476 = vand.u32 %v2474, 31
      %v2477 = vsub.s32 32, %v2476
      %v2478 = vshrl.u32 683565275, %v2477
      %v2479 = vshll.u32 683565275, %v2476
      %v2480 = vshrl.u32 2475754826, %v2477
      %v2481 = vor.u32 %v2479, %v2480
      %v2482 = vshll.u32 2475754826, %v2476
      %v2483 = vshrl.u32 2131351028, %v2477
      %v2484 = vor.u32 %v2482, %v2483
      %v2485 = vshll.u32 2131351028, %v2476
      %v2486 = vshrl.u32 2102212464, %v2477
      %v2487 = vor.u32 %v2485, %v2486
      %v2488 = vshll.u32 2102212464, %v2476
      %v2489 = vshrl.u32 920167782, %v2477
      %v2490 = vor.u32 %v2488, %v2489
      %v2491 = vshll.u32 920167782, %v2476
      %v2492 = vshrl.u32 1326507024, %v2477
      %v2493 = vor.u32 %v2491, %v2492
      %vm2494 = vcmp.lt.s32.totalorder %v2475, 1
      %vm2495 = vcmp.lt.s32.totalorder %v2475, 2
      %vm2496 = vcmp.lt.s32.totalorder %v2475, 3
      %vm2497 = vcmp.lt.s32.totalorder %v2475, 4
      %v2498 = vsel %vm2494, %v2478, %v2481
      %v2499 = vsel %vm2497, %v2487, 2102212464
      %v2500 = vsel %vm2496, %v2484, %v2499
      %v2501 = vsel %vm2495, %v2498, %v2500
      %v2502 = vsel %vm2494, %v2481, %v2484
      %v2503 = vsel %vm2497, %v2490, 920167782
      %v2504 = vsel %vm2496, %v2487, %v2503
      %v2505 = vsel %vm2495, %v2502, %v2504
      %v2506 = vsel %vm2494, %v2484, %v2487
      %v2507 = vsel %vm2497, %v2493, 1326507024
      %v2508 = vsel %vm2496, %v2490, %v2507
      %v2509 = vsel %vm2495, %v2506, %v2508
      %v2510 = vshll.u32 %v2470, 8
      %v2511 = vmul.u32.u64.compose %v2510, %v2509
      %v2512 = vextract.low.u32 %v2511
      %v2513 = vextract.high.u32 %v2511
      %v2514 = vmul.u32.u64.compose %v2510, %v2505
      %v2515 = vextract.low.u32 %v2514
      %v2516 = vextract.high.u32 %v2514
      %v2517 = vmul.u32 %v2510, %v2501
      %v2518 = vadd.s32 %v2513, %v2515
      %vm2519 = vc.u32 %v2513, %v2515
      %v2520 = vadd.s32 %v2516, 1
      %v2521 = vsel %vm2519, %v2520, %v2516
      %v2522 = vadd.s32 %v2517, %v2521
      %v2523 = vadd.s32 %v2522, 536870912
      %v2524 = vshrl.u32 %v2523, 30
      %v2525 = vshll.u32 %v2524, 30
      %v2526 = vsub.s32 %v2522, %v2525
      %vm2527 = vcmp.lt.s32.totalorder %v2526, 0
      %v2528 = vsub.s32 0, %v2526
      %v2529 = vsel %vm2527, %v2528, %v2526
      %v2530 = vclz %v2529
      %v2531 = vsub.s32 %v2530, 2
      %vm2532 = vcmp.gt.s32.totalorder 0, %v2531
      %v2533 = vsel %vm2532, 0, %v2531
      %v2534 = vsub.s32 32, %v2533
      %v2535 = vshll.u32 %v2526, %v2533
      %v2536 = vshrl.u32 %v2518, %v2534
      %v2537 = vor.u32 %v2535, %v2536
      %v2538 = vsub.s32 4294967266, %v2533
      %v2539 = vadd.s32 %v2538, 127
      %v2540 = vshll.u32 %v2539, 23
      %v2541 = vor.u32 4788187, %v2540
      %v2542 = vand.u32 2147483647, %v2541
      %v2544 = vcvt.s32.f32 %v2537
      %v2545 = vmul.f32 %v2544, %v2542
      %v2546 = vxor.u32 %v2545, 2147483648
      %v2547 = vsel %vm2464, %v2546, %v2545
      %v2548 = vsub.s32 4, %v2524
      %v2549 = vsel %vm2464, %v2548, %v2524
      %v2550 = vsel %vm2463, %v1907, %v2547
      %v2551 = vsel %vm2463, 0, %v2549
      %v2552 = vcosq.f32.pop %v2550
      %v2553 = vsinq.f32.pop %v2550
      %vm2554 = vweird.f32 %v1907
      %v2555 = vand.u32 %v2551, 3
      %vm2556 = vcmp.lt.s32.totalorder %v2555, 2
      %vm2557 = vcmp.eq.s32.totalorder %v2555, 0
      %v2558 = vxor.u32 %v2553, 2147483648
      %v2559 = vsel %vm2557, %v2552, %v2558
      %vm2560 = vcmp.eq.s32.totalorder %v2555, 2
      %v2561 = vxor.u32 %v2552, 2147483648
      %v2562 = vsel %vm2560, %v2561, %v2553
      %v2563 = vsel %vm2556, %v2559, %v2562
      %v2564 = vsel %vm2554, nan, %v2563
      %v2565 = vand.u32 2147483647, %v1908
      %vm2566 = vcmp.le.f32.partialorder %v2565, 0.7853982
      %vm2567 = vcmp.lt.s32.totalorder %v1908, 0
      %v2568 = vand.u32 %v1908, 2139095040
      %v2569 = vshrl.u32 %v2568, 23
      %v2570 = vsub.s32 %v2569, 127
      %v2571 = vand.u32 2147483647, %v1908
      %v2572 = vand.u32 %v2571, 8388607
      %v2573 = vor.u32 %v2572, 8388608
      %v2574 = vsub.s32 0, %v2573
      %v2575 = vadd.s32 %v2570, 1
      %vm2576 = vcmp.gt.s32.totalorder %v2575, 0
      %v2577 = vsel %vm2576, %v2575, 0
      %v2578 = vshrl.u32 %v2577, 5
      %v2579 = vand.u32 %v2577, 31
      %v2580 = vsub.s32 32, %v2579
      %v2581 = vshrl.u32 683565275, %v2580
      %v2582 = vshll.u32 683565275, %v2579
      %v2583 = vshrl.u32 2475754826, %v2580
      %v2584 = vor.u32 %v2582, %v2583
      %v2585 = vshll.u32 2475754826, %v2579
      %v2586 = vshrl.u32 2131351028, %v2580
      %v2587 = vor.u32 %v2585, %v2586
      %v2588 = vshll.u32 2131351028, %v2579
      %v2589 = vshrl.u32 2102212464, %v2580
      %v2590 = vor.u32 %v2588, %v2589
      %v2591 = vshll.u32 2102212464, %v2579
      %v2592 = vshrl.u32 920167782, %v2580
      %v2593 = vor.u32 %v2591, %v2592
      %v2594 = vshll.u32 920167782, %v2579
      %v2595 = vshrl.u32 1326507024, %v2580
      %v2596 = vor.u32 %v2594, %v2595
      %vm2597 = vcmp.lt.s32.totalorder %v2578, 1
      %vm2598 = vcmp.lt.s32.totalorder %v2578, 2
      %vm2599 = vcmp.lt.s32.totalorder %v2578, 3
      %vm2600 = vcmp.lt.s32.totalorder %v2578, 4
      %v2601 = vsel %vm2597, %v2581, %v2584
      %v2602 = vsel %vm2600, %v2590, 2102212464
      %v2603 = vsel %vm2599, %v2587, %v2602
      %v2604 = vsel %vm2598, %v2601, %v2603
      %v2605 = vsel %vm2597, %v2584, %v2587
      %v2606 = vsel %vm2600, %v2593, 920167782
      %v2607 = vsel %vm2599, %v2590, %v2606
      %v2608 = vsel %vm2598, %v2605, %v2607
      %v2609 = vsel %vm2597, %v2587, %v2590
      %v2610 = vsel %vm2600, %v2596, 1326507024
      %v2611 = vsel %vm2599, %v2593, %v2610
      %v2612 = vsel %vm2598, %v2609, %v2611
      %v2613 = vshll.u32 %v2573, 8
      %v2614 = vmul.u32.u64.compose %v2613, %v2612
      %v2615 = vextract.low.u32 %v2614
      %v2616 = vextract.high.u32 %v2614
      %v2617 = vmul.u32.u64.compose %v2613, %v2608
      %v2618 = vextract.low.u32 %v2617
      %v2619 = vextract.high.u32 %v2617
      %v2620 = vmul.u32 %v2613, %v2604
      %v2621 = vadd.s32 %v2616, %v2618
      %vm2622 = vc.u32 %v2616, %v2618
      %v2623 = vadd.s32 %v2619, 1
      %v2624 = vsel %vm2622, %v2623, %v2619
      %v2625 = vadd.s32 %v2620, %v2624
      %v2626 = vadd.s32 %v2625, 536870912
      %v2627 = vshrl.u32 %v2626, 30
      %v2628 = vshll.u32 %v2627, 30
      %v2629 = vsub.s32 %v2625, %v2628
      %vm2630 = vcmp.lt.s32.totalorder %v2629, 0
      %v2631 = vsub.s32 0, %v2629
      %v2632 = vsel %vm2630, %v2631, %v2629
      %v2633 = vclz %v2632
      %v2634 = vsub.s32 %v2633, 2
      %vm2635 = vcmp.gt.s32.totalorder 0, %v2634
      %v2636 = vsel %vm2635, 0, %v2634
      %v2637 = vsub.s32 32, %v2636
      %v2638 = vshll.u32 %v2629, %v2636
      %v2639 = vshrl.u32 %v2621, %v2637
      %v2640 = vor.u32 %v2638, %v2639
      %v2641 = vsub.s32 4294967266, %v2636
      %v2642 = vadd.s32 %v2641, 127
      %v2643 = vshll.u32 %v2642, 23
      %v2644 = vor.u32 4788187, %v2643
      %v2645 = vand.u32 2147483647, %v2644
      %v2647 = vcvt.s32.f32 %v2640
      %v2648 = vmul.f32 %v2647, %v2645
      %v2649 = vxor.u32 %v2648, 2147483648
      %v2650 = vsel %vm2567, %v2649, %v2648
      %v2651 = vsub.s32 4, %v2627
      %v2652 = vsel %vm2567, %v2651, %v2627
      %v2653 = vsel %vm2566, %v1908, %v2650
      %v2654 = vsel %vm2566, 0, %v2652
      %v2655 = vcosq.f32.pop %v2653
      %v2656 = vsinq.f32.pop %v2653
      %vm2657 = vweird.f32 %v1908
      %v2658 = vand.u32 %v2654, 3
      %vm2659 = vcmp.lt.s32.totalorder %v2658, 2
      %vm2660 = vcmp.eq.s32.totalorder %v2658, 0
      %v2661 = vxor.u32 %v2656, 2147483648
      %v2662 = vsel %vm2660, %v2655, %v2661
      %vm2663 = vcmp.eq.s32.totalorder %v2658, 2
      %v2664 = vxor.u32 %v2655, 2147483648
      %v2665 = vsel %vm2663, %v2664, %v2656
      %v2666 = vsel %vm2659, %v2662, %v2665
      %v2667 = vsel %vm2657, nan, %v2666
      %v2668 = vand.u32 2147483647, %v1909
      %vm2669 = vcmp.le.f32.partialorder %v2668, 0.7853982
      %vm2670 = vcmp.lt.s32.totalorder %v1909, 0
      %v2671 = vand.u32 %v1909, 2139095040
      %v2672 = vshrl.u32 %v2671, 23
      %v2673 = vsub.s32 %v2672, 127
      %v2674 = vand.u32 2147483647, %v1909
      %v2675 = vand.u32 %v2674, 8388607
      %v2676 = vor.u32 %v2675, 8388608
      %v2677 = vsub.s32 0, %v2676
      %v2678 = vadd.s32 %v2673, 1
      %vm2679 = vcmp.gt.s32.totalorder %v2678, 0
      %v2680 = vsel %vm2679, %v2678, 0
      %v2681 = vshrl.u32 %v2680, 5
      %v2682 = vand.u32 %v2680, 31
      %v2683 = vsub.s32 32, %v2682
      %v2684 = vshrl.u32 683565275, %v2683
      %v2685 = vshll.u32 683565275, %v2682
      %v2686 = vshrl.u32 2475754826, %v2683
      %v2687 = vor.u32 %v2685, %v2686
      %v2688 = vshll.u32 2475754826, %v2682
      %v2689 = vshrl.u32 2131351028, %v2683
      %v2690 = vor.u32 %v2688, %v2689
      %v2691 = vshll.u32 2131351028, %v2682
      %v2692 = vshrl.u32 2102212464, %v2683
      %v2693 = vor.u32 %v2691, %v2692
      %v2694 = vshll.u32 2102212464, %v2682
      %v2695 = vshrl.u32 920167782, %v2683
      %v2696 = vor.u32 %v2694, %v2695
      %v2697 = vshll.u32 920167782, %v2682
      %v2698 = vshrl.u32 1326507024, %v2683
      %v2699 = vor.u32 %v2697, %v2698
      %vm2700 = vcmp.lt.s32.totalorder %v2681, 1
      %vm2701 = vcmp.lt.s32.totalorder %v2681, 2
      %vm2702 = vcmp.lt.s32.totalorder %v2681, 3
      %vm2703 = vcmp.lt.s32.totalorder %v2681, 4
      %v2704 = vsel %vm2700, %v2684, %v2687
      %v2705 = vsel %vm2703, %v2693, 2102212464
      %v2706 = vsel %vm2702, %v2690, %v2705
      %v2707 = vsel %vm2701, %v2704, %v2706
      %v2708 = vsel %vm2700, %v2687, %v2690
      %v2709 = vsel %vm2703, %v2696, 920167782
      %v2710 = vsel %vm2702, %v2693, %v2709
      %v2711 = vsel %vm2701, %v2708, %v2710
      %v2712 = vsel %vm2700, %v2690, %v2693
      %v2713 = vsel %vm2703, %v2699, 1326507024
      %v2714 = vsel %vm2702, %v2696, %v2713
      %v2715 = vsel %vm2701, %v2712, %v2714
      %v2716 = vshll.u32 %v2676, 8
      %v2717 = vmul.u32.u64.compose %v2716, %v2715
      %v2718 = vextract.low.u32 %v2717
      %v2719 = vextract.high.u32 %v2717
      %v2720 = vmul.u32.u64.compose %v2716, %v2711
      %v2721 = vextract.low.u32 %v2720
      %v2722 = vextract.high.u32 %v2720
      %v2723 = vmul.u32 %v2716, %v2707
      %v2724 = vadd.s32 %v2719, %v2721
      %vm2725 = vc.u32 %v2719, %v2721
      %v2726 = vadd.s32 %v2722, 1
      %v2727 = vsel %vm2725, %v2726, %v2722
      %v2728 = vadd.s32 %v2723, %v2727
      %v2729 = vadd.s32 %v2728, 536870912
      %v2730 = vshrl.u32 %v2729, 30
      %v2731 = vshll.u32 %v2730, 30
      %v2732 = vsub.s32 %v2728, %v2731
      %vm2733 = vcmp.lt.s32.totalorder %v2732, 0
      %v2734 = vsub.s32 0, %v2732
      %v2735 = vsel %vm2733, %v2734, %v2732
      %v2736 = vclz %v2735
      %v2737 = vsub.s32 %v2736, 2
      %vm2738 = vcmp.gt.s32.totalorder 0, %v2737
      %v2739 = vsel %vm2738, 0, %v2737
      %v2740 = vsub.s32 32, %v2739
      %v2741 = vshll.u32 %v2732, %v2739
      %v2742 = vshrl.u32 %v2724, %v2740
      %v2743 = vor.u32 %v2741, %v2742
      %v2744 = vsub.s32 4294967266, %v2739
      %v2745 = vadd.s32 %v2744, 127
      %v2746 = vshll.u32 %v2745, 23
      %v2747 = vor.u32 4788187, %v2746
      %v2748 = vand.u32 2147483647, %v2747
      %v2750 = vcvt.s32.f32 %v2743
      %v2751 = vmul.f32 %v2750, %v2748
      %v2752 = vxor.u32 %v2751, 2147483648
      %v2753 = vsel %vm2670, %v2752, %v2751
      %v2754 = vsub.s32 4, %v2730
      %v2755 = vsel %vm2670, %v2754, %v2730
      %v2756 = vsel %vm2669, %v1909, %v2753
      %v2757 = vsel %vm2669, 0, %v2755
      %v2758 = vcosq.f32.pop %v2756
      %v2759 = vsinq.f32.pop %v2756
      %vm2760 = vweird.f32 %v1909
      %v2761 = vand.u32 %v2757, 3
      %vm2762 = vcmp.lt.s32.totalorder %v2761, 2
      %vm2763 = vcmp.eq.s32.totalorder %v2761, 0
      %v2764 = vxor.u32 %v2759, 2147483648
      %v2765 = vsel %vm2763, %v2758, %v2764
      %vm2766 = vcmp.eq.s32.totalorder %v2761, 2
      %v2767 = vxor.u32 %v2758, 2147483648
      %v2768 = vsel %vm2766, %v2767, %v2759
      %v2769 = vsel %vm2762, %v2765, %v2768
      %v2770 = vsel %vm2760, nan, %v2769
      %v2771 = vand.u32 2147483647, %v1910
      %vm2772 = vcmp.le.f32.partialorder %v2771, 0.7853982
      %vm2773 = vcmp.lt.s32.totalorder %v1910, 0
      %v2774 = vand.u32 %v1910, 2139095040
      %v2775 = vshrl.u32 %v2774, 23
      %v2776 = vsub.s32 %v2775, 127
      %v2777 = vand.u32 2147483647, %v1910
      %v2778 = vand.u32 %v2777, 8388607
      %v2779 = vor.u32 %v2778, 8388608
      %v2780 = vsub.s32 0, %v2779
      %v2781 = vadd.s32 %v2776, 1
      %vm2782 = vcmp.gt.s32.totalorder %v2781, 0
      %v2783 = vsel %vm2782, %v2781, 0
      %v2784 = vshrl.u32 %v2783, 5
      %v2785 = vand.u32 %v2783, 31
      %v2786 = vsub.s32 32, %v2785
      %v2787 = vshrl.u32 683565275, %v2786
      %v2788 = vshll.u32 683565275, %v2785
      %v2789 = vshrl.u32 2475754826, %v2786
      %v2790 = vor.u32 %v2788, %v2789
      %v2791 = vshll.u32 2475754826, %v2785
      %v2792 = vshrl.u32 2131351028, %v2786
      %v2793 = vor.u32 %v2791, %v2792
      %v2794 = vshll.u32 2131351028, %v2785
      %v2795 = vshrl.u32 2102212464, %v2786
      %v2796 = vor.u32 %v2794, %v2795
      %v2797 = vshll.u32 2102212464, %v2785
      %v2798 = vshrl.u32 920167782, %v2786
      %v2799 = vor.u32 %v2797, %v2798
      %v2800 = vshll.u32 920167782, %v2785
      %v2801 = vshrl.u32 1326507024, %v2786
      %v2802 = vor.u32 %v2800, %v2801
      %vm2803 = vcmp.lt.s32.totalorder %v2784, 1
      %vm2804 = vcmp.lt.s32.totalorder %v2784, 2
      %vm2805 = vcmp.lt.s32.totalorder %v2784, 3
      %vm2806 = vcmp.lt.s32.totalorder %v2784, 4
      %v2807 = vsel %vm2803, %v2787, %v2790
      %v2808 = vsel %vm2806, %v2796, 2102212464
      %v2809 = vsel %vm2805, %v2793, %v2808
      %v2810 = vsel %vm2804, %v2807, %v2809
      %v2811 = vsel %vm2803, %v2790, %v2793
      %v2812 = vsel %vm2806, %v2799, 920167782
      %v2813 = vsel %vm2805, %v2796, %v2812
      %v2814 = vsel %vm2804, %v2811, %v2813
      %v2815 = vsel %vm2803, %v2793, %v2796
      %v2816 = vsel %vm2806, %v2802, 1326507024
      %v2817 = vsel %vm2805, %v2799, %v2816
      %v2818 = vsel %vm2804, %v2815, %v2817
      %v2819 = vshll.u32 %v2779, 8
      %v2820 = vmul.u32.u64.compose %v2819, %v2818
      %v2821 = vextract.low.u32 %v2820
      %v2822 = vextract.high.u32 %v2820
      %v2823 = vmul.u32.u64.compose %v2819, %v2814
      %v2824 = vextract.low.u32 %v2823
      %v2825 = vextract.high.u32 %v2823
      %v2826 = vmul.u32 %v2819, %v2810
      %v2827 = vadd.s32 %v2822, %v2824
      %vm2828 = vc.u32 %v2822, %v2824
      %v2829 = vadd.s32 %v2825, 1
      %v2830 = vsel %vm2828, %v2829, %v2825
      %v2831 = vadd.s32 %v2826, %v2830
      %v2832 = vadd.s32 %v2831, 536870912
      %v2833 = vshrl.u32 %v2832, 30
      %v2834 = vshll.u32 %v2833, 30
      %v2835 = vsub.s32 %v2831, %v2834
      %vm2836 = vcmp.lt.s32.totalorder %v2835, 0
      %v2837 = vsub.s32 0, %v2835
      %v2838 = vsel %vm2836, %v2837, %v2835
      %v2839 = vclz %v2838
      %v2840 = vsub.s32 %v2839, 2
      %vm2841 = vcmp.gt.s32.totalorder 0, %v2840
      %v2842 = vsel %vm2841, 0, %v2840
      %v2843 = vsub.s32 32, %v2842
      %v2844 = vshll.u32 %v2835, %v2842
      %v2845 = vshrl.u32 %v2827, %v2843
      %v2846 = vor.u32 %v2844, %v2845
      %v2847 = vsub.s32 4294967266, %v2842
      %v2848 = vadd.s32 %v2847, 127
      %v2849 = vshll.u32 %v2848, 23
      %v2850 = vor.u32 4788187, %v2849
      %v2851 = vand.u32 2147483647, %v2850
      %v2853 = vcvt.s32.f32 %v2846
      %v2854 = vmul.f32 %v2853, %v2851
      %v2855 = vxor.u32 %v2854, 2147483648
      %v2856 = vsel %vm2773, %v2855, %v2854
      %v2857 = vsub.s32 4, %v2833
      %v2858 = vsel %vm2773, %v2857, %v2833
      %v2859 = vsel %vm2772, %v1910, %v2856
      %v2860 = vsel %vm2772, 0, %v2858
      %v2861 = vcosq.f32.pop %v2859
      %v2862 = vsinq.f32.pop %v2859
      %vm2863 = vweird.f32 %v1910
      %v2864 = vand.u32 %v2860, 3
      %vm2865 = vcmp.lt.s32.totalorder %v2864, 2
      %vm2866 = vcmp.eq.s32.totalorder %v2864, 0
      %v2867 = vxor.u32 %v2862, 2147483648
      %v2868 = vsel %vm2866, %v2861, %v2867
      %vm2869 = vcmp.eq.s32.totalorder %v2864, 2
      %v2870 = vxor.u32 %v2861, 2147483648
      %v2871 = vsel %vm2869, %v2870, %v2862
      %v2872 = vsel %vm2865, %v2868, %v2871
      %v2873 = vsel %vm2863, nan, %v2872
      %v2874 = vand.u32 2147483647, %v1911
      %vm2875 = vcmp.le.f32.partialorder %v2874, 0.7853982
      %vm2876 = vcmp.lt.s32.totalorder %v1911, 0
      %v2877 = vand.u32 %v1911, 2139095040
      %v2878 = vshrl.u32 %v2877, 23
      %v2879 = vsub.s32 %v2878, 127
      %v2880 = vand.u32 2147483647, %v1911
      %v2881 = vand.u32 %v2880, 8388607
      %v2882 = vor.u32 %v2881, 8388608
      %v2883 = vsub.s32 0, %v2882
      %v2884 = vadd.s32 %v2879, 1
      %vm2885 = vcmp.gt.s32.totalorder %v2884, 0
      %v2886 = vsel %vm2885, %v2884, 0
      %v2887 = vshrl.u32 %v2886, 5
      %v2888 = vand.u32 %v2886, 31
      %v2889 = vsub.s32 32, %v2888
      %v2890 = vshrl.u32 683565275, %v2889
      %v2891 = vshll.u32 683565275, %v2888
      %v2892 = vshrl.u32 2475754826, %v2889
      %v2893 = vor.u32 %v2891, %v2892
      %v2894 = vshll.u32 2475754826, %v2888
      %v2895 = vshrl.u32 2131351028, %v2889
      %v2896 = vor.u32 %v2894, %v2895
      %v2897 = vshll.u32 2131351028, %v2888
      %v2898 = vshrl.u32 2102212464, %v2889
      %v2899 = vor.u32 %v2897, %v2898
      %v2900 = vshll.u32 2102212464, %v2888
      %v2901 = vshrl.u32 920167782, %v2889
      %v2902 = vor.u32 %v2900, %v2901
      %v2903 = vshll.u32 920167782, %v2888
      %v2904 = vshrl.u32 1326507024, %v2889
      %v2905 = vor.u32 %v2903, %v2904
      %vm2906 = vcmp.lt.s32.totalorder %v2887, 1
      %vm2907 = vcmp.lt.s32.totalorder %v2887, 2
      %vm2908 = vcmp.lt.s32.totalorder %v2887, 3
      %vm2909 = vcmp.lt.s32.totalorder %v2887, 4
      %v2910 = vsel %vm2906, %v2890, %v2893
      %v2911 = vsel %vm2909, %v2899, 2102212464
      %v2912 = vsel %vm2908, %v2896, %v2911
      %v2913 = vsel %vm2907, %v2910, %v2912
      %v2914 = vsel %vm2906, %v2893, %v2896
      %v2915 = vsel %vm2909, %v2902, 920167782
      %v2916 = vsel %vm2908, %v2899, %v2915
      %v2917 = vsel %vm2907, %v2914, %v2916
      %v2918 = vsel %vm2906, %v2896, %v2899
      %v2919 = vsel %vm2909, %v2905, 1326507024
      %v2920 = vsel %vm2908, %v2902, %v2919
      %v2921 = vsel %vm2907, %v2918, %v2920
      %v2922 = vshll.u32 %v2882, 8
      %v2923 = vmul.u32.u64.compose %v2922, %v2921
      %v2924 = vextract.low.u32 %v2923
      %v2925 = vextract.high.u32 %v2923
      %v2926 = vmul.u32.u64.compose %v2922, %v2917
      %v2927 = vextract.low.u32 %v2926
      %v2928 = vextract.high.u32 %v2926
      %v2929 = vmul.u32 %v2922, %v2913
      %v2930 = vadd.s32 %v2925, %v2927
      %vm2931 = vc.u32 %v2925, %v2927
      %v2932 = vadd.s32 %v2928, 1
      %v2933 = vsel %vm2931, %v2932, %v2928
      %v2934 = vadd.s32 %v2929, %v2933
      %v2935 = vadd.s32 %v2934, 536870912
      %v2936 = vshrl.u32 %v2935, 30
      %v2937 = vshll.u32 %v2936, 30
      %v2938 = vsub.s32 %v2934, %v2937
      %vm2939 = vcmp.lt.s32.totalorder %v2938, 0
      %v2940 = vsub.s32 0, %v2938
      %v2941 = vsel %vm2939, %v2940, %v2938
      %v2942 = vclz %v2941
      %v2943 = vsub.s32 %v2942, 2
      %vm2944 = vcmp.gt.s32.totalorder 0, %v2943
      %v2945 = vsel %vm2944, 0, %v2943
      %v2946 = vsub.s32 32, %v2945
      %v2947 = vshll.u32 %v2938, %v2945
      %v2948 = vshrl.u32 %v2930, %v2946
      %v2949 = vor.u32 %v2947, %v2948
      %v2950 = vsub.s32 4294967266, %v2945
      %v2951 = vadd.s32 %v2950, 127
      %v2952 = vshll.u32 %v2951, 23
      %v2953 = vor.u32 4788187, %v2952
      %v2954 = vand.u32 2147483647, %v2953
      %v2956 = vcvt.s32.f32 %v2949
      %v2957 = vmul.f32 %v2956, %v2954
      %v2958 = vxor.u32 %v2957, 2147483648
      %v2959 = vsel %vm2876, %v2958, %v2957
      %v2960 = vsub.s32 4, %v2936
      %v2961 = vsel %vm2876, %v2960, %v2936
      %v2962 = vsel %vm2875, %v1911, %v2959
      %v2963 = vsel %vm2875, 0, %v2961
      %v2964 = vcosq.f32.pop %v2962
      %v2965 = vsinq.f32.pop %v2962
      %vm2966 = vweird.f32 %v1911
      %v2967 = vand.u32 %v2963, 3
      %vm2968 = vcmp.lt.s32.totalorder %v2967, 2
      %vm2969 = vcmp.eq.s32.totalorder %v2967, 0
      %v2970 = vxor.u32 %v2965, 2147483648
      %v2971 = vsel %vm2969, %v2964, %v2970
      %vm2972 = vcmp.eq.s32.totalorder %v2967, 2
      %v2973 = vxor.u32 %v2964, 2147483648
      %v2974 = vsel %vm2972, %v2973, %v2965
      %v2975 = vsel %vm2968, %v2971, %v2974
      %v2976 = vsel %vm2966, nan, %v2975
      %v2977 = vand.u32 2147483647, %v1912
      %vm2978 = vcmp.le.f32.partialorder %v2977, 0.7853982
      %vm2979 = vcmp.lt.s32.totalorder %v1912, 0
      %v2980 = vand.u32 %v1912, 2139095040
      %v2981 = vshrl.u32 %v2980, 23
      %v2982 = vsub.s32 %v2981, 127
      %v2983 = vand.u32 2147483647, %v1912
      %v2984 = vand.u32 %v2983, 8388607
      %v2985 = vor.u32 %v2984, 8388608
      %v2986 = vsub.s32 0, %v2985
      %v2987 = vadd.s32 %v2982, 1
      %vm2988 = vcmp.gt.s32.totalorder %v2987, 0
      %v2989 = vsel %vm2988, %v2987, 0
      %v2990 = vshrl.u32 %v2989, 5
      %v2991 = vand.u32 %v2989, 31
      %v2992 = vsub.s32 32, %v2991
      %v2993 = vshrl.u32 683565275, %v2992
      %v2994 = vshll.u32 683565275, %v2991
      %v2995 = vshrl.u32 2475754826, %v2992
      %v2996 = vor.u32 %v2994, %v2995
      %v2997 = vshll.u32 2475754826, %v2991
      %v2998 = vshrl.u32 2131351028, %v2992
      %v2999 = vor.u32 %v2997, %v2998
      %v3000 = vshll.u32 2131351028, %v2991
      %v3001 = vshrl.u32 2102212464, %v2992
      %v3002 = vor.u32 %v3000, %v3001
      %v3003 = vshll.u32 2102212464, %v2991
      %v3004 = vshrl.u32 920167782, %v2992
      %v3005 = vor.u32 %v3003, %v3004
      %v3006 = vshll.u32 920167782, %v2991
      %v3007 = vshrl.u32 1326507024, %v2992
      %v3008 = vor.u32 %v3006, %v3007
      %vm3009 = vcmp.lt.s32.totalorder %v2990, 1
      %vm3010 = vcmp.lt.s32.totalorder %v2990, 2
      %vm3011 = vcmp.lt.s32.totalorder %v2990, 3
      %vm3012 = vcmp.lt.s32.totalorder %v2990, 4
      %v3013 = vsel %vm3009, %v2993, %v2996
      %v3014 = vsel %vm3012, %v3002, 2102212464
      %v3015 = vsel %vm3011, %v2999, %v3014
      %v3016 = vsel %vm3010, %v3013, %v3015
      %v3017 = vsel %vm3009, %v2996, %v2999
      %v3018 = vsel %vm3012, %v3005, 920167782
      %v3019 = vsel %vm3011, %v3002, %v3018
      %v3020 = vsel %vm3010, %v3017, %v3019
      %v3021 = vsel %vm3009, %v2999, %v3002
      %v3022 = vsel %vm3012, %v3008, 1326507024
      %v3023 = vsel %vm3011, %v3005, %v3022
      %v3024 = vsel %vm3010, %v3021, %v3023
      %v3025 = vshll.u32 %v2985, 8
      %v3026 = vmul.u32.u64.compose %v3025, %v3024
      %v3027 = vextract.low.u32 %v3026
      %v3028 = vextract.high.u32 %v3026
      %v3029 = vmul.u32.u64.compose %v3025, %v3020
      %v3030 = vextract.low.u32 %v3029
      %v3031 = vextract.high.u32 %v3029
      %v3032 = vmul.u32 %v3025, %v3016
      %v3033 = vadd.s32 %v3028, %v3030
      %vm3034 = vc.u32 %v3028, %v3030
      %v3035 = vadd.s32 %v3031, 1
      %v3036 = vsel %vm3034, %v3035, %v3031
      %v3037 = vadd.s32 %v3032, %v3036
      %v3038 = vadd.s32 %v3037, 536870912
      %v3039 = vshrl.u32 %v3038, 30
      %v3040 = vshll.u32 %v3039, 30
      %v3041 = vsub.s32 %v3037, %v3040
      %vm3042 = vcmp.lt.s32.totalorder %v3041, 0
      %v3043 = vsub.s32 0, %v3041
      %v3044 = vsel %vm3042, %v3043, %v3041
      %v3045 = vclz %v3044
      %v3046 = vsub.s32 %v3045, 2
      %vm3047 = vcmp.gt.s32.totalorder 0, %v3046
      %v3048 = vsel %vm3047, 0, %v3046
      %v3049 = vsub.s32 32, %v3048
      %v3050 = vshll.u32 %v3041, %v3048
      %v3051 = vshrl.u32 %v3033, %v3049
      %v3052 = vor.u32 %v3050, %v3051
      %v3053 = vsub.s32 4294967266, %v3048
      %v3054 = vadd.s32 %v3053, 127
      %v3055 = vshll.u32 %v3054, 23
      %v3056 = vor.u32 4788187, %v3055
      %v3057 = vand.u32 2147483647, %v3056
      %v3059 = vcvt.s32.f32 %v3052
      %v3060 = vmul.f32 %v3059, %v3057
      %v3061 = vxor.u32 %v3060, 2147483648
      %v3062 = vsel %vm2979, %v3061, %v3060
      %v3063 = vsub.s32 4, %v3039
      %v3064 = vsel %vm2979, %v3063, %v3039
      %v3065 = vsel %vm2978, %v1912, %v3062
      %v3066 = vsel %vm2978, 0, %v3064
      %v3067 = vcosq.f32.pop %v3065
      %v3068 = vsinq.f32.pop %v3065
      %vm3069 = vweird.f32 %v1912
      %v3070 = vand.u32 %v3066, 3
      %vm3071 = vcmp.lt.s32.totalorder %v3070, 2
      %vm3072 = vcmp.eq.s32.totalorder %v3070, 0
      %v3073 = vxor.u32 %v3068, 2147483648
      %v3074 = vsel %vm3072, %v3067, %v3073
      %vm3075 = vcmp.eq.s32.totalorder %v3070, 2
      %v3076 = vxor.u32 %v3067, 2147483648
      %v3077 = vsel %vm3075, %v3076, %v3068
      %v3078 = vsel %vm3071, %v3074, %v3077
      %v3079 = vsel %vm3069, nan, %v3078
      %v3080 = vand.u32 2147483647, %v1913
      %vm3081 = vcmp.le.f32.partialorder %v3080, 0.7853982
      %vm3082 = vcmp.lt.s32.totalorder %v1913, 0
      %v3083 = vand.u32 %v1913, 2139095040
      %v3084 = vshrl.u32 %v3083, 23
      %v3085 = vsub.s32 %v3084, 127
      %v3086 = vand.u32 2147483647, %v1913
      %v3087 = vand.u32 %v3086, 8388607
      %v3088 = vor.u32 %v3087, 8388608
      %v3089 = vsub.s32 0, %v3088
      %v3090 = vadd.s32 %v3085, 1
      %vm3091 = vcmp.gt.s32.totalorder %v3090, 0
      %v3092 = vsel %vm3091, %v3090, 0
      %v3093 = vshrl.u32 %v3092, 5
      %v3094 = vand.u32 %v3092, 31
      %v3095 = vsub.s32 32, %v3094
      %v3096 = vshrl.u32 683565275, %v3095
      %v3097 = vshll.u32 683565275, %v3094
      %v3098 = vshrl.u32 2475754826, %v3095
      %v3099 = vor.u32 %v3097, %v3098
      %v3100 = vshll.u32 2475754826, %v3094
      %v3101 = vshrl.u32 2131351028, %v3095
      %v3102 = vor.u32 %v3100, %v3101
      %v3103 = vshll.u32 2131351028, %v3094
      %v3104 = vshrl.u32 2102212464, %v3095
      %v3105 = vor.u32 %v3103, %v3104
      %v3106 = vshll.u32 2102212464, %v3094
      %v3107 = vshrl.u32 920167782, %v3095
      %v3108 = vor.u32 %v3106, %v3107
      %v3109 = vshll.u32 920167782, %v3094
      %v3110 = vshrl.u32 1326507024, %v3095
      %v3111 = vor.u32 %v3109, %v3110
      %vm3112 = vcmp.lt.s32.totalorder %v3093, 1
      %vm3113 = vcmp.lt.s32.totalorder %v3093, 2
      %vm3114 = vcmp.lt.s32.totalorder %v3093, 3
      %vm3115 = vcmp.lt.s32.totalorder %v3093, 4
      %v3116 = vsel %vm3112, %v3096, %v3099
      %v3117 = vsel %vm3115, %v3105, 2102212464
      %v3118 = vsel %vm3114, %v3102, %v3117
      %v3119 = vsel %vm3113, %v3116, %v3118
      %v3120 = vsel %vm3112, %v3099, %v3102
      %v3121 = vsel %vm3115, %v3108, 920167782
      %v3122 = vsel %vm3114, %v3105, %v3121
      %v3123 = vsel %vm3113, %v3120, %v3122
      %v3124 = vsel %vm3112, %v3102, %v3105
      %v3125 = vsel %vm3115, %v3111, 1326507024
      %v3126 = vsel %vm3114, %v3108, %v3125
      %v3127 = vsel %vm3113, %v3124, %v3126
      %v3128 = vshll.u32 %v3088, 8
      %v3129 = vmul.u32.u64.compose %v3128, %v3127
      %v3130 = vextract.low.u32 %v3129
      %v3131 = vextract.high.u32 %v3129
      %v3132 = vmul.u32.u64.compose %v3128, %v3123
      %v3133 = vextract.low.u32 %v3132
      %v3134 = vextract.high.u32 %v3132
      %v3135 = vmul.u32 %v3128, %v3119
      %v3136 = vadd.s32 %v3131, %v3133
      %vm3137 = vc.u32 %v3131, %v3133
      %v3138 = vadd.s32 %v3134, 1
      %v3139 = vsel %vm3137, %v3138, %v3134
      %v3140 = vadd.s32 %v3135, %v3139
      %v3141 = vadd.s32 %v3140, 536870912
      %v3142 = vshrl.u32 %v3141, 30
      %v3143 = vshll.u32 %v3142, 30
      %v3144 = vsub.s32 %v3140, %v3143
      %vm3145 = vcmp.lt.s32.totalorder %v3144, 0
      %v3146 = vsub.s32 0, %v3144
      %v3147 = vsel %vm3145, %v3146, %v3144
      %v3148 = vclz %v3147
      %v3149 = vsub.s32 %v3148, 2
      %vm3150 = vcmp.gt.s32.totalorder 0, %v3149
      %v3151 = vsel %vm3150, 0, %v3149
      %v3152 = vsub.s32 32, %v3151
      %v3153 = vshll.u32 %v3144, %v3151
      %v3154 = vshrl.u32 %v3136, %v3152
      %v3155 = vor.u32 %v3153, %v3154
      %v3156 = vsub.s32 4294967266, %v3151
      %v3157 = vadd.s32 %v3156, 127
      %v3158 = vshll.u32 %v3157, 23
      %v3159 = vor.u32 4788187, %v3158
      %v3160 = vand.u32 2147483647, %v3159
      %v3162 = vcvt.s32.f32 %v3155
      %v3163 = vmul.f32 %v3162, %v3160
      %v3164 = vxor.u32 %v3163, 2147483648
      %v3165 = vsel %vm3082, %v3164, %v3163
      %v3166 = vsub.s32 4, %v3142
      %v3167 = vsel %vm3082, %v3166, %v3142
      %v3168 = vsel %vm3081, %v1913, %v3165
      %v3169 = vsel %vm3081, 0, %v3167
      %v3170 = vcosq.f32.pop %v3168
      %v3171 = vsinq.f32.pop %v3168
      %vm3172 = vweird.f32 %v1913
      %v3173 = vand.u32 %v3169, 3
      %vm3174 = vcmp.lt.s32.totalorder %v3173, 2
      %vm3175 = vcmp.eq.s32.totalorder %v3173, 0
      %v3176 = vxor.u32 %v3171, 2147483648
      %v3177 = vsel %vm3175, %v3170, %v3176
      %vm3178 = vcmp.eq.s32.totalorder %v3173, 2
      %v3179 = vxor.u32 %v3170, 2147483648
      %v3180 = vsel %vm3178, %v3179, %v3171
      %v3181 = vsel %vm3174, %v3177, %v3180
      %v3182 = vsel %vm3172, nan, %v3181
      %v3183 = vand.u32 2147483647, %v1914
      %vm3184 = vcmp.le.f32.partialorder %v3183, 0.7853982
      %vm3185 = vcmp.lt.s32.totalorder %v1914, 0
      %v3186 = vand.u32 %v1914, 2139095040
      %v3187 = vshrl.u32 %v3186, 23
      %v3188 = vsub.s32 %v3187, 127
      %v3189 = vand.u32 2147483647, %v1914
      %v3190 = vand.u32 %v3189, 8388607
      %v3191 = vor.u32 %v3190, 8388608
      %v3192 = vsub.s32 0, %v3191
      %v3193 = vadd.s32 %v3188, 1
      %vm3194 = vcmp.gt.s32.totalorder %v3193, 0
      %v3195 = vsel %vm3194, %v3193, 0
      %v3196 = vshrl.u32 %v3195, 5
      %v3197 = vand.u32 %v3195, 31
      %v3198 = vsub.s32 32, %v3197
      %v3199 = vshrl.u32 683565275, %v3198
      %v3200 = vshll.u32 683565275, %v3197
      %v3201 = vshrl.u32 2475754826, %v3198
      %v3202 = vor.u32 %v3200, %v3201
      %v3203 = vshll.u32 2475754826, %v3197
      %v3204 = vshrl.u32 2131351028, %v3198
      %v3205 = vor.u32 %v3203, %v3204
      %v3206 = vshll.u32 2131351028, %v3197
      %v3207 = vshrl.u32 2102212464, %v3198
      %v3208 = vor.u32 %v3206, %v3207
      %v3209 = vshll.u32 2102212464, %v3197
      %v3210 = vshrl.u32 920167782, %v3198
      %v3211 = vor.u32 %v3209, %v3210
      %v3212 = vshll.u32 920167782, %v3197
      %v3213 = vshrl.u32 1326507024, %v3198
      %v3214 = vor.u32 %v3212, %v3213
      %vm3215 = vcmp.lt.s32.totalorder %v3196, 1
      %vm3216 = vcmp.lt.s32.totalorder %v3196, 2
      %vm3217 = vcmp.lt.s32.totalorder %v3196, 3
      %vm3218 = vcmp.lt.s32.totalorder %v3196, 4
      %v3219 = vsel %vm3215, %v3199, %v3202
      %v3220 = vsel %vm3218, %v3208, 2102212464
      %v3221 = vsel %vm3217, %v3205, %v3220
      %v3222 = vsel %vm3216, %v3219, %v3221
      %v3223 = vsel %vm3215, %v3202, %v3205
      %v3224 = vsel %vm3218, %v3211, 920167782
      %v3225 = vsel %vm3217, %v3208, %v3224
      %v3226 = vsel %vm3216, %v3223, %v3225
      %v3227 = vsel %vm3215, %v3205, %v3208
      %v3228 = vsel %vm3218, %v3214, 1326507024
      %v3229 = vsel %vm3217, %v3211, %v3228
      %v3230 = vsel %vm3216, %v3227, %v3229
      %v3231 = vshll.u32 %v3191, 8
      %v3232 = vmul.u32.u64.compose %v3231, %v3230
      %v3233 = vextract.low.u32 %v3232
      %v3234 = vextract.high.u32 %v3232
      %v3235 = vmul.u32.u64.compose %v3231, %v3226
      %v3236 = vextract.low.u32 %v3235
      %v3237 = vextract.high.u32 %v3235
      %v3238 = vmul.u32 %v3231, %v3222
      %v3239 = vadd.s32 %v3234, %v3236
      %vm3240 = vc.u32 %v3234, %v3236
      %v3241 = vadd.s32 %v3237, 1
      %v3242 = vsel %vm3240, %v3241, %v3237
      %v3243 = vadd.s32 %v3238, %v3242
      %v3244 = vadd.s32 %v3243, 536870912
      %v3245 = vshrl.u32 %v3244, 30
      %v3246 = vshll.u32 %v3245, 30
      %v3247 = vsub.s32 %v3243, %v3246
      %vm3248 = vcmp.lt.s32.totalorder %v3247, 0
      %v3249 = vsub.s32 0, %v3247
      %v3250 = vsel %vm3248, %v3249, %v3247
      %v3251 = vclz %v3250
      %v3252 = vsub.s32 %v3251, 2
      %vm3253 = vcmp.gt.s32.totalorder 0, %v3252
      %v3254 = vsel %vm3253, 0, %v3252
      %v3255 = vsub.s32 32, %v3254
      %v3256 = vshll.u32 %v3247, %v3254
      %v3257 = vshrl.u32 %v3239, %v3255
      %v3258 = vor.u32 %v3256, %v3257
      %v3259 = vsub.s32 4294967266, %v3254
      %v3260 = vadd.s32 %v3259, 127
      %v3261 = vshll.u32 %v3260, 23
      %v3262 = vor.u32 4788187, %v3261
      %v3263 = vand.u32 2147483647, %v3262
      %v3265 = vcvt.s32.f32 %v3258
      %v3266 = vmul.f32 %v3265, %v3263
      %v3267 = vxor.u32 %v3266, 2147483648
      %v3268 = vsel %vm3185, %v3267, %v3266
      %v3269 = vsub.s32 4, %v3245
      %v3270 = vsel %vm3185, %v3269, %v3245
      %v3271 = vsel %vm3184, %v1914, %v3268
      %v3272 = vsel %vm3184, 0, %v3270
      %v3273 = vcosq.f32.pop %v3271
      %v3274 = vsinq.f32.pop %v3271
      %vm3275 = vweird.f32 %v1914
      %v3276 = vand.u32 %v3272, 3
      %vm3277 = vcmp.lt.s32.totalorder %v3276, 2
      %vm3278 = vcmp.eq.s32.totalorder %v3276, 0
      %v3279 = vxor.u32 %v3274, 2147483648
      %v3280 = vsel %vm3278, %v3273, %v3279
      %vm3281 = vcmp.eq.s32.totalorder %v3276, 2
      %v3282 = vxor.u32 %v3273, 2147483648
      %v3283 = vsel %vm3281, %v3282, %v3274
      %v3284 = vsel %vm3277, %v3280, %v3283
      %v3285 = vsel %vm3275, nan, %v3284
      %v3286 = vand.u32 2147483647, %v1915
      %vm3287 = vcmp.le.f32.partialorder %v3286, 0.7853982
      %vm3288 = vcmp.lt.s32.totalorder %v1915, 0
      %v3289 = vand.u32 %v1915, 2139095040
      %v3290 = vshrl.u32 %v3289, 23
      %v3291 = vsub.s32 %v3290, 127
      %v3292 = vand.u32 2147483647, %v1915
      %v3293 = vand.u32 %v3292, 8388607
      %v3294 = vor.u32 %v3293, 8388608
      %v3295 = vsub.s32 0, %v3294
      %v3296 = vadd.s32 %v3291, 1
      %vm3297 = vcmp.gt.s32.totalorder %v3296, 0
      %v3298 = vsel %vm3297, %v3296, 0
      %v3299 = vshrl.u32 %v3298, 5
      %v3300 = vand.u32 %v3298, 31
      %v3301 = vsub.s32 32, %v3300
      %v3302 = vshrl.u32 683565275, %v3301
      %v3303 = vshll.u32 683565275, %v3300
      %v3304 = vshrl.u32 2475754826, %v3301
      %v3305 = vor.u32 %v3303, %v3304
      %v3306 = vshll.u32 2475754826, %v3300
      %v3307 = vshrl.u32 2131351028, %v3301
      %v3308 = vor.u32 %v3306, %v3307
      %v3309 = vshll.u32 2131351028, %v3300
      %v3310 = vshrl.u32 2102212464, %v3301
      %v3311 = vor.u32 %v3309, %v3310
      %v3312 = vshll.u32 2102212464, %v3300
      %v3313 = vshrl.u32 920167782, %v3301
      %v3314 = vor.u32 %v3312, %v3313
      %v3315 = vshll.u32 920167782, %v3300
      %v3316 = vshrl.u32 1326507024, %v3301
      %v3317 = vor.u32 %v3315, %v3316
      %vm3318 = vcmp.lt.s32.totalorder %v3299, 1
      %vm3319 = vcmp.lt.s32.totalorder %v3299, 2
      %vm3320 = vcmp.lt.s32.totalorder %v3299, 3
      %vm3321 = vcmp.lt.s32.totalorder %v3299, 4
      %v3322 = vsel %vm3318, %v3302, %v3305
      %v3323 = vsel %vm3321, %v3311, 2102212464
      %v3324 = vsel %vm3320, %v3308, %v3323
      %v3325 = vsel %vm3319, %v3322, %v3324
      %v3326 = vsel %vm3318, %v3305, %v3308
      %v3327 = vsel %vm3321, %v3314, 920167782
      %v3328 = vsel %vm3320, %v3311, %v3327
      %v3329 = vsel %vm3319, %v3326, %v3328
      %v3330 = vsel %vm3318, %v3308, %v3311
      %v3331 = vsel %vm3321, %v3317, 1326507024
      %v3332 = vsel %vm3320, %v3314, %v3331
      %v3333 = vsel %vm3319, %v3330, %v3332
      %v3334 = vshll.u32 %v3294, 8
      %v3335 = vmul.u32.u64.compose %v3334, %v3333
      %v3336 = vextract.low.u32 %v3335
      %v3337 = vextract.high.u32 %v3335
      %v3338 = vmul.u32.u64.compose %v3334, %v3329
      %v3339 = vextract.low.u32 %v3338
      %v3340 = vextract.high.u32 %v3338
      %v3341 = vmul.u32 %v3334, %v3325
      %v3342 = vadd.s32 %v3337, %v3339
      %vm3343 = vc.u32 %v3337, %v3339
      %v3344 = vadd.s32 %v3340, 1
      %v3345 = vsel %vm3343, %v3344, %v3340
      %v3346 = vadd.s32 %v3341, %v3345
      %v3347 = vadd.s32 %v3346, 536870912
      %v3348 = vshrl.u32 %v3347, 30
      %v3349 = vshll.u32 %v3348, 30
      %v3350 = vsub.s32 %v3346, %v3349
      %vm3351 = vcmp.lt.s32.totalorder %v3350, 0
      %v3352 = vsub.s32 0, %v3350
      %v3353 = vsel %vm3351, %v3352, %v3350
      %v3354 = vclz %v3353
      %v3355 = vsub.s32 %v3354, 2
      %vm3356 = vcmp.gt.s32.totalorder 0, %v3355
      %v3357 = vsel %vm3356, 0, %v3355
      %v3358 = vsub.s32 32, %v3357
      %v3359 = vshll.u32 %v3350, %v3357
      %v3360 = vshrl.u32 %v3342, %v3358
      %v3361 = vor.u32 %v3359, %v3360
      %v3362 = vsub.s32 4294967266, %v3357
      %v3363 = vadd.s32 %v3362, 127
      %v3364 = vshll.u32 %v3363, 23
      %v3365 = vor.u32 4788187, %v3364
      %v3366 = vand.u32 2147483647, %v3365
      %v3368 = vcvt.s32.f32 %v3361
      %v3369 = vmul.f32 %v3368, %v3366
      %v3370 = vxor.u32 %v3369, 2147483648
      %v3371 = vsel %vm3288, %v3370, %v3369
      %v3372 = vsub.s32 4, %v3348
      %v3373 = vsel %vm3288, %v3372, %v3348
      %v3374 = vsel %vm3287, %v1915, %v3371
      %v3375 = vsel %vm3287, 0, %v3373
      %v3376 = vcosq.f32.pop %v3374
      %v3377 = vsinq.f32.pop %v3374
      %vm3378 = vweird.f32 %v1915
      %v3379 = vand.u32 %v3375, 3
      %vm3380 = vcmp.lt.s32.totalorder %v3379, 2
      %vm3381 = vcmp.eq.s32.totalorder %v3379, 0
      %v3382 = vxor.u32 %v3377, 2147483648
      %v3383 = vsel %vm3381, %v3376, %v3382
      %vm3384 = vcmp.eq.s32.totalorder %v3379, 2
      %v3385 = vxor.u32 %v3376, 2147483648
      %v3386 = vsel %vm3384, %v3385, %v3377
      %v3387 = vsel %vm3380, %v3383, %v3386
      %v3388 = vsel %vm3378, nan, %v3387
      %v3389 = vand.u32 2147483647, %v1916
      %vm3390 = vcmp.le.f32.partialorder %v3389, 0.7853982
      %vm3391 = vcmp.lt.s32.totalorder %v1916, 0
      %v3392 = vand.u32 %v1916, 2139095040
      %v3393 = vshrl.u32 %v3392, 23
      %v3394 = vsub.s32 %v3393, 127
      %v3395 = vand.u32 2147483647, %v1916
      %v3396 = vand.u32 %v3395, 8388607
      %v3397 = vor.u32 %v3396, 8388608
      %v3398 = vsub.s32 0, %v3397
      %v3399 = vadd.s32 %v3394, 1
      %vm3400 = vcmp.gt.s32.totalorder %v3399, 0
      %v3401 = vsel %vm3400, %v3399, 0
      %v3402 = vshrl.u32 %v3401, 5
      %v3403 = vand.u32 %v3401, 31
      %v3404 = vsub.s32 32, %v3403
      %v3405 = vshrl.u32 683565275, %v3404
      %v3406 = vshll.u32 683565275, %v3403
      %v3407 = vshrl.u32 2475754826, %v3404
      %v3408 = vor.u32 %v3406, %v3407
      %v3409 = vshll.u32 2475754826, %v3403
      %v3410 = vshrl.u32 2131351028, %v3404
      %v3411 = vor.u32 %v3409, %v3410
      %v3412 = vshll.u32 2131351028, %v3403
      %v3413 = vshrl.u32 2102212464, %v3404
      %v3414 = vor.u32 %v3412, %v3413
      %v3415 = vshll.u32 2102212464, %v3403
      %v3416 = vshrl.u32 920167782, %v3404
      %v3417 = vor.u32 %v3415, %v3416
      %v3418 = vshll.u32 920167782, %v3403
      %v3419 = vshrl.u32 1326507024, %v3404
      %v3420 = vor.u32 %v3418, %v3419
      %vm3421 = vcmp.lt.s32.totalorder %v3402, 1
      %vm3422 = vcmp.lt.s32.totalorder %v3402, 2
      %vm3423 = vcmp.lt.s32.totalorder %v3402, 3
      %vm3424 = vcmp.lt.s32.totalorder %v3402, 4
      %v3425 = vsel %vm3421, %v3405, %v3408
      %v3426 = vsel %vm3424, %v3414, 2102212464
      %v3427 = vsel %vm3423, %v3411, %v3426
      %v3428 = vsel %vm3422, %v3425, %v3427
      %v3429 = vsel %vm3421, %v3408, %v3411
      %v3430 = vsel %vm3424, %v3417, 920167782
      %v3431 = vsel %vm3423, %v3414, %v3430
      %v3432 = vsel %vm3422, %v3429, %v3431
      %v3433 = vsel %vm3421, %v3411, %v3414
      %v3434 = vsel %vm3424, %v3420, 1326507024
      %v3435 = vsel %vm3423, %v3417, %v3434
      %v3436 = vsel %vm3422, %v3433, %v3435
      %v3437 = vshll.u32 %v3397, 8
      %v3438 = vmul.u32.u64.compose %v3437, %v3436
      %v3439 = vextract.low.u32 %v3438
      %v3440 = vextract.high.u32 %v3438
      %v3441 = vmul.u32.u64.compose %v3437, %v3432
      %v3442 = vextract.low.u32 %v3441
      %v3443 = vextract.high.u32 %v3441
      %v3444 = vmul.u32 %v3437, %v3428
      %v3445 = vadd.s32 %v3440, %v3442
      %vm3446 = vc.u32 %v3440, %v3442
      %v3447 = vadd.s32 %v3443, 1
      %v3448 = vsel %vm3446, %v3447, %v3443
      %v3449 = vadd.s32 %v3444, %v3448
      %v3450 = vadd.s32 %v3449, 536870912
      %v3451 = vshrl.u32 %v3450, 30
      %v3452 = vshll.u32 %v3451, 30
      %v3453 = vsub.s32 %v3449, %v3452
      %vm3454 = vcmp.lt.s32.totalorder %v3453, 0
      %v3455 = vsub.s32 0, %v3453
      %v3456 = vsel %vm3454, %v3455, %v3453
      %v3457 = vclz %v3456
      %v3458 = vsub.s32 %v3457, 2
      %vm3459 = vcmp.gt.s32.totalorder 0, %v3458
      %v3460 = vsel %vm3459, 0, %v3458
      %v3461 = vsub.s32 32, %v3460
      %v3462 = vshll.u32 %v3453, %v3460
      %v3463 = vshrl.u32 %v3445, %v3461
      %v3464 = vor.u32 %v3462, %v3463
      %v3465 = vsub.s32 4294967266, %v3460
      %v3466 = vadd.s32 %v3465, 127
      %v3467 = vshll.u32 %v3466, 23
      %v3468 = vor.u32 4788187, %v3467
      %v3469 = vand.u32 2147483647, %v3468
      %v3471 = vcvt.s32.f32 %v3464
      %v3472 = vmul.f32 %v3471, %v3469
      %v3473 = vxor.u32 %v3472, 2147483648
      %v3474 = vsel %vm3391, %v3473, %v3472
      %v3475 = vsub.s32 4, %v3451
      %v3476 = vsel %vm3391, %v3475, %v3451
      %v3477 = vsel %vm3390, %v1916, %v3474
      %v3478 = vsel %vm3390, 0, %v3476
      %v3479 = vcosq.f32.pop %v3477
      %v3480 = vsinq.f32.pop %v3477
      %vm3481 = vweird.f32 %v1916
      %v3482 = vand.u32 %v3478, 3
      %vm3483 = vcmp.lt.s32.totalorder %v3482, 2
      %vm3484 = vcmp.eq.s32.totalorder %v3482, 0
      %v3485 = vxor.u32 %v3480, 2147483648
      %v3486 = vsel %vm3484, %v3479, %v3485
      %vm3487 = vcmp.eq.s32.totalorder %v3482, 2
      %v3488 = vxor.u32 %v3479, 2147483648
      %v3489 = vsel %vm3487, %v3488, %v3480
      %v3490 = vsel %vm3483, %v3486, %v3489
      %v3491 = vsel %vm3481, nan, %v3490
      %v3492 = vand.u32 2147483647, %v1917
      %vm3493 = vcmp.le.f32.partialorder %v3492, 0.7853982
      %vm3494 = vcmp.lt.s32.totalorder %v1917, 0
      %v3495 = vand.u32 %v1917, 2139095040
      %v3496 = vshrl.u32 %v3495, 23
      %v3497 = vsub.s32 %v3496, 127
      %v3498 = vand.u32 2147483647, %v1917
      %v3499 = vand.u32 %v3498, 8388607
      %v3500 = vor.u32 %v3499, 8388608
      %v3501 = vsub.s32 0, %v3500
      %v3502 = vadd.s32 %v3497, 1
      %vm3503 = vcmp.gt.s32.totalorder %v3502, 0
      %v3504 = vsel %vm3503, %v3502, 0
      %v3505 = vshrl.u32 %v3504, 5
      %v3506 = vand.u32 %v3504, 31
      %v3507 = vsub.s32 32, %v3506
      %v3508 = vshrl.u32 683565275, %v3507
      %v3509 = vshll.u32 683565275, %v3506
      %v3510 = vshrl.u32 2475754826, %v3507
      %v3511 = vor.u32 %v3509, %v3510
      %v3512 = vshll.u32 2475754826, %v3506
      %v3513 = vshrl.u32 2131351028, %v3507
      %v3514 = vor.u32 %v3512, %v3513
      %v3515 = vshll.u32 2131351028, %v3506
      %v3516 = vshrl.u32 2102212464, %v3507
      %v3517 = vor.u32 %v3515, %v3516
      %v3518 = vshll.u32 2102212464, %v3506
      %v3519 = vshrl.u32 920167782, %v3507
      %v3520 = vor.u32 %v3518, %v3519
      %v3521 = vshll.u32 920167782, %v3506
      %v3522 = vshrl.u32 1326507024, %v3507
      %v3523 = vor.u32 %v3521, %v3522
      %vm3524 = vcmp.lt.s32.totalorder %v3505, 1
      %vm3525 = vcmp.lt.s32.totalorder %v3505, 2
      %vm3526 = vcmp.lt.s32.totalorder %v3505, 3
      %vm3527 = vcmp.lt.s32.totalorder %v3505, 4
      %v3528 = vsel %vm3524, %v3508, %v3511
      %v3529 = vsel %vm3527, %v3517, 2102212464
      %v3530 = vsel %vm3526, %v3514, %v3529
      %v3531 = vsel %vm3525, %v3528, %v3530
      %v3532 = vsel %vm3524, %v3511, %v3514
      %v3533 = vsel %vm3527, %v3520, 920167782
      %v3534 = vsel %vm3526, %v3517, %v3533
      %v3535 = vsel %vm3525, %v3532, %v3534
      %v3536 = vsel %vm3524, %v3514, %v3517
      %v3537 = vsel %vm3527, %v3523, 1326507024
      %v3538 = vsel %vm3526, %v3520, %v3537
      %v3539 = vsel %vm3525, %v3536, %v3538
      %v3540 = vshll.u32 %v3500, 8
      %v3541 = vmul.u32.u64.compose %v3540, %v3539
      %v3542 = vextract.low.u32 %v3541
      %v3543 = vextract.high.u32 %v3541
      %v3544 = vmul.u32.u64.compose %v3540, %v3535
      %v3545 = vextract.low.u32 %v3544
      %v3546 = vextract.high.u32 %v3544
      %v3547 = vmul.u32 %v3540, %v3531
      %v3548 = vadd.s32 %v3543, %v3545
      %vm3549 = vc.u32 %v3543, %v3545
      %v3550 = vadd.s32 %v3546, 1
      %v3551 = vsel %vm3549, %v3550, %v3546
      %v3552 = vadd.s32 %v3547, %v3551
      %v3553 = vadd.s32 %v3552, 536870912
      %v3554 = vshrl.u32 %v3553, 30
      %v3555 = vshll.u32 %v3554, 30
      %v3556 = vsub.s32 %v3552, %v3555
      %vm3557 = vcmp.lt.s32.totalorder %v3556, 0
      %v3558 = vsub.s32 0, %v3556
      %v3559 = vsel %vm3557, %v3558, %v3556
      %v3560 = vclz %v3559
      %v3561 = vsub.s32 %v3560, 2
      %vm3562 = vcmp.gt.s32.totalorder 0, %v3561
      %v3563 = vsel %vm3562, 0, %v3561
      %v3564 = vsub.s32 32, %v3563
      %v3565 = vshll.u32 %v3556, %v3563
      %v3566 = vshrl.u32 %v3548, %v3564
      %v3567 = vor.u32 %v3565, %v3566
      %v3568 = vsub.s32 4294967266, %v3563
      %v3569 = vadd.s32 %v3568, 127
      %v3570 = vshll.u32 %v3569, 23
      %v3571 = vor.u32 4788187, %v3570
      %v3572 = vand.u32 2147483647, %v3571
      %v3574 = vcvt.s32.f32 %v3567
      %v3575 = vmul.f32 %v3574, %v3572
      %v3576 = vxor.u32 %v3575, 2147483648
      %v3577 = vsel %vm3494, %v3576, %v3575
      %v3578 = vsub.s32 4, %v3554
      %v3579 = vsel %vm3494, %v3578, %v3554
      %v3580 = vsel %vm3493, %v1917, %v3577
      %v3581 = vsel %vm3493, 0, %v3579
      %v3582 = vcosq.f32.pop %v3580
      %v3583 = vsinq.f32.pop %v3580
      %vm3584 = vweird.f32 %v1917
      %v3585 = vand.u32 %v3581, 3
      %vm3586 = vcmp.lt.s32.totalorder %v3585, 2
      %vm3587 = vcmp.eq.s32.totalorder %v3585, 0
      %v3588 = vxor.u32 %v3583, 2147483648
      %v3589 = vsel %vm3587, %v3582, %v3588
      %vm3590 = vcmp.eq.s32.totalorder %v3585, 2
      %v3591 = vxor.u32 %v3582, 2147483648
      %v3592 = vsel %vm3590, %v3591, %v3583
      %v3593 = vsel %vm3586, %v3589, %v3592
      %v3594 = vsel %vm3584, nan, %v3593
      %v3595 = vand.u32 2147483647, %v1918
      %vm3596 = vcmp.le.f32.partialorder %v3595, 0.7853982
      %vm3597 = vcmp.lt.s32.totalorder %v1918, 0
      %v3598 = vand.u32 %v1918, 2139095040
      %v3599 = vshrl.u32 %v3598, 23
      %v3600 = vsub.s32 %v3599, 127
      %v3601 = vand.u32 2147483647, %v1918
      %v3602 = vand.u32 %v3601, 8388607
      %v3603 = vor.u32 %v3602, 8388608
      %v3604 = vsub.s32 0, %v3603
      %v3605 = vadd.s32 %v3600, 1
      %vm3606 = vcmp.gt.s32.totalorder %v3605, 0
      %v3607 = vsel %vm3606, %v3605, 0
      %v3608 = vshrl.u32 %v3607, 5
      %v3609 = vand.u32 %v3607, 31
      %v3610 = vsub.s32 32, %v3609
      %v3611 = vshrl.u32 683565275, %v3610
      %v3612 = vshll.u32 683565275, %v3609
      %v3613 = vshrl.u32 2475754826, %v3610
      %v3614 = vor.u32 %v3612, %v3613
      %v3615 = vshll.u32 2475754826, %v3609
      %v3616 = vshrl.u32 2131351028, %v3610
      %v3617 = vor.u32 %v3615, %v3616
      %v3618 = vshll.u32 2131351028, %v3609
      %v3619 = vshrl.u32 2102212464, %v3610
      %v3620 = vor.u32 %v3618, %v3619
      %v3621 = vshll.u32 2102212464, %v3609
      %v3622 = vshrl.u32 920167782, %v3610
      %v3623 = vor.u32 %v3621, %v3622
      %v3624 = vshll.u32 920167782, %v3609
      %v3625 = vshrl.u32 1326507024, %v3610
      %v3626 = vor.u32 %v3624, %v3625
      %vm3627 = vcmp.lt.s32.totalorder %v3608, 1
      %vm3628 = vcmp.lt.s32.totalorder %v3608, 2
      %vm3629 = vcmp.lt.s32.totalorder %v3608, 3
      %vm3630 = vcmp.lt.s32.totalorder %v3608, 4
      %v3631 = vsel %vm3627, %v3611, %v3614
      %v3632 = vsel %vm3630, %v3620, 2102212464
      %v3633 = vsel %vm3629, %v3617, %v3632
      %v3634 = vsel %vm3628, %v3631, %v3633
      %v3635 = vsel %vm3627, %v3614, %v3617
      %v3636 = vsel %vm3630, %v3623, 920167782
      %v3637 = vsel %vm3629, %v3620, %v3636
      %v3638 = vsel %vm3628, %v3635, %v3637
      %v3639 = vsel %vm3627, %v3617, %v3620
      %v3640 = vsel %vm3630, %v3626, 1326507024
      %v3641 = vsel %vm3629, %v3623, %v3640
      %v3642 = vsel %vm3628, %v3639, %v3641
      %v3643 = vshll.u32 %v3603, 8
      %v3644 = vmul.u32.u64.compose %v3643, %v3642
      %v3645 = vextract.low.u32 %v3644
      %v3646 = vextract.high.u32 %v3644
      %v3647 = vmul.u32.u64.compose %v3643, %v3638
      %v3648 = vextract.low.u32 %v3647
      %v3649 = vextract.high.u32 %v3647
      %v3650 = vmul.u32 %v3643, %v3634
      %v3651 = vadd.s32 %v3646, %v3648
      %vm3652 = vc.u32 %v3646, %v3648
      %v3653 = vadd.s32 %v3649, 1
      %v3654 = vsel %vm3652, %v3653, %v3649
      %v3655 = vadd.s32 %v3650, %v3654
      %v3656 = vadd.s32 %v3655, 536870912
      %v3657 = vshrl.u32 %v3656, 30
      %v3658 = vshll.u32 %v3657, 30
      %v3659 = vsub.s32 %v3655, %v3658
      %vm3660 = vcmp.lt.s32.totalorder %v3659, 0
      %v3661 = vsub.s32 0, %v3659
      %v3662 = vsel %vm3660, %v3661, %v3659
      %v3663 = vclz %v3662
      %v3664 = vsub.s32 %v3663, 2
      %vm3665 = vcmp.gt.s32.totalorder 0, %v3664
      %v3666 = vsel %vm3665, 0, %v3664
      %v3667 = vsub.s32 32, %v3666
      %v3668 = vshll.u32 %v3659, %v3666
      %v3669 = vshrl.u32 %v3651, %v3667
      %v3670 = vor.u32 %v3668, %v3669
      %v3671 = vsub.s32 4294967266, %v3666
      %v3672 = vadd.s32 %v3671, 127
      %v3673 = vshll.u32 %v3672, 23
      %v3674 = vor.u32 4788187, %v3673
      %v3675 = vand.u32 2147483647, %v3674
      %v3677 = vcvt.s32.f32 %v3670
      %v3678 = vmul.f32 %v3677, %v3675
      %v3679 = vxor.u32 %v3678, 2147483648
      %v3680 = vsel %vm3597, %v3679, %v3678
      %v3681 = vsub.s32 4, %v3657
      %v3682 = vsel %vm3597, %v3681, %v3657
      %v3683 = vsel %vm3596, %v1918, %v3680
      %v3684 = vsel %vm3596, 0, %v3682
      %v3685 = vcosq.f32.pop %v3683
      %v3686 = vsinq.f32.pop %v3683
      %vm3687 = vweird.f32 %v1918
      %v3688 = vand.u32 %v3684, 3
      %vm3689 = vcmp.lt.s32.totalorder %v3688, 2
      %vm3690 = vcmp.eq.s32.totalorder %v3688, 0
      %v3691 = vxor.u32 %v3686, 2147483648
      %v3692 = vsel %vm3690, %v3685, %v3691
      %vm3693 = vcmp.eq.s32.totalorder %v3688, 2
      %v3694 = vxor.u32 %v3685, 2147483648
      %v3695 = vsel %vm3693, %v3694, %v3686
      %v3696 = vsel %vm3689, %v3692, %v3695
      %v3697 = vsel %vm3687, nan, %v3696
      %v3698 = vand.u32 2147483647, %v1919
      %vm3699 = vcmp.le.f32.partialorder %v3698, 0.7853982
      %vm3700 = vcmp.lt.s32.totalorder %v1919, 0
      %v3701 = vand.u32 %v1919, 2139095040
      %v3702 = vshrl.u32 %v3701, 23
      %v3703 = vsub.s32 %v3702, 127
      %v3704 = vand.u32 2147483647, %v1919
      %v3705 = vand.u32 %v3704, 8388607
      %v3706 = vor.u32 %v3705, 8388608
      %v3707 = vsub.s32 0, %v3706
      %v3708 = vadd.s32 %v3703, 1
      %vm3709 = vcmp.gt.s32.totalorder %v3708, 0
      %v3710 = vsel %vm3709, %v3708, 0
      %v3711 = vshrl.u32 %v3710, 5
      %v3712 = vand.u32 %v3710, 31
      %v3713 = vsub.s32 32, %v3712
      %v3714 = vshrl.u32 683565275, %v3713
      %v3715 = vshll.u32 683565275, %v3712
      %v3716 = vshrl.u32 2475754826, %v3713
      %v3717 = vor.u32 %v3715, %v3716
      %v3718 = vshll.u32 2475754826, %v3712
      %v3719 = vshrl.u32 2131351028, %v3713
      %v3720 = vor.u32 %v3718, %v3719
      %v3721 = vshll.u32 2131351028, %v3712
      %v3722 = vshrl.u32 2102212464, %v3713
      %v3723 = vor.u32 %v3721, %v3722
      %v3724 = vshll.u32 2102212464, %v3712
      %v3725 = vshrl.u32 920167782, %v3713
      %v3726 = vor.u32 %v3724, %v3725
      %v3727 = vshll.u32 920167782, %v3712
      %v3728 = vshrl.u32 1326507024, %v3713
      %v3729 = vor.u32 %v3727, %v3728
      %vm3730 = vcmp.lt.s32.totalorder %v3711, 1
      %vm3731 = vcmp.lt.s32.totalorder %v3711, 2
      %vm3732 = vcmp.lt.s32.totalorder %v3711, 3
      %vm3733 = vcmp.lt.s32.totalorder %v3711, 4
      %v3734 = vsel %vm3730, %v3714, %v3717
      %v3735 = vsel %vm3733, %v3723, 2102212464
      %v3736 = vsel %vm3732, %v3720, %v3735
      %v3737 = vsel %vm3731, %v3734, %v3736
      %v3738 = vsel %vm3730, %v3717, %v3720
      %v3739 = vsel %vm3733, %v3726, 920167782
      %v3740 = vsel %vm3732, %v3723, %v3739
      %v3741 = vsel %vm3731, %v3738, %v3740
      %v3742 = vsel %vm3730, %v3720, %v3723
      %v3743 = vsel %vm3733, %v3729, 1326507024
      %v3744 = vsel %vm3732, %v3726, %v3743
      %v3745 = vsel %vm3731, %v3742, %v3744
      %v3746 = vshll.u32 %v3706, 8
      %v3747 = vmul.u32.u64.compose %v3746, %v3745
      %v3748 = vextract.low.u32 %v3747
      %v3749 = vextract.high.u32 %v3747
      %v3750 = vmul.u32.u64.compose %v3746, %v3741
      %v3751 = vextract.low.u32 %v3750
      %v3752 = vextract.high.u32 %v3750
      %v3753 = vmul.u32 %v3746, %v3737
      %v3754 = vadd.s32 %v3749, %v3751
      %vm3755 = vc.u32 %v3749, %v3751
      %v3756 = vadd.s32 %v3752, 1
      %v3757 = vsel %vm3755, %v3756, %v3752
      %v3758 = vadd.s32 %v3753, %v3757
      %v3759 = vadd.s32 %v3758, 536870912
      %v3760 = vshrl.u32 %v3759, 30
      %v3761 = vshll.u32 %v3760, 30
      %v3762 = vsub.s32 %v3758, %v3761
      %vm3763 = vcmp.lt.s32.totalorder %v3762, 0
      %v3764 = vsub.s32 0, %v3762
      %v3765 = vsel %vm3763, %v3764, %v3762
      %v3766 = vclz %v3765
      %v3767 = vsub.s32 %v3766, 2
      %vm3768 = vcmp.gt.s32.totalorder 0, %v3767
      %v3769 = vsel %vm3768, 0, %v3767
      %v3770 = vsub.s32 32, %v3769
      %v3771 = vshll.u32 %v3762, %v3769
      %v3772 = vshrl.u32 %v3754, %v3770
      %v3773 = vor.u32 %v3771, %v3772
      %v3774 = vsub.s32 4294967266, %v3769
      %v3775 = vadd.s32 %v3774, 127
      %v3776 = vshll.u32 %v3775, 23
      %v3777 = vor.u32 4788187, %v3776
      %v3778 = vand.u32 2147483647, %v3777
      %v3780 = vcvt.s32.f32 %v3773
      %v3781 = vmul.f32 %v3780, %v3778
      %v3782 = vxor.u32 %v3781, 2147483648
      %v3783 = vsel %vm3700, %v3782, %v3781
      %v3784 = vsub.s32 4, %v3760
      %v3785 = vsel %vm3700, %v3784, %v3760
      %v3786 = vsel %vm3699, %v1919, %v3783
      %v3787 = vsel %vm3699, 0, %v3785
      %v3788 = vcosq.f32.pop %v3786
      %v3789 = vsinq.f32.pop %v3786
      %vm3790 = vweird.f32 %v1919
      %v3791 = vand.u32 %v3787, 3
      %vm3792 = vcmp.lt.s32.totalorder %v3791, 2
      %vm3793 = vcmp.eq.s32.totalorder %v3791, 0
      %v3794 = vxor.u32 %v3789, 2147483648
      %v3795 = vsel %vm3793, %v3788, %v3794
      %vm3796 = vcmp.eq.s32.totalorder %v3791, 2
      %v3797 = vxor.u32 %v3788, 2147483648
      %v3798 = vsel %vm3796, %v3797, %v3789
      %v3799 = vsel %vm3792, %v3795, %v3798
      %v3800 = vsel %vm3790, nan, %v3799
      %v3801 = vand.u32 2147483647, %v1920
      %vm3802 = vcmp.le.f32.partialorder %v3801, 0.7853982
      %vm3803 = vcmp.lt.s32.totalorder %v1920, 0
      %v3804 = vand.u32 %v1920, 2139095040
      %v3805 = vshrl.u32 %v3804, 23
      %v3806 = vsub.s32 %v3805, 127
      %v3807 = vand.u32 2147483647, %v1920
      %v3808 = vand.u32 %v3807, 8388607
      %v3809 = vor.u32 %v3808, 8388608
      %v3810 = vsub.s32 0, %v3809
      %v3811 = vadd.s32 %v3806, 1
      %vm3812 = vcmp.gt.s32.totalorder %v3811, 0
      %v3813 = vsel %vm3812, %v3811, 0
      %v3814 = vshrl.u32 %v3813, 5
      %v3815 = vand.u32 %v3813, 31
      %v3816 = vsub.s32 32, %v3815
      %v3817 = vshrl.u32 683565275, %v3816
      %v3818 = vshll.u32 683565275, %v3815
      %v3819 = vshrl.u32 2475754826, %v3816
      %v3820 = vor.u32 %v3818, %v3819
      %v3821 = vshll.u32 2475754826, %v3815
      %v3822 = vshrl.u32 2131351028, %v3816
      %v3823 = vor.u32 %v3821, %v3822
      %v3824 = vshll.u32 2131351028, %v3815
      %v3825 = vshrl.u32 2102212464, %v3816
      %v3826 = vor.u32 %v3824, %v3825
      %v3827 = vshll.u32 2102212464, %v3815
      %v3828 = vshrl.u32 920167782, %v3816
      %v3829 = vor.u32 %v3827, %v3828
      %v3830 = vshll.u32 920167782, %v3815
      %v3831 = vshrl.u32 1326507024, %v3816
      %v3832 = vor.u32 %v3830, %v3831
      %vm3833 = vcmp.lt.s32.totalorder %v3814, 1
      %vm3834 = vcmp.lt.s32.totalorder %v3814, 2
      %vm3835 = vcmp.lt.s32.totalorder %v3814, 3
      %vm3836 = vcmp.lt.s32.totalorder %v3814, 4
      %v3837 = vsel %vm3833, %v3817, %v3820
      %v3838 = vsel %vm3836, %v3826, 2102212464
      %v3839 = vsel %vm3835, %v3823, %v3838
      %v3840 = vsel %vm3834, %v3837, %v3839
      %v3841 = vsel %vm3833, %v3820, %v3823
      %v3842 = vsel %vm3836, %v3829, 920167782
      %v3843 = vsel %vm3835, %v3826, %v3842
      %v3844 = vsel %vm3834, %v3841, %v3843
      %v3845 = vsel %vm3833, %v3823, %v3826
      %v3846 = vsel %vm3836, %v3832, 1326507024
      %v3847 = vsel %vm3835, %v3829, %v3846
      %v3848 = vsel %vm3834, %v3845, %v3847
      %v3849 = vshll.u32 %v3809, 8
      %v3850 = vmul.u32.u64.compose %v3849, %v3848
      %v3851 = vextract.low.u32 %v3850
      %v3852 = vextract.high.u32 %v3850
      %v3853 = vmul.u32.u64.compose %v3849, %v3844
      %v3854 = vextract.low.u32 %v3853
      %v3855 = vextract.high.u32 %v3853
      %v3856 = vmul.u32 %v3849, %v3840
      %v3857 = vadd.s32 %v3852, %v3854
      %vm3858 = vc.u32 %v3852, %v3854
      %v3859 = vadd.s32 %v3855, 1
      %v3860 = vsel %vm3858, %v3859, %v3855
      %v3861 = vadd.s32 %v3856, %v3860
      %v3862 = vadd.s32 %v3861, 536870912
      %v3863 = vshrl.u32 %v3862, 30
      %v3864 = vshll.u32 %v3863, 30
      %v3865 = vsub.s32 %v3861, %v3864
      %vm3866 = vcmp.lt.s32.totalorder %v3865, 0
      %v3867 = vsub.s32 0, %v3865
      %v3868 = vsel %vm3866, %v3867, %v3865
      %v3869 = vclz %v3868
      %v3870 = vsub.s32 %v3869, 2
      %vm3871 = vcmp.gt.s32.totalorder 0, %v3870
      %v3872 = vsel %vm3871, 0, %v3870
      %v3873 = vsub.s32 32, %v3872
      %v3874 = vshll.u32 %v3865, %v3872
      %v3875 = vshrl.u32 %v3857, %v3873
      %v3876 = vor.u32 %v3874, %v3875
      %v3877 = vsub.s32 4294967266, %v3872
      %v3878 = vadd.s32 %v3877, 127
      %v3879 = vshll.u32 %v3878, 23
      %v3880 = vor.u32 4788187, %v3879
      %v3881 = vand.u32 2147483647, %v3880
      %v3883 = vcvt.s32.f32 %v3876
      %v3884 = vmul.f32 %v3883, %v3881
      %v3885 = vxor.u32 %v3884, 2147483648
      %v3886 = vsel %vm3803, %v3885, %v3884
      %v3887 = vsub.s32 4, %v3863
      %v3888 = vsel %vm3803, %v3887, %v3863
      %v3889 = vsel %vm3802, %v1920, %v3886
      %v3890 = vsel %vm3802, 0, %v3888
      %v3891 = vcosq.f32.pop %v3889
      %v3892 = vsinq.f32.pop %v3889
      %vm3893 = vweird.f32 %v1920
      %v3894 = vand.u32 %v3890, 3
      %vm3895 = vcmp.lt.s32.totalorder %v3894, 2
      %vm3896 = vcmp.eq.s32.totalorder %v3894, 0
      %v3897 = vxor.u32 %v3892, 2147483648
      %v3898 = vsel %vm3896, %v3891, %v3897
      %vm3899 = vcmp.eq.s32.totalorder %v3894, 2
      %v3900 = vxor.u32 %v3891, 2147483648
      %v3901 = vsel %vm3899, %v3900, %v3892
      %v3902 = vsel %vm3895, %v3898, %v3901
      %v3903 = vsel %vm3893, nan, %v3902
      %v3904 = vand.u32 2147483647, %v1921
      %vm3905 = vcmp.le.f32.partialorder %v3904, 0.7853982
      %vm3906 = vcmp.lt.s32.totalorder %v1921, 0
      %v3907 = vand.u32 %v1921, 2139095040
      %v3908 = vshrl.u32 %v3907, 23
      %v3909 = vsub.s32 %v3908, 127
      %v3910 = vand.u32 2147483647, %v1921
      %v3911 = vand.u32 %v3910, 8388607
      %v3912 = vor.u32 %v3911, 8388608
      %v3913 = vsub.s32 0, %v3912
      %v3914 = vadd.s32 %v3909, 1
      %vm3915 = vcmp.gt.s32.totalorder %v3914, 0
      %v3916 = vsel %vm3915, %v3914, 0
      %v3917 = vshrl.u32 %v3916, 5
      %v3918 = vand.u32 %v3916, 31
      %v3919 = vsub.s32 32, %v3918
      %v3920 = vshrl.u32 683565275, %v3919
      %v3921 = vshll.u32 683565275, %v3918
      %v3922 = vshrl.u32 2475754826, %v3919
      %v3923 = vor.u32 %v3921, %v3922
      %v3924 = vshll.u32 2475754826, %v3918
      %v3925 = vshrl.u32 2131351028, %v3919
      %v3926 = vor.u32 %v3924, %v3925
      %v3927 = vshll.u32 2131351028, %v3918
      %v3928 = vshrl.u32 2102212464, %v3919
      %v3929 = vor.u32 %v3927, %v3928
      %v3930 = vshll.u32 2102212464, %v3918
      %v3931 = vshrl.u32 920167782, %v3919
      %v3932 = vor.u32 %v3930, %v3931
      %v3933 = vshll.u32 920167782, %v3918
      %v3934 = vshrl.u32 1326507024, %v3919
      %v3935 = vor.u32 %v3933, %v3934
      %vm3936 = vcmp.lt.s32.totalorder %v3917, 1
      %vm3937 = vcmp.lt.s32.totalorder %v3917, 2
      %vm3938 = vcmp.lt.s32.totalorder %v3917, 3
      %vm3939 = vcmp.lt.s32.totalorder %v3917, 4
      %v3940 = vsel %vm3936, %v3920, %v3923
      %v3941 = vsel %vm3939, %v3929, 2102212464
      %v3942 = vsel %vm3938, %v3926, %v3941
      %v3943 = vsel %vm3937, %v3940, %v3942
      %v3944 = vsel %vm3936, %v3923, %v3926
      %v3945 = vsel %vm3939, %v3932, 920167782
      %v3946 = vsel %vm3938, %v3929, %v3945
      %v3947 = vsel %vm3937, %v3944, %v3946
      %v3948 = vsel %vm3936, %v3926, %v3929
      %v3949 = vsel %vm3939, %v3935, 1326507024
      %v3950 = vsel %vm3938, %v3932, %v3949
      %v3951 = vsel %vm3937, %v3948, %v3950
      %v3952 = vshll.u32 %v3912, 8
      %v3953 = vmul.u32.u64.compose %v3952, %v3951
      %v3954 = vextract.low.u32 %v3953
      %v3955 = vextract.high.u32 %v3953
      %v3956 = vmul.u32.u64.compose %v3952, %v3947
      %v3957 = vextract.low.u32 %v3956
      %v3958 = vextract.high.u32 %v3956
      %v3959 = vmul.u32 %v3952, %v3943
      %v3960 = vadd.s32 %v3955, %v3957
      %vm3961 = vc.u32 %v3955, %v3957
      %v3962 = vadd.s32 %v3958, 1
      %v3963 = vsel %vm3961, %v3962, %v3958
      %v3964 = vadd.s32 %v3959, %v3963
      %v3965 = vadd.s32 %v3964, 536870912
      %v3966 = vshrl.u32 %v3965, 30
      %v3967 = vshll.u32 %v3966, 30
      %v3968 = vsub.s32 %v3964, %v3967
      %vm3969 = vcmp.lt.s32.totalorder %v3968, 0
      %v3970 = vsub.s32 0, %v3968
      %v3971 = vsel %vm3969, %v3970, %v3968
      %v3972 = vclz %v3971
      %v3973 = vsub.s32 %v3972, 2
      %vm3974 = vcmp.gt.s32.totalorder 0, %v3973
      %v3975 = vsel %vm3974, 0, %v3973
      %v3976 = vsub.s32 32, %v3975
      %v3977 = vshll.u32 %v3968, %v3975
      %v3978 = vshrl.u32 %v3960, %v3976
      %v3979 = vor.u32 %v3977, %v3978
      %v3980 = vsub.s32 4294967266, %v3975
      %v3981 = vadd.s32 %v3980, 127
      %v3982 = vshll.u32 %v3981, 23
      %v3983 = vor.u32 4788187, %v3982
      %v3984 = vand.u32 2147483647, %v3983
      %v3986 = vcvt.s32.f32 %v3979
      %v3987 = vmul.f32 %v3986, %v3984
      %v3988 = vxor.u32 %v3987, 2147483648
      %v3989 = vsel %vm3906, %v3988, %v3987
      %v3990 = vsub.s32 4, %v3966
      %v3991 = vsel %vm3906, %v3990, %v3966
      %v3992 = vsel %vm3905, %v1921, %v3989
      %v3993 = vsel %vm3905, 0, %v3991
      %v3994 = vcosq.f32.pop %v3992
      %v3995 = vsinq.f32.pop %v3992
      %vm3996 = vweird.f32 %v1921
      %v3997 = vand.u32 %v3993, 3
      %vm3998 = vcmp.lt.s32.totalorder %v3997, 2
      %vm3999 = vcmp.eq.s32.totalorder %v3997, 0
      %v4000 = vxor.u32 %v3995, 2147483648
      %v4001 = vsel %vm3999, %v3994, %v4000
      %vm4002 = vcmp.eq.s32.totalorder %v3997, 2
      %v4003 = vxor.u32 %v3994, 2147483648
      %v4004 = vsel %vm4002, %v4003, %v3995
      %v4005 = vsel %vm3998, %v4001, %v4004
      %v4006 = vsel %vm3996, nan, %v4005
      %v4007 = vand.u32 2147483647, %v1922
      %vm4008 = vcmp.le.f32.partialorder %v4007, 0.7853982
      %vm4009 = vcmp.lt.s32.totalorder %v1922, 0
      %v4010 = vand.u32 %v1922, 2139095040
      %v4011 = vshrl.u32 %v4010, 23
      %v4012 = vsub.s32 %v4011, 127
      %v4013 = vand.u32 2147483647, %v1922
      %v4014 = vand.u32 %v4013, 8388607
      %v4015 = vor.u32 %v4014, 8388608
      %v4016 = vsub.s32 0, %v4015
      %v4017 = vadd.s32 %v4012, 1
      %vm4018 = vcmp.gt.s32.totalorder %v4017, 0
      %v4019 = vsel %vm4018, %v4017, 0
      %v4020 = vshrl.u32 %v4019, 5
      %v4021 = vand.u32 %v4019, 31
      %v4022 = vsub.s32 32, %v4021
      %v4023 = vshrl.u32 683565275, %v4022
      %v4024 = vshll.u32 683565275, %v4021
      %v4025 = vshrl.u32 2475754826, %v4022
      %v4026 = vor.u32 %v4024, %v4025
      %v4027 = vshll.u32 2475754826, %v4021
      %v4028 = vshrl.u32 2131351028, %v4022
      %v4029 = vor.u32 %v4027, %v4028
      %v4030 = vshll.u32 2131351028, %v4021
      %v4031 = vshrl.u32 2102212464, %v4022
      %v4032 = vor.u32 %v4030, %v4031
      %v4033 = vshll.u32 2102212464, %v4021
      %v4034 = vshrl.u32 920167782, %v4022
      %v4035 = vor.u32 %v4033, %v4034
      %v4036 = vshll.u32 920167782, %v4021
      %v4037 = vshrl.u32 1326507024, %v4022
      %v4038 = vor.u32 %v4036, %v4037
      %vm4039 = vcmp.lt.s32.totalorder %v4020, 1
      %vm4040 = vcmp.lt.s32.totalorder %v4020, 2
      %vm4041 = vcmp.lt.s32.totalorder %v4020, 3
      %vm4042 = vcmp.lt.s32.totalorder %v4020, 4
      %v4043 = vsel %vm4039, %v4023, %v4026
      %v4044 = vsel %vm4042, %v4032, 2102212464
      %v4045 = vsel %vm4041, %v4029, %v4044
      %v4046 = vsel %vm4040, %v4043, %v4045
      %v4047 = vsel %vm4039, %v4026, %v4029
      %v4048 = vsel %vm4042, %v4035, 920167782
      %v4049 = vsel %vm4041, %v4032, %v4048
      %v4050 = vsel %vm4040, %v4047, %v4049
      %v4051 = vsel %vm4039, %v4029, %v4032
      %v4052 = vsel %vm4042, %v4038, 1326507024
      %v4053 = vsel %vm4041, %v4035, %v4052
      %v4054 = vsel %vm4040, %v4051, %v4053
      %v4055 = vshll.u32 %v4015, 8
      %v4056 = vmul.u32.u64.compose %v4055, %v4054
      %v4057 = vextract.low.u32 %v4056
      %v4058 = vextract.high.u32 %v4056
      %v4059 = vmul.u32.u64.compose %v4055, %v4050
      %v4060 = vextract.low.u32 %v4059
      %v4061 = vextract.high.u32 %v4059
      %v4062 = vmul.u32 %v4055, %v4046
      %v4063 = vadd.s32 %v4058, %v4060
      %vm4064 = vc.u32 %v4058, %v4060
      %v4065 = vadd.s32 %v4061, 1
      %v4066 = vsel %vm4064, %v4065, %v4061
      %v4067 = vadd.s32 %v4062, %v4066
      %v4068 = vadd.s32 %v4067, 536870912
      %v4069 = vshrl.u32 %v4068, 30
      %v4070 = vshll.u32 %v4069, 30
      %v4071 = vsub.s32 %v4067, %v4070
      %vm4072 = vcmp.lt.s32.totalorder %v4071, 0
      %v4073 = vsub.s32 0, %v4071
      %v4074 = vsel %vm4072, %v4073, %v4071
      %v4075 = vclz %v4074
      %v4076 = vsub.s32 %v4075, 2
      %vm4077 = vcmp.gt.s32.totalorder 0, %v4076
      %v4078 = vsel %vm4077, 0, %v4076
      %v4079 = vsub.s32 32, %v4078
      %v4080 = vshll.u32 %v4071, %v4078
      %v4081 = vshrl.u32 %v4063, %v4079
      %v4082 = vor.u32 %v4080, %v4081
      %v4083 = vsub.s32 4294967266, %v4078
      %v4084 = vadd.s32 %v4083, 127
      %v4085 = vshll.u32 %v4084, 23
      %v4086 = vor.u32 4788187, %v4085
      %v4087 = vand.u32 2147483647, %v4086
      %v4089 = vcvt.s32.f32 %v4082
      %v4090 = vmul.f32 %v4089, %v4087
      %v4091 = vxor.u32 %v4090, 2147483648
      %v4092 = vsel %vm4009, %v4091, %v4090
      %v4093 = vsub.s32 4, %v4069
      %v4094 = vsel %vm4009, %v4093, %v4069
      %v4095 = vsel %vm4008, %v1922, %v4092
      %v4096 = vsel %vm4008, 0, %v4094
      %v4097 = vcosq.f32.pop %v4095
      %v4098 = vsinq.f32.pop %v4095
      %vm4099 = vweird.f32 %v1922
      %v4100 = vand.u32 %v4096, 3
      %vm4101 = vcmp.lt.s32.totalorder %v4100, 2
      %vm4102 = vcmp.eq.s32.totalorder %v4100, 0
      %v4103 = vxor.u32 %v4098, 2147483648
      %v4104 = vsel %vm4102, %v4097, %v4103
      %vm4105 = vcmp.eq.s32.totalorder %v4100, 2
      %v4106 = vxor.u32 %v4097, 2147483648
      %v4107 = vsel %vm4105, %v4106, %v4098
      %v4108 = vsel %vm4101, %v4104, %v4107
      %v4109 = vsel %vm4099, nan, %v4108
      %v4110 = vand.u32 2147483647, %v1923
      %vm4111 = vcmp.le.f32.partialorder %v4110, 0.7853982
      %vm4112 = vcmp.lt.s32.totalorder %v1923, 0
      %v4113 = vand.u32 %v1923, 2139095040
      %v4114 = vshrl.u32 %v4113, 23
      %v4115 = vsub.s32 %v4114, 127
      %v4116 = vand.u32 2147483647, %v1923
      %v4117 = vand.u32 %v4116, 8388607
      %v4118 = vor.u32 %v4117, 8388608
      %v4119 = vsub.s32 0, %v4118
      %v4120 = vadd.s32 %v4115, 1
      %vm4121 = vcmp.gt.s32.totalorder %v4120, 0
      %v4122 = vsel %vm4121, %v4120, 0
      %v4123 = vshrl.u32 %v4122, 5
      %v4124 = vand.u32 %v4122, 31
      %v4125 = vsub.s32 32, %v4124
      %v4126 = vshrl.u32 683565275, %v4125
      %v4127 = vshll.u32 683565275, %v4124
      %v4128 = vshrl.u32 2475754826, %v4125
      %v4129 = vor.u32 %v4127, %v4128
      %v4130 = vshll.u32 2475754826, %v4124
      %v4131 = vshrl.u32 2131351028, %v4125
      %v4132 = vor.u32 %v4130, %v4131
      %v4133 = vshll.u32 2131351028, %v4124
      %v4134 = vshrl.u32 2102212464, %v4125
      %v4135 = vor.u32 %v4133, %v4134
      %v4136 = vshll.u32 2102212464, %v4124
      %v4137 = vshrl.u32 920167782, %v4125
      %v4138 = vor.u32 %v4136, %v4137
      %v4139 = vshll.u32 920167782, %v4124
      %v4140 = vshrl.u32 1326507024, %v4125
      %v4141 = vor.u32 %v4139, %v4140
      %vm4142 = vcmp.lt.s32.totalorder %v4123, 1
      %vm4143 = vcmp.lt.s32.totalorder %v4123, 2
      %vm4144 = vcmp.lt.s32.totalorder %v4123, 3
      %vm4145 = vcmp.lt.s32.totalorder %v4123, 4
      %v4146 = vsel %vm4142, %v4126, %v4129
      %v4147 = vsel %vm4145, %v4135, 2102212464
      %v4148 = vsel %vm4144, %v4132, %v4147
      %v4149 = vsel %vm4143, %v4146, %v4148
      %v4150 = vsel %vm4142, %v4129, %v4132
      %v4151 = vsel %vm4145, %v4138, 920167782
      %v4152 = vsel %vm4144, %v4135, %v4151
      %v4153 = vsel %vm4143, %v4150, %v4152
      %v4154 = vsel %vm4142, %v4132, %v4135
      %v4155 = vsel %vm4145, %v4141, 1326507024
      %v4156 = vsel %vm4144, %v4138, %v4155
      %v4157 = vsel %vm4143, %v4154, %v4156
      %v4158 = vshll.u32 %v4118, 8
      %v4159 = vmul.u32.u64.compose %v4158, %v4157
      %v4160 = vextract.low.u32 %v4159
      %v4161 = vextract.high.u32 %v4159
      %v4162 = vmul.u32.u64.compose %v4158, %v4153
      %v4163 = vextract.low.u32 %v4162
      %v4164 = vextract.high.u32 %v4162
      %v4165 = vmul.u32 %v4158, %v4149
      %v4166 = vadd.s32 %v4161, %v4163
      %vm4167 = vc.u32 %v4161, %v4163
      %v4168 = vadd.s32 %v4164, 1
      %v4169 = vsel %vm4167, %v4168, %v4164
      %v4170 = vadd.s32 %v4165, %v4169
      %v4171 = vadd.s32 %v4170, 536870912
      %v4172 = vshrl.u32 %v4171, 30
      %v4173 = vshll.u32 %v4172, 30
      %v4174 = vsub.s32 %v4170, %v4173
      %vm4175 = vcmp.lt.s32.totalorder %v4174, 0
      %v4176 = vsub.s32 0, %v4174
      %v4177 = vsel %vm4175, %v4176, %v4174
      %v4178 = vclz %v4177
      %v4179 = vsub.s32 %v4178, 2
      %vm4180 = vcmp.gt.s32.totalorder 0, %v4179
      %v4181 = vsel %vm4180, 0, %v4179
      %v4182 = vsub.s32 32, %v4181
      %v4183 = vshll.u32 %v4174, %v4181
      %v4184 = vshrl.u32 %v4166, %v4182
      %v4185 = vor.u32 %v4183, %v4184
      %v4186 = vsub.s32 4294967266, %v4181
      %v4187 = vadd.s32 %v4186, 127
      %v4188 = vshll.u32 %v4187, 23
      %v4189 = vor.u32 4788187, %v4188
      %v4190 = vand.u32 2147483647, %v4189
      %v4192 = vcvt.s32.f32 %v4185
      %v4193 = vmul.f32 %v4192, %v4190
      %v4194 = vxor.u32 %v4193, 2147483648
      %v4195 = vsel %vm4112, %v4194, %v4193
      %v4196 = vsub.s32 4, %v4172
      %v4197 = vsel %vm4112, %v4196, %v4172
      %v4198 = vsel %vm4111, %v1923, %v4195
      %v4199 = vsel %vm4111, 0, %v4197
      %v4200 = vcosq.f32.pop %v4198
      %v4201 = vsinq.f32.pop %v4198
      %vm4202 = vweird.f32 %v1923
      %v4203 = vand.u32 %v4199, 3
      %vm4204 = vcmp.lt.s32.totalorder %v4203, 2
      %vm4205 = vcmp.eq.s32.totalorder %v4203, 0
      %v4206 = vxor.u32 %v4201, 2147483648
      %v4207 = vsel %vm4205, %v4200, %v4206
      %vm4208 = vcmp.eq.s32.totalorder %v4203, 2
      %v4209 = vxor.u32 %v4200, 2147483648
      %v4210 = vsel %vm4208, %v4209, %v4201
      %v4211 = vsel %vm4204, %v4207, %v4210
      %v4212 = vsel %vm4202, nan, %v4211
      %v4213 = vand.u32 2147483647, %v1924
      %vm4214 = vcmp.le.f32.partialorder %v4213, 0.7853982
      %vm4215 = vcmp.lt.s32.totalorder %v1924, 0
      %v4216 = vand.u32 %v1924, 2139095040
      %v4217 = vshrl.u32 %v4216, 23
      %v4218 = vsub.s32 %v4217, 127
      %v4219 = vand.u32 2147483647, %v1924
      %v4220 = vand.u32 %v4219, 8388607
      %v4221 = vor.u32 %v4220, 8388608
      %v4222 = vsub.s32 0, %v4221
      %v4223 = vadd.s32 %v4218, 1
      %vm4224 = vcmp.gt.s32.totalorder %v4223, 0
      %v4225 = vsel %vm4224, %v4223, 0
      %v4226 = vshrl.u32 %v4225, 5
      %v4227 = vand.u32 %v4225, 31
      %v4228 = vsub.s32 32, %v4227
      %v4229 = vshrl.u32 683565275, %v4228
      %v4230 = vshll.u32 683565275, %v4227
      %v4231 = vshrl.u32 2475754826, %v4228
      %v4232 = vor.u32 %v4230, %v4231
      %v4233 = vshll.u32 2475754826, %v4227
      %v4234 = vshrl.u32 2131351028, %v4228
      %v4235 = vor.u32 %v4233, %v4234
      %v4236 = vshll.u32 2131351028, %v4227
      %v4237 = vshrl.u32 2102212464, %v4228
      %v4238 = vor.u32 %v4236, %v4237
      %v4239 = vshll.u32 2102212464, %v4227
      %v4240 = vshrl.u32 920167782, %v4228
      %v4241 = vor.u32 %v4239, %v4240
      %v4242 = vshll.u32 920167782, %v4227
      %v4243 = vshrl.u32 1326507024, %v4228
      %v4244 = vor.u32 %v4242, %v4243
      %vm4245 = vcmp.lt.s32.totalorder %v4226, 1
      %vm4246 = vcmp.lt.s32.totalorder %v4226, 2
      %vm4247 = vcmp.lt.s32.totalorder %v4226, 3
      %vm4248 = vcmp.lt.s32.totalorder %v4226, 4
      %v4249 = vsel %vm4245, %v4229, %v4232
      %v4250 = vsel %vm4248, %v4238, 2102212464
      %v4251 = vsel %vm4247, %v4235, %v4250
      %v4252 = vsel %vm4246, %v4249, %v4251
      %v4253 = vsel %vm4245, %v4232, %v4235
      %v4254 = vsel %vm4248, %v4241, 920167782
      %v4255 = vsel %vm4247, %v4238, %v4254
      %v4256 = vsel %vm4246, %v4253, %v4255
      %v4257 = vsel %vm4245, %v4235, %v4238
      %v4258 = vsel %vm4248, %v4244, 1326507024
      %v4259 = vsel %vm4247, %v4241, %v4258
      %v4260 = vsel %vm4246, %v4257, %v4259
      %v4261 = vshll.u32 %v4221, 8
      %v4262 = vmul.u32.u64.compose %v4261, %v4260
      %v4263 = vextract.low.u32 %v4262
      %v4264 = vextract.high.u32 %v4262
      %v4265 = vmul.u32.u64.compose %v4261, %v4256
      %v4266 = vextract.low.u32 %v4265
      %v4267 = vextract.high.u32 %v4265
      %v4268 = vmul.u32 %v4261, %v4252
      %v4269 = vadd.s32 %v4264, %v4266
      %vm4270 = vc.u32 %v4264, %v4266
      %v4271 = vadd.s32 %v4267, 1
      %v4272 = vsel %vm4270, %v4271, %v4267
      %v4273 = vadd.s32 %v4268, %v4272
      %v4274 = vadd.s32 %v4273, 536870912
      %v4275 = vshrl.u32 %v4274, 30
      %v4276 = vshll.u32 %v4275, 30
      %v4277 = vsub.s32 %v4273, %v4276
      %vm4278 = vcmp.lt.s32.totalorder %v4277, 0
      %v4279 = vsub.s32 0, %v4277
      %v4280 = vsel %vm4278, %v4279, %v4277
      %v4281 = vclz %v4280
      %v4282 = vsub.s32 %v4281, 2
      %vm4283 = vcmp.gt.s32.totalorder 0, %v4282
      %v4284 = vsel %vm4283, 0, %v4282
      %v4285 = vsub.s32 32, %v4284
      %v4286 = vshll.u32 %v4277, %v4284
      %v4287 = vshrl.u32 %v4269, %v4285
      %v4288 = vor.u32 %v4286, %v4287
      %v4289 = vsub.s32 4294967266, %v4284
      %v4290 = vadd.s32 %v4289, 127
      %v4291 = vshll.u32 %v4290, 23
      %v4292 = vor.u32 4788187, %v4291
      %v4293 = vand.u32 2147483647, %v4292
      %v4295 = vcvt.s32.f32 %v4288
      %v4296 = vmul.f32 %v4295, %v4293
      %v4297 = vxor.u32 %v4296, 2147483648
      %v4298 = vsel %vm4215, %v4297, %v4296
      %v4299 = vsub.s32 4, %v4275
      %v4300 = vsel %vm4215, %v4299, %v4275
      %v4301 = vsel %vm4214, %v1924, %v4298
      %v4302 = vsel %vm4214, 0, %v4300
      %v4303 = vcosq.f32.pop %v4301
      %v4304 = vsinq.f32.pop %v4301
      %vm4305 = vweird.f32 %v1924
      %v4306 = vand.u32 %v4302, 3
      %vm4307 = vcmp.lt.s32.totalorder %v4306, 2
      %vm4308 = vcmp.eq.s32.totalorder %v4306, 0
      %v4309 = vxor.u32 %v4304, 2147483648
      %v4310 = vsel %vm4308, %v4303, %v4309
      %vm4311 = vcmp.eq.s32.totalorder %v4306, 2
      %v4312 = vxor.u32 %v4303, 2147483648
      %v4313 = vsel %vm4311, %v4312, %v4304
      %v4314 = vsel %vm4307, %v4310, %v4313
      %v4315 = vsel %vm4305, nan, %v4314
      %v4316 = vand.u32 2147483647, %v1925
      %vm4317 = vcmp.le.f32.partialorder %v4316, 0.7853982
      %vm4318 = vcmp.lt.s32.totalorder %v1925, 0
      %v4319 = vand.u32 %v1925, 2139095040
      %v4320 = vshrl.u32 %v4319, 23
      %v4321 = vsub.s32 %v4320, 127
      %v4322 = vand.u32 2147483647, %v1925
      %v4323 = vand.u32 %v4322, 8388607
      %v4324 = vor.u32 %v4323, 8388608
      %v4325 = vsub.s32 0, %v4324
      %v4326 = vadd.s32 %v4321, 1
      %vm4327 = vcmp.gt.s32.totalorder %v4326, 0
      %v4328 = vsel %vm4327, %v4326, 0
      %v4329 = vshrl.u32 %v4328, 5
      %v4330 = vand.u32 %v4328, 31
      %v4331 = vsub.s32 32, %v4330
      %v4332 = vshrl.u32 683565275, %v4331
      %v4333 = vshll.u32 683565275, %v4330
      %v4334 = vshrl.u32 2475754826, %v4331
      %v4335 = vor.u32 %v4333, %v4334
      %v4336 = vshll.u32 2475754826, %v4330
      %v4337 = vshrl.u32 2131351028, %v4331
      %v4338 = vor.u32 %v4336, %v4337
      %v4339 = vshll.u32 2131351028, %v4330
      %v4340 = vshrl.u32 2102212464, %v4331
      %v4341 = vor.u32 %v4339, %v4340
      %v4342 = vshll.u32 2102212464, %v4330
      %v4343 = vshrl.u32 920167782, %v4331
      %v4344 = vor.u32 %v4342, %v4343
      %v4345 = vshll.u32 920167782, %v4330
      %v4346 = vshrl.u32 1326507024, %v4331
      %v4347 = vor.u32 %v4345, %v4346
      %vm4348 = vcmp.lt.s32.totalorder %v4329, 1
      %vm4349 = vcmp.lt.s32.totalorder %v4329, 2
      %vm4350 = vcmp.lt.s32.totalorder %v4329, 3
      %vm4351 = vcmp.lt.s32.totalorder %v4329, 4
      %v4352 = vsel %vm4348, %v4332, %v4335
      %v4353 = vsel %vm4351, %v4341, 2102212464
      %v4354 = vsel %vm4350, %v4338, %v4353
      %v4355 = vsel %vm4349, %v4352, %v4354
      %v4356 = vsel %vm4348, %v4335, %v4338
      %v4357 = vsel %vm4351, %v4344, 920167782
      %v4358 = vsel %vm4350, %v4341, %v4357
      %v4359 = vsel %vm4349, %v4356, %v4358
      %v4360 = vsel %vm4348, %v4338, %v4341
      %v4361 = vsel %vm4351, %v4347, 1326507024
      %v4362 = vsel %vm4350, %v4344, %v4361
      %v4363 = vsel %vm4349, %v4360, %v4362
      %v4364 = vshll.u32 %v4324, 8
      %v4365 = vmul.u32.u64.compose %v4364, %v4363
      %v4366 = vextract.low.u32 %v4365
      %v4367 = vextract.high.u32 %v4365
      %v4368 = vmul.u32.u64.compose %v4364, %v4359
      %v4369 = vextract.low.u32 %v4368
      %v4370 = vextract.high.u32 %v4368
      %v4371 = vmul.u32 %v4364, %v4355
      %v4372 = vadd.s32 %v4367, %v4369
      %vm4373 = vc.u32 %v4367, %v4369
      %v4374 = vadd.s32 %v4370, 1
      %v4375 = vsel %vm4373, %v4374, %v4370
      %v4376 = vadd.s32 %v4371, %v4375
      %v4377 = vadd.s32 %v4376, 536870912
      %v4378 = vshrl.u32 %v4377, 30
      %v4379 = vshll.u32 %v4378, 30
      %v4380 = vsub.s32 %v4376, %v4379
      %vm4381 = vcmp.lt.s32.totalorder %v4380, 0
      %v4382 = vsub.s32 0, %v4380
      %v4383 = vsel %vm4381, %v4382, %v4380
      %v4384 = vclz %v4383
      %v4385 = vsub.s32 %v4384, 2
      %vm4386 = vcmp.gt.s32.totalorder 0, %v4385
      %v4387 = vsel %vm4386, 0, %v4385
      %v4388 = vsub.s32 32, %v4387
      %v4389 = vshll.u32 %v4380, %v4387
      %v4390 = vshrl.u32 %v4372, %v4388
      %v4391 = vor.u32 %v4389, %v4390
      %v4392 = vsub.s32 4294967266, %v4387
      %v4393 = vadd.s32 %v4392, 127
      %v4394 = vshll.u32 %v4393, 23
      %v4395 = vor.u32 4788187, %v4394
      %v4396 = vand.u32 2147483647, %v4395
      %v4398 = vcvt.s32.f32 %v4391
      %v4399 = vmul.f32 %v4398, %v4396
      %v4400 = vxor.u32 %v4399, 2147483648
      %v4401 = vsel %vm4318, %v4400, %v4399
      %v4402 = vsub.s32 4, %v4378
      %v4403 = vsel %vm4318, %v4402, %v4378
      %v4404 = vsel %vm4317, %v1925, %v4401
      %v4405 = vsel %vm4317, 0, %v4403
      %v4406 = vcosq.f32.pop %v4404
      %v4407 = vsinq.f32.pop %v4404
      %vm4408 = vweird.f32 %v1925
      %v4409 = vand.u32 %v4405, 3
      %vm4410 = vcmp.lt.s32.totalorder %v4409, 2
      %vm4411 = vcmp.eq.s32.totalorder %v4409, 0
      %v4412 = vxor.u32 %v4407, 2147483648
      %v4413 = vsel %vm4411, %v4406, %v4412
      %vm4414 = vcmp.eq.s32.totalorder %v4409, 2
      %v4415 = vxor.u32 %v4406, 2147483648
      %v4416 = vsel %vm4414, %v4415, %v4407
      %v4417 = vsel %vm4410, %v4413, %v4416
      %v4418 = vsel %vm4408, nan, %v4417
      %v4419 = vand.u32 2147483647, %v1926
      %vm4420 = vcmp.le.f32.partialorder %v4419, 0.7853982
      %vm4421 = vcmp.lt.s32.totalorder %v1926, 0
      %v4422 = vand.u32 %v1926, 2139095040
      %v4423 = vshrl.u32 %v4422, 23
      %v4424 = vsub.s32 %v4423, 127
      %v4425 = vand.u32 2147483647, %v1926
      %v4426 = vand.u32 %v4425, 8388607
      %v4427 = vor.u32 %v4426, 8388608
      %v4428 = vsub.s32 0, %v4427
      %v4429 = vadd.s32 %v4424, 1
      %vm4430 = vcmp.gt.s32.totalorder %v4429, 0
      %v4431 = vsel %vm4430, %v4429, 0
      %v4432 = vshrl.u32 %v4431, 5
      %v4433 = vand.u32 %v4431, 31
      %v4434 = vsub.s32 32, %v4433
      %v4435 = vshrl.u32 683565275, %v4434
      %v4436 = vshll.u32 683565275, %v4433
      %v4437 = vshrl.u32 2475754826, %v4434
      %v4438 = vor.u32 %v4436, %v4437
      %v4439 = vshll.u32 2475754826, %v4433
      %v4440 = vshrl.u32 2131351028, %v4434
      %v4441 = vor.u32 %v4439, %v4440
      %v4442 = vshll.u32 2131351028, %v4433
      %v4443 = vshrl.u32 2102212464, %v4434
      %v4444 = vor.u32 %v4442, %v4443
      %v4445 = vshll.u32 2102212464, %v4433
      %v4446 = vshrl.u32 920167782, %v4434
      %v4447 = vor.u32 %v4445, %v4446
      %v4448 = vshll.u32 920167782, %v4433
      %v4449 = vshrl.u32 1326507024, %v4434
      %v4450 = vor.u32 %v4448, %v4449
      %vm4451 = vcmp.lt.s32.totalorder %v4432, 1
      %vm4452 = vcmp.lt.s32.totalorder %v4432, 2
      %vm4453 = vcmp.lt.s32.totalorder %v4432, 3
      %vm4454 = vcmp.lt.s32.totalorder %v4432, 4
      %v4455 = vsel %vm4451, %v4435, %v4438
      %v4456 = vsel %vm4454, %v4444, 2102212464
      %v4457 = vsel %vm4453, %v4441, %v4456
      %v4458 = vsel %vm4452, %v4455, %v4457
      %v4459 = vsel %vm4451, %v4438, %v4441
      %v4460 = vsel %vm4454, %v4447, 920167782
      %v4461 = vsel %vm4453, %v4444, %v4460
      %v4462 = vsel %vm4452, %v4459, %v4461
      %v4463 = vsel %vm4451, %v4441, %v4444
      %v4464 = vsel %vm4454, %v4450, 1326507024
      %v4465 = vsel %vm4453, %v4447, %v4464
      %v4466 = vsel %vm4452, %v4463, %v4465
      %v4467 = vshll.u32 %v4427, 8
      %v4468 = vmul.u32.u64.compose %v4467, %v4466
      %v4469 = vextract.low.u32 %v4468
      %v4470 = vextract.high.u32 %v4468
      %v4471 = vmul.u32.u64.compose %v4467, %v4462
      %v4472 = vextract.low.u32 %v4471
      %v4473 = vextract.high.u32 %v4471
      %v4474 = vmul.u32 %v4467, %v4458
      %v4475 = vadd.s32 %v4470, %v4472
      %vm4476 = vc.u32 %v4470, %v4472
      %v4477 = vadd.s32 %v4473, 1
      %v4478 = vsel %vm4476, %v4477, %v4473
      %v4479 = vadd.s32 %v4474, %v4478
      %v4480 = vadd.s32 %v4479, 536870912
      %v4481 = vshrl.u32 %v4480, 30
      %v4482 = vshll.u32 %v4481, 30
      %v4483 = vsub.s32 %v4479, %v4482
      %vm4484 = vcmp.lt.s32.totalorder %v4483, 0
      %v4485 = vsub.s32 0, %v4483
      %v4486 = vsel %vm4484, %v4485, %v4483
      %v4487 = vclz %v4486
      %v4488 = vsub.s32 %v4487, 2
      %vm4489 = vcmp.gt.s32.totalorder 0, %v4488
      %v4490 = vsel %vm4489, 0, %v4488
      %v4491 = vsub.s32 32, %v4490
      %v4492 = vshll.u32 %v4483, %v4490
      %v4493 = vshrl.u32 %v4475, %v4491
      %v4494 = vor.u32 %v4492, %v4493
      %v4495 = vsub.s32 4294967266, %v4490
      %v4496 = vadd.s32 %v4495, 127
      %v4497 = vshll.u32 %v4496, 23
      %v4498 = vor.u32 4788187, %v4497
      %v4499 = vand.u32 2147483647, %v4498
      %v4501 = vcvt.s32.f32 %v4494
      %v4502 = vmul.f32 %v4501, %v4499
      %v4503 = vxor.u32 %v4502, 2147483648
      %v4504 = vsel %vm4421, %v4503, %v4502
      %v4505 = vsub.s32 4, %v4481
      %v4506 = vsel %vm4421, %v4505, %v4481
      %v4507 = vsel %vm4420, %v1926, %v4504
      %v4508 = vsel %vm4420, 0, %v4506
      %v4509 = vcosq.f32.pop %v4507
      %v4510 = vsinq.f32.pop %v4507
      %vm4511 = vweird.f32 %v1926
      %v4512 = vand.u32 %v4508, 3
      %vm4513 = vcmp.lt.s32.totalorder %v4512, 2
      %vm4514 = vcmp.eq.s32.totalorder %v4512, 0
      %v4515 = vxor.u32 %v4510, 2147483648
      %v4516 = vsel %vm4514, %v4509, %v4515
      %vm4517 = vcmp.eq.s32.totalorder %v4512, 2
      %v4518 = vxor.u32 %v4509, 2147483648
      %v4519 = vsel %vm4517, %v4518, %v4510
      %v4520 = vsel %vm4513, %v4516, %v4519
      %v4521 = vsel %vm4511, nan, %v4520
      %v4522 = vand.u32 2147483647, %v1927
      %vm4523 = vcmp.le.f32.partialorder %v4522, 0.7853982
      %vm4524 = vcmp.lt.s32.totalorder %v1927, 0
      %v4525 = vand.u32 %v1927, 2139095040
      %v4526 = vshrl.u32 %v4525, 23
      %v4527 = vsub.s32 %v4526, 127
      %v4528 = vand.u32 2147483647, %v1927
      %v4529 = vand.u32 %v4528, 8388607
      %v4530 = vor.u32 %v4529, 8388608
      %v4531 = vsub.s32 0, %v4530
      %v4532 = vadd.s32 %v4527, 1
      %vm4533 = vcmp.gt.s32.totalorder %v4532, 0
      %v4534 = vsel %vm4533, %v4532, 0
      %v4535 = vshrl.u32 %v4534, 5
      %v4536 = vand.u32 %v4534, 31
      %v4537 = vsub.s32 32, %v4536
      %v4538 = vshrl.u32 683565275, %v4537
      %v4539 = vshll.u32 683565275, %v4536
      %v4540 = vshrl.u32 2475754826, %v4537
      %v4541 = vor.u32 %v4539, %v4540
      %v4542 = vshll.u32 2475754826, %v4536
      %v4543 = vshrl.u32 2131351028, %v4537
      %v4544 = vor.u32 %v4542, %v4543
      %v4545 = vshll.u32 2131351028, %v4536
      %v4546 = vshrl.u32 2102212464, %v4537
      %v4547 = vor.u32 %v4545, %v4546
      %v4548 = vshll.u32 2102212464, %v4536
      %v4549 = vshrl.u32 920167782, %v4537
      %v4550 = vor.u32 %v4548, %v4549
      %v4551 = vshll.u32 920167782, %v4536
      %v4552 = vshrl.u32 1326507024, %v4537
      %v4553 = vor.u32 %v4551, %v4552
      %vm4554 = vcmp.lt.s32.totalorder %v4535, 1
      %vm4555 = vcmp.lt.s32.totalorder %v4535, 2
      %vm4556 = vcmp.lt.s32.totalorder %v4535, 3
      %vm4557 = vcmp.lt.s32.totalorder %v4535, 4
      %v4558 = vsel %vm4554, %v4538, %v4541
      %v4559 = vsel %vm4557, %v4547, 2102212464
      %v4560 = vsel %vm4556, %v4544, %v4559
      %v4561 = vsel %vm4555, %v4558, %v4560
      %v4562 = vsel %vm4554, %v4541, %v4544
      %v4563 = vsel %vm4557, %v4550, 920167782
      %v4564 = vsel %vm4556, %v4547, %v4563
      %v4565 = vsel %vm4555, %v4562, %v4564
      %v4566 = vsel %vm4554, %v4544, %v4547
      %v4567 = vsel %vm4557, %v4553, 1326507024
      %v4568 = vsel %vm4556, %v4550, %v4567
      %v4569 = vsel %vm4555, %v4566, %v4568
      %v4570 = vshll.u32 %v4530, 8
      %v4571 = vmul.u32.u64.compose %v4570, %v4569
      %v4572 = vextract.low.u32 %v4571
      %v4573 = vextract.high.u32 %v4571
      %v4574 = vmul.u32.u64.compose %v4570, %v4565
      %v4575 = vextract.low.u32 %v4574
      %v4576 = vextract.high.u32 %v4574
      %v4577 = vmul.u32 %v4570, %v4561
      %v4578 = vadd.s32 %v4573, %v4575
      %vm4579 = vc.u32 %v4573, %v4575
      %v4580 = vadd.s32 %v4576, 1
      %v4581 = vsel %vm4579, %v4580, %v4576
      %v4582 = vadd.s32 %v4577, %v4581
      %v4583 = vadd.s32 %v4582, 536870912
      %v4584 = vshrl.u32 %v4583, 30
      %v4585 = vshll.u32 %v4584, 30
      %v4586 = vsub.s32 %v4582, %v4585
      %vm4587 = vcmp.lt.s32.totalorder %v4586, 0
      %v4588 = vsub.s32 0, %v4586
      %v4589 = vsel %vm4587, %v4588, %v4586
      %v4590 = vclz %v4589
      %v4591 = vsub.s32 %v4590, 2
      %vm4592 = vcmp.gt.s32.totalorder 0, %v4591
      %v4593 = vsel %vm4592, 0, %v4591
      %v4594 = vsub.s32 32, %v4593
      %v4595 = vshll.u32 %v4586, %v4593
      %v4596 = vshrl.u32 %v4578, %v4594
      %v4597 = vor.u32 %v4595, %v4596
      %v4598 = vsub.s32 4294967266, %v4593
      %v4599 = vadd.s32 %v4598, 127
      %v4600 = vshll.u32 %v4599, 23
      %v4601 = vor.u32 4788187, %v4600
      %v4602 = vand.u32 2147483647, %v4601
      %v4604 = vcvt.s32.f32 %v4597
      %v4605 = vmul.f32 %v4604, %v4602
      %v4606 = vxor.u32 %v4605, 2147483648
      %v4607 = vsel %vm4524, %v4606, %v4605
      %v4608 = vsub.s32 4, %v4584
      %v4609 = vsel %vm4524, %v4608, %v4584
      %v4610 = vsel %vm4523, %v1927, %v4607
      %v4611 = vsel %vm4523, 0, %v4609
      %v4612 = vcosq.f32.pop %v4610
      %v4613 = vsinq.f32.pop %v4610
      %vm4614 = vweird.f32 %v1927
      %v4615 = vand.u32 %v4611, 3
      %vm4616 = vcmp.lt.s32.totalorder %v4615, 2
      %vm4617 = vcmp.eq.s32.totalorder %v4615, 0
      %v4618 = vxor.u32 %v4613, 2147483648
      %v4619 = vsel %vm4617, %v4612, %v4618
      %vm4620 = vcmp.eq.s32.totalorder %v4615, 2
      %v4621 = vxor.u32 %v4612, 2147483648
      %v4622 = vsel %vm4620, %v4621, %v4613
      %v4623 = vsel %vm4616, %v4619, %v4622
      %v4624 = vsel %vm4614, nan, %v4623
      %v4625 = vand.u32 2147483647, %v1928
      %vm4626 = vcmp.le.f32.partialorder %v4625, 0.7853982
      %vm4627 = vcmp.lt.s32.totalorder %v1928, 0
      %v4628 = vand.u32 %v1928, 2139095040
      %v4629 = vshrl.u32 %v4628, 23
      %v4630 = vsub.s32 %v4629, 127
      %v4631 = vand.u32 2147483647, %v1928
      %v4632 = vand.u32 %v4631, 8388607
      %v4633 = vor.u32 %v4632, 8388608
      %v4634 = vsub.s32 0, %v4633
      %v4635 = vadd.s32 %v4630, 1
      %vm4636 = vcmp.gt.s32.totalorder %v4635, 0
      %v4637 = vsel %vm4636, %v4635, 0
      %v4638 = vshrl.u32 %v4637, 5
      %v4639 = vand.u32 %v4637, 31
      %v4640 = vsub.s32 32, %v4639
      %v4641 = vshrl.u32 683565275, %v4640
      %v4642 = vshll.u32 683565275, %v4639
      %v4643 = vshrl.u32 2475754826, %v4640
      %v4644 = vor.u32 %v4642, %v4643
      %v4645 = vshll.u32 2475754826, %v4639
      %v4646 = vshrl.u32 2131351028, %v4640
      %v4647 = vor.u32 %v4645, %v4646
      %v4648 = vshll.u32 2131351028, %v4639
      %v4649 = vshrl.u32 2102212464, %v4640
      %v4650 = vor.u32 %v4648, %v4649
      %v4651 = vshll.u32 2102212464, %v4639
      %v4652 = vshrl.u32 920167782, %v4640
      %v4653 = vor.u32 %v4651, %v4652
      %v4654 = vshll.u32 920167782, %v4639
      %v4655 = vshrl.u32 1326507024, %v4640
      %v4656 = vor.u32 %v4654, %v4655
      %vm4657 = vcmp.lt.s32.totalorder %v4638, 1
      %vm4658 = vcmp.lt.s32.totalorder %v4638, 2
      %vm4659 = vcmp.lt.s32.totalorder %v4638, 3
      %vm4660 = vcmp.lt.s32.totalorder %v4638, 4
      %v4661 = vsel %vm4657, %v4641, %v4644
      %v4662 = vsel %vm4660, %v4650, 2102212464
      %v4663 = vsel %vm4659, %v4647, %v4662
      %v4664 = vsel %vm4658, %v4661, %v4663
      %v4665 = vsel %vm4657, %v4644, %v4647
      %v4666 = vsel %vm4660, %v4653, 920167782
      %v4667 = vsel %vm4659, %v4650, %v4666
      %v4668 = vsel %vm4658, %v4665, %v4667
      %v4669 = vsel %vm4657, %v4647, %v4650
      %v4670 = vsel %vm4660, %v4656, 1326507024
      %v4671 = vsel %vm4659, %v4653, %v4670
      %v4672 = vsel %vm4658, %v4669, %v4671
      %v4673 = vshll.u32 %v4633, 8
      %v4674 = vmul.u32.u64.compose %v4673, %v4672
      %v4675 = vextract.low.u32 %v4674
      %v4676 = vextract.high.u32 %v4674
      %v4677 = vmul.u32.u64.compose %v4673, %v4668
      %v4678 = vextract.low.u32 %v4677
      %v4679 = vextract.high.u32 %v4677
      %v4680 = vmul.u32 %v4673, %v4664
      %v4681 = vadd.s32 %v4676, %v4678
      %vm4682 = vc.u32 %v4676, %v4678
      %v4683 = vadd.s32 %v4679, 1
      %v4684 = vsel %vm4682, %v4683, %v4679
      %v4685 = vadd.s32 %v4680, %v4684
      %v4686 = vadd.s32 %v4685, 536870912
      %v4687 = vshrl.u32 %v4686, 30
      %v4688 = vshll.u32 %v4687, 30
      %v4689 = vsub.s32 %v4685, %v4688
      %vm4690 = vcmp.lt.s32.totalorder %v4689, 0
      %v4691 = vsub.s32 0, %v4689
      %v4692 = vsel %vm4690, %v4691, %v4689
      %v4693 = vclz %v4692
      %v4694 = vsub.s32 %v4693, 2
      %vm4695 = vcmp.gt.s32.totalorder 0, %v4694
      %v4696 = vsel %vm4695, 0, %v4694
      %v4697 = vsub.s32 32, %v4696
      %v4698 = vshll.u32 %v4689, %v4696
      %v4699 = vshrl.u32 %v4681, %v4697
      %v4700 = vor.u32 %v4698, %v4699
      %v4701 = vsub.s32 4294967266, %v4696
      %v4702 = vadd.s32 %v4701, 127
      %v4703 = vshll.u32 %v4702, 23
      %v4704 = vor.u32 4788187, %v4703
      %v4705 = vand.u32 2147483647, %v4704
      %v4707 = vcvt.s32.f32 %v4700
      %v4708 = vmul.f32 %v4707, %v4705
      %v4709 = vxor.u32 %v4708, 2147483648
      %v4710 = vsel %vm4627, %v4709, %v4708
      %v4711 = vsub.s32 4, %v4687
      %v4712 = vsel %vm4627, %v4711, %v4687
      %v4713 = vsel %vm4626, %v1928, %v4710
      %v4714 = vsel %vm4626, 0, %v4712
      %v4715 = vcosq.f32.pop %v4713
      %v4716 = vsinq.f32.pop %v4713
      %vm4717 = vweird.f32 %v1928
      %v4718 = vand.u32 %v4714, 3
      %vm4719 = vcmp.lt.s32.totalorder %v4718, 2
      %vm4720 = vcmp.eq.s32.totalorder %v4718, 0
      %v4721 = vxor.u32 %v4716, 2147483648
      %v4722 = vsel %vm4720, %v4715, %v4721
      %vm4723 = vcmp.eq.s32.totalorder %v4718, 2
      %v4724 = vxor.u32 %v4715, 2147483648
      %v4725 = vsel %vm4723, %v4724, %v4716
      %v4726 = vsel %vm4719, %v4722, %v4725
      %v4727 = vsel %vm4717, nan, %v4726
      %v4728 = vand.u32 2147483647, %v1929
      %vm4729 = vcmp.le.f32.partialorder %v4728, 0.7853982
      %vm4730 = vcmp.lt.s32.totalorder %v1929, 0
      %v4731 = vand.u32 %v1929, 2139095040
      %v4732 = vshrl.u32 %v4731, 23
      %v4733 = vsub.s32 %v4732, 127
      %v4734 = vand.u32 2147483647, %v1929
      %v4735 = vand.u32 %v4734, 8388607
      %v4736 = vor.u32 %v4735, 8388608
      %v4737 = vsub.s32 0, %v4736
      %v4738 = vadd.s32 %v4733, 1
      %vm4739 = vcmp.gt.s32.totalorder %v4738, 0
      %v4740 = vsel %vm4739, %v4738, 0
      %v4741 = vshrl.u32 %v4740, 5
      %v4742 = vand.u32 %v4740, 31
      %v4743 = vsub.s32 32, %v4742
      %v4744 = vshrl.u32 683565275, %v4743
      %v4745 = vshll.u32 683565275, %v4742
      %v4746 = vshrl.u32 2475754826, %v4743
      %v4747 = vor.u32 %v4745, %v4746
      %v4748 = vshll.u32 2475754826, %v4742
      %v4749 = vshrl.u32 2131351028, %v4743
      %v4750 = vor.u32 %v4748, %v4749
      %v4751 = vshll.u32 2131351028, %v4742
      %v4752 = vshrl.u32 2102212464, %v4743
      %v4753 = vor.u32 %v4751, %v4752
      %v4754 = vshll.u32 2102212464, %v4742
      %v4755 = vshrl.u32 920167782, %v4743
      %v4756 = vor.u32 %v4754, %v4755
      %v4757 = vshll.u32 920167782, %v4742
      %v4758 = vshrl.u32 1326507024, %v4743
      %v4759 = vor.u32 %v4757, %v4758
      %vm4760 = vcmp.lt.s32.totalorder %v4741, 1
      %vm4761 = vcmp.lt.s32.totalorder %v4741, 2
      %vm4762 = vcmp.lt.s32.totalorder %v4741, 3
      %vm4763 = vcmp.lt.s32.totalorder %v4741, 4
      %v4764 = vsel %vm4760, %v4744, %v4747
      %v4765 = vsel %vm4763, %v4753, 2102212464
      %v4766 = vsel %vm4762, %v4750, %v4765
      %v4767 = vsel %vm4761, %v4764, %v4766
      %v4768 = vsel %vm4760, %v4747, %v4750
      %v4769 = vsel %vm4763, %v4756, 920167782
      %v4770 = vsel %vm4762, %v4753, %v4769
      %v4771 = vsel %vm4761, %v4768, %v4770
      %v4772 = vsel %vm4760, %v4750, %v4753
      %v4773 = vsel %vm4763, %v4759, 1326507024
      %v4774 = vsel %vm4762, %v4756, %v4773
      %v4775 = vsel %vm4761, %v4772, %v4774
      %v4776 = vshll.u32 %v4736, 8
      %v4777 = vmul.u32.u64.compose %v4776, %v4775
      %v4778 = vextract.low.u32 %v4777
      %v4779 = vextract.high.u32 %v4777
      %v4780 = vmul.u32.u64.compose %v4776, %v4771
      %v4781 = vextract.low.u32 %v4780
      %v4782 = vextract.high.u32 %v4780
      %v4783 = vmul.u32 %v4776, %v4767
      %v4784 = vadd.s32 %v4779, %v4781
      %vm4785 = vc.u32 %v4779, %v4781
      %v4786 = vadd.s32 %v4782, 1
      %v4787 = vsel %vm4785, %v4786, %v4782
      %v4788 = vadd.s32 %v4783, %v4787
      %v4789 = vadd.s32 %v4788, 536870912
      %v4790 = vshrl.u32 %v4789, 30
      %v4791 = vshll.u32 %v4790, 30
      %v4792 = vsub.s32 %v4788, %v4791
      %vm4793 = vcmp.lt.s32.totalorder %v4792, 0
      %v4794 = vsub.s32 0, %v4792
      %v4795 = vsel %vm4793, %v4794, %v4792
      %v4796 = vclz %v4795
      %v4797 = vsub.s32 %v4796, 2
      %vm4798 = vcmp.gt.s32.totalorder 0, %v4797
      %v4799 = vsel %vm4798, 0, %v4797
      %v4800 = vsub.s32 32, %v4799
      %v4801 = vshll.u32 %v4792, %v4799
      %v4802 = vshrl.u32 %v4784, %v4800
      %v4803 = vor.u32 %v4801, %v4802
      %v4804 = vsub.s32 4294967266, %v4799
      %v4805 = vadd.s32 %v4804, 127
      %v4806 = vshll.u32 %v4805, 23
      %v4807 = vor.u32 4788187, %v4806
      %v4808 = vand.u32 2147483647, %v4807
      %v4810 = vcvt.s32.f32 %v4803
      %v4811 = vmul.f32 %v4810, %v4808
      %v4812 = vxor.u32 %v4811, 2147483648
      %v4813 = vsel %vm4730, %v4812, %v4811
      %v4814 = vsub.s32 4, %v4790
      %v4815 = vsel %vm4730, %v4814, %v4790
      %v4816 = vsel %vm4729, %v1929, %v4813
      %v4817 = vsel %vm4729, 0, %v4815
      %v4818 = vcosq.f32.pop %v4816
      %v4819 = vsinq.f32.pop %v4816
      %vm4820 = vweird.f32 %v1929
      %v4821 = vand.u32 %v4817, 3
      %vm4822 = vcmp.lt.s32.totalorder %v4821, 2
      %vm4823 = vcmp.eq.s32.totalorder %v4821, 0
      %v4824 = vxor.u32 %v4819, 2147483648
      %v4825 = vsel %vm4823, %v4818, %v4824
      %vm4826 = vcmp.eq.s32.totalorder %v4821, 2
      %v4827 = vxor.u32 %v4818, 2147483648
      %v4828 = vsel %vm4826, %v4827, %v4819
      %v4829 = vsel %vm4822, %v4825, %v4828
      %v4830 = vsel %vm4820, nan, %v4829
      %v4831 = vand.u32 2147483647, %v1930
      %vm4832 = vcmp.le.f32.partialorder %v4831, 0.7853982
      %vm4833 = vcmp.lt.s32.totalorder %v1930, 0
      %v4834 = vand.u32 %v1930, 2139095040
      %v4835 = vshrl.u32 %v4834, 23
      %v4836 = vsub.s32 %v4835, 127
      %v4837 = vand.u32 2147483647, %v1930
      %v4838 = vand.u32 %v4837, 8388607
      %v4839 = vor.u32 %v4838, 8388608
      %v4840 = vsub.s32 0, %v4839
      %v4841 = vadd.s32 %v4836, 1
      %vm4842 = vcmp.gt.s32.totalorder %v4841, 0
      %v4843 = vsel %vm4842, %v4841, 0
      %v4844 = vshrl.u32 %v4843, 5
      %v4845 = vand.u32 %v4843, 31
      %v4846 = vsub.s32 32, %v4845
      %v4847 = vshrl.u32 683565275, %v4846
      %v4848 = vshll.u32 683565275, %v4845
      %v4849 = vshrl.u32 2475754826, %v4846
      %v4850 = vor.u32 %v4848, %v4849
      %v4851 = vshll.u32 2475754826, %v4845
      %v4852 = vshrl.u32 2131351028, %v4846
      %v4853 = vor.u32 %v4851, %v4852
      %v4854 = vshll.u32 2131351028, %v4845
      %v4855 = vshrl.u32 2102212464, %v4846
      %v4856 = vor.u32 %v4854, %v4855
      %v4857 = vshll.u32 2102212464, %v4845
      %v4858 = vshrl.u32 920167782, %v4846
      %v4859 = vor.u32 %v4857, %v4858
      %v4860 = vshll.u32 920167782, %v4845
      %v4861 = vshrl.u32 1326507024, %v4846
      %v4862 = vor.u32 %v4860, %v4861
      %vm4863 = vcmp.lt.s32.totalorder %v4844, 1
      %vm4864 = vcmp.lt.s32.totalorder %v4844, 2
      %vm4865 = vcmp.lt.s32.totalorder %v4844, 3
      %vm4866 = vcmp.lt.s32.totalorder %v4844, 4
      %v4867 = vsel %vm4863, %v4847, %v4850
      %v4868 = vsel %vm4866, %v4856, 2102212464
      %v4869 = vsel %vm4865, %v4853, %v4868
      %v4870 = vsel %vm4864, %v4867, %v4869
      %v4871 = vsel %vm4863, %v4850, %v4853
      %v4872 = vsel %vm4866, %v4859, 920167782
      %v4873 = vsel %vm4865, %v4856, %v4872
      %v4874 = vsel %vm4864, %v4871, %v4873
      %v4875 = vsel %vm4863, %v4853, %v4856
      %v4876 = vsel %vm4866, %v4862, 1326507024
      %v4877 = vsel %vm4865, %v4859, %v4876
      %v4878 = vsel %vm4864, %v4875, %v4877
      %v4879 = vshll.u32 %v4839, 8
      %v4880 = vmul.u32.u64.compose %v4879, %v4878
      %v4881 = vextract.low.u32 %v4880
      %v4882 = vextract.high.u32 %v4880
      %v4883 = vmul.u32.u64.compose %v4879, %v4874
      %v4884 = vextract.low.u32 %v4883
      %v4885 = vextract.high.u32 %v4883
      %v4886 = vmul.u32 %v4879, %v4870
      %v4887 = vadd.s32 %v4882, %v4884
      %vm4888 = vc.u32 %v4882, %v4884
      %v4889 = vadd.s32 %v4885, 1
      %v4890 = vsel %vm4888, %v4889, %v4885
      %v4891 = vadd.s32 %v4886, %v4890
      %v4892 = vadd.s32 %v4891, 536870912
      %v4893 = vshrl.u32 %v4892, 30
      %v4894 = vshll.u32 %v4893, 30
      %v4895 = vsub.s32 %v4891, %v4894
      %vm4896 = vcmp.lt.s32.totalorder %v4895, 0
      %v4897 = vsub.s32 0, %v4895
      %v4898 = vsel %vm4896, %v4897, %v4895
      %v4899 = vclz %v4898
      %v4900 = vsub.s32 %v4899, 2
      %vm4901 = vcmp.gt.s32.totalorder 0, %v4900
      %v4902 = vsel %vm4901, 0, %v4900
      %v4903 = vsub.s32 32, %v4902
      %v4904 = vshll.u32 %v4895, %v4902
      %v4905 = vshrl.u32 %v4887, %v4903
      %v4906 = vor.u32 %v4904, %v4905
      %v4907 = vsub.s32 4294967266, %v4902
      %v4908 = vadd.s32 %v4907, 127
      %v4909 = vshll.u32 %v4908, 23
      %v4910 = vor.u32 4788187, %v4909
      %v4911 = vand.u32 2147483647, %v4910
      %v4913 = vcvt.s32.f32 %v4906
      %v4914 = vmul.f32 %v4913, %v4911
      %v4915 = vxor.u32 %v4914, 2147483648
      %v4916 = vsel %vm4833, %v4915, %v4914
      %v4917 = vsub.s32 4, %v4893
      %v4918 = vsel %vm4833, %v4917, %v4893
      %v4919 = vsel %vm4832, %v1930, %v4916
      %v4920 = vsel %vm4832, 0, %v4918
      %v4921 = vcosq.f32.pop %v4919
      %v4922 = vsinq.f32.pop %v4919
      %vm4923 = vweird.f32 %v1930
      %v4924 = vand.u32 %v4920, 3
      %vm4925 = vcmp.lt.s32.totalorder %v4924, 2
      %vm4926 = vcmp.eq.s32.totalorder %v4924, 0
      %v4927 = vxor.u32 %v4922, 2147483648
      %v4928 = vsel %vm4926, %v4921, %v4927
      %vm4929 = vcmp.eq.s32.totalorder %v4924, 2
      %v4930 = vxor.u32 %v4921, 2147483648
      %v4931 = vsel %vm4929, %v4930, %v4922
      %v4932 = vsel %vm4925, %v4928, %v4931
      %v4933 = vsel %vm4923, nan, %v4932
      %v4934 = vand.u32 2147483647, %v1931
      %vm4935 = vcmp.le.f32.partialorder %v4934, 0.7853982
      %vm4936 = vcmp.lt.s32.totalorder %v1931, 0
      %v4937 = vand.u32 %v1931, 2139095040
      %v4938 = vshrl.u32 %v4937, 23
      %v4939 = vsub.s32 %v4938, 127
      %v4940 = vand.u32 2147483647, %v1931
      %v4941 = vand.u32 %v4940, 8388607
      %v4942 = vor.u32 %v4941, 8388608
      %v4943 = vsub.s32 0, %v4942
      %v4944 = vadd.s32 %v4939, 1
      %vm4945 = vcmp.gt.s32.totalorder %v4944, 0
      %v4946 = vsel %vm4945, %v4944, 0
      %v4947 = vshrl.u32 %v4946, 5
      %v4948 = vand.u32 %v4946, 31
      %v4949 = vsub.s32 32, %v4948
      %v4950 = vshrl.u32 683565275, %v4949
      %v4951 = vshll.u32 683565275, %v4948
      %v4952 = vshrl.u32 2475754826, %v4949
      %v4953 = vor.u32 %v4951, %v4952
      %v4954 = vshll.u32 2475754826, %v4948
      %v4955 = vshrl.u32 2131351028, %v4949
      %v4956 = vor.u32 %v4954, %v4955
      %v4957 = vshll.u32 2131351028, %v4948
      %v4958 = vshrl.u32 2102212464, %v4949
      %v4959 = vor.u32 %v4957, %v4958
      %v4960 = vshll.u32 2102212464, %v4948
      %v4961 = vshrl.u32 920167782, %v4949
      %v4962 = vor.u32 %v4960, %v4961
      %v4963 = vshll.u32 920167782, %v4948
      %v4964 = vshrl.u32 1326507024, %v4949
      %v4965 = vor.u32 %v4963, %v4964
      %vm4966 = vcmp.lt.s32.totalorder %v4947, 1
      %vm4967 = vcmp.lt.s32.totalorder %v4947, 2
      %vm4968 = vcmp.lt.s32.totalorder %v4947, 3
      %vm4969 = vcmp.lt.s32.totalorder %v4947, 4
      %v4970 = vsel %vm4966, %v4950, %v4953
      %v4971 = vsel %vm4969, %v4959, 2102212464
      %v4972 = vsel %vm4968, %v4956, %v4971
      %v4973 = vsel %vm4967, %v4970, %v4972
      %v4974 = vsel %vm4966, %v4953, %v4956
      %v4975 = vsel %vm4969, %v4962, 920167782
      %v4976 = vsel %vm4968, %v4959, %v4975
      %v4977 = vsel %vm4967, %v4974, %v4976
      %v4978 = vsel %vm4966, %v4956, %v4959
      %v4979 = vsel %vm4969, %v4965, 1326507024
      %v4980 = vsel %vm4968, %v4962, %v4979
      %v4981 = vsel %vm4967, %v4978, %v4980
      %v4982 = vshll.u32 %v4942, 8
      %v4983 = vmul.u32.u64.compose %v4982, %v4981
      %v4984 = vextract.low.u32 %v4983
      %v4985 = vextract.high.u32 %v4983
      %v4986 = vmul.u32.u64.compose %v4982, %v4977
      %v4987 = vextract.low.u32 %v4986
      %v4988 = vextract.high.u32 %v4986
      %v4989 = vmul.u32 %v4982, %v4973
      %v4990 = vadd.s32 %v4985, %v4987
      %vm4991 = vc.u32 %v4985, %v4987
      %v4992 = vadd.s32 %v4988, 1
      %v4993 = vsel %vm4991, %v4992, %v4988
      %v4994 = vadd.s32 %v4989, %v4993
      %v4995 = vadd.s32 %v4994, 536870912
      %v4996 = vshrl.u32 %v4995, 30
      %v4997 = vshll.u32 %v4996, 30
      %v4998 = vsub.s32 %v4994, %v4997
      %vm4999 = vcmp.lt.s32.totalorder %v4998, 0
      %v5000 = vsub.s32 0, %v4998
      %v5001 = vsel %vm4999, %v5000, %v4998
      %v5002 = vclz %v5001
      %v5003 = vsub.s32 %v5002, 2
      %vm5004 = vcmp.gt.s32.totalorder 0, %v5003
      %v5005 = vsel %vm5004, 0, %v5003
      %v5006 = vsub.s32 32, %v5005
      %v5007 = vshll.u32 %v4998, %v5005
      %v5008 = vshrl.u32 %v4990, %v5006
      %v5009 = vor.u32 %v5007, %v5008
      %v5010 = vsub.s32 4294967266, %v5005
      %v5011 = vadd.s32 %v5010, 127
      %v5012 = vshll.u32 %v5011, 23
      %v5013 = vor.u32 4788187, %v5012
      %v5014 = vand.u32 2147483647, %v5013
      %v5016 = vcvt.s32.f32 %v5009
      %v5017 = vmul.f32 %v5016, %v5014
      %v5018 = vxor.u32 %v5017, 2147483648
      %v5019 = vsel %vm4936, %v5018, %v5017
      %v5020 = vsub.s32 4, %v4996
      %v5021 = vsel %vm4936, %v5020, %v4996
      %v5022 = vsel %vm4935, %v1931, %v5019
      %v5023 = vsel %vm4935, 0, %v5021
      %v5024 = vcosq.f32.pop %v5022
      %v5025 = vsinq.f32.pop %v5022
      %vm5026 = vweird.f32 %v1931
      %v5027 = vand.u32 %v5023, 3
      %vm5028 = vcmp.lt.s32.totalorder %v5027, 2
      %vm5029 = vcmp.eq.s32.totalorder %v5027, 0
      %v5030 = vxor.u32 %v5025, 2147483648
      %v5031 = vsel %vm5029, %v5024, %v5030
      %vm5032 = vcmp.eq.s32.totalorder %v5027, 2
      %v5033 = vxor.u32 %v5024, 2147483648
      %v5034 = vsel %vm5032, %v5033, %v5025
      %v5035 = vsel %vm5028, %v5031, %v5034
      %v5036 = vsel %vm5026, nan, %v5035
      %v5037 = vand.u32 2147483647, %v1902
      %vm5038 = vcmp.le.f32.partialorder %v5037, 0.7853982
      %vm5039 = vcmp.lt.s32.totalorder %v1902, 0
      %v5040 = vand.u32 %v1902, 2139095040
      %v5041 = vshrl.u32 %v5040, 23
      %v5042 = vsub.s32 %v5041, 127
      %v5043 = vand.u32 2147483647, %v1902
      %v5044 = vand.u32 %v5043, 8388607
      %v5045 = vor.u32 %v5044, 8388608
      %v5046 = vsub.s32 0, %v5045
      %v5047 = vadd.s32 %v5042, 1
      %vm5048 = vcmp.gt.s32.totalorder %v5047, 0
      %v5049 = vsel %vm5048, %v5047, 0
      %v5050 = vshrl.u32 %v5049, 5
      %v5051 = vand.u32 %v5049, 31
      %v5052 = vsub.s32 32, %v5051
      %v5053 = vshrl.u32 683565275, %v5052
      %v5054 = vshll.u32 683565275, %v5051
      %v5055 = vshrl.u32 2475754826, %v5052
      %v5056 = vor.u32 %v5054, %v5055
      %v5057 = vshll.u32 2475754826, %v5051
      %v5058 = vshrl.u32 2131351028, %v5052
      %v5059 = vor.u32 %v5057, %v5058
      %v5060 = vshll.u32 2131351028, %v5051
      %v5061 = vshrl.u32 2102212464, %v5052
      %v5062 = vor.u32 %v5060, %v5061
      %v5063 = vshll.u32 2102212464, %v5051
      %v5064 = vshrl.u32 920167782, %v5052
      %v5065 = vor.u32 %v5063, %v5064
      %v5066 = vshll.u32 920167782, %v5051
      %v5067 = vshrl.u32 1326507024, %v5052
      %v5068 = vor.u32 %v5066, %v5067
      %vm5069 = vcmp.lt.s32.totalorder %v5050, 1
      %vm5070 = vcmp.lt.s32.totalorder %v5050, 2
      %vm5071 = vcmp.lt.s32.totalorder %v5050, 3
      %vm5072 = vcmp.lt.s32.totalorder %v5050, 4
      %v5073 = vsel %vm5069, %v5053, %v5056
      %v5074 = vsel %vm5072, %v5062, 2102212464
      %v5075 = vsel %vm5071, %v5059, %v5074
      %v5076 = vsel %vm5070, %v5073, %v5075
      %v5077 = vsel %vm5069, %v5056, %v5059
      %v5078 = vsel %vm5072, %v5065, 920167782
      %v5079 = vsel %vm5071, %v5062, %v5078
      %v5080 = vsel %vm5070, %v5077, %v5079
      %v5081 = vsel %vm5069, %v5059, %v5062
      %v5082 = vsel %vm5072, %v5068, 1326507024
      %v5083 = vsel %vm5071, %v5065, %v5082
      %v5084 = vsel %vm5070, %v5081, %v5083
      %v5085 = vshll.u32 %v5045, 8
      %v5086 = vmul.u32.u64.compose %v5085, %v5084
      %v5087 = vextract.low.u32 %v5086
      %v5088 = vextract.high.u32 %v5086
      %v5089 = vmul.u32.u64.compose %v5085, %v5080
      %v5090 = vextract.low.u32 %v5089
      %v5091 = vextract.high.u32 %v5089
      %v5092 = vmul.u32 %v5085, %v5076
      %v5093 = vadd.s32 %v5088, %v5090
      %vm5094 = vc.u32 %v5088, %v5090
      %v5095 = vadd.s32 %v5091, 1
      %v5096 = vsel %vm5094, %v5095, %v5091
      %v5097 = vadd.s32 %v5092, %v5096
      %v5098 = vadd.s32 %v5097, 536870912
      %v5099 = vshrl.u32 %v5098, 30
      %v5100 = vshll.u32 %v5099, 30
      %v5101 = vsub.s32 %v5097, %v5100
      %vm5102 = vcmp.lt.s32.totalorder %v5101, 0
      %v5103 = vsub.s32 0, %v5101
      %v5104 = vsel %vm5102, %v5103, %v5101
      %v5105 = vclz %v5104
      %v5106 = vsub.s32 %v5105, 2
      %vm5107 = vcmp.gt.s32.totalorder 0, %v5106
      %v5108 = vsel %vm5107, 0, %v5106
      %v5109 = vsub.s32 32, %v5108
      %v5110 = vshll.u32 %v5101, %v5108
      %v5111 = vshrl.u32 %v5093, %v5109
      %v5112 = vor.u32 %v5110, %v5111
      %v5113 = vsub.s32 4294967266, %v5108
      %v5114 = vadd.s32 %v5113, 127
      %v5115 = vshll.u32 %v5114, 23
      %v5116 = vor.u32 4788187, %v5115
      %v5117 = vand.u32 2147483647, %v5116
      %v5119 = vcvt.s32.f32 %v5112
      %v5120 = vmul.f32 %v5119, %v5117
      %v5121 = vxor.u32 %v5120, 2147483648
      %v5122 = vsel %vm5039, %v5121, %v5120
      %v5123 = vsub.s32 4, %v5099
      %v5124 = vsel %vm5039, %v5123, %v5099
      %v5125 = vsel %vm5038, %v1902, %v5122
      %v5126 = vsel %vm5038, 0, %v5124
      %v5127 = vcosq.f32.pop %v5125
      %v5128 = vsinq.f32.pop %v5125
      %vm5129 = vweird.f32 %v1902
      %v5130 = vadd.s32 %v5126, 3
      %v5131 = vand.u32 %v5130, 3
      %vm5132 = vcmp.lt.s32.totalorder %v5131, 2
      %vm5133 = vcmp.eq.s32.totalorder %v5131, 0
      %v5134 = vxor.u32 %v5128, 2147483648
      %v5135 = vsel %vm5133, %v5127, %v5134
      %vm5136 = vcmp.eq.s32.totalorder %v5131, 2
      %v5137 = vxor.u32 %v5127, 2147483648
      %v5138 = vsel %vm5136, %v5137, %v5128
      %v5139 = vsel %vm5132, %v5135, %v5138
      %v5140 = vsel %vm5129, nan, %v5139
      %v5141 = vand.u32 2147483647, %v1903
      %vm5142 = vcmp.le.f32.partialorder %v5141, 0.7853982
      %vm5143 = vcmp.lt.s32.totalorder %v1903, 0
      %v5144 = vand.u32 %v1903, 2139095040
      %v5145 = vshrl.u32 %v5144, 23
      %v5146 = vsub.s32 %v5145, 127
      %v5147 = vand.u32 2147483647, %v1903
      %v5148 = vand.u32 %v5147, 8388607
      %v5149 = vor.u32 %v5148, 8388608
      %v5150 = vsub.s32 0, %v5149
      %v5151 = vadd.s32 %v5146, 1
      %vm5152 = vcmp.gt.s32.totalorder %v5151, 0
      %v5153 = vsel %vm5152, %v5151, 0
      %v5154 = vshrl.u32 %v5153, 5
      %v5155 = vand.u32 %v5153, 31
      %v5156 = vsub.s32 32, %v5155
      %v5157 = vshrl.u32 683565275, %v5156
      %v5158 = vshll.u32 683565275, %v5155
      %v5159 = vshrl.u32 2475754826, %v5156
      %v5160 = vor.u32 %v5158, %v5159
      %v5161 = vshll.u32 2475754826, %v5155
      %v5162 = vshrl.u32 2131351028, %v5156
      %v5163 = vor.u32 %v5161, %v5162
      %v5164 = vshll.u32 2131351028, %v5155
      %v5165 = vshrl.u32 2102212464, %v5156
      %v5166 = vor.u32 %v5164, %v5165
      %v5167 = vshll.u32 2102212464, %v5155
      %v5168 = vshrl.u32 920167782, %v5156
      %v5169 = vor.u32 %v5167, %v5168
      %v5170 = vshll.u32 920167782, %v5155
      %v5171 = vshrl.u32 1326507024, %v5156
      %v5172 = vor.u32 %v5170, %v5171
      %vm5173 = vcmp.lt.s32.totalorder %v5154, 1
      %vm5174 = vcmp.lt.s32.totalorder %v5154, 2
      %vm5175 = vcmp.lt.s32.totalorder %v5154, 3
      %vm5176 = vcmp.lt.s32.totalorder %v5154, 4
      %v5177 = vsel %vm5173, %v5157, %v5160
      %v5178 = vsel %vm5176, %v5166, 2102212464
      %v5179 = vsel %vm5175, %v5163, %v5178
      %v5180 = vsel %vm5174, %v5177, %v5179
      %v5181 = vsel %vm5173, %v5160, %v5163
      %v5182 = vsel %vm5176, %v5169, 920167782
      %v5183 = vsel %vm5175, %v5166, %v5182
      %v5184 = vsel %vm5174, %v5181, %v5183
      %v5185 = vsel %vm5173, %v5163, %v5166
      %v5186 = vsel %vm5176, %v5172, 1326507024
      %v5187 = vsel %vm5175, %v5169, %v5186
      %v5188 = vsel %vm5174, %v5185, %v5187
      %v5189 = vshll.u32 %v5149, 8
      %v5190 = vmul.u32.u64.compose %v5189, %v5188
      %v5191 = vextract.low.u32 %v5190
      %v5192 = vextract.high.u32 %v5190
      %v5193 = vmul.u32.u64.compose %v5189, %v5184
      %v5194 = vextract.low.u32 %v5193
      %v5195 = vextract.high.u32 %v5193
      %v5196 = vmul.u32 %v5189, %v5180
      %v5197 = vadd.s32 %v5192, %v5194
      %vm5198 = vc.u32 %v5192, %v5194
      %v5199 = vadd.s32 %v5195, 1
      %v5200 = vsel %vm5198, %v5199, %v5195
      %v5201 = vadd.s32 %v5196, %v5200
      %v5202 = vadd.s32 %v5201, 536870912
      %v5203 = vshrl.u32 %v5202, 30
      %v5204 = vshll.u32 %v5203, 30
      %v5205 = vsub.s32 %v5201, %v5204
      %vm5206 = vcmp.lt.s32.totalorder %v5205, 0
      %v5207 = vsub.s32 0, %v5205
      %v5208 = vsel %vm5206, %v5207, %v5205
      %v5209 = vclz %v5208
      %v5210 = vsub.s32 %v5209, 2
      %vm5211 = vcmp.gt.s32.totalorder 0, %v5210
      %v5212 = vsel %vm5211, 0, %v5210
      %v5213 = vsub.s32 32, %v5212
      %v5214 = vshll.u32 %v5205, %v5212
      %v5215 = vshrl.u32 %v5197, %v5213
      %v5216 = vor.u32 %v5214, %v5215
      %v5217 = vsub.s32 4294967266, %v5212
      %v5218 = vadd.s32 %v5217, 127
      %v5219 = vshll.u32 %v5218, 23
      %v5220 = vor.u32 4788187, %v5219
      %v5221 = vand.u32 2147483647, %v5220
      %v5223 = vcvt.s32.f32 %v5216
      %v5224 = vmul.f32 %v5223, %v5221
      %v5225 = vxor.u32 %v5224, 2147483648
      %v5226 = vsel %vm5143, %v5225, %v5224
      %v5227 = vsub.s32 4, %v5203
      %v5228 = vsel %vm5143, %v5227, %v5203
      %v5229 = vsel %vm5142, %v1903, %v5226
      %v5230 = vsel %vm5142, 0, %v5228
      %v5231 = vcosq.f32.pop %v5229
      %v5232 = vsinq.f32.pop %v5229
      %vm5233 = vweird.f32 %v1903
      %v5234 = vadd.s32 %v5230, 3
      %v5235 = vand.u32 %v5234, 3
      %vm5236 = vcmp.lt.s32.totalorder %v5235, 2
      %vm5237 = vcmp.eq.s32.totalorder %v5235, 0
      %v5238 = vxor.u32 %v5232, 2147483648
      %v5239 = vsel %vm5237, %v5231, %v5238
      %vm5240 = vcmp.eq.s32.totalorder %v5235, 2
      %v5241 = vxor.u32 %v5231, 2147483648
      %v5242 = vsel %vm5240, %v5241, %v5232
      %v5243 = vsel %vm5236, %v5239, %v5242
      %v5244 = vsel %vm5233, nan, %v5243
      %v5245 = vand.u32 2147483647, %v1904
      %vm5246 = vcmp.le.f32.partialorder %v5245, 0.7853982
      %vm5247 = vcmp.lt.s32.totalorder %v1904, 0
      %v5248 = vand.u32 %v1904, 2139095040
      %v5249 = vshrl.u32 %v5248, 23
      %v5250 = vsub.s32 %v5249, 127
      %v5251 = vand.u32 2147483647, %v1904
      %v5252 = vand.u32 %v5251, 8388607
      %v5253 = vor.u32 %v5252, 8388608
      %v5254 = vsub.s32 0, %v5253
      %v5255 = vadd.s32 %v5250, 1
      %vm5256 = vcmp.gt.s32.totalorder %v5255, 0
      %v5257 = vsel %vm5256, %v5255, 0
      %v5258 = vshrl.u32 %v5257, 5
      %v5259 = vand.u32 %v5257, 31
      %v5260 = vsub.s32 32, %v5259
      %v5261 = vshrl.u32 683565275, %v5260
      %v5262 = vshll.u32 683565275, %v5259
      %v5263 = vshrl.u32 2475754826, %v5260
      %v5264 = vor.u32 %v5262, %v5263
      %v5265 = vshll.u32 2475754826, %v5259
      %v5266 = vshrl.u32 2131351028, %v5260
      %v5267 = vor.u32 %v5265, %v5266
      %v5268 = vshll.u32 2131351028, %v5259
      %v5269 = vshrl.u32 2102212464, %v5260
      %v5270 = vor.u32 %v5268, %v5269
      %v5271 = vshll.u32 2102212464, %v5259
      %v5272 = vshrl.u32 920167782, %v5260
      %v5273 = vor.u32 %v5271, %v5272
      %v5274 = vshll.u32 920167782, %v5259
      %v5275 = vshrl.u32 1326507024, %v5260
      %v5276 = vor.u32 %v5274, %v5275
      %vm5277 = vcmp.lt.s32.totalorder %v5258, 1
      %vm5278 = vcmp.lt.s32.totalorder %v5258, 2
      %vm5279 = vcmp.lt.s32.totalorder %v5258, 3
      %vm5280 = vcmp.lt.s32.totalorder %v5258, 4
      %v5281 = vsel %vm5277, %v5261, %v5264
      %v5282 = vsel %vm5280, %v5270, 2102212464
      %v5283 = vsel %vm5279, %v5267, %v5282
      %v5284 = vsel %vm5278, %v5281, %v5283
      %v5285 = vsel %vm5277, %v5264, %v5267
      %v5286 = vsel %vm5280, %v5273, 920167782
      %v5287 = vsel %vm5279, %v5270, %v5286
      %v5288 = vsel %vm5278, %v5285, %v5287
      %v5289 = vsel %vm5277, %v5267, %v5270
      %v5290 = vsel %vm5280, %v5276, 1326507024
      %v5291 = vsel %vm5279, %v5273, %v5290
      %v5292 = vsel %vm5278, %v5289, %v5291
      %v5293 = vshll.u32 %v5253, 8
      %v5294 = vmul.u32.u64.compose %v5293, %v5292
      %v5295 = vextract.low.u32 %v5294
      %v5296 = vextract.high.u32 %v5294
      %v5297 = vmul.u32.u64.compose %v5293, %v5288
      %v5298 = vextract.low.u32 %v5297
      %v5299 = vextract.high.u32 %v5297
      %v5300 = vmul.u32 %v5293, %v5284
      %v5301 = vadd.s32 %v5296, %v5298
      %vm5302 = vc.u32 %v5296, %v5298
      %v5303 = vadd.s32 %v5299, 1
      %v5304 = vsel %vm5302, %v5303, %v5299
      %v5305 = vadd.s32 %v5300, %v5304
      %v5306 = vadd.s32 %v5305, 536870912
      %v5307 = vshrl.u32 %v5306, 30
      %v5308 = vshll.u32 %v5307, 30
      %v5309 = vsub.s32 %v5305, %v5308
      %vm5310 = vcmp.lt.s32.totalorder %v5309, 0
      %v5311 = vsub.s32 0, %v5309
      %v5312 = vsel %vm5310, %v5311, %v5309
      %v5313 = vclz %v5312
      %v5314 = vsub.s32 %v5313, 2
      %vm5315 = vcmp.gt.s32.totalorder 0, %v5314
      %v5316 = vsel %vm5315, 0, %v5314
      %v5317 = vsub.s32 32, %v5316
      %v5318 = vshll.u32 %v5309, %v5316
      %v5319 = vshrl.u32 %v5301, %v5317
      %v5320 = vor.u32 %v5318, %v5319
      %v5321 = vsub.s32 4294967266, %v5316
      %v5322 = vadd.s32 %v5321, 127
      %v5323 = vshll.u32 %v5322, 23
      %v5324 = vor.u32 4788187, %v5323
      %v5325 = vand.u32 2147483647, %v5324
      %v5327 = vcvt.s32.f32 %v5320
      %v5328 = vmul.f32 %v5327, %v5325
      %v5329 = vxor.u32 %v5328, 2147483648
      %v5330 = vsel %vm5247, %v5329, %v5328
      %v5331 = vsub.s32 4, %v5307
      %v5332 = vsel %vm5247, %v5331, %v5307
      %v5333 = vsel %vm5246, %v1904, %v5330
      %v5334 = vsel %vm5246, 0, %v5332
      %v5335 = vcosq.f32.pop %v5333
      %v5336 = vsinq.f32.pop %v5333
      %vm5337 = vweird.f32 %v1904
      %v5338 = vadd.s32 %v5334, 3
      %v5339 = vand.u32 %v5338, 3
      %vm5340 = vcmp.lt.s32.totalorder %v5339, 2
      %vm5341 = vcmp.eq.s32.totalorder %v5339, 0
      %v5342 = vxor.u32 %v5336, 2147483648
      %v5343 = vsel %vm5341, %v5335, %v5342
      %vm5344 = vcmp.eq.s32.totalorder %v5339, 2
      %v5345 = vxor.u32 %v5335, 2147483648
      %v5346 = vsel %vm5344, %v5345, %v5336
      %v5347 = vsel %vm5340, %v5343, %v5346
      %v5348 = vsel %vm5337, nan, %v5347
      %v5349 = vand.u32 2147483647, %v1905
      %vm5350 = vcmp.le.f32.partialorder %v5349, 0.7853982
      %vm5351 = vcmp.lt.s32.totalorder %v1905, 0
      %v5352 = vand.u32 %v1905, 2139095040
      %v5353 = vshrl.u32 %v5352, 23
      %v5354 = vsub.s32 %v5353, 127
      %v5355 = vand.u32 2147483647, %v1905
      %v5356 = vand.u32 %v5355, 8388607
      %v5357 = vor.u32 %v5356, 8388608
      %v5358 = vsub.s32 0, %v5357
      %v5359 = vadd.s32 %v5354, 1
      %vm5360 = vcmp.gt.s32.totalorder %v5359, 0
      %v5361 = vsel %vm5360, %v5359, 0
      %v5362 = vshrl.u32 %v5361, 5
      %v5363 = vand.u32 %v5361, 31
      %v5364 = vsub.s32 32, %v5363
      %v5365 = vshrl.u32 683565275, %v5364
      %v5366 = vshll.u32 683565275, %v5363
      %v5367 = vshrl.u32 2475754826, %v5364
      %v5368 = vor.u32 %v5366, %v5367
      %v5369 = vshll.u32 2475754826, %v5363
      %v5370 = vshrl.u32 2131351028, %v5364
      %v5371 = vor.u32 %v5369, %v5370
      %v5372 = vshll.u32 2131351028, %v5363
      %v5373 = vshrl.u32 2102212464, %v5364
      %v5374 = vor.u32 %v5372, %v5373
      %v5375 = vshll.u32 2102212464, %v5363
      %v5376 = vshrl.u32 920167782, %v5364
      %v5377 = vor.u32 %v5375, %v5376
      %v5378 = vshll.u32 920167782, %v5363
      %v5379 = vshrl.u32 1326507024, %v5364
      %v5380 = vor.u32 %v5378, %v5379
      %vm5381 = vcmp.lt.s32.totalorder %v5362, 1
      %vm5382 = vcmp.lt.s32.totalorder %v5362, 2
      %vm5383 = vcmp.lt.s32.totalorder %v5362, 3
      %vm5384 = vcmp.lt.s32.totalorder %v5362, 4
      %v5385 = vsel %vm5381, %v5365, %v5368
      %v5386 = vsel %vm5384, %v5374, 2102212464
      %v5387 = vsel %vm5383, %v5371, %v5386
      %v5388 = vsel %vm5382, %v5385, %v5387
      %v5389 = vsel %vm5381, %v5368, %v5371
      %v5390 = vsel %vm5384, %v5377, 920167782
      %v5391 = vsel %vm5383, %v5374, %v5390
      %v5392 = vsel %vm5382, %v5389, %v5391
      %v5393 = vsel %vm5381, %v5371, %v5374
      %v5394 = vsel %vm5384, %v5380, 1326507024
      %v5395 = vsel %vm5383, %v5377, %v5394
      %v5396 = vsel %vm5382, %v5393, %v5395
      %v5397 = vshll.u32 %v5357, 8
      %v5398 = vmul.u32.u64.compose %v5397, %v5396
      %v5399 = vextract.low.u32 %v5398
      %v5400 = vextract.high.u32 %v5398
      %v5401 = vmul.u32.u64.compose %v5397, %v5392
      %v5402 = vextract.low.u32 %v5401
      %v5403 = vextract.high.u32 %v5401
      %v5404 = vmul.u32 %v5397, %v5388
      %v5405 = vadd.s32 %v5400, %v5402
      %vm5406 = vc.u32 %v5400, %v5402
      %v5407 = vadd.s32 %v5403, 1
      %v5408 = vsel %vm5406, %v5407, %v5403
      %v5409 = vadd.s32 %v5404, %v5408
      %v5410 = vadd.s32 %v5409, 536870912
      %v5411 = vshrl.u32 %v5410, 30
      %v5412 = vshll.u32 %v5411, 30
      %v5413 = vsub.s32 %v5409, %v5412
      %vm5414 = vcmp.lt.s32.totalorder %v5413, 0
      %v5415 = vsub.s32 0, %v5413
      %v5416 = vsel %vm5414, %v5415, %v5413
      %v5417 = vclz %v5416
      %v5418 = vsub.s32 %v5417, 2
      %vm5419 = vcmp.gt.s32.totalorder 0, %v5418
      %v5420 = vsel %vm5419, 0, %v5418
      %v5421 = vsub.s32 32, %v5420
      %v5422 = vshll.u32 %v5413, %v5420
      %v5423 = vshrl.u32 %v5405, %v5421
      %v5424 = vor.u32 %v5422, %v5423
      %v5425 = vsub.s32 4294967266, %v5420
      %v5426 = vadd.s32 %v5425, 127
      %v5427 = vshll.u32 %v5426, 23
      %v5428 = vor.u32 4788187, %v5427
      %v5429 = vand.u32 2147483647, %v5428
      %v5431 = vcvt.s32.f32 %v5424
      %v5432 = vmul.f32 %v5431, %v5429
      %v5433 = vxor.u32 %v5432, 2147483648
      %v5434 = vsel %vm5351, %v5433, %v5432
      %v5435 = vsub.s32 4, %v5411
      %v5436 = vsel %vm5351, %v5435, %v5411
      %v5437 = vsel %vm5350, %v1905, %v5434
      %v5438 = vsel %vm5350, 0, %v5436
      %v5439 = vcosq.f32.pop %v5437
      %v5440 = vsinq.f32.pop %v5437
      %vm5441 = vweird.f32 %v1905
      %v5442 = vadd.s32 %v5438, 3
      %v5443 = vand.u32 %v5442, 3
      %vm5444 = vcmp.lt.s32.totalorder %v5443, 2
      %vm5445 = vcmp.eq.s32.totalorder %v5443, 0
      %v5446 = vxor.u32 %v5440, 2147483648
      %v5447 = vsel %vm5445, %v5439, %v5446
      %vm5448 = vcmp.eq.s32.totalorder %v5443, 2
      %v5449 = vxor.u32 %v5439, 2147483648
      %v5450 = vsel %vm5448, %v5449, %v5440
      %v5451 = vsel %vm5444, %v5447, %v5450
      %v5452 = vsel %vm5441, nan, %v5451
      %v5453 = vand.u32 2147483647, %v1906
      %vm5454 = vcmp.le.f32.partialorder %v5453, 0.7853982
      %vm5455 = vcmp.lt.s32.totalorder %v1906, 0
      %v5456 = vand.u32 %v1906, 2139095040
      %v5457 = vshrl.u32 %v5456, 23
      %v5458 = vsub.s32 %v5457, 127
      %v5459 = vand.u32 2147483647, %v1906
      %v5460 = vand.u32 %v5459, 8388607
      %v5461 = vor.u32 %v5460, 8388608
      %v5462 = vsub.s32 0, %v5461
      %v5463 = vadd.s32 %v5458, 1
      %vm5464 = vcmp.gt.s32.totalorder %v5463, 0
      %v5465 = vsel %vm5464, %v5463, 0
      %v5466 = vshrl.u32 %v5465, 5
      %v5467 = vand.u32 %v5465, 31
      %v5468 = vsub.s32 32, %v5467
      %v5469 = vshrl.u32 683565275, %v5468
      %v5470 = vshll.u32 683565275, %v5467
      %v5471 = vshrl.u32 2475754826, %v5468
      %v5472 = vor.u32 %v5470, %v5471
      %v5473 = vshll.u32 2475754826, %v5467
      %v5474 = vshrl.u32 2131351028, %v5468
      %v5475 = vor.u32 %v5473, %v5474
      %v5476 = vshll.u32 2131351028, %v5467
      %v5477 = vshrl.u32 2102212464, %v5468
      %v5478 = vor.u32 %v5476, %v5477
      %v5479 = vshll.u32 2102212464, %v5467
      %v5480 = vshrl.u32 920167782, %v5468
      %v5481 = vor.u32 %v5479, %v5480
      %v5482 = vshll.u32 920167782, %v5467
      %v5483 = vshrl.u32 1326507024, %v5468
      %v5484 = vor.u32 %v5482, %v5483
      %vm5485 = vcmp.lt.s32.totalorder %v5466, 1
      %vm5486 = vcmp.lt.s32.totalorder %v5466, 2
      %vm5487 = vcmp.lt.s32.totalorder %v5466, 3
      %vm5488 = vcmp.lt.s32.totalorder %v5466, 4
      %v5489 = vsel %vm5485, %v5469, %v5472
      %v5490 = vsel %vm5488, %v5478, 2102212464
      %v5491 = vsel %vm5487, %v5475, %v5490
      %v5492 = vsel %vm5486, %v5489, %v5491
      %v5493 = vsel %vm5485, %v5472, %v5475
      %v5494 = vsel %vm5488, %v5481, 920167782
      %v5495 = vsel %vm5487, %v5478, %v5494
      %v5496 = vsel %vm5486, %v5493, %v5495
      %v5497 = vsel %vm5485, %v5475, %v5478
      %v5498 = vsel %vm5488, %v5484, 1326507024
      %v5499 = vsel %vm5487, %v5481, %v5498
      %v5500 = vsel %vm5486, %v5497, %v5499
      %v5501 = vshll.u32 %v5461, 8
      %v5502 = vmul.u32.u64.compose %v5501, %v5500
      %v5503 = vextract.low.u32 %v5502
      %v5504 = vextract.high.u32 %v5502
      %v5505 = vmul.u32.u64.compose %v5501, %v5496
      %v5506 = vextract.low.u32 %v5505
      %v5507 = vextract.high.u32 %v5505
      %v5508 = vmul.u32 %v5501, %v5492
      %v5509 = vadd.s32 %v5504, %v5506
      %vm5510 = vc.u32 %v5504, %v5506
      %v5511 = vadd.s32 %v5507, 1
      %v5512 = vsel %vm5510, %v5511, %v5507
      %v5513 = vadd.s32 %v5508, %v5512
      %v5514 = vadd.s32 %v5513, 536870912
      %v5515 = vshrl.u32 %v5514, 30
      %v5516 = vshll.u32 %v5515, 30
      %v5517 = vsub.s32 %v5513, %v5516
      %vm5518 = vcmp.lt.s32.totalorder %v5517, 0
      %v5519 = vsub.s32 0, %v5517
      %v5520 = vsel %vm5518, %v5519, %v5517
      %v5521 = vclz %v5520
      %v5522 = vsub.s32 %v5521, 2
      %vm5523 = vcmp.gt.s32.totalorder 0, %v5522
      %v5524 = vsel %vm5523, 0, %v5522
      %v5525 = vsub.s32 32, %v5524
      %v5526 = vshll.u32 %v5517, %v5524
      %v5527 = vshrl.u32 %v5509, %v5525
      %v5528 = vor.u32 %v5526, %v5527
      %v5529 = vsub.s32 4294967266, %v5524
      %v5530 = vadd.s32 %v5529, 127
      %v5531 = vshll.u32 %v5530, 23
      %v5532 = vor.u32 4788187, %v5531
      %v5533 = vand.u32 2147483647, %v5532
      %v5535 = vcvt.s32.f32 %v5528
      %v5536 = vmul.f32 %v5535, %v5533
      %v5537 = vxor.u32 %v5536, 2147483648
      %v5538 = vsel %vm5455, %v5537, %v5536
      %v5539 = vsub.s32 4, %v5515
      %v5540 = vsel %vm5455, %v5539, %v5515
      %v5541 = vsel %vm5454, %v1906, %v5538
      %v5542 = vsel %vm5454, 0, %v5540
      %v5543 = vcosq.f32.pop %v5541
      %v5544 = vsinq.f32.pop %v5541
      %vm5545 = vweird.f32 %v1906
      %v5546 = vadd.s32 %v5542, 3
      %v5547 = vand.u32 %v5546, 3
      %vm5548 = vcmp.lt.s32.totalorder %v5547, 2
      %vm5549 = vcmp.eq.s32.totalorder %v5547, 0
      %v5550 = vxor.u32 %v5544, 2147483648
      %v5551 = vsel %vm5549, %v5543, %v5550
      %vm5552 = vcmp.eq.s32.totalorder %v5547, 2
      %v5553 = vxor.u32 %v5543, 2147483648
      %v5554 = vsel %vm5552, %v5553, %v5544
      %v5555 = vsel %vm5548, %v5551, %v5554
      %v5556 = vsel %vm5545, nan, %v5555
      %v5557 = vand.u32 2147483647, %v1907
      %vm5558 = vcmp.le.f32.partialorder %v5557, 0.7853982
      %vm5559 = vcmp.lt.s32.totalorder %v1907, 0
      %v5560 = vand.u32 %v1907, 2139095040
      %v5561 = vshrl.u32 %v5560, 23
      %v5562 = vsub.s32 %v5561, 127
      %v5563 = vand.u32 2147483647, %v1907
      %v5564 = vand.u32 %v5563, 8388607
      %v5565 = vor.u32 %v5564, 8388608
      %v5566 = vsub.s32 0, %v5565
      %v5567 = vadd.s32 %v5562, 1
      %vm5568 = vcmp.gt.s32.totalorder %v5567, 0
      %v5569 = vsel %vm5568, %v5567, 0
      %v5570 = vshrl.u32 %v5569, 5
      %v5571 = vand.u32 %v5569, 31
      %v5572 = vsub.s32 32, %v5571
      %v5573 = vshrl.u32 683565275, %v5572
      %v5574 = vshll.u32 683565275, %v5571
      %v5575 = vshrl.u32 2475754826, %v5572
      %v5576 = vor.u32 %v5574, %v5575
      %v5577 = vshll.u32 2475754826, %v5571
      %v5578 = vshrl.u32 2131351028, %v5572
      %v5579 = vor.u32 %v5577, %v5578
      %v5580 = vshll.u32 2131351028, %v5571
      %v5581 = vshrl.u32 2102212464, %v5572
      %v5582 = vor.u32 %v5580, %v5581
      %v5583 = vshll.u32 2102212464, %v5571
      %v5584 = vshrl.u32 920167782, %v5572
      %v5585 = vor.u32 %v5583, %v5584
      %v5586 = vshll.u32 920167782, %v5571
      %v5587 = vshrl.u32 1326507024, %v5572
      %v5588 = vor.u32 %v5586, %v5587
      %vm5589 = vcmp.lt.s32.totalorder %v5570, 1
      %vm5590 = vcmp.lt.s32.totalorder %v5570, 2
      %vm5591 = vcmp.lt.s32.totalorder %v5570, 3
      %vm5592 = vcmp.lt.s32.totalorder %v5570, 4
      %v5593 = vsel %vm5589, %v5573, %v5576
      %v5594 = vsel %vm5592, %v5582, 2102212464
      %v5595 = vsel %vm5591, %v5579, %v5594
      %v5596 = vsel %vm5590, %v5593, %v5595
      %v5597 = vsel %vm5589, %v5576, %v5579
      %v5598 = vsel %vm5592, %v5585, 920167782
      %v5599 = vsel %vm5591, %v5582, %v5598
      %v5600 = vsel %vm5590, %v5597, %v5599
      %v5601 = vsel %vm5589, %v5579, %v5582
      %v5602 = vsel %vm5592, %v5588, 1326507024
      %v5603 = vsel %vm5591, %v5585, %v5602
      %v5604 = vsel %vm5590, %v5601, %v5603
      %v5605 = vshll.u32 %v5565, 8
      %v5606 = vmul.u32.u64.compose %v5605, %v5604
      %v5607 = vextract.low.u32 %v5606
      %v5608 = vextract.high.u32 %v5606
      %v5609 = vmul.u32.u64.compose %v5605, %v5600
      %v5610 = vextract.low.u32 %v5609
      %v5611 = vextract.high.u32 %v5609
      %v5612 = vmul.u32 %v5605, %v5596
      %v5613 = vadd.s32 %v5608, %v5610
      %vm5614 = vc.u32 %v5608, %v5610
      %v5615 = vadd.s32 %v5611, 1
      %v5616 = vsel %vm5614, %v5615, %v5611
      %v5617 = vadd.s32 %v5612, %v5616
      %v5618 = vadd.s32 %v5617, 536870912
      %v5619 = vshrl.u32 %v5618, 30
      %v5620 = vshll.u32 %v5619, 30
      %v5621 = vsub.s32 %v5617, %v5620
      %vm5622 = vcmp.lt.s32.totalorder %v5621, 0
      %v5623 = vsub.s32 0, %v5621
      %v5624 = vsel %vm5622, %v5623, %v5621
      %v5625 = vclz %v5624
      %v5626 = vsub.s32 %v5625, 2
      %vm5627 = vcmp.gt.s32.totalorder 0, %v5626
      %v5628 = vsel %vm5627, 0, %v5626
      %v5629 = vsub.s32 32, %v5628
      %v5630 = vshll.u32 %v5621, %v5628
      %v5631 = vshrl.u32 %v5613, %v5629
      %v5632 = vor.u32 %v5630, %v5631
      %v5633 = vsub.s32 4294967266, %v5628
      %v5634 = vadd.s32 %v5633, 127
      %v5635 = vshll.u32 %v5634, 23
      %v5636 = vor.u32 4788187, %v5635
      %v5637 = vand.u32 2147483647, %v5636
      %v5639 = vcvt.s32.f32 %v5632
      %v5640 = vmul.f32 %v5639, %v5637
      %v5641 = vxor.u32 %v5640, 2147483648
      %v5642 = vsel %vm5559, %v5641, %v5640
      %v5643 = vsub.s32 4, %v5619
      %v5644 = vsel %vm5559, %v5643, %v5619
      %v5645 = vsel %vm5558, %v1907, %v5642
      %v5646 = vsel %vm5558, 0, %v5644
      %v5647 = vcosq.f32.pop %v5645
      %v5648 = vsinq.f32.pop %v5645
      %vm5649 = vweird.f32 %v1907
      %v5650 = vadd.s32 %v5646, 3
      %v5651 = vand.u32 %v5650, 3
      %vm5652 = vcmp.lt.s32.totalorder %v5651, 2
      %vm5653 = vcmp.eq.s32.totalorder %v5651, 0
      %v5654 = vxor.u32 %v5648, 2147483648
      %v5655 = vsel %vm5653, %v5647, %v5654
      %vm5656 = vcmp.eq.s32.totalorder %v5651, 2
      %v5657 = vxor.u32 %v5647, 2147483648
      %v5658 = vsel %vm5656, %v5657, %v5648
      %v5659 = vsel %vm5652, %v5655, %v5658
      %v5660 = vsel %vm5649, nan, %v5659
      %v5661 = vand.u32 2147483647, %v1908
      %vm5662 = vcmp.le.f32.partialorder %v5661, 0.7853982
      %vm5663 = vcmp.lt.s32.totalorder %v1908, 0
      %v5664 = vand.u32 %v1908, 2139095040
      %v5665 = vshrl.u32 %v5664, 23
      %v5666 = vsub.s32 %v5665, 127
      %v5667 = vand.u32 2147483647, %v1908
      %v5668 = vand.u32 %v5667, 8388607
      %v5669 = vor.u32 %v5668, 8388608
      %v5670 = vsub.s32 0, %v5669
      %v5671 = vadd.s32 %v5666, 1
      %vm5672 = vcmp.gt.s32.totalorder %v5671, 0
      %v5673 = vsel %vm5672, %v5671, 0
      %v5674 = vshrl.u32 %v5673, 5
      %v5675 = vand.u32 %v5673, 31
      %v5676 = vsub.s32 32, %v5675
      %v5677 = vshrl.u32 683565275, %v5676
      %v5678 = vshll.u32 683565275, %v5675
      %v5679 = vshrl.u32 2475754826, %v5676
      %v5680 = vor.u32 %v5678, %v5679
      %v5681 = vshll.u32 2475754826, %v5675
      %v5682 = vshrl.u32 2131351028, %v5676
      %v5683 = vor.u32 %v5681, %v5682
      %v5684 = vshll.u32 2131351028, %v5675
      %v5685 = vshrl.u32 2102212464, %v5676
      %v5686 = vor.u32 %v5684, %v5685
      %v5687 = vshll.u32 2102212464, %v5675
      %v5688 = vshrl.u32 920167782, %v5676
      %v5689 = vor.u32 %v5687, %v5688
      %v5690 = vshll.u32 920167782, %v5675
      %v5691 = vshrl.u32 1326507024, %v5676
      %v5692 = vor.u32 %v5690, %v5691
      %vm5693 = vcmp.lt.s32.totalorder %v5674, 1
      %vm5694 = vcmp.lt.s32.totalorder %v5674, 2
      %vm5695 = vcmp.lt.s32.totalorder %v5674, 3
      %vm5696 = vcmp.lt.s32.totalorder %v5674, 4
      %v5697 = vsel %vm5693, %v5677, %v5680
      %v5698 = vsel %vm5696, %v5686, 2102212464
      %v5699 = vsel %vm5695, %v5683, %v5698
      %v5700 = vsel %vm5694, %v5697, %v5699
      %v5701 = vsel %vm5693, %v5680, %v5683
      %v5702 = vsel %vm5696, %v5689, 920167782
      %v5703 = vsel %vm5695, %v5686, %v5702
      %v5704 = vsel %vm5694, %v5701, %v5703
      %v5705 = vsel %vm5693, %v5683, %v5686
      %v5706 = vsel %vm5696, %v5692, 1326507024
      %v5707 = vsel %vm5695, %v5689, %v5706
      %v5708 = vsel %vm5694, %v5705, %v5707
      %v5709 = vshll.u32 %v5669, 8
      %v5710 = vmul.u32.u64.compose %v5709, %v5708
      %v5711 = vextract.low.u32 %v5710
      %v5712 = vextract.high.u32 %v5710
      %v5713 = vmul.u32.u64.compose %v5709, %v5704
      %v5714 = vextract.low.u32 %v5713
      %v5715 = vextract.high.u32 %v5713
      %v5716 = vmul.u32 %v5709, %v5700
      %v5717 = vadd.s32 %v5712, %v5714
      %vm5718 = vc.u32 %v5712, %v5714
      %v5719 = vadd.s32 %v5715, 1
      %v5720 = vsel %vm5718, %v5719, %v5715
      %v5721 = vadd.s32 %v5716, %v5720
      %v5722 = vadd.s32 %v5721, 536870912
      %v5723 = vshrl.u32 %v5722, 30
      %v5724 = vshll.u32 %v5723, 30
      %v5725 = vsub.s32 %v5721, %v5724
      %vm5726 = vcmp.lt.s32.totalorder %v5725, 0
      %v5727 = vsub.s32 0, %v5725
      %v5728 = vsel %vm5726, %v5727, %v5725
      %v5729 = vclz %v5728
      %v5730 = vsub.s32 %v5729, 2
      %vm5731 = vcmp.gt.s32.totalorder 0, %v5730
      %v5732 = vsel %vm5731, 0, %v5730
      %v5733 = vsub.s32 32, %v5732
      %v5734 = vshll.u32 %v5725, %v5732
      %v5735 = vshrl.u32 %v5717, %v5733
      %v5736 = vor.u32 %v5734, %v5735
      %v5737 = vsub.s32 4294967266, %v5732
      %v5738 = vadd.s32 %v5737, 127
      %v5739 = vshll.u32 %v5738, 23
      %v5740 = vor.u32 4788187, %v5739
      %v5741 = vand.u32 2147483647, %v5740
      %v5743 = vcvt.s32.f32 %v5736
      %v5744 = vmul.f32 %v5743, %v5741
      %v5745 = vxor.u32 %v5744, 2147483648
      %v5746 = vsel %vm5663, %v5745, %v5744
      %v5747 = vsub.s32 4, %v5723
      %v5748 = vsel %vm5663, %v5747, %v5723
      %v5749 = vsel %vm5662, %v1908, %v5746
      %v5750 = vsel %vm5662, 0, %v5748
      %v5751 = vcosq.f32.pop %v5749
      %v5752 = vsinq.f32.pop %v5749
      %vm5753 = vweird.f32 %v1908
      %v5754 = vadd.s32 %v5750, 3
      %v5755 = vand.u32 %v5754, 3
      %vm5756 = vcmp.lt.s32.totalorder %v5755, 2
      %vm5757 = vcmp.eq.s32.totalorder %v5755, 0
      %v5758 = vxor.u32 %v5752, 2147483648
      %v5759 = vsel %vm5757, %v5751, %v5758
      %vm5760 = vcmp.eq.s32.totalorder %v5755, 2
      %v5761 = vxor.u32 %v5751, 2147483648
      %v5762 = vsel %vm5760, %v5761, %v5752
      %v5763 = vsel %vm5756, %v5759, %v5762
      %v5764 = vsel %vm5753, nan, %v5763
      %v5765 = vand.u32 2147483647, %v1909
      %vm5766 = vcmp.le.f32.partialorder %v5765, 0.7853982
      %vm5767 = vcmp.lt.s32.totalorder %v1909, 0
      %v5768 = vand.u32 %v1909, 2139095040
      %v5769 = vshrl.u32 %v5768, 23
      %v5770 = vsub.s32 %v5769, 127
      %v5771 = vand.u32 2147483647, %v1909
      %v5772 = vand.u32 %v5771, 8388607
      %v5773 = vor.u32 %v5772, 8388608
      %v5774 = vsub.s32 0, %v5773
      %v5775 = vadd.s32 %v5770, 1
      %vm5776 = vcmp.gt.s32.totalorder %v5775, 0
      %v5777 = vsel %vm5776, %v5775, 0
      %v5778 = vshrl.u32 %v5777, 5
      %v5779 = vand.u32 %v5777, 31
      %v5780 = vsub.s32 32, %v5779
      %v5781 = vshrl.u32 683565275, %v5780
      %v5782 = vshll.u32 683565275, %v5779
      %v5783 = vshrl.u32 2475754826, %v5780
      %v5784 = vor.u32 %v5782, %v5783
      %v5785 = vshll.u32 2475754826, %v5779
      %v5786 = vshrl.u32 2131351028, %v5780
      %v5787 = vor.u32 %v5785, %v5786
      %v5788 = vshll.u32 2131351028, %v5779
      %v5789 = vshrl.u32 2102212464, %v5780
      %v5790 = vor.u32 %v5788, %v5789
      %v5791 = vshll.u32 2102212464, %v5779
      %v5792 = vshrl.u32 920167782, %v5780
      %v5793 = vor.u32 %v5791, %v5792
      %v5794 = vshll.u32 920167782, %v5779
      %v5795 = vshrl.u32 1326507024, %v5780
      %v5796 = vor.u32 %v5794, %v5795
      %vm5797 = vcmp.lt.s32.totalorder %v5778, 1
      %vm5798 = vcmp.lt.s32.totalorder %v5778, 2
      %vm5799 = vcmp.lt.s32.totalorder %v5778, 3
      %vm5800 = vcmp.lt.s32.totalorder %v5778, 4
      %v5801 = vsel %vm5797, %v5781, %v5784
      %v5802 = vsel %vm5800, %v5790, 2102212464
      %v5803 = vsel %vm5799, %v5787, %v5802
      %v5804 = vsel %vm5798, %v5801, %v5803
      %v5805 = vsel %vm5797, %v5784, %v5787
      %v5806 = vsel %vm5800, %v5793, 920167782
      %v5807 = vsel %vm5799, %v5790, %v5806
      %v5808 = vsel %vm5798, %v5805, %v5807
      %v5809 = vsel %vm5797, %v5787, %v5790
      %v5810 = vsel %vm5800, %v5796, 1326507024
      %v5811 = vsel %vm5799, %v5793, %v5810
      %v5812 = vsel %vm5798, %v5809, %v5811
      %v5813 = vshll.u32 %v5773, 8
      %v5814 = vmul.u32.u64.compose %v5813, %v5812
      %v5815 = vextract.low.u32 %v5814
      %v5816 = vextract.high.u32 %v5814
      %v5817 = vmul.u32.u64.compose %v5813, %v5808
      %v5818 = vextract.low.u32 %v5817
      %v5819 = vextract.high.u32 %v5817
      %v5820 = vmul.u32 %v5813, %v5804
      %v5821 = vadd.s32 %v5816, %v5818
      %vm5822 = vc.u32 %v5816, %v5818
      %v5823 = vadd.s32 %v5819, 1
      %v5824 = vsel %vm5822, %v5823, %v5819
      %v5825 = vadd.s32 %v5820, %v5824
      %v5826 = vadd.s32 %v5825, 536870912
      %v5827 = vshrl.u32 %v5826, 30
      %v5828 = vshll.u32 %v5827, 30
      %v5829 = vsub.s32 %v5825, %v5828
      %vm5830 = vcmp.lt.s32.totalorder %v5829, 0
      %v5831 = vsub.s32 0, %v5829
      %v5832 = vsel %vm5830, %v5831, %v5829
      %v5833 = vclz %v5832
      %v5834 = vsub.s32 %v5833, 2
      %vm5835 = vcmp.gt.s32.totalorder 0, %v5834
      %v5836 = vsel %vm5835, 0, %v5834
      %v5837 = vsub.s32 32, %v5836
      %v5838 = vshll.u32 %v5829, %v5836
      %v5839 = vshrl.u32 %v5821, %v5837
      %v5840 = vor.u32 %v5838, %v5839
      %v5841 = vsub.s32 4294967266, %v5836
      %v5842 = vadd.s32 %v5841, 127
      %v5843 = vshll.u32 %v5842, 23
      %v5844 = vor.u32 4788187, %v5843
      %v5845 = vand.u32 2147483647, %v5844
      %v5847 = vcvt.s32.f32 %v5840
      %v5848 = vmul.f32 %v5847, %v5845
      %v5849 = vxor.u32 %v5848, 2147483648
      %v5850 = vsel %vm5767, %v5849, %v5848
      %v5851 = vsub.s32 4, %v5827
      %v5852 = vsel %vm5767, %v5851, %v5827
      %v5853 = vsel %vm5766, %v1909, %v5850
      %v5854 = vsel %vm5766, 0, %v5852
      %v5855 = vcosq.f32.pop %v5853
      %v5856 = vsinq.f32.pop %v5853
      %vm5857 = vweird.f32 %v1909
      %v5858 = vadd.s32 %v5854, 3
      %v5859 = vand.u32 %v5858, 3
      %vm5860 = vcmp.lt.s32.totalorder %v5859, 2
      %vm5861 = vcmp.eq.s32.totalorder %v5859, 0
      %v5862 = vxor.u32 %v5856, 2147483648
      %v5863 = vsel %vm5861, %v5855, %v5862
      %vm5864 = vcmp.eq.s32.totalorder %v5859, 2
      %v5865 = vxor.u32 %v5855, 2147483648
      %v5866 = vsel %vm5864, %v5865, %v5856
      %v5867 = vsel %vm5860, %v5863, %v5866
      %v5868 = vsel %vm5857, nan, %v5867
      %v5869 = vand.u32 2147483647, %v1910
      %vm5870 = vcmp.le.f32.partialorder %v5869, 0.7853982
      %vm5871 = vcmp.lt.s32.totalorder %v1910, 0
      %v5872 = vand.u32 %v1910, 2139095040
      %v5873 = vshrl.u32 %v5872, 23
      %v5874 = vsub.s32 %v5873, 127
      %v5875 = vand.u32 2147483647, %v1910
      %v5876 = vand.u32 %v5875, 8388607
      %v5877 = vor.u32 %v5876, 8388608
      %v5878 = vsub.s32 0, %v5877
      %v5879 = vadd.s32 %v5874, 1
      %vm5880 = vcmp.gt.s32.totalorder %v5879, 0
      %v5881 = vsel %vm5880, %v5879, 0
      %v5882 = vshrl.u32 %v5881, 5
      %v5883 = vand.u32 %v5881, 31
      %v5884 = vsub.s32 32, %v5883
      %v5885 = vshrl.u32 683565275, %v5884
      %v5886 = vshll.u32 683565275, %v5883
      %v5887 = vshrl.u32 2475754826, %v5884
      %v5888 = vor.u32 %v5886, %v5887
      %v5889 = vshll.u32 2475754826, %v5883
      %v5890 = vshrl.u32 2131351028, %v5884
      %v5891 = vor.u32 %v5889, %v5890
      %v5892 = vshll.u32 2131351028, %v5883
      %v5893 = vshrl.u32 2102212464, %v5884
      %v5894 = vor.u32 %v5892, %v5893
      %v5895 = vshll.u32 2102212464, %v5883
      %v5896 = vshrl.u32 920167782, %v5884
      %v5897 = vor.u32 %v5895, %v5896
      %v5898 = vshll.u32 920167782, %v5883
      %v5899 = vshrl.u32 1326507024, %v5884
      %v5900 = vor.u32 %v5898, %v5899
      %vm5901 = vcmp.lt.s32.totalorder %v5882, 1
      %vm5902 = vcmp.lt.s32.totalorder %v5882, 2
      %vm5903 = vcmp.lt.s32.totalorder %v5882, 3
      %vm5904 = vcmp.lt.s32.totalorder %v5882, 4
      %v5905 = vsel %vm5901, %v5885, %v5888
      %v5906 = vsel %vm5904, %v5894, 2102212464
      %v5907 = vsel %vm5903, %v5891, %v5906
      %v5908 = vsel %vm5902, %v5905, %v5907
      %v5909 = vsel %vm5901, %v5888, %v5891
      %v5910 = vsel %vm5904, %v5897, 920167782
      %v5911 = vsel %vm5903, %v5894, %v5910
      %v5912 = vsel %vm5902, %v5909, %v5911
      %v5913 = vsel %vm5901, %v5891, %v5894
      %v5914 = vsel %vm5904, %v5900, 1326507024
      %v5915 = vsel %vm5903, %v5897, %v5914
      %v5916 = vsel %vm5902, %v5913, %v5915
      %v5917 = vshll.u32 %v5877, 8
      %v5918 = vmul.u32.u64.compose %v5917, %v5916
      %v5919 = vextract.low.u32 %v5918
      %v5920 = vextract.high.u32 %v5918
      %v5921 = vmul.u32.u64.compose %v5917, %v5912
      %v5922 = vextract.low.u32 %v5921
      %v5923 = vextract.high.u32 %v5921
      %v5924 = vmul.u32 %v5917, %v5908
      %v5925 = vadd.s32 %v5920, %v5922
      %vm5926 = vc.u32 %v5920, %v5922
      %v5927 = vadd.s32 %v5923, 1
      %v5928 = vsel %vm5926, %v5927, %v5923
      %v5929 = vadd.s32 %v5924, %v5928
      %v5930 = vadd.s32 %v5929, 536870912
      %v5931 = vshrl.u32 %v5930, 30
      %v5932 = vshll.u32 %v5931, 30
      %v5933 = vsub.s32 %v5929, %v5932
      %vm5934 = vcmp.lt.s32.totalorder %v5933, 0
      %v5935 = vsub.s32 0, %v5933
      %v5936 = vsel %vm5934, %v5935, %v5933
      %v5937 = vclz %v5936
      %v5938 = vsub.s32 %v5937, 2
      %vm5939 = vcmp.gt.s32.totalorder 0, %v5938
      %v5940 = vsel %vm5939, 0, %v5938
      %v5941 = vsub.s32 32, %v5940
      %v5942 = vshll.u32 %v5933, %v5940
      %v5943 = vshrl.u32 %v5925, %v5941
      %v5944 = vor.u32 %v5942, %v5943
      %v5945 = vsub.s32 4294967266, %v5940
      %v5946 = vadd.s32 %v5945, 127
      %v5947 = vshll.u32 %v5946, 23
      %v5948 = vor.u32 4788187, %v5947
      %v5949 = vand.u32 2147483647, %v5948
      %v5951 = vcvt.s32.f32 %v5944
      %v5952 = vmul.f32 %v5951, %v5949
      %v5953 = vxor.u32 %v5952, 2147483648
      %v5954 = vsel %vm5871, %v5953, %v5952
      %v5955 = vsub.s32 4, %v5931
      %v5956 = vsel %vm5871, %v5955, %v5931
      %v5957 = vsel %vm5870, %v1910, %v5954
      %v5958 = vsel %vm5870, 0, %v5956
      %v5959 = vcosq.f32.pop %v5957
      %v5960 = vsinq.f32.pop %v5957
      %vm5961 = vweird.f32 %v1910
      %v5962 = vadd.s32 %v5958, 3
      %v5963 = vand.u32 %v5962, 3
      %vm5964 = vcmp.lt.s32.totalorder %v5963, 2
      %vm5965 = vcmp.eq.s32.totalorder %v5963, 0
      %v5966 = vxor.u32 %v5960, 2147483648
      %v5967 = vsel %vm5965, %v5959, %v5966
      %vm5968 = vcmp.eq.s32.totalorder %v5963, 2
      %v5969 = vxor.u32 %v5959, 2147483648
      %v5970 = vsel %vm5968, %v5969, %v5960
      %v5971 = vsel %vm5964, %v5967, %v5970
      %v5972 = vsel %vm5961, nan, %v5971
      %v5973 = vand.u32 2147483647, %v1911
      %vm5974 = vcmp.le.f32.partialorder %v5973, 0.7853982
      %vm5975 = vcmp.lt.s32.totalorder %v1911, 0
      %v5976 = vand.u32 %v1911, 2139095040
      %v5977 = vshrl.u32 %v5976, 23
      %v5978 = vsub.s32 %v5977, 127
      %v5979 = vand.u32 2147483647, %v1911
      %v5980 = vand.u32 %v5979, 8388607
      %v5981 = vor.u32 %v5980, 8388608
      %v5982 = vsub.s32 0, %v5981
      %v5983 = vadd.s32 %v5978, 1
      %vm5984 = vcmp.gt.s32.totalorder %v5983, 0
      %v5985 = vsel %vm5984, %v5983, 0
      %v5986 = vshrl.u32 %v5985, 5
      %v5987 = vand.u32 %v5985, 31
      %v5988 = vsub.s32 32, %v5987
      %v5989 = vshrl.u32 683565275, %v5988
      %v5990 = vshll.u32 683565275, %v5987
      %v5991 = vshrl.u32 2475754826, %v5988
      %v5992 = vor.u32 %v5990, %v5991
      %v5993 = vshll.u32 2475754826, %v5987
      %v5994 = vshrl.u32 2131351028, %v5988
      %v5995 = vor.u32 %v5993, %v5994
      %v5996 = vshll.u32 2131351028, %v5987
      %v5997 = vshrl.u32 2102212464, %v5988
      %v5998 = vor.u32 %v5996, %v5997
      %v5999 = vshll.u32 2102212464, %v5987
      %v6000 = vshrl.u32 920167782, %v5988
      %v6001 = vor.u32 %v5999, %v6000
      %v6002 = vshll.u32 920167782, %v5987
      %v6003 = vshrl.u32 1326507024, %v5988
      %v6004 = vor.u32 %v6002, %v6003
      %vm6005 = vcmp.lt.s32.totalorder %v5986, 1
      %vm6006 = vcmp.lt.s32.totalorder %v5986, 2
      %vm6007 = vcmp.lt.s32.totalorder %v5986, 3
      %vm6008 = vcmp.lt.s32.totalorder %v5986, 4
      %v6009 = vsel %vm6005, %v5989, %v5992
      %v6010 = vsel %vm6008, %v5998, 2102212464
      %v6011 = vsel %vm6007, %v5995, %v6010
      %v6012 = vsel %vm6006, %v6009, %v6011
      %v6013 = vsel %vm6005, %v5992, %v5995
      %v6014 = vsel %vm6008, %v6001, 920167782
      %v6015 = vsel %vm6007, %v5998, %v6014
      %v6016 = vsel %vm6006, %v6013, %v6015
      %v6017 = vsel %vm6005, %v5995, %v5998
      %v6018 = vsel %vm6008, %v6004, 1326507024
      %v6019 = vsel %vm6007, %v6001, %v6018
      %v6020 = vsel %vm6006, %v6017, %v6019
      %v6021 = vshll.u32 %v5981, 8
      %v6022 = vmul.u32.u64.compose %v6021, %v6020
      %v6023 = vextract.low.u32 %v6022
      %v6024 = vextract.high.u32 %v6022
      %v6025 = vmul.u32.u64.compose %v6021, %v6016
      %v6026 = vextract.low.u32 %v6025
      %v6027 = vextract.high.u32 %v6025
      %v6028 = vmul.u32 %v6021, %v6012
      %v6029 = vadd.s32 %v6024, %v6026
      %vm6030 = vc.u32 %v6024, %v6026
      %v6031 = vadd.s32 %v6027, 1
      %v6032 = vsel %vm6030, %v6031, %v6027
      %v6033 = vadd.s32 %v6028, %v6032
      %v6034 = vadd.s32 %v6033, 536870912
      %v6035 = vshrl.u32 %v6034, 30
      %v6036 = vshll.u32 %v6035, 30
      %v6037 = vsub.s32 %v6033, %v6036
      %vm6038 = vcmp.lt.s32.totalorder %v6037, 0
      %v6039 = vsub.s32 0, %v6037
      %v6040 = vsel %vm6038, %v6039, %v6037
      %v6041 = vclz %v6040
      %v6042 = vsub.s32 %v6041, 2
      %vm6043 = vcmp.gt.s32.totalorder 0, %v6042
      %v6044 = vsel %vm6043, 0, %v6042
      %v6045 = vsub.s32 32, %v6044
      %v6046 = vshll.u32 %v6037, %v6044
      %v6047 = vshrl.u32 %v6029, %v6045
      %v6048 = vor.u32 %v6046, %v6047
      %v6049 = vsub.s32 4294967266, %v6044
      %v6050 = vadd.s32 %v6049, 127
      %v6051 = vshll.u32 %v6050, 23
      %v6052 = vor.u32 4788187, %v6051
      %v6053 = vand.u32 2147483647, %v6052
      %v6055 = vcvt.s32.f32 %v6048
      %v6056 = vmul.f32 %v6055, %v6053
      %v6057 = vxor.u32 %v6056, 2147483648
      %v6058 = vsel %vm5975, %v6057, %v6056
      %v6059 = vsub.s32 4, %v6035
      %v6060 = vsel %vm5975, %v6059, %v6035
      %v6061 = vsel %vm5974, %v1911, %v6058
      %v6062 = vsel %vm5974, 0, %v6060
      %v6063 = vcosq.f32.pop %v6061
      %v6064 = vsinq.f32.pop %v6061
      %vm6065 = vweird.f32 %v1911
      %v6066 = vadd.s32 %v6062, 3
      %v6067 = vand.u32 %v6066, 3
      %vm6068 = vcmp.lt.s32.totalorder %v6067, 2
      %vm6069 = vcmp.eq.s32.totalorder %v6067, 0
      %v6070 = vxor.u32 %v6064, 2147483648
      %v6071 = vsel %vm6069, %v6063, %v6070
      %vm6072 = vcmp.eq.s32.totalorder %v6067, 2
      %v6073 = vxor.u32 %v6063, 2147483648
      %v6074 = vsel %vm6072, %v6073, %v6064
      %v6075 = vsel %vm6068, %v6071, %v6074
      %v6076 = vsel %vm6065, nan, %v6075
      %v6077 = vand.u32 2147483647, %v1912
      %vm6078 = vcmp.le.f32.partialorder %v6077, 0.7853982
      %vm6079 = vcmp.lt.s32.totalorder %v1912, 0
      %v6080 = vand.u32 %v1912, 2139095040
      %v6081 = vshrl.u32 %v6080, 23
      %v6082 = vsub.s32 %v6081, 127
      %v6083 = vand.u32 2147483647, %v1912
      %v6084 = vand.u32 %v6083, 8388607
      %v6085 = vor.u32 %v6084, 8388608
      %v6086 = vsub.s32 0, %v6085
      %v6087 = vadd.s32 %v6082, 1
      %vm6088 = vcmp.gt.s32.totalorder %v6087, 0
      %v6089 = vsel %vm6088, %v6087, 0
      %v6090 = vshrl.u32 %v6089, 5
      %v6091 = vand.u32 %v6089, 31
      %v6092 = vsub.s32 32, %v6091
      %v6093 = vshrl.u32 683565275, %v6092
      %v6094 = vshll.u32 683565275, %v6091
      %v6095 = vshrl.u32 2475754826, %v6092
      %v6096 = vor.u32 %v6094, %v6095
      %v6097 = vshll.u32 2475754826, %v6091
      %v6098 = vshrl.u32 2131351028, %v6092
      %v6099 = vor.u32 %v6097, %v6098
      %v6100 = vshll.u32 2131351028, %v6091
      %v6101 = vshrl.u32 2102212464, %v6092
      %v6102 = vor.u32 %v6100, %v6101
      %v6103 = vshll.u32 2102212464, %v6091
      %v6104 = vshrl.u32 920167782, %v6092
      %v6105 = vor.u32 %v6103, %v6104
      %v6106 = vshll.u32 920167782, %v6091
      %v6107 = vshrl.u32 1326507024, %v6092
      %v6108 = vor.u32 %v6106, %v6107
      %vm6109 = vcmp.lt.s32.totalorder %v6090, 1
      %vm6110 = vcmp.lt.s32.totalorder %v6090, 2
      %vm6111 = vcmp.lt.s32.totalorder %v6090, 3
      %vm6112 = vcmp.lt.s32.totalorder %v6090, 4
      %v6113 = vsel %vm6109, %v6093, %v6096
      %v6114 = vsel %vm6112, %v6102, 2102212464
      %v6115 = vsel %vm6111, %v6099, %v6114
      %v6116 = vsel %vm6110, %v6113, %v6115
      %v6117 = vsel %vm6109, %v6096, %v6099
      %v6118 = vsel %vm6112, %v6105, 920167782
      %v6119 = vsel %vm6111, %v6102, %v6118
      %v6120 = vsel %vm6110, %v6117, %v6119
      %v6121 = vsel %vm6109, %v6099, %v6102
      %v6122 = vsel %vm6112, %v6108, 1326507024
      %v6123 = vsel %vm6111, %v6105, %v6122
      %v6124 = vsel %vm6110, %v6121, %v6123
      %v6125 = vshll.u32 %v6085, 8
      %v6126 = vmul.u32.u64.compose %v6125, %v6124
      %v6127 = vextract.low.u32 %v6126
      %v6128 = vextract.high.u32 %v6126
      %v6129 = vmul.u32.u64.compose %v6125, %v6120
      %v6130 = vextract.low.u32 %v6129
      %v6131 = vextract.high.u32 %v6129
      %v6132 = vmul.u32 %v6125, %v6116
      %v6133 = vadd.s32 %v6128, %v6130
      %vm6134 = vc.u32 %v6128, %v6130
      %v6135 = vadd.s32 %v6131, 1
      %v6136 = vsel %vm6134, %v6135, %v6131
      %v6137 = vadd.s32 %v6132, %v6136
      %v6138 = vadd.s32 %v6137, 536870912
      %v6139 = vshrl.u32 %v6138, 30
      %v6140 = vshll.u32 %v6139, 30
      %v6141 = vsub.s32 %v6137, %v6140
      %vm6142 = vcmp.lt.s32.totalorder %v6141, 0
      %v6143 = vsub.s32 0, %v6141
      %v6144 = vsel %vm6142, %v6143, %v6141
      %v6145 = vclz %v6144
      %v6146 = vsub.s32 %v6145, 2
      %vm6147 = vcmp.gt.s32.totalorder 0, %v6146
      %v6148 = vsel %vm6147, 0, %v6146
      %v6149 = vsub.s32 32, %v6148
      %v6150 = vshll.u32 %v6141, %v6148
      %v6151 = vshrl.u32 %v6133, %v6149
      %v6152 = vor.u32 %v6150, %v6151
      %v6153 = vsub.s32 4294967266, %v6148
      %v6154 = vadd.s32 %v6153, 127
      %v6155 = vshll.u32 %v6154, 23
      %v6156 = vor.u32 4788187, %v6155
      %v6157 = vand.u32 2147483647, %v6156
      %v6159 = vcvt.s32.f32 %v6152
      %v6160 = vmul.f32 %v6159, %v6157
      %v6161 = vxor.u32 %v6160, 2147483648
      %v6162 = vsel %vm6079, %v6161, %v6160
      %v6163 = vsub.s32 4, %v6139
      %v6164 = vsel %vm6079, %v6163, %v6139
      %v6165 = vsel %vm6078, %v1912, %v6162
      %v6166 = vsel %vm6078, 0, %v6164
      %v6167 = vcosq.f32.pop %v6165
      %v6168 = vsinq.f32.pop %v6165
      %vm6169 = vweird.f32 %v1912
      %v6170 = vadd.s32 %v6166, 3
      %v6171 = vand.u32 %v6170, 3
      %vm6172 = vcmp.lt.s32.totalorder %v6171, 2
      %vm6173 = vcmp.eq.s32.totalorder %v6171, 0
      %v6174 = vxor.u32 %v6168, 2147483648
      %v6175 = vsel %vm6173, %v6167, %v6174
      %vm6176 = vcmp.eq.s32.totalorder %v6171, 2
      %v6177 = vxor.u32 %v6167, 2147483648
      %v6178 = vsel %vm6176, %v6177, %v6168
      %v6179 = vsel %vm6172, %v6175, %v6178
      %v6180 = vsel %vm6169, nan, %v6179
      %v6181 = vand.u32 2147483647, %v1913
      %vm6182 = vcmp.le.f32.partialorder %v6181, 0.7853982
      %vm6183 = vcmp.lt.s32.totalorder %v1913, 0
      %v6184 = vand.u32 %v1913, 2139095040
      %v6185 = vshrl.u32 %v6184, 23
      %v6186 = vsub.s32 %v6185, 127
      %v6187 = vand.u32 2147483647, %v1913
      %v6188 = vand.u32 %v6187, 8388607
      %v6189 = vor.u32 %v6188, 8388608
      %v6190 = vsub.s32 0, %v6189
      %v6191 = vadd.s32 %v6186, 1
      %vm6192 = vcmp.gt.s32.totalorder %v6191, 0
      %v6193 = vsel %vm6192, %v6191, 0
      %v6194 = vshrl.u32 %v6193, 5
      %v6195 = vand.u32 %v6193, 31
      %v6196 = vsub.s32 32, %v6195
      %v6197 = vshrl.u32 683565275, %v6196
      %v6198 = vshll.u32 683565275, %v6195
      %v6199 = vshrl.u32 2475754826, %v6196
      %v6200 = vor.u32 %v6198, %v6199
      %v6201 = vshll.u32 2475754826, %v6195
      %v6202 = vshrl.u32 2131351028, %v6196
      %v6203 = vor.u32 %v6201, %v6202
      %v6204 = vshll.u32 2131351028, %v6195
      %v6205 = vshrl.u32 2102212464, %v6196
      %v6206 = vor.u32 %v6204, %v6205
      %v6207 = vshll.u32 2102212464, %v6195
      %v6208 = vshrl.u32 920167782, %v6196
      %v6209 = vor.u32 %v6207, %v6208
      %v6210 = vshll.u32 920167782, %v6195
      %v6211 = vshrl.u32 1326507024, %v6196
      %v6212 = vor.u32 %v6210, %v6211
      %vm6213 = vcmp.lt.s32.totalorder %v6194, 1
      %vm6214 = vcmp.lt.s32.totalorder %v6194, 2
      %vm6215 = vcmp.lt.s32.totalorder %v6194, 3
      %vm6216 = vcmp.lt.s32.totalorder %v6194, 4
      %v6217 = vsel %vm6213, %v6197, %v6200
      %v6218 = vsel %vm6216, %v6206, 2102212464
      %v6219 = vsel %vm6215, %v6203, %v6218
      %v6220 = vsel %vm6214, %v6217, %v6219
      %v6221 = vsel %vm6213, %v6200, %v6203
      %v6222 = vsel %vm6216, %v6209, 920167782
      %v6223 = vsel %vm6215, %v6206, %v6222
      %v6224 = vsel %vm6214, %v6221, %v6223
      %v6225 = vsel %vm6213, %v6203, %v6206
      %v6226 = vsel %vm6216, %v6212, 1326507024
      %v6227 = vsel %vm6215, %v6209, %v6226
      %v6228 = vsel %vm6214, %v6225, %v6227
      %v6229 = vshll.u32 %v6189, 8
      %v6230 = vmul.u32.u64.compose %v6229, %v6228
      %v6231 = vextract.low.u32 %v6230
      %v6232 = vextract.high.u32 %v6230
      %v6233 = vmul.u32.u64.compose %v6229, %v6224
      %v6234 = vextract.low.u32 %v6233
      %v6235 = vextract.high.u32 %v6233
      %v6236 = vmul.u32 %v6229, %v6220
      %v6237 = vadd.s32 %v6232, %v6234
      %vm6238 = vc.u32 %v6232, %v6234
      %v6239 = vadd.s32 %v6235, 1
      %v6240 = vsel %vm6238, %v6239, %v6235
      %v6241 = vadd.s32 %v6236, %v6240
      %v6242 = vadd.s32 %v6241, 536870912
      %v6243 = vshrl.u32 %v6242, 30
      %v6244 = vshll.u32 %v6243, 30
      %v6245 = vsub.s32 %v6241, %v6244
      %vm6246 = vcmp.lt.s32.totalorder %v6245, 0
      %v6247 = vsub.s32 0, %v6245
      %v6248 = vsel %vm6246, %v6247, %v6245
      %v6249 = vclz %v6248
      %v6250 = vsub.s32 %v6249, 2
      %vm6251 = vcmp.gt.s32.totalorder 0, %v6250
      %v6252 = vsel %vm6251, 0, %v6250
      %v6253 = vsub.s32 32, %v6252
      %v6254 = vshll.u32 %v6245, %v6252
      %v6255 = vshrl.u32 %v6237, %v6253
      %v6256 = vor.u32 %v6254, %v6255
      %v6257 = vsub.s32 4294967266, %v6252
      %v6258 = vadd.s32 %v6257, 127
      %v6259 = vshll.u32 %v6258, 23
      %v6260 = vor.u32 4788187, %v6259
      %v6261 = vand.u32 2147483647, %v6260
      %v6263 = vcvt.s32.f32 %v6256
      %v6264 = vmul.f32 %v6263, %v6261
      %v6265 = vxor.u32 %v6264, 2147483648
      %v6266 = vsel %vm6183, %v6265, %v6264
      %v6267 = vsub.s32 4, %v6243
      %v6268 = vsel %vm6183, %v6267, %v6243
      %v6269 = vsel %vm6182, %v1913, %v6266
      %v6270 = vsel %vm6182, 0, %v6268
      %v6271 = vcosq.f32.pop %v6269
      %v6272 = vsinq.f32.pop %v6269
      %vm6273 = vweird.f32 %v1913
      %v6274 = vadd.s32 %v6270, 3
      %v6275 = vand.u32 %v6274, 3
      %vm6276 = vcmp.lt.s32.totalorder %v6275, 2
      %vm6277 = vcmp.eq.s32.totalorder %v6275, 0
      %v6278 = vxor.u32 %v6272, 2147483648
      %v6279 = vsel %vm6277, %v6271, %v6278
      %vm6280 = vcmp.eq.s32.totalorder %v6275, 2
      %v6281 = vxor.u32 %v6271, 2147483648
      %v6282 = vsel %vm6280, %v6281, %v6272
      %v6283 = vsel %vm6276, %v6279, %v6282
      %v6284 = vsel %vm6273, nan, %v6283
      %v6285 = vand.u32 2147483647, %v1914
      %vm6286 = vcmp.le.f32.partialorder %v6285, 0.7853982
      %vm6287 = vcmp.lt.s32.totalorder %v1914, 0
      %v6288 = vand.u32 %v1914, 2139095040
      %v6289 = vshrl.u32 %v6288, 23
      %v6290 = vsub.s32 %v6289, 127
      %v6291 = vand.u32 2147483647, %v1914
      %v6292 = vand.u32 %v6291, 8388607
      %v6293 = vor.u32 %v6292, 8388608
      %v6294 = vsub.s32 0, %v6293
      %v6295 = vadd.s32 %v6290, 1
      %vm6296 = vcmp.gt.s32.totalorder %v6295, 0
      %v6297 = vsel %vm6296, %v6295, 0
      %v6298 = vshrl.u32 %v6297, 5
      %v6299 = vand.u32 %v6297, 31
      %v6300 = vsub.s32 32, %v6299
      %v6301 = vshrl.u32 683565275, %v6300
      %v6302 = vshll.u32 683565275, %v6299
      %v6303 = vshrl.u32 2475754826, %v6300
      %v6304 = vor.u32 %v6302, %v6303
      %v6305 = vshll.u32 2475754826, %v6299
      %v6306 = vshrl.u32 2131351028, %v6300
      %v6307 = vor.u32 %v6305, %v6306
      %v6308 = vshll.u32 2131351028, %v6299
      %v6309 = vshrl.u32 2102212464, %v6300
      %v6310 = vor.u32 %v6308, %v6309
      %v6311 = vshll.u32 2102212464, %v6299
      %v6312 = vshrl.u32 920167782, %v6300
      %v6313 = vor.u32 %v6311, %v6312
      %v6314 = vshll.u32 920167782, %v6299
      %v6315 = vshrl.u32 1326507024, %v6300
      %v6316 = vor.u32 %v6314, %v6315
      %vm6317 = vcmp.lt.s32.totalorder %v6298, 1
      %vm6318 = vcmp.lt.s32.totalorder %v6298, 2
      %vm6319 = vcmp.lt.s32.totalorder %v6298, 3
      %vm6320 = vcmp.lt.s32.totalorder %v6298, 4
      %v6321 = vsel %vm6317, %v6301, %v6304
      %v6322 = vsel %vm6320, %v6310, 2102212464
      %v6323 = vsel %vm6319, %v6307, %v6322
      %v6324 = vsel %vm6318, %v6321, %v6323
      %v6325 = vsel %vm6317, %v6304, %v6307
      %v6326 = vsel %vm6320, %v6313, 920167782
      %v6327 = vsel %vm6319, %v6310, %v6326
      %v6328 = vsel %vm6318, %v6325, %v6327
      %v6329 = vsel %vm6317, %v6307, %v6310
      %v6330 = vsel %vm6320, %v6316, 1326507024
      %v6331 = vsel %vm6319, %v6313, %v6330
      %v6332 = vsel %vm6318, %v6329, %v6331
      %v6333 = vshll.u32 %v6293, 8
      %v6334 = vmul.u32.u64.compose %v6333, %v6332
      %v6335 = vextract.low.u32 %v6334
      %v6336 = vextract.high.u32 %v6334
      %v6337 = vmul.u32.u64.compose %v6333, %v6328
      %v6338 = vextract.low.u32 %v6337
      %v6339 = vextract.high.u32 %v6337
      %v6340 = vmul.u32 %v6333, %v6324
      %v6341 = vadd.s32 %v6336, %v6338
      %vm6342 = vc.u32 %v6336, %v6338
      %v6343 = vadd.s32 %v6339, 1
      %v6344 = vsel %vm6342, %v6343, %v6339
      %v6345 = vadd.s32 %v6340, %v6344
      %v6346 = vadd.s32 %v6345, 536870912
      %v6347 = vshrl.u32 %v6346, 30
      %v6348 = vshll.u32 %v6347, 30
      %v6349 = vsub.s32 %v6345, %v6348
      %vm6350 = vcmp.lt.s32.totalorder %v6349, 0
      %v6351 = vsub.s32 0, %v6349
      %v6352 = vsel %vm6350, %v6351, %v6349
      %v6353 = vclz %v6352
      %v6354 = vsub.s32 %v6353, 2
      %vm6355 = vcmp.gt.s32.totalorder 0, %v6354
      %v6356 = vsel %vm6355, 0, %v6354
      %v6357 = vsub.s32 32, %v6356
      %v6358 = vshll.u32 %v6349, %v6356
      %v6359 = vshrl.u32 %v6341, %v6357
      %v6360 = vor.u32 %v6358, %v6359
      %v6361 = vsub.s32 4294967266, %v6356
      %v6362 = vadd.s32 %v6361, 127
      %v6363 = vshll.u32 %v6362, 23
      %v6364 = vor.u32 4788187, %v6363
      %v6365 = vand.u32 2147483647, %v6364
      %v6367 = vcvt.s32.f32 %v6360
      %v6368 = vmul.f32 %v6367, %v6365
      %v6369 = vxor.u32 %v6368, 2147483648
      %v6370 = vsel %vm6287, %v6369, %v6368
      %v6371 = vsub.s32 4, %v6347
      %v6372 = vsel %vm6287, %v6371, %v6347
      %v6373 = vsel %vm6286, %v1914, %v6370
      %v6374 = vsel %vm6286, 0, %v6372
      %v6375 = vcosq.f32.pop %v6373
      %v6376 = vsinq.f32.pop %v6373
      %vm6377 = vweird.f32 %v1914
      %v6378 = vadd.s32 %v6374, 3
      %v6379 = vand.u32 %v6378, 3
      %vm6380 = vcmp.lt.s32.totalorder %v6379, 2
      %vm6381 = vcmp.eq.s32.totalorder %v6379, 0
      %v6382 = vxor.u32 %v6376, 2147483648
      %v6383 = vsel %vm6381, %v6375, %v6382
      %vm6384 = vcmp.eq.s32.totalorder %v6379, 2
      %v6385 = vxor.u32 %v6375, 2147483648
      %v6386 = vsel %vm6384, %v6385, %v6376
      %v6387 = vsel %vm6380, %v6383, %v6386
      %v6388 = vsel %vm6377, nan, %v6387
      %v6389 = vand.u32 2147483647, %v1915
      %vm6390 = vcmp.le.f32.partialorder %v6389, 0.7853982
      %vm6391 = vcmp.lt.s32.totalorder %v1915, 0
      %v6392 = vand.u32 %v1915, 2139095040
      %v6393 = vshrl.u32 %v6392, 23
      %v6394 = vsub.s32 %v6393, 127
      %v6395 = vand.u32 2147483647, %v1915
      %v6396 = vand.u32 %v6395, 8388607
      %v6397 = vor.u32 %v6396, 8388608
      %v6398 = vsub.s32 0, %v6397
      %v6399 = vadd.s32 %v6394, 1
      %vm6400 = vcmp.gt.s32.totalorder %v6399, 0
      %v6401 = vsel %vm6400, %v6399, 0
      %v6402 = vshrl.u32 %v6401, 5
      %v6403 = vand.u32 %v6401, 31
      %v6404 = vsub.s32 32, %v6403
      %v6405 = vshrl.u32 683565275, %v6404
      %v6406 = vshll.u32 683565275, %v6403
      %v6407 = vshrl.u32 2475754826, %v6404
      %v6408 = vor.u32 %v6406, %v6407
      %v6409 = vshll.u32 2475754826, %v6403
      %v6410 = vshrl.u32 2131351028, %v6404
      %v6411 = vor.u32 %v6409, %v6410
      %v6412 = vshll.u32 2131351028, %v6403
      %v6413 = vshrl.u32 2102212464, %v6404
      %v6414 = vor.u32 %v6412, %v6413
      %v6415 = vshll.u32 2102212464, %v6403
      %v6416 = vshrl.u32 920167782, %v6404
      %v6417 = vor.u32 %v6415, %v6416
      %v6418 = vshll.u32 920167782, %v6403
      %v6419 = vshrl.u32 1326507024, %v6404
      %v6420 = vor.u32 %v6418, %v6419
      %vm6421 = vcmp.lt.s32.totalorder %v6402, 1
      %vm6422 = vcmp.lt.s32.totalorder %v6402, 2
      %vm6423 = vcmp.lt.s32.totalorder %v6402, 3
      %vm6424 = vcmp.lt.s32.totalorder %v6402, 4
      %v6425 = vsel %vm6421, %v6405, %v6408
      %v6426 = vsel %vm6424, %v6414, 2102212464
      %v6427 = vsel %vm6423, %v6411, %v6426
      %v6428 = vsel %vm6422, %v6425, %v6427
      %v6429 = vsel %vm6421, %v6408, %v6411
      %v6430 = vsel %vm6424, %v6417, 920167782
      %v6431 = vsel %vm6423, %v6414, %v6430
      %v6432 = vsel %vm6422, %v6429, %v6431
      %v6433 = vsel %vm6421, %v6411, %v6414
      %v6434 = vsel %vm6424, %v6420, 1326507024
      %v6435 = vsel %vm6423, %v6417, %v6434
      %v6436 = vsel %vm6422, %v6433, %v6435
      %v6437 = vshll.u32 %v6397, 8
      %v6438 = vmul.u32.u64.compose %v6437, %v6436
      %v6439 = vextract.low.u32 %v6438
      %v6440 = vextract.high.u32 %v6438
      %v6441 = vmul.u32.u64.compose %v6437, %v6432
      %v6442 = vextract.low.u32 %v6441
      %v6443 = vextract.high.u32 %v6441
      %v6444 = vmul.u32 %v6437, %v6428
      %v6445 = vadd.s32 %v6440, %v6442
      %vm6446 = vc.u32 %v6440, %v6442
      %v6447 = vadd.s32 %v6443, 1
      %v6448 = vsel %vm6446, %v6447, %v6443
      %v6449 = vadd.s32 %v6444, %v6448
      %v6450 = vadd.s32 %v6449, 536870912
      %v6451 = vshrl.u32 %v6450, 30
      %v6452 = vshll.u32 %v6451, 30
      %v6453 = vsub.s32 %v6449, %v6452
      %vm6454 = vcmp.lt.s32.totalorder %v6453, 0
      %v6455 = vsub.s32 0, %v6453
      %v6456 = vsel %vm6454, %v6455, %v6453
      %v6457 = vclz %v6456
      %v6458 = vsub.s32 %v6457, 2
      %vm6459 = vcmp.gt.s32.totalorder 0, %v6458
      %v6460 = vsel %vm6459, 0, %v6458
      %v6461 = vsub.s32 32, %v6460
      %v6462 = vshll.u32 %v6453, %v6460
      %v6463 = vshrl.u32 %v6445, %v6461
      %v6464 = vor.u32 %v6462, %v6463
      %v6465 = vsub.s32 4294967266, %v6460
      %v6466 = vadd.s32 %v6465, 127
      %v6467 = vshll.u32 %v6466, 23
      %v6468 = vor.u32 4788187, %v6467
      %v6469 = vand.u32 2147483647, %v6468
      %v6471 = vcvt.s32.f32 %v6464
      %v6472 = vmul.f32 %v6471, %v6469
      %v6473 = vxor.u32 %v6472, 2147483648
      %v6474 = vsel %vm6391, %v6473, %v6472
      %v6475 = vsub.s32 4, %v6451
      %v6476 = vsel %vm6391, %v6475, %v6451
      %v6477 = vsel %vm6390, %v1915, %v6474
      %v6478 = vsel %vm6390, 0, %v6476
      %v6479 = vcosq.f32.pop %v6477
      %v6480 = vsinq.f32.pop %v6477
      %vm6481 = vweird.f32 %v1915
      %v6482 = vadd.s32 %v6478, 3
      %v6483 = vand.u32 %v6482, 3
      %vm6484 = vcmp.lt.s32.totalorder %v6483, 2
      %vm6485 = vcmp.eq.s32.totalorder %v6483, 0
      %v6486 = vxor.u32 %v6480, 2147483648
      %v6487 = vsel %vm6485, %v6479, %v6486
      %vm6488 = vcmp.eq.s32.totalorder %v6483, 2
      %v6489 = vxor.u32 %v6479, 2147483648
      %v6490 = vsel %vm6488, %v6489, %v6480
      %v6491 = vsel %vm6484, %v6487, %v6490
      %v6492 = vsel %vm6481, nan, %v6491
      %v6493 = vand.u32 2147483647, %v1916
      %vm6494 = vcmp.le.f32.partialorder %v6493, 0.7853982
      %vm6495 = vcmp.lt.s32.totalorder %v1916, 0
      %v6496 = vand.u32 %v1916, 2139095040
      %v6497 = vshrl.u32 %v6496, 23
      %v6498 = vsub.s32 %v6497, 127
      %v6499 = vand.u32 2147483647, %v1916
      %v6500 = vand.u32 %v6499, 8388607
      %v6501 = vor.u32 %v6500, 8388608
      %v6502 = vsub.s32 0, %v6501
      %v6503 = vadd.s32 %v6498, 1
      %vm6504 = vcmp.gt.s32.totalorder %v6503, 0
      %v6505 = vsel %vm6504, %v6503, 0
      %v6506 = vshrl.u32 %v6505, 5
      %v6507 = vand.u32 %v6505, 31
      %v6508 = vsub.s32 32, %v6507
      %v6509 = vshrl.u32 683565275, %v6508
      %v6510 = vshll.u32 683565275, %v6507
      %v6511 = vshrl.u32 2475754826, %v6508
      %v6512 = vor.u32 %v6510, %v6511
      %v6513 = vshll.u32 2475754826, %v6507
      %v6514 = vshrl.u32 2131351028, %v6508
      %v6515 = vor.u32 %v6513, %v6514
      %v6516 = vshll.u32 2131351028, %v6507
      %v6517 = vshrl.u32 2102212464, %v6508
      %v6518 = vor.u32 %v6516, %v6517
      %v6519 = vshll.u32 2102212464, %v6507
      %v6520 = vshrl.u32 920167782, %v6508
      %v6521 = vor.u32 %v6519, %v6520
      %v6522 = vshll.u32 920167782, %v6507
      %v6523 = vshrl.u32 1326507024, %v6508
      %v6524 = vor.u32 %v6522, %v6523
      %vm6525 = vcmp.lt.s32.totalorder %v6506, 1
      %vm6526 = vcmp.lt.s32.totalorder %v6506, 2
      %vm6527 = vcmp.lt.s32.totalorder %v6506, 3
      %vm6528 = vcmp.lt.s32.totalorder %v6506, 4
      %v6529 = vsel %vm6525, %v6509, %v6512
      %v6530 = vsel %vm6528, %v6518, 2102212464
      %v6531 = vsel %vm6527, %v6515, %v6530
      %v6532 = vsel %vm6526, %v6529, %v6531
      %v6533 = vsel %vm6525, %v6512, %v6515
      %v6534 = vsel %vm6528, %v6521, 920167782
      %v6535 = vsel %vm6527, %v6518, %v6534
      %v6536 = vsel %vm6526, %v6533, %v6535
      %v6537 = vsel %vm6525, %v6515, %v6518
      %v6538 = vsel %vm6528, %v6524, 1326507024
      %v6539 = vsel %vm6527, %v6521, %v6538
      %v6540 = vsel %vm6526, %v6537, %v6539
      %v6541 = vshll.u32 %v6501, 8
      %v6542 = vmul.u32.u64.compose %v6541, %v6540
      %v6543 = vextract.low.u32 %v6542
      %v6544 = vextract.high.u32 %v6542
      %v6545 = vmul.u32.u64.compose %v6541, %v6536
      %v6546 = vextract.low.u32 %v6545
      %v6547 = vextract.high.u32 %v6545
      %v6548 = vmul.u32 %v6541, %v6532
      %v6549 = vadd.s32 %v6544, %v6546
      %vm6550 = vc.u32 %v6544, %v6546
      %v6551 = vadd.s32 %v6547, 1
      %v6552 = vsel %vm6550, %v6551, %v6547
      %v6553 = vadd.s32 %v6548, %v6552
      %v6554 = vadd.s32 %v6553, 536870912
      %v6555 = vshrl.u32 %v6554, 30
      %v6556 = vshll.u32 %v6555, 30
      %v6557 = vsub.s32 %v6553, %v6556
      %vm6558 = vcmp.lt.s32.totalorder %v6557, 0
      %v6559 = vsub.s32 0, %v6557
      %v6560 = vsel %vm6558, %v6559, %v6557
      %v6561 = vclz %v6560
      %v6562 = vsub.s32 %v6561, 2
      %vm6563 = vcmp.gt.s32.totalorder 0, %v6562
      %v6564 = vsel %vm6563, 0, %v6562
      %v6565 = vsub.s32 32, %v6564
      %v6566 = vshll.u32 %v6557, %v6564
      %v6567 = vshrl.u32 %v6549, %v6565
      %v6568 = vor.u32 %v6566, %v6567
      %v6569 = vsub.s32 4294967266, %v6564
      %v6570 = vadd.s32 %v6569, 127
      %v6571 = vshll.u32 %v6570, 23
      %v6572 = vor.u32 4788187, %v6571
      %v6573 = vand.u32 2147483647, %v6572
      %v6575 = vcvt.s32.f32 %v6568
      %v6576 = vmul.f32 %v6575, %v6573
      %v6577 = vxor.u32 %v6576, 2147483648
      %v6578 = vsel %vm6495, %v6577, %v6576
      %v6579 = vsub.s32 4, %v6555
      %v6580 = vsel %vm6495, %v6579, %v6555
      %v6581 = vsel %vm6494, %v1916, %v6578
      %v6582 = vsel %vm6494, 0, %v6580
      %v6583 = vcosq.f32.pop %v6581
      %v6584 = vsinq.f32.pop %v6581
      %vm6585 = vweird.f32 %v1916
      %v6586 = vadd.s32 %v6582, 3
      %v6587 = vand.u32 %v6586, 3
      %vm6588 = vcmp.lt.s32.totalorder %v6587, 2
      %vm6589 = vcmp.eq.s32.totalorder %v6587, 0
      %v6590 = vxor.u32 %v6584, 2147483648
      %v6591 = vsel %vm6589, %v6583, %v6590
      %vm6592 = vcmp.eq.s32.totalorder %v6587, 2
      %v6593 = vxor.u32 %v6583, 2147483648
      %v6594 = vsel %vm6592, %v6593, %v6584
      %v6595 = vsel %vm6588, %v6591, %v6594
      %v6596 = vsel %vm6585, nan, %v6595
      %v6597 = vand.u32 2147483647, %v1917
      %vm6598 = vcmp.le.f32.partialorder %v6597, 0.7853982
      %vm6599 = vcmp.lt.s32.totalorder %v1917, 0
      %v6600 = vand.u32 %v1917, 2139095040
      %v6601 = vshrl.u32 %v6600, 23
      %v6602 = vsub.s32 %v6601, 127
      %v6603 = vand.u32 2147483647, %v1917
      %v6604 = vand.u32 %v6603, 8388607
      %v6605 = vor.u32 %v6604, 8388608
      %v6606 = vsub.s32 0, %v6605
      %v6607 = vadd.s32 %v6602, 1
      %vm6608 = vcmp.gt.s32.totalorder %v6607, 0
      %v6609 = vsel %vm6608, %v6607, 0
      %v6610 = vshrl.u32 %v6609, 5
      %v6611 = vand.u32 %v6609, 31
      %v6612 = vsub.s32 32, %v6611
      %v6613 = vshrl.u32 683565275, %v6612
      %v6614 = vshll.u32 683565275, %v6611
      %v6615 = vshrl.u32 2475754826, %v6612
      %v6616 = vor.u32 %v6614, %v6615
      %v6617 = vshll.u32 2475754826, %v6611
      %v6618 = vshrl.u32 2131351028, %v6612
      %v6619 = vor.u32 %v6617, %v6618
      %v6620 = vshll.u32 2131351028, %v6611
      %v6621 = vshrl.u32 2102212464, %v6612
      %v6622 = vor.u32 %v6620, %v6621
      %v6623 = vshll.u32 2102212464, %v6611
      %v6624 = vshrl.u32 920167782, %v6612
      %v6625 = vor.u32 %v6623, %v6624
      %v6626 = vshll.u32 920167782, %v6611
      %v6627 = vshrl.u32 1326507024, %v6612
      %v6628 = vor.u32 %v6626, %v6627
      %vm6629 = vcmp.lt.s32.totalorder %v6610, 1
      %vm6630 = vcmp.lt.s32.totalorder %v6610, 2
      %vm6631 = vcmp.lt.s32.totalorder %v6610, 3
      %vm6632 = vcmp.lt.s32.totalorder %v6610, 4
      %v6633 = vsel %vm6629, %v6613, %v6616
      %v6634 = vsel %vm6632, %v6622, 2102212464
      %v6635 = vsel %vm6631, %v6619, %v6634
      %v6636 = vsel %vm6630, %v6633, %v6635
      %v6637 = vsel %vm6629, %v6616, %v6619
      %v6638 = vsel %vm6632, %v6625, 920167782
      %v6639 = vsel %vm6631, %v6622, %v6638
      %v6640 = vsel %vm6630, %v6637, %v6639
      %v6641 = vsel %vm6629, %v6619, %v6622
      %v6642 = vsel %vm6632, %v6628, 1326507024
      %v6643 = vsel %vm6631, %v6625, %v6642
      %v6644 = vsel %vm6630, %v6641, %v6643
      %v6645 = vshll.u32 %v6605, 8
      %v6646 = vmul.u32.u64.compose %v6645, %v6644
      %v6647 = vextract.low.u32 %v6646
      %v6648 = vextract.high.u32 %v6646
      %v6649 = vmul.u32.u64.compose %v6645, %v6640
      %v6650 = vextract.low.u32 %v6649
      %v6651 = vextract.high.u32 %v6649
      %v6652 = vmul.u32 %v6645, %v6636
      %v6653 = vadd.s32 %v6648, %v6650
      %vm6654 = vc.u32 %v6648, %v6650
      %v6655 = vadd.s32 %v6651, 1
      %v6656 = vsel %vm6654, %v6655, %v6651
      %v6657 = vadd.s32 %v6652, %v6656
      %v6658 = vadd.s32 %v6657, 536870912
      %v6659 = vshrl.u32 %v6658, 30
      %v6660 = vshll.u32 %v6659, 30
      %v6661 = vsub.s32 %v6657, %v6660
      %vm6662 = vcmp.lt.s32.totalorder %v6661, 0
      %v6663 = vsub.s32 0, %v6661
      %v6664 = vsel %vm6662, %v6663, %v6661
      %v6665 = vclz %v6664
      %v6666 = vsub.s32 %v6665, 2
      %vm6667 = vcmp.gt.s32.totalorder 0, %v6666
      %v6668 = vsel %vm6667, 0, %v6666
      %v6669 = vsub.s32 32, %v6668
      %v6670 = vshll.u32 %v6661, %v6668
      %v6671 = vshrl.u32 %v6653, %v6669
      %v6672 = vor.u32 %v6670, %v6671
      %v6673 = vsub.s32 4294967266, %v6668
      %v6674 = vadd.s32 %v6673, 127
      %v6675 = vshll.u32 %v6674, 23
      %v6676 = vor.u32 4788187, %v6675
      %v6677 = vand.u32 2147483647, %v6676
      %v6679 = vcvt.s32.f32 %v6672
      %v6680 = vmul.f32 %v6679, %v6677
      %v6681 = vxor.u32 %v6680, 2147483648
      %v6682 = vsel %vm6599, %v6681, %v6680
      %v6683 = vsub.s32 4, %v6659
      %v6684 = vsel %vm6599, %v6683, %v6659
      %v6685 = vsel %vm6598, %v1917, %v6682
      %v6686 = vsel %vm6598, 0, %v6684
      %v6687 = vcosq.f32.pop %v6685
      %v6688 = vsinq.f32.pop %v6685
      %vm6689 = vweird.f32 %v1917
      %v6690 = vadd.s32 %v6686, 3
      %v6691 = vand.u32 %v6690, 3
      %vm6692 = vcmp.lt.s32.totalorder %v6691, 2
      %vm6693 = vcmp.eq.s32.totalorder %v6691, 0
      %v6694 = vxor.u32 %v6688, 2147483648
      %v6695 = vsel %vm6693, %v6687, %v6694
      %vm6696 = vcmp.eq.s32.totalorder %v6691, 2
      %v6697 = vxor.u32 %v6687, 2147483648
      %v6698 = vsel %vm6696, %v6697, %v6688
      %v6699 = vsel %vm6692, %v6695, %v6698
      %v6700 = vsel %vm6689, nan, %v6699
      %v6701 = vand.u32 2147483647, %v1918
      %vm6702 = vcmp.le.f32.partialorder %v6701, 0.7853982
      %vm6703 = vcmp.lt.s32.totalorder %v1918, 0
      %v6704 = vand.u32 %v1918, 2139095040
      %v6705 = vshrl.u32 %v6704, 23
      %v6706 = vsub.s32 %v6705, 127
      %v6707 = vand.u32 2147483647, %v1918
      %v6708 = vand.u32 %v6707, 8388607
      %v6709 = vor.u32 %v6708, 8388608
      %v6710 = vsub.s32 0, %v6709
      %v6711 = vadd.s32 %v6706, 1
      %vm6712 = vcmp.gt.s32.totalorder %v6711, 0
      %v6713 = vsel %vm6712, %v6711, 0
      %v6714 = vshrl.u32 %v6713, 5
      %v6715 = vand.u32 %v6713, 31
      %v6716 = vsub.s32 32, %v6715
      %v6717 = vshrl.u32 683565275, %v6716
      %v6718 = vshll.u32 683565275, %v6715
      %v6719 = vshrl.u32 2475754826, %v6716
      %v6720 = vor.u32 %v6718, %v6719
      %v6721 = vshll.u32 2475754826, %v6715
      %v6722 = vshrl.u32 2131351028, %v6716
      %v6723 = vor.u32 %v6721, %v6722
      %v6724 = vshll.u32 2131351028, %v6715
      %v6725 = vshrl.u32 2102212464, %v6716
      %v6726 = vor.u32 %v6724, %v6725
      %v6727 = vshll.u32 2102212464, %v6715
      %v6728 = vshrl.u32 920167782, %v6716
      %v6729 = vor.u32 %v6727, %v6728
      %v6730 = vshll.u32 920167782, %v6715
      %v6731 = vshrl.u32 1326507024, %v6716
      %v6732 = vor.u32 %v6730, %v6731
      %vm6733 = vcmp.lt.s32.totalorder %v6714, 1
      %vm6734 = vcmp.lt.s32.totalorder %v6714, 2
      %vm6735 = vcmp.lt.s32.totalorder %v6714, 3
      %vm6736 = vcmp.lt.s32.totalorder %v6714, 4
      %v6737 = vsel %vm6733, %v6717, %v6720
      %v6738 = vsel %vm6736, %v6726, 2102212464
      %v6739 = vsel %vm6735, %v6723, %v6738
      %v6740 = vsel %vm6734, %v6737, %v6739
      %v6741 = vsel %vm6733, %v6720, %v6723
      %v6742 = vsel %vm6736, %v6729, 920167782
      %v6743 = vsel %vm6735, %v6726, %v6742
      %v6744 = vsel %vm6734, %v6741, %v6743
      %v6745 = vsel %vm6733, %v6723, %v6726
      %v6746 = vsel %vm6736, %v6732, 1326507024
      %v6747 = vsel %vm6735, %v6729, %v6746
      %v6748 = vsel %vm6734, %v6745, %v6747
      %v6749 = vshll.u32 %v6709, 8
      %v6750 = vmul.u32.u64.compose %v6749, %v6748
      %v6751 = vextract.low.u32 %v6750
      %v6752 = vextract.high.u32 %v6750
      %v6753 = vmul.u32.u64.compose %v6749, %v6744
      %v6754 = vextract.low.u32 %v6753
      %v6755 = vextract.high.u32 %v6753
      %v6756 = vmul.u32 %v6749, %v6740
      %v6757 = vadd.s32 %v6752, %v6754
      %vm6758 = vc.u32 %v6752, %v6754
      %v6759 = vadd.s32 %v6755, 1
      %v6760 = vsel %vm6758, %v6759, %v6755
      %v6761 = vadd.s32 %v6756, %v6760
      %v6762 = vadd.s32 %v6761, 536870912
      %v6763 = vshrl.u32 %v6762, 30
      %v6764 = vshll.u32 %v6763, 30
      %v6765 = vsub.s32 %v6761, %v6764
      %vm6766 = vcmp.lt.s32.totalorder %v6765, 0
      %v6767 = vsub.s32 0, %v6765
      %v6768 = vsel %vm6766, %v6767, %v6765
      %v6769 = vclz %v6768
      %v6770 = vsub.s32 %v6769, 2
      %vm6771 = vcmp.gt.s32.totalorder 0, %v6770
      %v6772 = vsel %vm6771, 0, %v6770
      %v6773 = vsub.s32 32, %v6772
      %v6774 = vshll.u32 %v6765, %v6772
      %v6775 = vshrl.u32 %v6757, %v6773
      %v6776 = vor.u32 %v6774, %v6775
      %v6777 = vsub.s32 4294967266, %v6772
      %v6778 = vadd.s32 %v6777, 127
      %v6779 = vshll.u32 %v6778, 23
      %v6780 = vor.u32 4788187, %v6779
      %v6781 = vand.u32 2147483647, %v6780
      %v6783 = vcvt.s32.f32 %v6776
      %v6784 = vmul.f32 %v6783, %v6781
      %v6785 = vxor.u32 %v6784, 2147483648
      %v6786 = vsel %vm6703, %v6785, %v6784
      %v6787 = vsub.s32 4, %v6763
      %v6788 = vsel %vm6703, %v6787, %v6763
      %v6789 = vsel %vm6702, %v1918, %v6786
      %v6790 = vsel %vm6702, 0, %v6788
      %v6791 = vcosq.f32.pop %v6789
      %v6792 = vsinq.f32.pop %v6789
      %vm6793 = vweird.f32 %v1918
      %v6794 = vadd.s32 %v6790, 3
      %v6795 = vand.u32 %v6794, 3
      %vm6796 = vcmp.lt.s32.totalorder %v6795, 2
      %vm6797 = vcmp.eq.s32.totalorder %v6795, 0
      %v6798 = vxor.u32 %v6792, 2147483648
      %v6799 = vsel %vm6797, %v6791, %v6798
      %vm6800 = vcmp.eq.s32.totalorder %v6795, 2
      %v6801 = vxor.u32 %v6791, 2147483648
      %v6802 = vsel %vm6800, %v6801, %v6792
      %v6803 = vsel %vm6796, %v6799, %v6802
      %v6804 = vsel %vm6793, nan, %v6803
      %v6805 = vand.u32 2147483647, %v1919
      %vm6806 = vcmp.le.f32.partialorder %v6805, 0.7853982
      %vm6807 = vcmp.lt.s32.totalorder %v1919, 0
      %v6808 = vand.u32 %v1919, 2139095040
      %v6809 = vshrl.u32 %v6808, 23
      %v6810 = vsub.s32 %v6809, 127
      %v6811 = vand.u32 2147483647, %v1919
      %v6812 = vand.u32 %v6811, 8388607
      %v6813 = vor.u32 %v6812, 8388608
      %v6814 = vsub.s32 0, %v6813
      %v6815 = vadd.s32 %v6810, 1
      %vm6816 = vcmp.gt.s32.totalorder %v6815, 0
      %v6817 = vsel %vm6816, %v6815, 0
      %v6818 = vshrl.u32 %v6817, 5
      %v6819 = vand.u32 %v6817, 31
      %v6820 = vsub.s32 32, %v6819
      %v6821 = vshrl.u32 683565275, %v6820
      %v6822 = vshll.u32 683565275, %v6819
      %v6823 = vshrl.u32 2475754826, %v6820
      %v6824 = vor.u32 %v6822, %v6823
      %v6825 = vshll.u32 2475754826, %v6819
      %v6826 = vshrl.u32 2131351028, %v6820
      %v6827 = vor.u32 %v6825, %v6826
      %v6828 = vshll.u32 2131351028, %v6819
      %v6829 = vshrl.u32 2102212464, %v6820
      %v6830 = vor.u32 %v6828, %v6829
      %v6831 = vshll.u32 2102212464, %v6819
      %v6832 = vshrl.u32 920167782, %v6820
      %v6833 = vor.u32 %v6831, %v6832
      %v6834 = vshll.u32 920167782, %v6819
      %v6835 = vshrl.u32 1326507024, %v6820
      %v6836 = vor.u32 %v6834, %v6835
      %vm6837 = vcmp.lt.s32.totalorder %v6818, 1
      %vm6838 = vcmp.lt.s32.totalorder %v6818, 2
      %vm6839 = vcmp.lt.s32.totalorder %v6818, 3
      %vm6840 = vcmp.lt.s32.totalorder %v6818, 4
      %v6841 = vsel %vm6837, %v6821, %v6824
      %v6842 = vsel %vm6840, %v6830, 2102212464
      %v6843 = vsel %vm6839, %v6827, %v6842
      %v6844 = vsel %vm6838, %v6841, %v6843
      %v6845 = vsel %vm6837, %v6824, %v6827
      %v6846 = vsel %vm6840, %v6833, 920167782
      %v6847 = vsel %vm6839, %v6830, %v6846
      %v6848 = vsel %vm6838, %v6845, %v6847
      %v6849 = vsel %vm6837, %v6827, %v6830
      %v6850 = vsel %vm6840, %v6836, 1326507024
      %v6851 = vsel %vm6839, %v6833, %v6850
      %v6852 = vsel %vm6838, %v6849, %v6851
      %v6853 = vshll.u32 %v6813, 8
      %v6854 = vmul.u32.u64.compose %v6853, %v6852
      %v6855 = vextract.low.u32 %v6854
      %v6856 = vextract.high.u32 %v6854
      %v6857 = vmul.u32.u64.compose %v6853, %v6848
      %v6858 = vextract.low.u32 %v6857
      %v6859 = vextract.high.u32 %v6857
      %v6860 = vmul.u32 %v6853, %v6844
      %v6861 = vadd.s32 %v6856, %v6858
      %vm6862 = vc.u32 %v6856, %v6858
      %v6863 = vadd.s32 %v6859, 1
      %v6864 = vsel %vm6862, %v6863, %v6859
      %v6865 = vadd.s32 %v6860, %v6864
      %v6866 = vadd.s32 %v6865, 536870912
      %v6867 = vshrl.u32 %v6866, 30
      %v6868 = vshll.u32 %v6867, 30
      %v6869 = vsub.s32 %v6865, %v6868
      %vm6870 = vcmp.lt.s32.totalorder %v6869, 0
      %v6871 = vsub.s32 0, %v6869
      %v6872 = vsel %vm6870, %v6871, %v6869
      %v6873 = vclz %v6872
      %v6874 = vsub.s32 %v6873, 2
      %vm6875 = vcmp.gt.s32.totalorder 0, %v6874
      %v6876 = vsel %vm6875, 0, %v6874
      %v6877 = vsub.s32 32, %v6876
      %v6878 = vshll.u32 %v6869, %v6876
      %v6879 = vshrl.u32 %v6861, %v6877
      %v6880 = vor.u32 %v6878, %v6879
      %v6881 = vsub.s32 4294967266, %v6876
      %v6882 = vadd.s32 %v6881, 127
      %v6883 = vshll.u32 %v6882, 23
      %v6884 = vor.u32 4788187, %v6883
      %v6885 = vand.u32 2147483647, %v6884
      %v6887 = vcvt.s32.f32 %v6880
      %v6888 = vmul.f32 %v6887, %v6885
      %v6889 = vxor.u32 %v6888, 2147483648
      %v6890 = vsel %vm6807, %v6889, %v6888
      %v6891 = vsub.s32 4, %v6867
      %v6892 = vsel %vm6807, %v6891, %v6867
      %v6893 = vsel %vm6806, %v1919, %v6890
      %v6894 = vsel %vm6806, 0, %v6892
      %v6895 = vcosq.f32.pop %v6893
      %v6896 = vsinq.f32.pop %v6893
      %vm6897 = vweird.f32 %v1919
      %v6898 = vadd.s32 %v6894, 3
      %v6899 = vand.u32 %v6898, 3
      %vm6900 = vcmp.lt.s32.totalorder %v6899, 2
      %vm6901 = vcmp.eq.s32.totalorder %v6899, 0
      %v6902 = vxor.u32 %v6896, 2147483648
      %v6903 = vsel %vm6901, %v6895, %v6902
      %vm6904 = vcmp.eq.s32.totalorder %v6899, 2
      %v6905 = vxor.u32 %v6895, 2147483648
      %v6906 = vsel %vm6904, %v6905, %v6896
      %v6907 = vsel %vm6900, %v6903, %v6906
      %v6908 = vsel %vm6897, nan, %v6907
      %v6909 = vand.u32 2147483647, %v1920
      %vm6910 = vcmp.le.f32.partialorder %v6909, 0.7853982
      %vm6911 = vcmp.lt.s32.totalorder %v1920, 0
      %v6912 = vand.u32 %v1920, 2139095040
      %v6913 = vshrl.u32 %v6912, 23
      %v6914 = vsub.s32 %v6913, 127
      %v6915 = vand.u32 2147483647, %v1920
      %v6916 = vand.u32 %v6915, 8388607
      %v6917 = vor.u32 %v6916, 8388608
      %v6918 = vsub.s32 0, %v6917
      %v6919 = vadd.s32 %v6914, 1
      %vm6920 = vcmp.gt.s32.totalorder %v6919, 0
      %v6921 = vsel %vm6920, %v6919, 0
      %v6922 = vshrl.u32 %v6921, 5
      %v6923 = vand.u32 %v6921, 31
      %v6924 = vsub.s32 32, %v6923
      %v6925 = vshrl.u32 683565275, %v6924
      %v6926 = vshll.u32 683565275, %v6923
      %v6927 = vshrl.u32 2475754826, %v6924
      %v6928 = vor.u32 %v6926, %v6927
      %v6929 = vshll.u32 2475754826, %v6923
      %v6930 = vshrl.u32 2131351028, %v6924
      %v6931 = vor.u32 %v6929, %v6930
      %v6932 = vshll.u32 2131351028, %v6923
      %v6933 = vshrl.u32 2102212464, %v6924
      %v6934 = vor.u32 %v6932, %v6933
      %v6935 = vshll.u32 2102212464, %v6923
      %v6936 = vshrl.u32 920167782, %v6924
      %v6937 = vor.u32 %v6935, %v6936
      %v6938 = vshll.u32 920167782, %v6923
      %v6939 = vshrl.u32 1326507024, %v6924
      %v6940 = vor.u32 %v6938, %v6939
      %vm6941 = vcmp.lt.s32.totalorder %v6922, 1
      %vm6942 = vcmp.lt.s32.totalorder %v6922, 2
      %vm6943 = vcmp.lt.s32.totalorder %v6922, 3
      %vm6944 = vcmp.lt.s32.totalorder %v6922, 4
      %v6945 = vsel %vm6941, %v6925, %v6928
      %v6946 = vsel %vm6944, %v6934, 2102212464
      %v6947 = vsel %vm6943, %v6931, %v6946
      %v6948 = vsel %vm6942, %v6945, %v6947
      %v6949 = vsel %vm6941, %v6928, %v6931
      %v6950 = vsel %vm6944, %v6937, 920167782
      %v6951 = vsel %vm6943, %v6934, %v6950
      %v6952 = vsel %vm6942, %v6949, %v6951
      %v6953 = vsel %vm6941, %v6931, %v6934
      %v6954 = vsel %vm6944, %v6940, 1326507024
      %v6955 = vsel %vm6943, %v6937, %v6954
      %v6956 = vsel %vm6942, %v6953, %v6955
      %v6957 = vshll.u32 %v6917, 8
      %v6958 = vmul.u32.u64.compose %v6957, %v6956
      %v6959 = vextract.low.u32 %v6958
      %v6960 = vextract.high.u32 %v6958
      %v6961 = vmul.u32.u64.compose %v6957, %v6952
      %v6962 = vextract.low.u32 %v6961
      %v6963 = vextract.high.u32 %v6961
      %v6964 = vmul.u32 %v6957, %v6948
      %v6965 = vadd.s32 %v6960, %v6962
      %vm6966 = vc.u32 %v6960, %v6962
      %v6967 = vadd.s32 %v6963, 1
      %v6968 = vsel %vm6966, %v6967, %v6963
      %v6969 = vadd.s32 %v6964, %v6968
      %v6970 = vadd.s32 %v6969, 536870912
      %v6971 = vshrl.u32 %v6970, 30
      %v6972 = vshll.u32 %v6971, 30
      %v6973 = vsub.s32 %v6969, %v6972
      %vm6974 = vcmp.lt.s32.totalorder %v6973, 0
      %v6975 = vsub.s32 0, %v6973
      %v6976 = vsel %vm6974, %v6975, %v6973
      %v6977 = vclz %v6976
      %v6978 = vsub.s32 %v6977, 2
      %vm6979 = vcmp.gt.s32.totalorder 0, %v6978
      %v6980 = vsel %vm6979, 0, %v6978
      %v6981 = vsub.s32 32, %v6980
      %v6982 = vshll.u32 %v6973, %v6980
      %v6983 = vshrl.u32 %v6965, %v6981
      %v6984 = vor.u32 %v6982, %v6983
      %v6985 = vsub.s32 4294967266, %v6980
      %v6986 = vadd.s32 %v6985, 127
      %v6987 = vshll.u32 %v6986, 23
      %v6988 = vor.u32 4788187, %v6987
      %v6989 = vand.u32 2147483647, %v6988
      %v6991 = vcvt.s32.f32 %v6984
      %v6992 = vmul.f32 %v6991, %v6989
      %v6993 = vxor.u32 %v6992, 2147483648
      %v6994 = vsel %vm6911, %v6993, %v6992
      %v6995 = vsub.s32 4, %v6971
      %v6996 = vsel %vm6911, %v6995, %v6971
      %v6997 = vsel %vm6910, %v1920, %v6994
      %v6998 = vsel %vm6910, 0, %v6996
      %v6999 = vcosq.f32.pop %v6997
      %v7000 = vsinq.f32.pop %v6997
      %vm7001 = vweird.f32 %v1920
      %v7002 = vadd.s32 %v6998, 3
      %v7003 = vand.u32 %v7002, 3
      %vm7004 = vcmp.lt.s32.totalorder %v7003, 2
      %vm7005 = vcmp.eq.s32.totalorder %v7003, 0
      %v7006 = vxor.u32 %v7000, 2147483648
      %v7007 = vsel %vm7005, %v6999, %v7006
      %vm7008 = vcmp.eq.s32.totalorder %v7003, 2
      %v7009 = vxor.u32 %v6999, 2147483648
      %v7010 = vsel %vm7008, %v7009, %v7000
      %v7011 = vsel %vm7004, %v7007, %v7010
      %v7012 = vsel %vm7001, nan, %v7011
      %v7013 = vand.u32 2147483647, %v1921
      %vm7014 = vcmp.le.f32.partialorder %v7013, 0.7853982
      %vm7015 = vcmp.lt.s32.totalorder %v1921, 0
      %v7016 = vand.u32 %v1921, 2139095040
      %v7017 = vshrl.u32 %v7016, 23
      %v7018 = vsub.s32 %v7017, 127
      %v7019 = vand.u32 2147483647, %v1921
      %v7020 = vand.u32 %v7019, 8388607
      %v7021 = vor.u32 %v7020, 8388608
      %v7022 = vsub.s32 0, %v7021
      %v7023 = vadd.s32 %v7018, 1
      %vm7024 = vcmp.gt.s32.totalorder %v7023, 0
      %v7025 = vsel %vm7024, %v7023, 0
      %v7026 = vshrl.u32 %v7025, 5
      %v7027 = vand.u32 %v7025, 31
      %v7028 = vsub.s32 32, %v7027
      %v7029 = vshrl.u32 683565275, %v7028
      %v7030 = vshll.u32 683565275, %v7027
      %v7031 = vshrl.u32 2475754826, %v7028
      %v7032 = vor.u32 %v7030, %v7031
      %v7033 = vshll.u32 2475754826, %v7027
      %v7034 = vshrl.u32 2131351028, %v7028
      %v7035 = vor.u32 %v7033, %v7034
      %v7036 = vshll.u32 2131351028, %v7027
      %v7037 = vshrl.u32 2102212464, %v7028
      %v7038 = vor.u32 %v7036, %v7037
      %v7039 = vshll.u32 2102212464, %v7027
      %v7040 = vshrl.u32 920167782, %v7028
      %v7041 = vor.u32 %v7039, %v7040
      %v7042 = vshll.u32 920167782, %v7027
      %v7043 = vshrl.u32 1326507024, %v7028
      %v7044 = vor.u32 %v7042, %v7043
      %vm7045 = vcmp.lt.s32.totalorder %v7026, 1
      %vm7046 = vcmp.lt.s32.totalorder %v7026, 2
      %vm7047 = vcmp.lt.s32.totalorder %v7026, 3
      %vm7048 = vcmp.lt.s32.totalorder %v7026, 4
      %v7049 = vsel %vm7045, %v7029, %v7032
      %v7050 = vsel %vm7048, %v7038, 2102212464
      %v7051 = vsel %vm7047, %v7035, %v7050
      %v7052 = vsel %vm7046, %v7049, %v7051
      %v7053 = vsel %vm7045, %v7032, %v7035
      %v7054 = vsel %vm7048, %v7041, 920167782
      %v7055 = vsel %vm7047, %v7038, %v7054
      %v7056 = vsel %vm7046, %v7053, %v7055
      %v7057 = vsel %vm7045, %v7035, %v7038
      %v7058 = vsel %vm7048, %v7044, 1326507024
      %v7059 = vsel %vm7047, %v7041, %v7058
      %v7060 = vsel %vm7046, %v7057, %v7059
      %v7061 = vshll.u32 %v7021, 8
      %v7062 = vmul.u32.u64.compose %v7061, %v7060
      %v7063 = vextract.low.u32 %v7062
      %v7064 = vextract.high.u32 %v7062
      %v7065 = vmul.u32.u64.compose %v7061, %v7056
      %v7066 = vextract.low.u32 %v7065
      %v7067 = vextract.high.u32 %v7065
      %v7068 = vmul.u32 %v7061, %v7052
      %v7069 = vadd.s32 %v7064, %v7066
      %vm7070 = vc.u32 %v7064, %v7066
      %v7071 = vadd.s32 %v7067, 1
      %v7072 = vsel %vm7070, %v7071, %v7067
      %v7073 = vadd.s32 %v7068, %v7072
      %v7074 = vadd.s32 %v7073, 536870912
      %v7075 = vshrl.u32 %v7074, 30
      %v7076 = vshll.u32 %v7075, 30
      %v7077 = vsub.s32 %v7073, %v7076
      %vm7078 = vcmp.lt.s32.totalorder %v7077, 0
      %v7079 = vsub.s32 0, %v7077
      %v7080 = vsel %vm7078, %v7079, %v7077
      %v7081 = vclz %v7080
      %v7082 = vsub.s32 %v7081, 2
      %vm7083 = vcmp.gt.s32.totalorder 0, %v7082
      %v7084 = vsel %vm7083, 0, %v7082
      %v7085 = vsub.s32 32, %v7084
      %v7086 = vshll.u32 %v7077, %v7084
      %v7087 = vshrl.u32 %v7069, %v7085
      %v7088 = vor.u32 %v7086, %v7087
      %v7089 = vsub.s32 4294967266, %v7084
      %v7090 = vadd.s32 %v7089, 127
      %v7091 = vshll.u32 %v7090, 23
      %v7092 = vor.u32 4788187, %v7091
      %v7093 = vand.u32 2147483647, %v7092
      %v7095 = vcvt.s32.f32 %v7088
      %v7096 = vmul.f32 %v7095, %v7093
      %v7097 = vxor.u32 %v7096, 2147483648
      %v7098 = vsel %vm7015, %v7097, %v7096
      %v7099 = vsub.s32 4, %v7075
      %v7100 = vsel %vm7015, %v7099, %v7075
      %v7101 = vsel %vm7014, %v1921, %v7098
      %v7102 = vsel %vm7014, 0, %v7100
      %v7103 = vcosq.f32.pop %v7101
      %v7104 = vsinq.f32.pop %v7101
      %vm7105 = vweird.f32 %v1921
      %v7106 = vadd.s32 %v7102, 3
      %v7107 = vand.u32 %v7106, 3
      %vm7108 = vcmp.lt.s32.totalorder %v7107, 2
      %vm7109 = vcmp.eq.s32.totalorder %v7107, 0
      %v7110 = vxor.u32 %v7104, 2147483648
      %v7111 = vsel %vm7109, %v7103, %v7110
      %vm7112 = vcmp.eq.s32.totalorder %v7107, 2
      %v7113 = vxor.u32 %v7103, 2147483648
      %v7114 = vsel %vm7112, %v7113, %v7104
      %v7115 = vsel %vm7108, %v7111, %v7114
      %v7116 = vsel %vm7105, nan, %v7115
      %v7117 = vand.u32 2147483647, %v1922
      %vm7118 = vcmp.le.f32.partialorder %v7117, 0.7853982
      %vm7119 = vcmp.lt.s32.totalorder %v1922, 0
      %v7120 = vand.u32 %v1922, 2139095040
      %v7121 = vshrl.u32 %v7120, 23
      %v7122 = vsub.s32 %v7121, 127
      %v7123 = vand.u32 2147483647, %v1922
      %v7124 = vand.u32 %v7123, 8388607
      %v7125 = vor.u32 %v7124, 8388608
      %v7126 = vsub.s32 0, %v7125
      %v7127 = vadd.s32 %v7122, 1
      %vm7128 = vcmp.gt.s32.totalorder %v7127, 0
      %v7129 = vsel %vm7128, %v7127, 0
      %v7130 = vshrl.u32 %v7129, 5
      %v7131 = vand.u32 %v7129, 31
      %v7132 = vsub.s32 32, %v7131
      %v7133 = vshrl.u32 683565275, %v7132
      %v7134 = vshll.u32 683565275, %v7131
      %v7135 = vshrl.u32 2475754826, %v7132
      %v7136 = vor.u32 %v7134, %v7135
      %v7137 = vshll.u32 2475754826, %v7131
      %v7138 = vshrl.u32 2131351028, %v7132
      %v7139 = vor.u32 %v7137, %v7138
      %v7140 = vshll.u32 2131351028, %v7131
      %v7141 = vshrl.u32 2102212464, %v7132
      %v7142 = vor.u32 %v7140, %v7141
      %v7143 = vshll.u32 2102212464, %v7131
      %v7144 = vshrl.u32 920167782, %v7132
      %v7145 = vor.u32 %v7143, %v7144
      %v7146 = vshll.u32 920167782, %v7131
      %v7147 = vshrl.u32 1326507024, %v7132
      %v7148 = vor.u32 %v7146, %v7147
      %vm7149 = vcmp.lt.s32.totalorder %v7130, 1
      %vm7150 = vcmp.lt.s32.totalorder %v7130, 2
      %vm7151 = vcmp.lt.s32.totalorder %v7130, 3
      %vm7152 = vcmp.lt.s32.totalorder %v7130, 4
      %v7153 = vsel %vm7149, %v7133, %v7136
      %v7154 = vsel %vm7152, %v7142, 2102212464
      %v7155 = vsel %vm7151, %v7139, %v7154
      %v7156 = vsel %vm7150, %v7153, %v7155
      %v7157 = vsel %vm7149, %v7136, %v7139
      %v7158 = vsel %vm7152, %v7145, 920167782
      %v7159 = vsel %vm7151, %v7142, %v7158
      %v7160 = vsel %vm7150, %v7157, %v7159
      %v7161 = vsel %vm7149, %v7139, %v7142
      %v7162 = vsel %vm7152, %v7148, 1326507024
      %v7163 = vsel %vm7151, %v7145, %v7162
      %v7164 = vsel %vm7150, %v7161, %v7163
      %v7165 = vshll.u32 %v7125, 8
      %v7166 = vmul.u32.u64.compose %v7165, %v7164
      %v7167 = vextract.low.u32 %v7166
      %v7168 = vextract.high.u32 %v7166
      %v7169 = vmul.u32.u64.compose %v7165, %v7160
      %v7170 = vextract.low.u32 %v7169
      %v7171 = vextract.high.u32 %v7169
      %v7172 = vmul.u32 %v7165, %v7156
      %v7173 = vadd.s32 %v7168, %v7170
      %vm7174 = vc.u32 %v7168, %v7170
      %v7175 = vadd.s32 %v7171, 1
      %v7176 = vsel %vm7174, %v7175, %v7171
      %v7177 = vadd.s32 %v7172, %v7176
      %v7178 = vadd.s32 %v7177, 536870912
      %v7179 = vshrl.u32 %v7178, 30
      %v7180 = vshll.u32 %v7179, 30
      %v7181 = vsub.s32 %v7177, %v7180
      %vm7182 = vcmp.lt.s32.totalorder %v7181, 0
      %v7183 = vsub.s32 0, %v7181
      %v7184 = vsel %vm7182, %v7183, %v7181
      %v7185 = vclz %v7184
      %v7186 = vsub.s32 %v7185, 2
      %vm7187 = vcmp.gt.s32.totalorder 0, %v7186
      %v7188 = vsel %vm7187, 0, %v7186
      %v7189 = vsub.s32 32, %v7188
      %v7190 = vshll.u32 %v7181, %v7188
      %v7191 = vshrl.u32 %v7173, %v7189
      %v7192 = vor.u32 %v7190, %v7191
      %v7193 = vsub.s32 4294967266, %v7188
      %v7194 = vadd.s32 %v7193, 127
      %v7195 = vshll.u32 %v7194, 23
      %v7196 = vor.u32 4788187, %v7195
      %v7197 = vand.u32 2147483647, %v7196
      %v7199 = vcvt.s32.f32 %v7192
      %v7200 = vmul.f32 %v7199, %v7197
      %v7201 = vxor.u32 %v7200, 2147483648
      %v7202 = vsel %vm7119, %v7201, %v7200
      %v7203 = vsub.s32 4, %v7179
      %v7204 = vsel %vm7119, %v7203, %v7179
      %v7205 = vsel %vm7118, %v1922, %v7202
      %v7206 = vsel %vm7118, 0, %v7204
      %v7207 = vcosq.f32.pop %v7205
      %v7208 = vsinq.f32.pop %v7205
      %vm7209 = vweird.f32 %v1922
      %v7210 = vadd.s32 %v7206, 3
      %v7211 = vand.u32 %v7210, 3
      %vm7212 = vcmp.lt.s32.totalorder %v7211, 2
      %vm7213 = vcmp.eq.s32.totalorder %v7211, 0
      %v7214 = vxor.u32 %v7208, 2147483648
      %v7215 = vsel %vm7213, %v7207, %v7214
      %vm7216 = vcmp.eq.s32.totalorder %v7211, 2
      %v7217 = vxor.u32 %v7207, 2147483648
      %v7218 = vsel %vm7216, %v7217, %v7208
      %v7219 = vsel %vm7212, %v7215, %v7218
      %v7220 = vsel %vm7209, nan, %v7219
      %v7221 = vand.u32 2147483647, %v1923
      %vm7222 = vcmp.le.f32.partialorder %v7221, 0.7853982
      %vm7223 = vcmp.lt.s32.totalorder %v1923, 0
      %v7224 = vand.u32 %v1923, 2139095040
      %v7225 = vshrl.u32 %v7224, 23
      %v7226 = vsub.s32 %v7225, 127
      %v7227 = vand.u32 2147483647, %v1923
      %v7228 = vand.u32 %v7227, 8388607
      %v7229 = vor.u32 %v7228, 8388608
      %v7230 = vsub.s32 0, %v7229
      %v7231 = vadd.s32 %v7226, 1
      %vm7232 = vcmp.gt.s32.totalorder %v7231, 0
      %v7233 = vsel %vm7232, %v7231, 0
      %v7234 = vshrl.u32 %v7233, 5
      %v7235 = vand.u32 %v7233, 31
      %v7236 = vsub.s32 32, %v7235
      %v7237 = vshrl.u32 683565275, %v7236
      %v7238 = vshll.u32 683565275, %v7235
      %v7239 = vshrl.u32 2475754826, %v7236
      %v7240 = vor.u32 %v7238, %v7239
      %v7241 = vshll.u32 2475754826, %v7235
      %v7242 = vshrl.u32 2131351028, %v7236
      %v7243 = vor.u32 %v7241, %v7242
      %v7244 = vshll.u32 2131351028, %v7235
      %v7245 = vshrl.u32 2102212464, %v7236
      %v7246 = vor.u32 %v7244, %v7245
      %v7247 = vshll.u32 2102212464, %v7235
      %v7248 = vshrl.u32 920167782, %v7236
      %v7249 = vor.u32 %v7247, %v7248
      %v7250 = vshll.u32 920167782, %v7235
      %v7251 = vshrl.u32 1326507024, %v7236
      %v7252 = vor.u32 %v7250, %v7251
      %vm7253 = vcmp.lt.s32.totalorder %v7234, 1
      %vm7254 = vcmp.lt.s32.totalorder %v7234, 2
      %vm7255 = vcmp.lt.s32.totalorder %v7234, 3
      %vm7256 = vcmp.lt.s32.totalorder %v7234, 4
      %v7257 = vsel %vm7253, %v7237, %v7240
      %v7258 = vsel %vm7256, %v7246, 2102212464
      %v7259 = vsel %vm7255, %v7243, %v7258
      %v7260 = vsel %vm7254, %v7257, %v7259
      %v7261 = vsel %vm7253, %v7240, %v7243
      %v7262 = vsel %vm7256, %v7249, 920167782
      %v7263 = vsel %vm7255, %v7246, %v7262
      %v7264 = vsel %vm7254, %v7261, %v7263
      %v7265 = vsel %vm7253, %v7243, %v7246
      %v7266 = vsel %vm7256, %v7252, 1326507024
      %v7267 = vsel %vm7255, %v7249, %v7266
      %v7268 = vsel %vm7254, %v7265, %v7267
      %v7269 = vshll.u32 %v7229, 8
      %v7270 = vmul.u32.u64.compose %v7269, %v7268
      %v7271 = vextract.low.u32 %v7270
      %v7272 = vextract.high.u32 %v7270
      %v7273 = vmul.u32.u64.compose %v7269, %v7264
      %v7274 = vextract.low.u32 %v7273
      %v7275 = vextract.high.u32 %v7273
      %v7276 = vmul.u32 %v7269, %v7260
      %v7277 = vadd.s32 %v7272, %v7274
      %vm7278 = vc.u32 %v7272, %v7274
      %v7279 = vadd.s32 %v7275, 1
      %v7280 = vsel %vm7278, %v7279, %v7275
      %v7281 = vadd.s32 %v7276, %v7280
      %v7282 = vadd.s32 %v7281, 536870912
      %v7283 = vshrl.u32 %v7282, 30
      %v7284 = vshll.u32 %v7283, 30
      %v7285 = vsub.s32 %v7281, %v7284
      %vm7286 = vcmp.lt.s32.totalorder %v7285, 0
      %v7287 = vsub.s32 0, %v7285
      %v7288 = vsel %vm7286, %v7287, %v7285
      %v7289 = vclz %v7288
      %v7290 = vsub.s32 %v7289, 2
      %vm7291 = vcmp.gt.s32.totalorder 0, %v7290
      %v7292 = vsel %vm7291, 0, %v7290
      %v7293 = vsub.s32 32, %v7292
      %v7294 = vshll.u32 %v7285, %v7292
      %v7295 = vshrl.u32 %v7277, %v7293
      %v7296 = vor.u32 %v7294, %v7295
      %v7297 = vsub.s32 4294967266, %v7292
      %v7298 = vadd.s32 %v7297, 127
      %v7299 = vshll.u32 %v7298, 23
      %v7300 = vor.u32 4788187, %v7299
      %v7301 = vand.u32 2147483647, %v7300
      %v7303 = vcvt.s32.f32 %v7296
      %v7304 = vmul.f32 %v7303, %v7301
      %v7305 = vxor.u32 %v7304, 2147483648
      %v7306 = vsel %vm7223, %v7305, %v7304
      %v7307 = vsub.s32 4, %v7283
      %v7308 = vsel %vm7223, %v7307, %v7283
      %v7309 = vsel %vm7222, %v1923, %v7306
      %v7310 = vsel %vm7222, 0, %v7308
      %v7311 = vcosq.f32.pop %v7309
      %v7312 = vsinq.f32.pop %v7309
      %vm7313 = vweird.f32 %v1923
      %v7314 = vadd.s32 %v7310, 3
      %v7315 = vand.u32 %v7314, 3
      %vm7316 = vcmp.lt.s32.totalorder %v7315, 2
      %vm7317 = vcmp.eq.s32.totalorder %v7315, 0
      %v7318 = vxor.u32 %v7312, 2147483648
      %v7319 = vsel %vm7317, %v7311, %v7318
      %vm7320 = vcmp.eq.s32.totalorder %v7315, 2
      %v7321 = vxor.u32 %v7311, 2147483648
      %v7322 = vsel %vm7320, %v7321, %v7312
      %v7323 = vsel %vm7316, %v7319, %v7322
      %v7324 = vsel %vm7313, nan, %v7323
      %v7325 = vand.u32 2147483647, %v1924
      %vm7326 = vcmp.le.f32.partialorder %v7325, 0.7853982
      %vm7327 = vcmp.lt.s32.totalorder %v1924, 0
      %v7328 = vand.u32 %v1924, 2139095040
      %v7329 = vshrl.u32 %v7328, 23
      %v7330 = vsub.s32 %v7329, 127
      %v7331 = vand.u32 2147483647, %v1924
      %v7332 = vand.u32 %v7331, 8388607
      %v7333 = vor.u32 %v7332, 8388608
      %v7334 = vsub.s32 0, %v7333
      %v7335 = vadd.s32 %v7330, 1
      %vm7336 = vcmp.gt.s32.totalorder %v7335, 0
      %v7337 = vsel %vm7336, %v7335, 0
      %v7338 = vshrl.u32 %v7337, 5
      %v7339 = vand.u32 %v7337, 31
      %v7340 = vsub.s32 32, %v7339
      %v7341 = vshrl.u32 683565275, %v7340
      %v7342 = vshll.u32 683565275, %v7339
      %v7343 = vshrl.u32 2475754826, %v7340
      %v7344 = vor.u32 %v7342, %v7343
      %v7345 = vshll.u32 2475754826, %v7339
      %v7346 = vshrl.u32 2131351028, %v7340
      %v7347 = vor.u32 %v7345, %v7346
      %v7348 = vshll.u32 2131351028, %v7339
      %v7349 = vshrl.u32 2102212464, %v7340
      %v7350 = vor.u32 %v7348, %v7349
      %v7351 = vshll.u32 2102212464, %v7339
      %v7352 = vshrl.u32 920167782, %v7340
      %v7353 = vor.u32 %v7351, %v7352
      %v7354 = vshll.u32 920167782, %v7339
      %v7355 = vshrl.u32 1326507024, %v7340
      %v7356 = vor.u32 %v7354, %v7355
      %vm7357 = vcmp.lt.s32.totalorder %v7338, 1
      %vm7358 = vcmp.lt.s32.totalorder %v7338, 2
      %vm7359 = vcmp.lt.s32.totalorder %v7338, 3
      %vm7360 = vcmp.lt.s32.totalorder %v7338, 4
      %v7361 = vsel %vm7357, %v7341, %v7344
      %v7362 = vsel %vm7360, %v7350, 2102212464
      %v7363 = vsel %vm7359, %v7347, %v7362
      %v7364 = vsel %vm7358, %v7361, %v7363
      %v7365 = vsel %vm7357, %v7344, %v7347
      %v7366 = vsel %vm7360, %v7353, 920167782
      %v7367 = vsel %vm7359, %v7350, %v7366
      %v7368 = vsel %vm7358, %v7365, %v7367
      %v7369 = vsel %vm7357, %v7347, %v7350
      %v7370 = vsel %vm7360, %v7356, 1326507024
      %v7371 = vsel %vm7359, %v7353, %v7370
      %v7372 = vsel %vm7358, %v7369, %v7371
      %v7373 = vshll.u32 %v7333, 8
      %v7374 = vmul.u32.u64.compose %v7373, %v7372
      %v7375 = vextract.low.u32 %v7374
      %v7376 = vextract.high.u32 %v7374
      %v7377 = vmul.u32.u64.compose %v7373, %v7368
      %v7378 = vextract.low.u32 %v7377
      %v7379 = vextract.high.u32 %v7377
      %v7380 = vmul.u32 %v7373, %v7364
      %v7381 = vadd.s32 %v7376, %v7378
      %vm7382 = vc.u32 %v7376, %v7378
      %v7383 = vadd.s32 %v7379, 1
      %v7384 = vsel %vm7382, %v7383, %v7379
      %v7385 = vadd.s32 %v7380, %v7384
      %v7386 = vadd.s32 %v7385, 536870912
      %v7387 = vshrl.u32 %v7386, 30
      %v7388 = vshll.u32 %v7387, 30
      %v7389 = vsub.s32 %v7385, %v7388
      %vm7390 = vcmp.lt.s32.totalorder %v7389, 0
      %v7391 = vsub.s32 0, %v7389
      %v7392 = vsel %vm7390, %v7391, %v7389
      %v7393 = vclz %v7392
      %v7394 = vsub.s32 %v7393, 2
      %vm7395 = vcmp.gt.s32.totalorder 0, %v7394
      %v7396 = vsel %vm7395, 0, %v7394
      %v7397 = vsub.s32 32, %v7396
      %v7398 = vshll.u32 %v7389, %v7396
      %v7399 = vshrl.u32 %v7381, %v7397
      %v7400 = vor.u32 %v7398, %v7399
      %v7401 = vsub.s32 4294967266, %v7396
      %v7402 = vadd.s32 %v7401, 127
      %v7403 = vshll.u32 %v7402, 23
      %v7404 = vor.u32 4788187, %v7403
      %v7405 = vand.u32 2147483647, %v7404
      %v7407 = vcvt.s32.f32 %v7400
      %v7408 = vmul.f32 %v7407, %v7405
      %v7409 = vxor.u32 %v7408, 2147483648
      %v7410 = vsel %vm7327, %v7409, %v7408
      %v7411 = vsub.s32 4, %v7387
      %v7412 = vsel %vm7327, %v7411, %v7387
      %v7413 = vsel %vm7326, %v1924, %v7410
      %v7414 = vsel %vm7326, 0, %v7412
      %v7415 = vcosq.f32.pop %v7413
      %v7416 = vsinq.f32.pop %v7413
      %vm7417 = vweird.f32 %v1924
      %v7418 = vadd.s32 %v7414, 3
      %v7419 = vand.u32 %v7418, 3
      %vm7420 = vcmp.lt.s32.totalorder %v7419, 2
      %vm7421 = vcmp.eq.s32.totalorder %v7419, 0
      %v7422 = vxor.u32 %v7416, 2147483648
      %v7423 = vsel %vm7421, %v7415, %v7422
      %vm7424 = vcmp.eq.s32.totalorder %v7419, 2
      %v7425 = vxor.u32 %v7415, 2147483648
      %v7426 = vsel %vm7424, %v7425, %v7416
      %v7427 = vsel %vm7420, %v7423, %v7426
      %v7428 = vsel %vm7417, nan, %v7427
      %v7429 = vand.u32 2147483647, %v1925
      %vm7430 = vcmp.le.f32.partialorder %v7429, 0.7853982
      %vm7431 = vcmp.lt.s32.totalorder %v1925, 0
      %v7432 = vand.u32 %v1925, 2139095040
      %v7433 = vshrl.u32 %v7432, 23
      %v7434 = vsub.s32 %v7433, 127
      %v7435 = vand.u32 2147483647, %v1925
      %v7436 = vand.u32 %v7435, 8388607
      %v7437 = vor.u32 %v7436, 8388608
      %v7438 = vsub.s32 0, %v7437
      %v7439 = vadd.s32 %v7434, 1
      %vm7440 = vcmp.gt.s32.totalorder %v7439, 0
      %v7441 = vsel %vm7440, %v7439, 0
      %v7442 = vshrl.u32 %v7441, 5
      %v7443 = vand.u32 %v7441, 31
      %v7444 = vsub.s32 32, %v7443
      %v7445 = vshrl.u32 683565275, %v7444
      %v7446 = vshll.u32 683565275, %v7443
      %v7447 = vshrl.u32 2475754826, %v7444
      %v7448 = vor.u32 %v7446, %v7447
      %v7449 = vshll.u32 2475754826, %v7443
      %v7450 = vshrl.u32 2131351028, %v7444
      %v7451 = vor.u32 %v7449, %v7450
      %v7452 = vshll.u32 2131351028, %v7443
      %v7453 = vshrl.u32 2102212464, %v7444
      %v7454 = vor.u32 %v7452, %v7453
      %v7455 = vshll.u32 2102212464, %v7443
      %v7456 = vshrl.u32 920167782, %v7444
      %v7457 = vor.u32 %v7455, %v7456
      %v7458 = vshll.u32 920167782, %v7443
      %v7459 = vshrl.u32 1326507024, %v7444
      %v7460 = vor.u32 %v7458, %v7459
      %vm7461 = vcmp.lt.s32.totalorder %v7442, 1
      %vm7462 = vcmp.lt.s32.totalorder %v7442, 2
      %vm7463 = vcmp.lt.s32.totalorder %v7442, 3
      %vm7464 = vcmp.lt.s32.totalorder %v7442, 4
      %v7465 = vsel %vm7461, %v7445, %v7448
      %v7466 = vsel %vm7464, %v7454, 2102212464
      %v7467 = vsel %vm7463, %v7451, %v7466
      %v7468 = vsel %vm7462, %v7465, %v7467
      %v7469 = vsel %vm7461, %v7448, %v7451
      %v7470 = vsel %vm7464, %v7457, 920167782
      %v7471 = vsel %vm7463, %v7454, %v7470
      %v7472 = vsel %vm7462, %v7469, %v7471
      %v7473 = vsel %vm7461, %v7451, %v7454
      %v7474 = vsel %vm7464, %v7460, 1326507024
      %v7475 = vsel %vm7463, %v7457, %v7474
      %v7476 = vsel %vm7462, %v7473, %v7475
      %v7477 = vshll.u32 %v7437, 8
      %v7478 = vmul.u32.u64.compose %v7477, %v7476
      %v7479 = vextract.low.u32 %v7478
      %v7480 = vextract.high.u32 %v7478
      %v7481 = vmul.u32.u64.compose %v7477, %v7472
      %v7482 = vextract.low.u32 %v7481
      %v7483 = vextract.high.u32 %v7481
      %v7484 = vmul.u32 %v7477, %v7468
      %v7485 = vadd.s32 %v7480, %v7482
      %vm7486 = vc.u32 %v7480, %v7482
      %v7487 = vadd.s32 %v7483, 1
      %v7488 = vsel %vm7486, %v7487, %v7483
      %v7489 = vadd.s32 %v7484, %v7488
      %v7490 = vadd.s32 %v7489, 536870912
      %v7491 = vshrl.u32 %v7490, 30
      %v7492 = vshll.u32 %v7491, 30
      %v7493 = vsub.s32 %v7489, %v7492
      %vm7494 = vcmp.lt.s32.totalorder %v7493, 0
      %v7495 = vsub.s32 0, %v7493
      %v7496 = vsel %vm7494, %v7495, %v7493
      %v7497 = vclz %v7496
      %v7498 = vsub.s32 %v7497, 2
      %vm7499 = vcmp.gt.s32.totalorder 0, %v7498
      %v7500 = vsel %vm7499, 0, %v7498
      %v7501 = vsub.s32 32, %v7500
      %v7502 = vshll.u32 %v7493, %v7500
      %v7503 = vshrl.u32 %v7485, %v7501
      %v7504 = vor.u32 %v7502, %v7503
      %v7505 = vsub.s32 4294967266, %v7500
      %v7506 = vadd.s32 %v7505, 127
      %v7507 = vshll.u32 %v7506, 23
      %v7508 = vor.u32 4788187, %v7507
      %v7509 = vand.u32 2147483647, %v7508
      %v7511 = vcvt.s32.f32 %v7504
      %v7512 = vmul.f32 %v7511, %v7509
      %v7513 = vxor.u32 %v7512, 2147483648
      %v7514 = vsel %vm7431, %v7513, %v7512
      %v7515 = vsub.s32 4, %v7491
      %v7516 = vsel %vm7431, %v7515, %v7491
      %v7517 = vsel %vm7430, %v1925, %v7514
      %v7518 = vsel %vm7430, 0, %v7516
      %v7519 = vcosq.f32.pop %v7517
      %v7520 = vsinq.f32.pop %v7517
      %vm7521 = vweird.f32 %v1925
      %v7522 = vadd.s32 %v7518, 3
      %v7523 = vand.u32 %v7522, 3
      %vm7524 = vcmp.lt.s32.totalorder %v7523, 2
      %vm7525 = vcmp.eq.s32.totalorder %v7523, 0
      %v7526 = vxor.u32 %v7520, 2147483648
      %v7527 = vsel %vm7525, %v7519, %v7526
      %vm7528 = vcmp.eq.s32.totalorder %v7523, 2
      %v7529 = vxor.u32 %v7519, 2147483648
      %v7530 = vsel %vm7528, %v7529, %v7520
      %v7531 = vsel %vm7524, %v7527, %v7530
      %v7532 = vsel %vm7521, nan, %v7531
      %v7533 = vand.u32 2147483647, %v1926
      %vm7534 = vcmp.le.f32.partialorder %v7533, 0.7853982
      %vm7535 = vcmp.lt.s32.totalorder %v1926, 0
      %v7536 = vand.u32 %v1926, 2139095040
      %v7537 = vshrl.u32 %v7536, 23
      %v7538 = vsub.s32 %v7537, 127
      %v7539 = vand.u32 2147483647, %v1926
      %v7540 = vand.u32 %v7539, 8388607
      %v7541 = vor.u32 %v7540, 8388608
      %v7542 = vsub.s32 0, %v7541
      %v7543 = vadd.s32 %v7538, 1
      %vm7544 = vcmp.gt.s32.totalorder %v7543, 0
      %v7545 = vsel %vm7544, %v7543, 0
      %v7546 = vshrl.u32 %v7545, 5
      %v7547 = vand.u32 %v7545, 31
      %v7548 = vsub.s32 32, %v7547
      %v7549 = vshrl.u32 683565275, %v7548
      %v7550 = vshll.u32 683565275, %v7547
      %v7551 = vshrl.u32 2475754826, %v7548
      %v7552 = vor.u32 %v7550, %v7551
      %v7553 = vshll.u32 2475754826, %v7547
      %v7554 = vshrl.u32 2131351028, %v7548
      %v7555 = vor.u32 %v7553, %v7554
      %v7556 = vshll.u32 2131351028, %v7547
      %v7557 = vshrl.u32 2102212464, %v7548
      %v7558 = vor.u32 %v7556, %v7557
      %v7559 = vshll.u32 2102212464, %v7547
      %v7560 = vshrl.u32 920167782, %v7548
      %v7561 = vor.u32 %v7559, %v7560
      %v7562 = vshll.u32 920167782, %v7547
      %v7563 = vshrl.u32 1326507024, %v7548
      %v7564 = vor.u32 %v7562, %v7563
      %vm7565 = vcmp.lt.s32.totalorder %v7546, 1
      %vm7566 = vcmp.lt.s32.totalorder %v7546, 2
      %vm7567 = vcmp.lt.s32.totalorder %v7546, 3
      %vm7568 = vcmp.lt.s32.totalorder %v7546, 4
      %v7569 = vsel %vm7565, %v7549, %v7552
      %v7570 = vsel %vm7568, %v7558, 2102212464
      %v7571 = vsel %vm7567, %v7555, %v7570
      %v7572 = vsel %vm7566, %v7569, %v7571
      %v7573 = vsel %vm7565, %v7552, %v7555
      %v7574 = vsel %vm7568, %v7561, 920167782
      %v7575 = vsel %vm7567, %v7558, %v7574
      %v7576 = vsel %vm7566, %v7573, %v7575
      %v7577 = vsel %vm7565, %v7555, %v7558
      %v7578 = vsel %vm7568, %v7564, 1326507024
      %v7579 = vsel %vm7567, %v7561, %v7578
      %v7580 = vsel %vm7566, %v7577, %v7579
      %v7581 = vshll.u32 %v7541, 8
      %v7582 = vmul.u32.u64.compose %v7581, %v7580
      %v7583 = vextract.low.u32 %v7582
      %v7584 = vextract.high.u32 %v7582
      %v7585 = vmul.u32.u64.compose %v7581, %v7576
      %v7586 = vextract.low.u32 %v7585
      %v7587 = vextract.high.u32 %v7585
      %v7588 = vmul.u32 %v7581, %v7572
      %v7589 = vadd.s32 %v7584, %v7586
      %vm7590 = vc.u32 %v7584, %v7586
      %v7591 = vadd.s32 %v7587, 1
      %v7592 = vsel %vm7590, %v7591, %v7587
      %v7593 = vadd.s32 %v7588, %v7592
      %v7594 = vadd.s32 %v7593, 536870912
      %v7595 = vshrl.u32 %v7594, 30
      %v7596 = vshll.u32 %v7595, 30
      %v7597 = vsub.s32 %v7593, %v7596
      %vm7598 = vcmp.lt.s32.totalorder %v7597, 0
      %v7599 = vsub.s32 0, %v7597
      %v7600 = vsel %vm7598, %v7599, %v7597
      %v7601 = vclz %v7600
      %v7602 = vsub.s32 %v7601, 2
      %vm7603 = vcmp.gt.s32.totalorder 0, %v7602
      %v7604 = vsel %vm7603, 0, %v7602
      %v7605 = vsub.s32 32, %v7604
      %v7606 = vshll.u32 %v7597, %v7604
      %v7607 = vshrl.u32 %v7589, %v7605
      %v7608 = vor.u32 %v7606, %v7607
      %v7609 = vsub.s32 4294967266, %v7604
      %v7610 = vadd.s32 %v7609, 127
      %v7611 = vshll.u32 %v7610, 23
      %v7612 = vor.u32 4788187, %v7611
      %v7613 = vand.u32 2147483647, %v7612
      %v7615 = vcvt.s32.f32 %v7608
      %v7616 = vmul.f32 %v7615, %v7613
      %v7617 = vxor.u32 %v7616, 2147483648
      %v7618 = vsel %vm7535, %v7617, %v7616
      %v7619 = vsub.s32 4, %v7595
      %v7620 = vsel %vm7535, %v7619, %v7595
      %v7621 = vsel %vm7534, %v1926, %v7618
      %v7622 = vsel %vm7534, 0, %v7620
      %v7623 = vcosq.f32.pop %v7621
      %v7624 = vsinq.f32.pop %v7621
      %vm7625 = vweird.f32 %v1926
      %v7626 = vadd.s32 %v7622, 3
      %v7627 = vand.u32 %v7626, 3
      %vm7628 = vcmp.lt.s32.totalorder %v7627, 2
      %vm7629 = vcmp.eq.s32.totalorder %v7627, 0
      %v7630 = vxor.u32 %v7624, 2147483648
      %v7631 = vsel %vm7629, %v7623, %v7630
      %vm7632 = vcmp.eq.s32.totalorder %v7627, 2
      %v7633 = vxor.u32 %v7623, 2147483648
      %v7634 = vsel %vm7632, %v7633, %v7624
      %v7635 = vsel %vm7628, %v7631, %v7634
      %v7636 = vsel %vm7625, nan, %v7635
      %v7637 = vand.u32 2147483647, %v1927
      %vm7638 = vcmp.le.f32.partialorder %v7637, 0.7853982
      %vm7639 = vcmp.lt.s32.totalorder %v1927, 0
      %v7640 = vand.u32 %v1927, 2139095040
      %v7641 = vshrl.u32 %v7640, 23
      %v7642 = vsub.s32 %v7641, 127
      %v7643 = vand.u32 2147483647, %v1927
      %v7644 = vand.u32 %v7643, 8388607
      %v7645 = vor.u32 %v7644, 8388608
      %v7646 = vsub.s32 0, %v7645
      %v7647 = vadd.s32 %v7642, 1
      %vm7648 = vcmp.gt.s32.totalorder %v7647, 0
      %v7649 = vsel %vm7648, %v7647, 0
      %v7650 = vshrl.u32 %v7649, 5
      %v7651 = vand.u32 %v7649, 31
      %v7652 = vsub.s32 32, %v7651
      %v7653 = vshrl.u32 683565275, %v7652
      %v7654 = vshll.u32 683565275, %v7651
      %v7655 = vshrl.u32 2475754826, %v7652
      %v7656 = vor.u32 %v7654, %v7655
      %v7657 = vshll.u32 2475754826, %v7651
      %v7658 = vshrl.u32 2131351028, %v7652
      %v7659 = vor.u32 %v7657, %v7658
      %v7660 = vshll.u32 2131351028, %v7651
      %v7661 = vshrl.u32 2102212464, %v7652
      %v7662 = vor.u32 %v7660, %v7661
      %v7663 = vshll.u32 2102212464, %v7651
      %v7664 = vshrl.u32 920167782, %v7652
      %v7665 = vor.u32 %v7663, %v7664
      %v7666 = vshll.u32 920167782, %v7651
      %v7667 = vshrl.u32 1326507024, %v7652
      %v7668 = vor.u32 %v7666, %v7667
      %vm7669 = vcmp.lt.s32.totalorder %v7650, 1
      %vm7670 = vcmp.lt.s32.totalorder %v7650, 2
      %vm7671 = vcmp.lt.s32.totalorder %v7650, 3
      %vm7672 = vcmp.lt.s32.totalorder %v7650, 4
      %v7673 = vsel %vm7669, %v7653, %v7656
      %v7674 = vsel %vm7672, %v7662, 2102212464
      %v7675 = vsel %vm7671, %v7659, %v7674
      %v7676 = vsel %vm7670, %v7673, %v7675
      %v7677 = vsel %vm7669, %v7656, %v7659
      %v7678 = vsel %vm7672, %v7665, 920167782
      %v7679 = vsel %vm7671, %v7662, %v7678
      %v7680 = vsel %vm7670, %v7677, %v7679
      %v7681 = vsel %vm7669, %v7659, %v7662
      %v7682 = vsel %vm7672, %v7668, 1326507024
      %v7683 = vsel %vm7671, %v7665, %v7682
      %v7684 = vsel %vm7670, %v7681, %v7683
      %v7685 = vshll.u32 %v7645, 8
      %v7686 = vmul.u32.u64.compose %v7685, %v7684
      %v7687 = vextract.low.u32 %v7686
      %v7688 = vextract.high.u32 %v7686
      %v7689 = vmul.u32.u64.compose %v7685, %v7680
      %v7690 = vextract.low.u32 %v7689
      %v7691 = vextract.high.u32 %v7689
      %v7692 = vmul.u32 %v7685, %v7676
      %v7693 = vadd.s32 %v7688, %v7690
      %vm7694 = vc.u32 %v7688, %v7690
      %v7695 = vadd.s32 %v7691, 1
      %v7696 = vsel %vm7694, %v7695, %v7691
      %v7697 = vadd.s32 %v7692, %v7696
      %v7698 = vadd.s32 %v7697, 536870912
      %v7699 = vshrl.u32 %v7698, 30
      %v7700 = vshll.u32 %v7699, 30
      %v7701 = vsub.s32 %v7697, %v7700
      %vm7702 = vcmp.lt.s32.totalorder %v7701, 0
      %v7703 = vsub.s32 0, %v7701
      %v7704 = vsel %vm7702, %v7703, %v7701
      %v7705 = vclz %v7704
      %v7706 = vsub.s32 %v7705, 2
      %vm7707 = vcmp.gt.s32.totalorder 0, %v7706
      %v7708 = vsel %vm7707, 0, %v7706
      %v7709 = vsub.s32 32, %v7708
      %v7710 = vshll.u32 %v7701, %v7708
      %v7711 = vshrl.u32 %v7693, %v7709
      %v7712 = vor.u32 %v7710, %v7711
      %v7713 = vsub.s32 4294967266, %v7708
      %v7714 = vadd.s32 %v7713, 127
      %v7715 = vshll.u32 %v7714, 23
      %v7716 = vor.u32 4788187, %v7715
      %v7717 = vand.u32 2147483647, %v7716
      %v7719 = vcvt.s32.f32 %v7712
      %v7720 = vmul.f32 %v7719, %v7717
      %v7721 = vxor.u32 %v7720, 2147483648
      %v7722 = vsel %vm7639, %v7721, %v7720
      %v7723 = vsub.s32 4, %v7699
      %v7724 = vsel %vm7639, %v7723, %v7699
      %v7725 = vsel %vm7638, %v1927, %v7722
      %v7726 = vsel %vm7638, 0, %v7724
      %v7727 = vcosq.f32.pop %v7725
      %v7728 = vsinq.f32.pop %v7725
      %vm7729 = vweird.f32 %v1927
      %v7730 = vadd.s32 %v7726, 3
      %v7731 = vand.u32 %v7730, 3
      %vm7732 = vcmp.lt.s32.totalorder %v7731, 2
      %vm7733 = vcmp.eq.s32.totalorder %v7731, 0
      %v7734 = vxor.u32 %v7728, 2147483648
      %v7735 = vsel %vm7733, %v7727, %v7734
      %vm7736 = vcmp.eq.s32.totalorder %v7731, 2
      %v7737 = vxor.u32 %v7727, 2147483648
      %v7738 = vsel %vm7736, %v7737, %v7728
      %v7739 = vsel %vm7732, %v7735, %v7738
      %v7740 = vsel %vm7729, nan, %v7739
      %v7741 = vand.u32 2147483647, %v1928
      %vm7742 = vcmp.le.f32.partialorder %v7741, 0.7853982
      %vm7743 = vcmp.lt.s32.totalorder %v1928, 0
      %v7744 = vand.u32 %v1928, 2139095040
      %v7745 = vshrl.u32 %v7744, 23
      %v7746 = vsub.s32 %v7745, 127
      %v7747 = vand.u32 2147483647, %v1928
      %v7748 = vand.u32 %v7747, 8388607
      %v7749 = vor.u32 %v7748, 8388608
      %v7750 = vsub.s32 0, %v7749
      %v7751 = vadd.s32 %v7746, 1
      %vm7752 = vcmp.gt.s32.totalorder %v7751, 0
      %v7753 = vsel %vm7752, %v7751, 0
      %v7754 = vshrl.u32 %v7753, 5
      %v7755 = vand.u32 %v7753, 31
      %v7756 = vsub.s32 32, %v7755
      %v7757 = vshrl.u32 683565275, %v7756
      %v7758 = vshll.u32 683565275, %v7755
      %v7759 = vshrl.u32 2475754826, %v7756
      %v7760 = vor.u32 %v7758, %v7759
      %v7761 = vshll.u32 2475754826, %v7755
      %v7762 = vshrl.u32 2131351028, %v7756
      %v7763 = vor.u32 %v7761, %v7762
      %v7764 = vshll.u32 2131351028, %v7755
      %v7765 = vshrl.u32 2102212464, %v7756
      %v7766 = vor.u32 %v7764, %v7765
      %v7767 = vshll.u32 2102212464, %v7755
      %v7768 = vshrl.u32 920167782, %v7756
      %v7769 = vor.u32 %v7767, %v7768
      %v7770 = vshll.u32 920167782, %v7755
      %v7771 = vshrl.u32 1326507024, %v7756
      %v7772 = vor.u32 %v7770, %v7771
      %vm7773 = vcmp.lt.s32.totalorder %v7754, 1
      %vm7774 = vcmp.lt.s32.totalorder %v7754, 2
      %vm7775 = vcmp.lt.s32.totalorder %v7754, 3
      %vm7776 = vcmp.lt.s32.totalorder %v7754, 4
      %v7777 = vsel %vm7773, %v7757, %v7760
      %v7778 = vsel %vm7776, %v7766, 2102212464
      %v7779 = vsel %vm7775, %v7763, %v7778
      %v7780 = vsel %vm7774, %v7777, %v7779
      %v7781 = vsel %vm7773, %v7760, %v7763
      %v7782 = vsel %vm7776, %v7769, 920167782
      %v7783 = vsel %vm7775, %v7766, %v7782
      %v7784 = vsel %vm7774, %v7781, %v7783
      %v7785 = vsel %vm7773, %v7763, %v7766
      %v7786 = vsel %vm7776, %v7772, 1326507024
      %v7787 = vsel %vm7775, %v7769, %v7786
      %v7788 = vsel %vm7774, %v7785, %v7787
      %v7789 = vshll.u32 %v7749, 8
      %v7790 = vmul.u32.u64.compose %v7789, %v7788
      %v7791 = vextract.low.u32 %v7790
      %v7792 = vextract.high.u32 %v7790
      %v7793 = vmul.u32.u64.compose %v7789, %v7784
      %v7794 = vextract.low.u32 %v7793
      %v7795 = vextract.high.u32 %v7793
      %v7796 = vmul.u32 %v7789, %v7780
      %v7797 = vadd.s32 %v7792, %v7794
      %vm7798 = vc.u32 %v7792, %v7794
      %v7799 = vadd.s32 %v7795, 1
      %v7800 = vsel %vm7798, %v7799, %v7795
      %v7801 = vadd.s32 %v7796, %v7800
      %v7802 = vadd.s32 %v7801, 536870912
      %v7803 = vshrl.u32 %v7802, 30
      %v7804 = vshll.u32 %v7803, 30
      %v7805 = vsub.s32 %v7801, %v7804
      %vm7806 = vcmp.lt.s32.totalorder %v7805, 0
      %v7807 = vsub.s32 0, %v7805
      %v7808 = vsel %vm7806, %v7807, %v7805
      %v7809 = vclz %v7808
      %v7810 = vsub.s32 %v7809, 2
      %vm7811 = vcmp.gt.s32.totalorder 0, %v7810
      %v7812 = vsel %vm7811, 0, %v7810
      %v7813 = vsub.s32 32, %v7812
      %v7814 = vshll.u32 %v7805, %v7812
      %v7815 = vshrl.u32 %v7797, %v7813
      %v7816 = vor.u32 %v7814, %v7815
      %v7817 = vsub.s32 4294967266, %v7812
      %v7818 = vadd.s32 %v7817, 127
      %v7819 = vshll.u32 %v7818, 23
      %v7820 = vor.u32 4788187, %v7819
      %v7821 = vand.u32 2147483647, %v7820
      %v7823 = vcvt.s32.f32 %v7816
      %v7824 = vmul.f32 %v7823, %v7821
      %v7825 = vxor.u32 %v7824, 2147483648
      %v7826 = vsel %vm7743, %v7825, %v7824
      %v7827 = vsub.s32 4, %v7803
      %v7828 = vsel %vm7743, %v7827, %v7803
      %v7829 = vsel %vm7742, %v1928, %v7826
      %v7830 = vsel %vm7742, 0, %v7828
      %v7831 = vcosq.f32.pop %v7829
      %v7832 = vsinq.f32.pop %v7829
      %vm7833 = vweird.f32 %v1928
      %v7834 = vadd.s32 %v7830, 3
      %v7835 = vand.u32 %v7834, 3
      %vm7836 = vcmp.lt.s32.totalorder %v7835, 2
      %vm7837 = vcmp.eq.s32.totalorder %v7835, 0
      %v7838 = vxor.u32 %v7832, 2147483648
      %v7839 = vsel %vm7837, %v7831, %v7838
      %vm7840 = vcmp.eq.s32.totalorder %v7835, 2
      %v7841 = vxor.u32 %v7831, 2147483648
      %v7842 = vsel %vm7840, %v7841, %v7832
      %v7843 = vsel %vm7836, %v7839, %v7842
      %v7844 = vsel %vm7833, nan, %v7843
      %v7845 = vand.u32 2147483647, %v1929
      %vm7846 = vcmp.le.f32.partialorder %v7845, 0.7853982
      %vm7847 = vcmp.lt.s32.totalorder %v1929, 0
      %v7848 = vand.u32 %v1929, 2139095040
      %v7849 = vshrl.u32 %v7848, 23
      %v7850 = vsub.s32 %v7849, 127
      %v7851 = vand.u32 2147483647, %v1929
      %v7852 = vand.u32 %v7851, 8388607
      %v7853 = vor.u32 %v7852, 8388608
      %v7854 = vsub.s32 0, %v7853
      %v7855 = vadd.s32 %v7850, 1
      %vm7856 = vcmp.gt.s32.totalorder %v7855, 0
      %v7857 = vsel %vm7856, %v7855, 0
      %v7858 = vshrl.u32 %v7857, 5
      %v7859 = vand.u32 %v7857, 31
      %v7860 = vsub.s32 32, %v7859
      %v7861 = vshrl.u32 683565275, %v7860
      %v7862 = vshll.u32 683565275, %v7859
      %v7863 = vshrl.u32 2475754826, %v7860
      %v7864 = vor.u32 %v7862, %v7863
      %v7865 = vshll.u32 2475754826, %v7859
      %v7866 = vshrl.u32 2131351028, %v7860
      %v7867 = vor.u32 %v7865, %v7866
      %v7868 = vshll.u32 2131351028, %v7859
      %v7869 = vshrl.u32 2102212464, %v7860
      %v7870 = vor.u32 %v7868, %v7869
      %v7871 = vshll.u32 2102212464, %v7859
      %v7872 = vshrl.u32 920167782, %v7860
      %v7873 = vor.u32 %v7871, %v7872
      %v7874 = vshll.u32 920167782, %v7859
      %v7875 = vshrl.u32 1326507024, %v7860
      %v7876 = vor.u32 %v7874, %v7875
      %vm7877 = vcmp.lt.s32.totalorder %v7858, 1
      %vm7878 = vcmp.lt.s32.totalorder %v7858, 2
      %vm7879 = vcmp.lt.s32.totalorder %v7858, 3
      %vm7880 = vcmp.lt.s32.totalorder %v7858, 4
      %v7881 = vsel %vm7877, %v7861, %v7864
      %v7882 = vsel %vm7880, %v7870, 2102212464
      %v7883 = vsel %vm7879, %v7867, %v7882
      %v7884 = vsel %vm7878, %v7881, %v7883
      %v7885 = vsel %vm7877, %v7864, %v7867
      %v7886 = vsel %vm7880, %v7873, 920167782
      %v7887 = vsel %vm7879, %v7870, %v7886
      %v7888 = vsel %vm7878, %v7885, %v7887
      %v7889 = vsel %vm7877, %v7867, %v7870
      %v7890 = vsel %vm7880, %v7876, 1326507024
      %v7891 = vsel %vm7879, %v7873, %v7890
      %v7892 = vsel %vm7878, %v7889, %v7891
      %v7893 = vshll.u32 %v7853, 8
      %v7894 = vmul.u32.u64.compose %v7893, %v7892
      %v7895 = vextract.low.u32 %v7894
      %v7896 = vextract.high.u32 %v7894
      %v7897 = vmul.u32.u64.compose %v7893, %v7888
      %v7898 = vextract.low.u32 %v7897
      %v7899 = vextract.high.u32 %v7897
      %v7900 = vmul.u32 %v7893, %v7884
      %v7901 = vadd.s32 %v7896, %v7898
      %vm7902 = vc.u32 %v7896, %v7898
      %v7903 = vadd.s32 %v7899, 1
      %v7904 = vsel %vm7902, %v7903, %v7899
      %v7905 = vadd.s32 %v7900, %v7904
      %v7906 = vadd.s32 %v7905, 536870912
      %v7907 = vshrl.u32 %v7906, 30
      %v7908 = vshll.u32 %v7907, 30
      %v7909 = vsub.s32 %v7905, %v7908
      %vm7910 = vcmp.lt.s32.totalorder %v7909, 0
      %v7911 = vsub.s32 0, %v7909
      %v7912 = vsel %vm7910, %v7911, %v7909
      %v7913 = vclz %v7912
      %v7914 = vsub.s32 %v7913, 2
      %vm7915 = vcmp.gt.s32.totalorder 0, %v7914
      %v7916 = vsel %vm7915, 0, %v7914
      %v7917 = vsub.s32 32, %v7916
      %v7918 = vshll.u32 %v7909, %v7916
      %v7919 = vshrl.u32 %v7901, %v7917
      %v7920 = vor.u32 %v7918, %v7919
      %v7921 = vsub.s32 4294967266, %v7916
      %v7922 = vadd.s32 %v7921, 127
      %v7923 = vshll.u32 %v7922, 23
      %v7924 = vor.u32 4788187, %v7923
      %v7925 = vand.u32 2147483647, %v7924
      %v7927 = vcvt.s32.f32 %v7920
      %v7928 = vmul.f32 %v7927, %v7925
      %v7929 = vxor.u32 %v7928, 2147483648
      %v7930 = vsel %vm7847, %v7929, %v7928
      %v7931 = vsub.s32 4, %v7907
      %v7932 = vsel %vm7847, %v7931, %v7907
      %v7933 = vsel %vm7846, %v1929, %v7930
      %v7934 = vsel %vm7846, 0, %v7932
      %v7935 = vcosq.f32.pop %v7933
      %v7936 = vsinq.f32.pop %v7933
      %vm7937 = vweird.f32 %v1929
      %v7938 = vadd.s32 %v7934, 3
      %v7939 = vand.u32 %v7938, 3
      %vm7940 = vcmp.lt.s32.totalorder %v7939, 2
      %vm7941 = vcmp.eq.s32.totalorder %v7939, 0
      %v7942 = vxor.u32 %v7936, 2147483648
      %v7943 = vsel %vm7941, %v7935, %v7942
      %vm7944 = vcmp.eq.s32.totalorder %v7939, 2
      %v7945 = vxor.u32 %v7935, 2147483648
      %v7946 = vsel %vm7944, %v7945, %v7936
      %v7947 = vsel %vm7940, %v7943, %v7946
      %v7948 = vsel %vm7937, nan, %v7947
      %v7949 = vand.u32 2147483647, %v1930
      %vm7950 = vcmp.le.f32.partialorder %v7949, 0.7853982
      %vm7951 = vcmp.lt.s32.totalorder %v1930, 0
      %v7952 = vand.u32 %v1930, 2139095040
      %v7953 = vshrl.u32 %v7952, 23
      %v7954 = vsub.s32 %v7953, 127
      %v7955 = vand.u32 2147483647, %v1930
      %v7956 = vand.u32 %v7955, 8388607
      %v7957 = vor.u32 %v7956, 8388608
      %v7958 = vsub.s32 0, %v7957
      %v7959 = vadd.s32 %v7954, 1
      %vm7960 = vcmp.gt.s32.totalorder %v7959, 0
      %v7961 = vsel %vm7960, %v7959, 0
      %v7962 = vshrl.u32 %v7961, 5
      %v7963 = vand.u32 %v7961, 31
      %v7964 = vsub.s32 32, %v7963
      %v7965 = vshrl.u32 683565275, %v7964
      %v7966 = vshll.u32 683565275, %v7963
      %v7967 = vshrl.u32 2475754826, %v7964
      %v7968 = vor.u32 %v7966, %v7967
      %v7969 = vshll.u32 2475754826, %v7963
      %v7970 = vshrl.u32 2131351028, %v7964
      %v7971 = vor.u32 %v7969, %v7970
      %v7972 = vshll.u32 2131351028, %v7963
      %v7973 = vshrl.u32 2102212464, %v7964
      %v7974 = vor.u32 %v7972, %v7973
      %v7975 = vshll.u32 2102212464, %v7963
      %v7976 = vshrl.u32 920167782, %v7964
      %v7977 = vor.u32 %v7975, %v7976
      %v7978 = vshll.u32 920167782, %v7963
      %v7979 = vshrl.u32 1326507024, %v7964
      %v7980 = vor.u32 %v7978, %v7979
      %vm7981 = vcmp.lt.s32.totalorder %v7962, 1
      %vm7982 = vcmp.lt.s32.totalorder %v7962, 2
      %vm7983 = vcmp.lt.s32.totalorder %v7962, 3
      %vm7984 = vcmp.lt.s32.totalorder %v7962, 4
      %v7985 = vsel %vm7981, %v7965, %v7968
      %v7986 = vsel %vm7984, %v7974, 2102212464
      %v7987 = vsel %vm7983, %v7971, %v7986
      %v7988 = vsel %vm7982, %v7985, %v7987
      %v7989 = vsel %vm7981, %v7968, %v7971
      %v7990 = vsel %vm7984, %v7977, 920167782
      %v7991 = vsel %vm7983, %v7974, %v7990
      %v7992 = vsel %vm7982, %v7989, %v7991
      %v7993 = vsel %vm7981, %v7971, %v7974
      %v7994 = vsel %vm7984, %v7980, 1326507024
      %v7995 = vsel %vm7983, %v7977, %v7994
      %v7996 = vsel %vm7982, %v7993, %v7995
      %v7997 = vshll.u32 %v7957, 8
      %v7998 = vmul.u32.u64.compose %v7997, %v7996
      %v7999 = vextract.low.u32 %v7998
      %v8000 = vextract.high.u32 %v7998
      %v8001 = vmul.u32.u64.compose %v7997, %v7992
      %v8002 = vextract.low.u32 %v8001
      %v8003 = vextract.high.u32 %v8001
      %v8004 = vmul.u32 %v7997, %v7988
      %v8005 = vadd.s32 %v8000, %v8002
      %vm8006 = vc.u32 %v8000, %v8002
      %v8007 = vadd.s32 %v8003, 1
      %v8008 = vsel %vm8006, %v8007, %v8003
      %v8009 = vadd.s32 %v8004, %v8008
      %v8010 = vadd.s32 %v8009, 536870912
      %v8011 = vshrl.u32 %v8010, 30
      %v8012 = vshll.u32 %v8011, 30
      %v8013 = vsub.s32 %v8009, %v8012
      %vm8014 = vcmp.lt.s32.totalorder %v8013, 0
      %v8015 = vsub.s32 0, %v8013
      %v8016 = vsel %vm8014, %v8015, %v8013
      %v8017 = vclz %v8016
      %v8018 = vsub.s32 %v8017, 2
      %vm8019 = vcmp.gt.s32.totalorder 0, %v8018
      %v8020 = vsel %vm8019, 0, %v8018
      %v8021 = vsub.s32 32, %v8020
      %v8022 = vshll.u32 %v8013, %v8020
      %v8023 = vshrl.u32 %v8005, %v8021
      %v8024 = vor.u32 %v8022, %v8023
      %v8025 = vsub.s32 4294967266, %v8020
      %v8026 = vadd.s32 %v8025, 127
      %v8027 = vshll.u32 %v8026, 23
      %v8028 = vor.u32 4788187, %v8027
      %v8029 = vand.u32 2147483647, %v8028
      %v8031 = vcvt.s32.f32 %v8024
      %v8032 = vmul.f32 %v8031, %v8029
      %v8033 = vxor.u32 %v8032, 2147483648
      %v8034 = vsel %vm7951, %v8033, %v8032
      %v8035 = vsub.s32 4, %v8011
      %v8036 = vsel %vm7951, %v8035, %v8011
      %v8037 = vsel %vm7950, %v1930, %v8034
      %v8038 = vsel %vm7950, 0, %v8036
      %v8039 = vcosq.f32.pop %v8037
      %v8040 = vsinq.f32.pop %v8037
      %vm8041 = vweird.f32 %v1930
      %v8042 = vadd.s32 %v8038, 3
      %v8043 = vand.u32 %v8042, 3
      %vm8044 = vcmp.lt.s32.totalorder %v8043, 2
      %vm8045 = vcmp.eq.s32.totalorder %v8043, 0
      %v8046 = vxor.u32 %v8040, 2147483648
      %v8047 = vsel %vm8045, %v8039, %v8046
      %vm8048 = vcmp.eq.s32.totalorder %v8043, 2
      %v8049 = vxor.u32 %v8039, 2147483648
      %v8050 = vsel %vm8048, %v8049, %v8040
      %v8051 = vsel %vm8044, %v8047, %v8050
      %v8052 = vsel %vm8041, nan, %v8051
      %v8053 = vand.u32 2147483647, %v1931
      %vm8054 = vcmp.le.f32.partialorder %v8053, 0.7853982
      %vm8055 = vcmp.lt.s32.totalorder %v1931, 0
      %v8056 = vand.u32 %v1931, 2139095040
      %v8057 = vshrl.u32 %v8056, 23
      %v8058 = vsub.s32 %v8057, 127
      %v8059 = vand.u32 2147483647, %v1931
      %v8060 = vand.u32 %v8059, 8388607
      %v8061 = vor.u32 %v8060, 8388608
      %v8062 = vsub.s32 0, %v8061
      %v8063 = vadd.s32 %v8058, 1
      %vm8064 = vcmp.gt.s32.totalorder %v8063, 0
      %v8065 = vsel %vm8064, %v8063, 0
      %v8066 = vshrl.u32 %v8065, 5
      %v8067 = vand.u32 %v8065, 31
      %v8068 = vsub.s32 32, %v8067
      %v8069 = vshrl.u32 683565275, %v8068
      %v8070 = vshll.u32 683565275, %v8067
      %v8071 = vshrl.u32 2475754826, %v8068
      %v8072 = vor.u32 %v8070, %v8071
      %v8073 = vshll.u32 2475754826, %v8067
      %v8074 = vshrl.u32 2131351028, %v8068
      %v8075 = vor.u32 %v8073, %v8074
      %v8076 = vshll.u32 2131351028, %v8067
      %v8077 = vshrl.u32 2102212464, %v8068
      %v8078 = vor.u32 %v8076, %v8077
      %v8079 = vshll.u32 2102212464, %v8067
      %v8080 = vshrl.u32 920167782, %v8068
      %v8081 = vor.u32 %v8079, %v8080
      %v8082 = vshll.u32 920167782, %v8067
      %v8083 = vshrl.u32 1326507024, %v8068
      %v8084 = vor.u32 %v8082, %v8083
      %vm8085 = vcmp.lt.s32.totalorder %v8066, 1
      %vm8086 = vcmp.lt.s32.totalorder %v8066, 2
      %vm8087 = vcmp.lt.s32.totalorder %v8066, 3
      %vm8088 = vcmp.lt.s32.totalorder %v8066, 4
      %v8089 = vsel %vm8085, %v8069, %v8072
      %v8090 = vsel %vm8088, %v8078, 2102212464
      %v8091 = vsel %vm8087, %v8075, %v8090
      %v8092 = vsel %vm8086, %v8089, %v8091
      %v8093 = vsel %vm8085, %v8072, %v8075
      %v8094 = vsel %vm8088, %v8081, 920167782
      %v8095 = vsel %vm8087, %v8078, %v8094
      %v8096 = vsel %vm8086, %v8093, %v8095
      %v8097 = vsel %vm8085, %v8075, %v8078
      %v8098 = vsel %vm8088, %v8084, 1326507024
      %v8099 = vsel %vm8087, %v8081, %v8098
      %v8100 = vsel %vm8086, %v8097, %v8099
      %v8101 = vshll.u32 %v8061, 8
      %v8102 = vmul.u32.u64.compose %v8101, %v8100
      %v8103 = vextract.low.u32 %v8102
      %v8104 = vextract.high.u32 %v8102
      %v8105 = vmul.u32.u64.compose %v8101, %v8096
      %v8106 = vextract.low.u32 %v8105
      %v8107 = vextract.high.u32 %v8105
      %v8108 = vmul.u32 %v8101, %v8092
      %v8109 = vadd.s32 %v8104, %v8106
      %vm8110 = vc.u32 %v8104, %v8106
      %v8111 = vadd.s32 %v8107, 1
      %v8112 = vsel %vm8110, %v8111, %v8107
      %v8113 = vadd.s32 %v8108, %v8112
      %v8114 = vadd.s32 %v8113, 536870912
      %v8115 = vshrl.u32 %v8114, 30
      %v8116 = vshll.u32 %v8115, 30
      %v8117 = vsub.s32 %v8113, %v8116
      %vm8118 = vcmp.lt.s32.totalorder %v8117, 0
      %v8119 = vsub.s32 0, %v8117
      %v8120 = vsel %vm8118, %v8119, %v8117
      %v8121 = vclz %v8120
      %v8122 = vsub.s32 %v8121, 2
      %vm8123 = vcmp.gt.s32.totalorder 0, %v8122
      %v8124 = vsel %vm8123, 0, %v8122
      %v8125 = vsub.s32 32, %v8124
      %v8126 = vshll.u32 %v8117, %v8124
      %v8127 = vshrl.u32 %v8109, %v8125
      %v8128 = vor.u32 %v8126, %v8127
      %v8129 = vsub.s32 4294967266, %v8124
      %v8130 = vadd.s32 %v8129, 127
      %v8131 = vshll.u32 %v8130, 23
      %v8132 = vor.u32 4788187, %v8131
      %v8133 = vand.u32 2147483647, %v8132
      %v8135 = vcvt.s32.f32 %v8128
      %v8136 = vmul.f32 %v8135, %v8133
      %v8137 = vxor.u32 %v8136, 2147483648
      %v8138 = vsel %vm8055, %v8137, %v8136
      %v8139 = vsub.s32 4, %v8115
      %v8140 = vsel %vm8055, %v8139, %v8115
      %v8141 = vsel %vm8054, %v1931, %v8138
      %v8142 = vsel %vm8054, 0, %v8140
      %v8143 = vcosq.f32.pop %v8141
      %v8144 = vsinq.f32.pop %v8141
      %vm8145 = vweird.f32 %v1931
      %v8146 = vadd.s32 %v8142, 3
      %v8147 = vand.u32 %v8146, 3
      %vm8148 = vcmp.lt.s32.totalorder %v8147, 2
      %vm8149 = vcmp.eq.s32.totalorder %v8147, 0
      %v8150 = vxor.u32 %v8144, 2147483648
      %v8151 = vsel %vm8149, %v8143, %v8150
      %vm8152 = vcmp.eq.s32.totalorder %v8147, 2
      %v8153 = vxor.u32 %v8143, 2147483648
      %v8154 = vsel %vm8152, %v8153, %v8144
      %v8155 = vsel %vm8148, %v8151, %v8154
      %v8156 = vsel %vm8145, nan, %v8155
      %v8157 = vsel %vm1932, %v2049, %v5140
      %v8158 = vsel %vm1933, %v2152, %v5244
      %v8159 = vsel %vm1934, %v2255, %v5348
      %v8160 = vsel %vm1935, %v2358, %v5452
      %v8161 = vsel %vm1936, %v2461, %v5556
      %v8162 = vsel %vm1937, %v2564, %v5660
      %v8163 = vsel %vm1938, %v2667, %v5764
      %v8164 = vsel %vm1939, %v2770, %v5868
      %v8165 = vsel %vm1940, %v2873, %v5972
      %v8166 = vsel %vm1941, %v2976, %v6076
      %v8167 = vsel %vm1942, %v3079, %v6180
      %v8168 = vsel %vm1943, %v3182, %v6284
      %v8169 = vsel %vm1944, %v3285, %v6388
      %v8170 = vsel %vm1945, %v3388, %v6492
      %v8171 = vsel %vm1946, %v3491, %v6596
      %v8172 = vsel %vm1932, %v3594, %v6700
      %v8173 = vsel %vm1933, %v3697, %v6804
      %v8174 = vsel %vm1934, %v3800, %v6908
      %v8175 = vsel %vm1935, %v3903, %v7012
      %v8176 = vsel %vm1936, %v4006, %v7116
      %v8177 = vsel %vm1937, %v4109, %v7220
      %v8178 = vsel %vm1938, %v4212, %v7324
      %v8179 = vsel %vm1939, %v4315, %v7428
      %v8180 = vsel %vm1940, %v4418, %v7532
      %v8181 = vsel %vm1941, %v4521, %v7636
      %v8182 = vsel %vm1942, %v4624, %v7740
      %v8183 = vsel %vm1943, %v4727, %v7844
      %v8184 = vsel %vm1944, %v4830, %v7948
      %v8185 = vsel %vm1945, %v4933, %v8052
      %v8186 = vsel %vm1946, %v5036, %v8156
      %8187 = vst [vmem:[%s174] sm:$0xff] %v8157
      %8188 = vst [vmem:[%s174 + $0x8] sm:$0xff] %v8158
      %8189 = vst [vmem:[%s174 + $0x10] sm:$0xff] %v8159
      %8190 = vst [vmem:[%s174 + $0x18] sm:$0xff] %v8160
      %8191 = vst [vmem:[%s174 + $0x20] sm:$0xff] %v8161
      %8192 = vst [vmem:[%s174 + $0x28] sm:$0xff] %v8162
      %8193 = vst [vmem:[%s174 + $0x30] sm:$0xff] %v8163
      %8194 = vst [vmem:[%s174 + $0x38] sm:$0xff] %v8164
      %8195 = vst [vmem:[%s174 + $0x40] sm:$0xff] %v8165
      %8196 = vst [vmem:[%s174 + $0x48] sm:$0xff] %v8166
      %8197 = vst [vmem:[%s174 + $0x50] sm:$0xff] %v8167
      %8198 = vst [vmem:[%s174 + $0x58] sm:$0xff] %v8168
      %8199 = vst [vmem:[%s174 + $0x60] sm:$0xff] %v8169
      %8200 = vst [vmem:[%s174 + $0x68] sm:$0xff] %v8170
      %8201 = vst [vmem:[%s174 + $0x70] sm:$0xff] %v8171
      %8202 = vst [vmem:[%s174 + $0x78] sm:$0xff] %v8172
      %8203 = vst [vmem:[%s174 + $0x80] sm:$0xff] %v8173
      %8204 = vst [vmem:[%s174 + $0x88] sm:$0xff] %v8174
      %8205 = vst [vmem:[%s174 + $0x90] sm:$0xff] %v8175
      %8206 = vst [vmem:[%s174 + $0x98] sm:$0xff] %v8176
      %8207 = vst [vmem:[%s174 + $0xa0] sm:$0xff] %v8177
      %8208 = vst [vmem:[%s174 + $0xa8] sm:$0xff] %v8178
      %8209 = vst [vmem:[%s174 + $0xb0] sm:$0xff] %v8179
      %8210 = vst [vmem:[%s174 + $0xb8] sm:$0xff] %v8180
      %8211 = vst [vmem:[%s174 + $0xc0] sm:$0xff] %v8181
      %8212 = vst [vmem:[%s174 + $0xc8] sm:$0xff] %v8182
      %8213 = vst [vmem:[%s174 + $0xd0] sm:$0xff] %v8183
      %8214 = vst [vmem:[%s174 + $0xd8] sm:$0xff] %v8184
      %8215 = vst [vmem:[%s174 + $0xe0] sm:$0xff] %v8185
      %8216 = vst [vmem:[%s174 + $0xe8] sm:$0xff] %v8186
      %s8217 = smul.u32 2, %s14
      %p8218 = scmp.lt.s32.totalorder %s8217, 7
      %s8219 = scalar_select %p8218, %s8217, 7
      %s8220 = smul.addr %s8219, 15
      %s8221 = smul.addr %s8220, 8
      %s8222 = scalar_lea.vmem %s3, %s8221
      // Predicated region
      $region33: #{positional_encoding.1} parent=31 // pred_check
        %p8223 = pneg %p100
      $region34: #{positional_encoding.1} parent=31 // pred_check_branch
        %8225 = sbr.rel (%p8223) target = $region36
      $region35: #{positional_encoding.1} parent=31 // pred_region
        %s8226 = smul.u32 2, %s14
      $region36: #{positional_encoding.1} parent=31 // pred_fallthru
        _
    $region32: #{positional_encoding.1} parent=5 // pred_fallthru
      _
    %p8227 = scmp.le.s32.totalorder 2, %s9
    // Predicated region
    $region37: #{positional_encoding.1} parent=5 // pred_check
      %p8228 = pneg %p8227
    $region38: #{positional_encoding.1} parent=5 // pred_check_branch
      %8230 = sbr.rel (%p8228) target = $region40
    $region39: #{positional_encoding.1} parent=5 // pred_region
      %s8231 = ssub.s32 %s9, 2
      // Predicated region
      $region41: #{positional_encoding.1} parent=39 // pred_check
        %p8232 = pneg %p106
      $region42: #{positional_encoding.1} parent=39 // pred_check_branch
        %8234 = sbr.rel (%p8232) target = $region44
      $region43: #{positional_encoding.1} parent=39 // pred_region
        %s8235 = smul.u32 2, %s15
        %p8236 = scmp.lt.s32.totalorder %s8235, 7
        %s8237 = scalar_select %p8236, %s8235, 7
        %s8238 = smul.addr %s8237, 15
        %s8239 = smul.addr %s8238, 8
        %s8240 = scalar_lea.vmem %s3, %s8239
      $region44: #{positional_encoding.1} parent=39 // pred_fallthru
        _
    $region40: #{positional_encoding.1} parent=5 // pred_fallthru
      _
  $region6: #{positional_encoding.1} parent=0 // loop_footer
    %s13 = sadd.s32 1, %s9
  $region7: #{positional_encoding.1} parent=0 // loop_footer_branch
    %8 = sbr.rel target = $region3
  $region8: #{positional_encoding.1} parent=0 // loop_exit
    _

</llo_original>
